<compile_context>
chip_gen: v6e
topology: v6e:2x2x1
jax: 0.10.0
libtpu: 0.0.40
codegen_flags: <defaults>
</compile_context>

<pallas_src>
import numpy as np
import jax
import jax.numpy as jnp
from jax import lax
from jax.experimental import pallas as pl
from jax.experimental.pallas import tpu as pltpu


# Static problem geometry (matches Linear(4032, 1): 64 * 7 * 9 = 4032).
N_BATCH = 2
H_IN, W_IN = 14, 18
H_OUT, W_OUT = 7, 9            # spatial dims after conv1 (stride 2, pad 1)
C = 64                         # channels everywhere after conv1
HW = H_OUT * W_OUT             # 63
ROWS = N_BATCH * HW            # 126 valid flattened rows (n*63 + h*9 + w)
ROWS_PAD = 128                 # padded to a sublane multiple
GUARD = 16                     # zero guard rows above/below the staged feature map
K1_PAD = 16                    # conv1 im2col depth 9 padded to 16


# ----------------------------- fused Pallas kernel ------------------------------ #

def _fused_resnet_kernel(p1_ref, masks_ref, w1_ref, b1_ref, wb_ref, bb_ref,
                         fcw_ref, fcb_ref, out_ref, fmap_ref):
    f32 = jnp.float32
    bf16 = jnp.bfloat16

    # Zero the staging scratch once so guard rows always read as exact zeros.
    fmap_ref[...] = jnp.zeros((GUARD + ROWS_PAD + GUARD, C), f32)

    row = lax.broadcasted_iota(jnp.int32, (ROWS_PAD, C), 0)
    valid = row < ROWS                       # rows 126,127 are padding

    # ---- conv1 (+ folded BN) + ReLU : (128,16) @ (16,64) on the MXU ----
    cur = jnp.dot(p1_ref[...], w1_ref[...], preferred_element_type=f32)
    cur = jnp.maximum(cur + b1_ref[...], 0.0)
    cur = jnp.where(valid, cur, 0.0)

    def conv3x3(widx):
        # 3x3 conv over the VMEM-resident flattened feature map staged in fmap_ref.
        # Taps are statically shifted sublane views; masks zero taps that fall outside
        # the 7x9 image (== zero padding) or would cross image/batch boundaries.
        acc = jnp.zeros((ROWS_PAD, C), f32)
        k = 0
        for dh in (-1, 0, 1):
            for dw in (-1, 0, 1):
                off = dh * W_OUT + dw
                start = GUARD + off
                tap = fmap_ref[start:start + ROWS_PAD, :]          # (128, 64) f32
                m = masks_ref[k]                                   # (128, 64) f32
                tap = jnp.where(m > 0.0, tap, 0.0).astype(bf16)
                wk = wb_ref[widx, k * C:(k + 1) * C, :]            # (64, 64) bf16
                acc = acc + jnp.dot(tap, wk, preferred_element_type=f32)
                k += 1
        return acc

    # ---- layer1: two ResBlocks (identity shortcut) ----
    for blk in range(2):
        res = cur
        fmap_ref[GUARD:GUARD + ROWS_PAD, :] = cur
        h = conv3x3(2 * blk + 0) + bb_ref[2 * blk + 0]
        h = jnp.where(valid, jnp.maximum(h, 0.0), 0.0)
        fmap_ref[GUARD:GUARD + ROWS_PAD, :] = h
        cur = conv3x3(2 * blk + 1) + bb_ref[2 * blk + 1] + res
        cur = jnp.where(valid, jnp.maximum(cur, 0.0), 0.0)

    # ---- avg_pool2d(out, 1) == identity;  FC(4032 -> 1) + Sigmoid ----
    # fcw is pre-permuted to the kernel's (row = n*63 + h*9 + w, lane = c) layout with
    # pad rows zeroed, so the FC is a VPU multiply + per-image masked reduction.
    prod = cur * fcw_ref[...]
    l0 = jnp.sum(jnp.where(row < HW, prod, 0.0))
    l1 = jnp.sum(jnp.where((row >= HW) & (row < ROWS), prod, 0.0))
    bias = fcb_ref[0, 0]

    sel0 = (lax.broadcasted_iota(jnp.int32, (N_BATCH, 1), 0) == 0).astype(f32)
    logits = sel0 * l0 + (1.0 - sel0) * l1 + bias
    out_ref[...] = 1.0 / (1.0 + jnp.exp(-logits))


# --------------------------------- JAX wrapper ---------------------------------- #

def _conv1_patches(x_nchw):
    """im2col for conv1 (3x3, stride 2, pad 1, Cin=1) -> (128, 16), (kh, kw) tap order."""
    x = x_nchw.astype(jnp.float32)
    xp = jnp.pad(x, ((0, 0), (0, 0), (1, 1), (1, 1)))          # (2, 1, 16, 20)
    taps = []
    for kh in range(3):
        for kw in range(3):
            taps.append(xp[:, 0, kh:kh + 2 * H_OUT:2, kw:kw + 2 * W_OUT:2])   # (2, 7, 9)
    p = jnp.stack(taps, axis=-1).reshape(ROWS, 9)              # rows = n*63 + h*9 + w
    return jnp.pad(p, ((0, ROWS_PAD - ROWS), (0, K1_PAD - 9)))


def _tap_masks():
    """(9, 128, 64) f32: 1.0 where tap k at flattened row r stays inside its own image."""
    m = np.zeros((9, ROWS_PAD, C), np.float32)
    for r in range(ROWS):
        h = (r % HW) // W_OUT
        w = r % W_OUT
        k = 0
        for dh in (-1, 0, 1):
            for dw in (-1, 0, 1):
                if 0 <= h + dh < H_OUT and 0 <= w + dw < W_OUT:
                    m[k, r, :] = 1.0
                k += 1
    return jnp.asarray(m)


def _fold_bn(key, c, eps=1e-5):
    k1, k2, k3, k4 = jax.random.split(key, 4)
    gamma = 1.0 + 0.1 * jax.random.normal(k1, (c,), jnp.float32)
    beta = 0.1 * jax.random.normal(k2, (c,), jnp.float32)
    mean = 0.1 * jax.random.normal(k3, (c,), jnp.float32)
    var = jnp.abs(1.0 + 0.1 * jax.random.normal(k4, (c,), jnp.float32))
    scale = gamma / jnp.sqrt(var + eps)
    bias = beta - mean * scale
    return scale, bias


def _conv_weight(key, cout, cin):
    # PyTorch layout (Cout, Cin, 3, 3) -> im2col layout (kh*kw*Cin, Cout)
    w = jax.random.normal(key, (cout, cin, 3, 3), jnp.float32) / float((cin * 9) ** 0.5)
    return jnp.transpose(w, (2, 3, 1, 0)).reshape(9 * cin, cout)


def init_params(key):
    keys = jax.random.split(key, 12)
    p = {}
    # conv1 (1 -> 64), BN scale folded into the weight; K padded 9 -> 16 with zero rows.
    w1 = _conv_weight(keys[0], C, 1)                           # (9, 64)
    s1, b1 = _fold_bn(keys[1], C)
    w1 = jnp.pad(w1 * s1[None, :], ((0, K1_PAD - 9), (0, 0)))
    p["w1"] = w1.astype(jnp.bfloat16)                          # (16, 64)
    p["b1"] = b1.reshape(1, C).astype(jnp.float32)

    # layer1: two ResBlocks, each with two 3x3 convs (64 -> 64), BN folded.
    ws, bs = [], []
    for i in range(4):
        w = _conv_weight(keys[2 + 2 * i], C, C)                # (576, 64)
        s, b = _fold_bn(keys[3 + 2 * i], C)
        ws.append((w * s[None, :]).astype(jnp.bfloat16))
        bs.append(b.reshape(1, C).astype(jnp.float32))
    p["wb"] = jnp.stack(ws)                                    # (4, 576, 64) bf16
    p["bb"] = jnp.stack(bs)                                    # (4, 1, 64) f32

    # fc: Linear(4032, 1).  Pre-permute the weight from PyTorch flatten order
    # (c*63 + h*9 + w) to the kernel's row layout (n*63 + h*9 + w, lane = c).
    fw = jax.random.normal(keys[10], (1, C * HW), jnp.float32) / float((C * HW) ** 0.5)
    fw_hw_c = jnp.transpose(fw.reshape(C, HW), (1, 0))         # (63, 64)
    p["fcw"] = jnp.concatenate(
        [fw_hw_c, fw_hw_c, jnp.zeros((ROWS_PAD - ROWS, C), jnp.float32)], axis=0)  # (128, 64)
    p["fcb"] = jax.random.normal(keys[11], (1, 1), jnp.float32)
    return p


@jax.jit
def resnet_forward(x_nchw, params):
    p1 = _conv1_patches(x_nchw).astype(jnp.bfloat16)           # (128, 16)
    masks = _tap_masks()                                        # (9, 128, 64) constant
    vspec = pl.BlockSpec(memory_space=pltpu.MemorySpace.VMEM)
    return pl.pallas_call(
        _fused_resnet_kernel,
        out_shape=jax.ShapeDtypeStruct((N_BATCH, 1), jnp.float32),
        in_specs=[vspec, vspec, vspec, vspec, vspec, vspec, vspec,
                  pl.BlockSpec(memory_space=pltpu.MemorySpace.SMEM)],
        out_specs=vspec,
        scratch_shapes=[pltpu.VMEM((GUARD + ROWS_PAD + GUARD, C), jnp.float32)],
    )(p1, masks, params["w1"], params["b1"], params["wb"], params["bb"],
      params["fcw"], params["fcb"])


# ------------------------------------ main -------------------------------------- #

if __name__ == "__main__":
    key = jax.random.PRNGKey(0)
    k_param, k_x = jax.random.split(key)
    params = init_params(k_param)

    # Input chosen so that 64 * (14//2) * (18//2) = 4032 matches Linear(4032, 1).
    x = jax.random.normal(k_x, (N_BATCH, 1, H_IN, W_IN), jnp.float32)   # NCHW

    y = resnet_forward(x, params)
    y = jax.block_until_ready(y)
    assert y.shape == (N_BATCH, 1)
    assert bool(jnp.all(jnp.isfinite(y)))
    print("KERNEL_OK")
</pallas_src>

<mosaic_0001>
module attributes {stable_mosaic.version = 11 : i64} {
  func.func @_fused_resnet_kernel(%arg0: memref<128x16xbf16, #tpu.memory_space<vmem>>, %arg1: memref<9x128x64xf32, #tpu.memory_space<vmem>>, %arg2: memref<16x64xbf16, #tpu.memory_space<vmem>>, %arg3: memref<1x64xf32, #tpu.memory_space<vmem>>, %arg4: memref<4x576x64xbf16, #tpu.memory_space<vmem>>, %arg5: memref<4x1x64xf32, #tpu.memory_space<vmem>>, %arg6: memref<128x64xf32, #tpu.memory_space<vmem>>, %arg7: memref<1x1xf32, #tpu.memory_space<smem>>, %arg8: memref<2x1xf32, #tpu.memory_space<vmem>>, %arg9: memref<160x64xf32, #tpu.memory_space<vmem>>) attributes {dimension_semantics = [], scalar_prefetch = 0 : i64, scratch_operands = 1 : i64, tpu.core_type = #tpu.core_type<tc>} {
    %cst = arith.constant 0.000000e+00 : f32
    %0 = vector.broadcast %cst : f32 to vector<160x64xf32>
    %c0 = arith.constant 0 : index
    %c0_0 = arith.constant 0 : index
    %1 = vector.load %arg9[%c0, %c0_0] : memref<160x64xf32, #tpu.memory_space<vmem>>, vector<160x64xf32>
    tpu.vector_store %arg9[%c0, %c0_0], %0 {strides = array<i32>} : memref<160x64xf32, #tpu.memory_space<vmem>>, vector<160x64xf32>,
    %2 = tpu.iota {dimensions = array<i32: 0>} : vector<128x64xi32>
    %c126_i32 = arith.constant 126 : i32
    %3 = vector.broadcast %c126_i32 : i32 to vector<128x64xi32>
    %4 = arith.cmpi slt, %2, %3 : vector<128x64xi32>
    %c0_1 = arith.constant 0 : index
    %c0_2 = arith.constant 0 : index
    %5 = vector.load %arg0[%c0_1, %c0_2] : memref<128x16xbf16, #tpu.memory_space<vmem>>, vector<128x16xbf16>
    %c0_3 = arith.constant 0 : index
    %c0_4 = arith.constant 0 : index
    %6 = vector.load %arg2[%c0_3, %c0_4] : memref<16x64xbf16, #tpu.memory_space<vmem>>, vector<16x64xbf16>
    %cst_5 = arith.constant dense<0.000000e+00> : vector<128x64xf32>
    %7 = tpu.matmul %5, %6, %cst_5 {dimension_numbers = #tpu.dot_dimension_numbers<[1], [0], [0], [1], [0, 0, 1, 1], [], []>} : vector<128x16xbf16>, vector<16x64xbf16>, vector<128x64xf32> -> vector<128x64xf32>
    %c0_6 = arith.constant 0 : index
    %c0_7 = arith.constant 0 : index
    %8 = vector.load %arg3[%c0_6, %c0_7] : memref<1x64xf32, #tpu.memory_space<vmem>>, vector<1x64xf32>
    %9 = vector.broadcast %8 : vector<1x64xf32> to vector<128x64xf32>
    %10 = arith.addf %7, %9 : vector<128x64xf32>
    %cst_8 = arith.constant 0.000000e+00 : f32
    %11 = vector.broadcast %cst_8 : f32 to vector<128x64xf32>
    %12 = arith.maximumf %10, %11 : vector<128x64xf32>
    %cst_9 = arith.constant 0.000000e+00 : f32
    %13 = vector.broadcast %cst_9 : f32 to vector<128x64xf32>
    %14 = arith.select %4, %12, %13 : vector<128x64xi1>, vector<128x64xf32>
    %c16 = arith.constant 16 : index
    %c0_10 = arith.constant 0 : index
    %15 = vector.load %arg9[%c16, %c0_10] : memref<160x64xf32, #tpu.memory_space<vmem>>, vector<128x64xf32>
    tpu.vector_store %arg9[%c16, %c0_10], %14 {strides = array<i32>} : memref<160x64xf32, #tpu.memory_space<vmem>>, vector<128x64xf32>,
    %cst_11 = arith.constant 0.000000e+00 : f32
    %16 = vector.broadcast %cst_11 : f32 to vector<128x64xf32>
    %c6 = arith.constant 6 : index
    %c0_12 = arith.constant 0 : index
    %17 = vector.load %arg9[%c6, %c0_12] : memref<160x64xf32, #tpu.memory_space<vmem>>, vector<128x64xf32>
    %c0_13 = arith.constant 0 : index
    %c0_14 = arith.constant 0 : index
    %c0_15 = arith.constant 0 : index
    %18 = vector.load %arg1[%c0_13, %c0_14, %c0_15] : memref<9x128x64xf32, #tpu.memory_space<vmem>>, vector<1x128x64xf32>
    %19 = vector.shape_cast %18 : vector<1x128x64xf32> to vector<128x64xf32>
    %cst_16 = arith.constant 0.000000e+00 : f32
    %20 = vector.broadcast %cst_16 : f32 to vector<128x64xf32>
    %21 = arith.cmpf ogt, %19, %20 : vector<128x64xf32>
    %cst_17 = arith.constant 0.000000e+00 : f32
    %22 = vector.broadcast %cst_17 : f32 to vector<128x64xf32>
    %23 = arith.select %21, %17, %22 : vector<128x64xi1>, vector<128x64xf32>
    %24 = arith.truncf %23 : vector<128x64xf32> to vector<128x64xbf16>
    %c0_18 = arith.constant 0 : index
    %c0_19 = arith.constant 0 : index
    %c0_20 = arith.constant 0 : index
    %25 = vector.load %arg4[%c0_18, %c0_19, %c0_20] : memref<4x576x64xbf16, #tpu.memory_space<vmem>>, vector<1x64x64xbf16>
    %26 = vector.shape_cast %25 : vector<1x64x64xbf16> to vector<64x64xbf16>
    %cst_21 = arith.constant dense<0.000000e+00> : vector<128x64xf32>
    %27 = tpu.matmul %24, %26, %cst_21 {dimension_numbers = #tpu.dot_dimension_numbers<[1], [0], [0], [1], [0, 0, 1, 1], [], []>} : vector<128x64xbf16>, vector<64x64xbf16>, vector<128x64xf32> -> vector<128x64xf32>
    %28 = arith.addf %16, %27 : vector<128x64xf32>
    %c7 = arith.constant 7 : index
    %c0_22 = arith.constant 0 : index
    %29 = vector.load %arg9[%c7, %c0_22] : memref<160x64xf32, #tpu.memory_space<vmem>>, vector<128x64xf32>
    %c1 = arith.constant 1 : index
    %c0_23 = arith.constant 0 : index
    %c0_24 = arith.constant 0 : index
    %30 = vector.load %arg1[%c1, %c0_23, %c0_24] : memref<9x128x64xf32, #tpu.memory_space<vmem>>, vector<1x128x64xf32>
    %31 = vector.shape_cast %30 : vector<1x128x64xf32> to vector<128x64xf32>
    %cst_25 = arith.constant 0.000000e+00 : f32
    %32 = vector.broadcast %cst_25 : f32 to vector<128x64xf32>
    %33 = arith.cmpf ogt, %31, %32 : vector<128x64xf32>
    %cst_26 = arith.constant 0.000000e+00 : f32
    %34 = vector.broadcast %cst_26 : f32 to vector<128x64xf32>
    %35 = arith.select %33, %29, %34 : vector<128x64xi1>, vector<128x64xf32>
    %36 = arith.truncf %35 : vector<128x64xf32> to vector<128x64xbf16>
    %c0_27 = arith.constant 0 : index
    %c64 = arith.constant 64 : index
    %c0_28 = arith.constant 0 : index
    %37 = vector.load %arg4[%c0_27, %c64, %c0_28] : memref<4x576x64xbf16, #tpu.memory_space<vmem>>, vector<1x64x64xbf16>
    %38 = vector.shape_cast %37 : vector<1x64x64xbf16> to vector<64x64xbf16>
    %cst_29 = arith.constant dense<0.000000e+00> : vector<128x64xf32>
    %39 = tpu.matmul %36, %38, %cst_29 {dimension_numbers = #tpu.dot_dimension_numbers<[1], [0], [0], [1], [0, 0, 1, 1], [], []>} : vector<128x64xbf16>, vector<64x64xbf16>, vector<128x64xf32> -> vector<128x64xf32>
    %40 = arith.addf %28, %39 : vector<128x64xf32>
    %c8 = arith.constant 8 : index
    %c0_30 = arith.constant 0 : index
    %41 = vector.load %arg9[%c8, %c0_30] : memref<160x64xf32, #tpu.memory_space<vmem>>, vector<128x64xf32>
    %c2 = arith.constant 2 : index
    %c0_31 = arith.constant 0 : index
    %c0_32 = arith.constant 0 : index
    %42 = vector.load %arg1[%c2, %c0_31, %c0_32] : memref<9x128x64xf32, #tpu.memory_space<vmem>>, vector<1x128x64xf32>
    %43 = vector.shape_cast %42 : vector<1x128x64xf32> to vector<128x64xf32>
    %cst_33 = arith.constant 0.000000e+00 : f32
    %44 = vector.broadcast %cst_33 : f32 to vector<128x64xf32>
    %45 = arith.cmpf ogt, %43, %44 : vector<128x64xf32>
    %cst_34 = arith.constant 0.000000e+00 : f32
    %46 = vector.broadcast %cst_34 : f32 to vector<128x64xf32>
    %47 = arith.select %45, %41, %46 : vector<128x64xi1>, vector<128x64xf32>
    %48 = arith.truncf %47 : vector<128x64xf32> to vector<128x64xbf16>
    %c0_35 = arith.constant 0 : index
    %c128 = arith.constant 128 : index
    %c0_36 = arith.constant 0 : index
    %49 = vector.load %arg4[%c0_35, %c128, %c0_36] : memref<4x576x64xbf16, #tpu.memory_space<vmem>>, vector<1x64x64xbf16>
    %50 = vector.shape_cast %49 : vector<1x64x64xbf16> to vector<64x64xbf16>
    %cst_37 = arith.constant dense<0.000000e+00> : vector<128x64xf32>
    %51 = tpu.matmul %48, %50, %cst_37 {dimension_numbers = #tpu.dot_dimension_numbers<[1], [0], [0], [1], [0, 0, 1, 1], [], []>} : vector<128x64xbf16>, vector<64x64xbf16>, vector<128x64xf32> -> vector<128x64xf32>
    %52 = arith.addf %40, %51 : vector<128x64xf32>
    %c15 = arith.constant 15 : index
    %c0_38 = arith.constant 0 : index
    %53 = vector.load %arg9[%c15, %c0_38] : memref<160x64xf32, #tpu.memory_space<vmem>>, vector<128x64xf32>
    %c3 = arith.constant 3 : index
    %c0_39 = arith.constant 0 : index
    %c0_40 = arith.constant 0 : index
    %54 = vector.load %arg1[%c3, %c0_39, %c0_40] : memref<9x128x64xf32, #tpu.memory_space<vmem>>, vector<1x128x64xf32>
    %55 = vector.shape_cast %54 : vector<1x128x64xf32> to vector<128x64xf32>
    %cst_41 = arith.constant 0.000000e+00 : f32
    %56 = vector.broadcast %cst_41 : f32 to vector<128x64xf32>
    %57 = arith.cmpf ogt, %55, %56 : vector<128x64xf32>
    %cst_42 = arith.constant 0.000000e+00 : f32
    %58 = vector.broadcast %cst_42 : f32 to vector<128x64xf32>
    %59 = arith.select %57, %53, %58 : vector<128x64xi1>, vector<128x64xf32>
    %60 = arith.truncf %59 : vector<128x64xf32> to vector<128x64xbf16>
    %c0_43 = arith.constant 0 : index
    %c192 = arith.constant 192 : index
    %c0_44 = arith.constant 0 : index
    %61 = vector.load %arg4[%c0_43, %c192, %c0_44] : memref<4x576x64xbf16, #tpu.memory_space<vmem>>, vector<1x64x64xbf16>
    %62 = vector.shape_cast %61 : vector<1x64x64xbf16> to vector<64x64xbf16>
    %cst_45 = arith.constant dense<0.000000e+00> : vector<128x64xf32>
    %63 = tpu.matmul %60, %62, %cst_45 {dimension_numbers = #tpu.dot_dimension_numbers<[1], [0], [0], [1], [0, 0, 1, 1], [], []>} : vector<128x64xbf16>, vector<64x64xbf16>, vector<128x64xf32> -> vector<128x64xf32>
    %64 = arith.addf %52, %63 : vector<128x64xf32>
    %c16_46 = arith.constant 16 : index
    %c0_47 = arith.constant 0 : index
    %65 = vector.load %arg9[%c16_46, %c0_47] : memref<160x64xf32, #tpu.memory_space<vmem>>, vector<128x64xf32>
    %c4 = arith.constant 4 : index
    %c0_48 = arith.constant 0 : index
    %c0_49 = arith.constant 0 : index
    %66 = vector.load %arg1[%c4, %c0_48, %c0_49] : memref<9x128x64xf32, #tpu.memory_space<vmem>>, vector<1x128x64xf32>
    %67 = vector.shape_cast %66 : vector<1x128x64xf32> to vector<128x64xf32>
    %cst_50 = arith.constant 0.000000e+00 : f32
    %68 = vector.broadcast %cst_50 : f32 to vector<128x64xf32>
    %69 = arith.cmpf ogt, %67, %68 : vector<128x64xf32>
    %cst_51 = arith.constant 0.000000e+00 : f32
    %70 = vector.broadcast %cst_51 : f32 to vector<128x64xf32>
    %71 = arith.select %69, %65, %70 : vector<128x64xi1>, vector<128x64xf32>
    %72 = arith.truncf %71 : vector<128x64xf32> to vector<128x64xbf16>
    %c0_52 = arith.constant 0 : index
    %c256 = arith.constant 256 : index
    %c0_53 = arith.constant 0 : index
    %73 = vector.load %arg4[%c0_52, %c256, %c0_53] : memref<4x576x64xbf16, #tpu.memory_space<vmem>>, vector<1x64x64xbf16>
    %74 = vector.shape_cast %73 : vector<1x64x64xbf16> to vector<64x64xbf16>
    %cst_54 = arith.constant dense<0.000000e+00> : vector<128x64xf32>
    %75 = tpu.matmul %72, %74, %cst_54 {dimension_numbers = #tpu.dot_dimension_numbers<[1], [0], [0], [1], [0, 0, 1, 1], [], []>} : vector<128x64xbf16>, vector<64x64xbf16>, vector<128x64xf32> -> vector<128x64xf32>
    %76 = arith.addf %64, %75 : vector<128x64xf32>
    %c17 = arith.constant 17 : index
    %c0_55 = arith.constant 0 : index
    %77 = vector.load %arg9[%c17, %c0_55] : memref<160x64xf32, #tpu.memory_space<vmem>>, vector<128x64xf32>
    %c5 = arith.constant 5 : index
    %c0_56 = arith.constant 0 : index
    %c0_57 = arith.constant 0 : index
    %78 = vector.load %arg1[%c5, %c0_56, %c0_57] : memref<9x128x64xf32, #tpu.memory_space<vmem>>, vector<1x128x64xf32>
    %79 = vector.shape_cast %78 : vector<1x128x64xf32> to vector<128x64xf32>
    %cst_58 = arith.constant 0.000000e+00 : f32
    %80 = vector.broadcast %cst_58 : f32 to vector<128x64xf32>
    %81 = arith.cmpf ogt, %79, %80 : vector<128x64xf32>
    %cst_59 = arith.constant 0.000000e+00 : f32
    %82 = vector.broadcast %cst_59 : f32 to vector<128x64xf32>
    %83 = arith.select %81, %77, %82 : vector<128x64xi1>, vector<128x64xf32>
    %84 = arith.truncf %83 : vector<128x64xf32> to vector<128x64xbf16>
    %c0_60 = arith.constant 0 : index
    %c320 = arith.constant 320 : index
    %c0_61 = arith.constant 0 : index
    %85 = vector.load %arg4[%c0_60, %c320, %c0_61] : memref<4x576x64xbf16, #tpu.memory_space<vmem>>, vector<1x64x64xbf16>
    %86 = vector.shape_cast %85 : vector<1x64x64xbf16> to vector<64x64xbf16>
    %cst_62 = arith.constant dense<0.000000e+00> : vector<128x64xf32>
    %87 = tpu.matmul %84, %86, %cst_62 {dimension_numbers = #tpu.dot_dimension_numbers<[1], [0], [0], [1], [0, 0, 1, 1], [], []>} : vector<128x64xbf16>, vector<64x64xbf16>, vector<128x64xf32> -> vector<128x64xf32>
    %88 = arith.addf %76, %87 : vector<128x64xf32>
    %c24 = arith.constant 24 : index
    %c0_63 = arith.constant 0 : index
    %89 = vector.load %arg9[%c24, %c0_63] : memref<160x64xf32, #tpu.memory_space<vmem>>, vector<128x64xf32>
    %c6_64 = arith.constant 6 : index
    %c0_65 = arith.constant 0 : index
    %c0_66 = arith.constant 0 : index
    %90 = vector.load %arg1[%c6_64, %c0_65, %c0_66] : memref<9x128x64xf32, #tpu.memory_space<vmem>>, vector<1x128x64xf32>
    %91 = vector.shape_cast %90 : vector<1x128x64xf32> to vector<128x64xf32>
    %cst_67 = arith.constant 0.000000e+00 : f32
    %92 = vector.broadcast %cst_67 : f32 to vector<128x64xf32>
    %93 = arith.cmpf ogt, %91, %92 : vector<128x64xf32>
    %cst_68 = arith.constant 0.000000e+00 : f32
    %94 = vector.broadcast %cst_68 : f32 to vector<128x64xf32>
    %95 = arith.select %93, %89, %94 : vector<128x64xi1>, vector<128x64xf32>
    %96 = arith.truncf %95 : vector<128x64xf32> to vector<128x64xbf16>
    %c0_69 = arith.constant 0 : index
    %c384 = arith.constant 384 : index
    %c0_70 = arith.constant 0 : index
    %97 = vector.load %arg4[%c0_69, %c384, %c0_70] : memref<4x576x64xbf16, #tpu.memory_space<vmem>>, vector<1x64x64xbf16>
    %98 = vector.shape_cast %97 : vector<1x64x64xbf16> to vector<64x64xbf16>
    %cst_71 = arith.constant dense<0.000000e+00> : vector<128x64xf32>
    %99 = tpu.matmul %96, %98, %cst_71 {dimension_numbers = #tpu.dot_dimension_numbers<[1], [0], [0], [1], [0, 0, 1, 1], [], []>} : vector<128x64xbf16>, vector<64x64xbf16>, vector<128x64xf32> -> vector<128x64xf32>
    %100 = arith.addf %88, %99 : vector<128x64xf32>
    %c25 = arith.constant 25 : index
    %c0_72 = arith.constant 0 : index
    %101 = vector.load %arg9[%c25, %c0_72] : memref<160x64xf32, #tpu.memory_space<vmem>>, vector<128x64xf32>
    %c7_73 = arith.constant 7 : index
    %c0_74 = arith.constant 0 : index
    %c0_75 = arith.constant 0 : index
    %102 = vector.load %arg1[%c7_73, %c0_74, %c0_75] : memref<9x128x64xf32, #tpu.memory_space<vmem>>, vector<1x128x64xf32>
    %103 = vector.shape_cast %102 : vector<1x128x64xf32> to vector<128x64xf32>
    %cst_76 = arith.constant 0.000000e+00 : f32
    %104 = vector.broadcast %cst_76 : f32 to vector<128x64xf32>
    %105 = arith.cmpf ogt, %103, %104 : vector<128x64xf32>
    %cst_77 = arith.constant 0.000000e+00 : f32
    %106 = vector.broadcast %cst_77 : f32 to vector<128x64xf32>
    %107 = arith.select %105, %101, %106 : vector<128x64xi1>, vector<128x64xf32>
    %108 = arith.truncf %107 : vector<128x64xf32> to vector<128x64xbf16>
    %c0_78 = arith.constant 0 : index
    %c448 = arith.constant 448 : index
    %c0_79 = arith.constant 0 : index
    %109 = vector.load %arg4[%c0_78, %c448, %c0_79] : memref<4x576x64xbf16, #tpu.memory_space<vmem>>, vector<1x64x64xbf16>
    %110 = vector.shape_cast %109 : vector<1x64x64xbf16> to vector<64x64xbf16>
    %cst_80 = arith.constant dense<0.000000e+00> : vector<128x64xf32>
    %111 = tpu.matmul %108, %110, %cst_80 {dimension_numbers = #tpu.dot_dimension_numbers<[1], [0], [0], [1], [0, 0, 1, 1], [], []>} : vector<128x64xbf16>, vector<64x64xbf16>, vector<128x64xf32> -> vector<128x64xf32>
    %112 = arith.addf %100, %111 : vector<128x64xf32>
    %c26 = arith.constant 26 : index
    %c0_81 = arith.constant 0 : index
    %113 = vector.load %arg9[%c26, %c0_81] : memref<160x64xf32, #tpu.memory_space<vmem>>, vector<128x64xf32>
    %c8_82 = arith.constant 8 : index
    %c0_83 = arith.constant 0 : index
    %c0_84 = arith.constant 0 : index
    %114 = vector.load %arg1[%c8_82, %c0_83, %c0_84] : memref<9x128x64xf32, #tpu.memory_space<vmem>>, vector<1x128x64xf32>
    %115 = vector.shape_cast %114 : vector<1x128x64xf32> to vector<128x64xf32>
    %cst_85 = arith.constant 0.000000e+00 : f32
    %116 = vector.broadcast %cst_85 : f32 to vector<128x64xf32>
    %117 = arith.cmpf ogt, %115, %116 : vector<128x64xf32>
    %cst_86 = arith.constant 0.000000e+00 : f32
    %118 = vector.broadcast %cst_86 : f32 to vector<128x64xf32>
    %119 = arith.select %117, %113, %118 : vector<128x64xi1>, vector<128x64xf32>
    %120 = arith.truncf %119 : vector<128x64xf32> to vector<128x64xbf16>
    %c0_87 = arith.constant 0 : index
    %c512 = arith.constant 512 : index
    %c0_88 = arith.constant 0 : index
    %121 = vector.load %arg4[%c0_87, %c512, %c0_88] : memref<4x576x64xbf16, #tpu.memory_space<vmem>>, vector<1x64x64xbf16>
    %122 = vector.shape_cast %121 : vector<1x64x64xbf16> to vector<64x64xbf16>
    %cst_89 = arith.constant dense<0.000000e+00> : vector<128x64xf32>
    %123 = tpu.matmul %120, %122, %cst_89 {dimension_numbers = #tpu.dot_dimension_numbers<[1], [0], [0], [1], [0, 0, 1, 1], [], []>} : vector<128x64xbf16>, vector<64x64xbf16>, vector<128x64xf32> -> vector<128x64xf32>
    %124 = arith.addf %112, %123 : vector<128x64xf32>
    %c0_90 = arith.constant 0 : index
    %c0_91 = arith.constant 0 : index
    %c0_92 = arith.constant 0 : index
    %125 = vector.load %arg5[%c0_90, %c0_91, %c0_92] : memref<4x1x64xf32, #tpu.memory_space<vmem>>, vector<1x1x64xf32>
    %126 = vector.shape_cast %125 : vector<1x1x64xf32> to vector<1x64xf32>
    %127 = vector.broadcast %126 : vector<1x64xf32> to vector<128x64xf32>
    %128 = arith.addf %124, %127 : vector<128x64xf32>
    %cst_93 = arith.constant 0.000000e+00 : f32
    %129 = vector.broadcast %cst_93 : f32 to vector<128x64xf32>
    %130 = arith.maximumf %128, %129 : vector<128x64xf32>
    %cst_94 = arith.constant 0.000000e+00 : f32
    %131 = vector.broadcast %cst_94 : f32 to vector<128x64xf32>
    %132 = arith.select %4, %130, %131 : vector<128x64xi1>, vector<128x64xf32>
    %c16_95 = arith.constant 16 : index
    %c0_96 = arith.constant 0 : index
    %133 = vector.load %arg9[%c16_95, %c0_96] : memref<160x64xf32, #tpu.memory_space<vmem>>, vector<128x64xf32>
    tpu.vector_store %arg9[%c16_95, %c0_96], %132 {strides = array<i32>} : memref<160x64xf32, #tpu.memory_space<vmem>>, vector<128x64xf32>,
    %cst_97 = arith.constant 0.000000e+00 : f32
    %134 = vector.broadcast %cst_97 : f32 to vector<128x64xf32>
    %c6_98 = arith.constant 6 : index
    %c0_99 = arith.constant 0 : index
    %135 = vector.load %arg9[%c6_98, %c0_99] : memref<160x64xf32, #tpu.memory_space<vmem>>, vector<128x64xf32>
    %c0_100 = arith.constant 0 : index
    %c0_101 = arith.constant 0 : index
    %c0_102 = arith.constant 0 : index
    %136 = vector.load %arg1[%c0_100, %c0_101, %c0_102] : memref<9x128x64xf32, #tpu.memory_space<vmem>>, vector<1x128x64xf32>
    %137 = vector.shape_cast %136 : vector<1x128x64xf32> to vector<128x64xf32>
    %cst_103 = arith.constant 0.000000e+00 : f32
    %138 = vector.broadcast %cst_103 : f32 to vector<128x64xf32>
    %139 = arith.cmpf ogt, %137, %138 : vector<128x64xf32>
    %cst_104 = arith.constant 0.000000e+00 : f32
    %140 = vector.broadcast %cst_104 : f32 to vector<128x64xf32>
    %141 = arith.select %139, %135, %140 : vector<128x64xi1>, vector<128x64xf32>
    %142 = arith.truncf %141 : vector<128x64xf32> to vector<128x64xbf16>
    %c1_105 = arith.constant 1 : index
    %c0_106 = arith.constant 0 : index
    %c0_107 = arith.constant 0 : index
    %143 = vector.load %arg4[%c1_105, %c0_106, %c0_107] : memref<4x576x64xbf16, #tpu.memory_space<vmem>>, vector<1x64x64xbf16>
    %144 = vector.shape_cast %143 : vector<1x64x64xbf16> to vector<64x64xbf16>
    %cst_108 = arith.constant dense<0.000000e+00> : vector<128x64xf32>
    %145 = tpu.matmul %142, %144, %cst_108 {dimension_numbers = #tpu.dot_dimension_numbers<[1], [0], [0], [1], [0, 0, 1, 1], [], []>} : vector<128x64xbf16>, vector<64x64xbf16>, vector<128x64xf32> -> vector<128x64xf32>
    %146 = arith.addf %134, %145 : vector<128x64xf32>
    %c7_109 = arith.constant 7 : index
    %c0_110 = arith.constant 0 : index
    %147 = vector.load %arg9[%c7_109, %c0_110] : memref<160x64xf32, #tpu.memory_space<vmem>>, vector<128x64xf32>
    %c1_111 = arith.constant 1 : index
    %c0_112 = arith.constant 0 : index
    %c0_113 = arith.constant 0 : index
    %148 = vector.load %arg1[%c1_111, %c0_112, %c0_113] : memref<9x128x64xf32, #tpu.memory_space<vmem>>, vector<1x128x64xf32>
    %149 = vector.shape_cast %148 : vector<1x128x64xf32> to vector<128x64xf32>
    %cst_114 = arith.constant 0.000000e+00 : f32
    %150 = vector.broadcast %cst_114 : f32 to vector<128x64xf32>
    %151 = arith.cmpf ogt, %149, %150 : vector<128x64xf32>
    %cst_115 = arith.constant 0.000000e+00 : f32
    %152 = vector.broadcast %cst_115 : f32 to vector<128x64xf32>
    %153 = arith.select %151, %147, %152 : vector<128x64xi1>, vector<128x64xf32>
    %154 = arith.truncf %153 : vector<128x64xf32> to vector<128x64xbf16>
    %c1_116 = arith.constant 1 : index
    %c64_117 = arith.constant 64 : index
    %c0_118 = arith.constant 0 : index
    %155 = vector.load %arg4[%c1_116, %c64_117, %c0_118] : memref<4x576x64xbf16, #tpu.memory_space<vmem>>, vector<1x64x64xbf16>
    %156 = vector.shape_cast %155 : vector<1x64x64xbf16> to vector<64x64xbf16>
    %cst_119 = arith.constant dense<0.000000e+00> : vector<128x64xf32>
    %157 = tpu.matmul %154, %156, %cst_119 {dimension_numbers = #tpu.dot_dimension_numbers<[1], [0], [0], [1], [0, 0, 1, 1], [], []>} : vector<128x64xbf16>, vector<64x64xbf16>, vector<128x64xf32> -> vector<128x64xf32>
    %158 = arith.addf %146, %157 : vector<128x64xf32>
    %c8_120 = arith.constant 8 : index
    %c0_121 = arith.constant 0 : index
    %159 = vector.load %arg9[%c8_120, %c0_121] : memref<160x64xf32, #tpu.memory_space<vmem>>, vector<128x64xf32>
    %c2_122 = arith.constant 2 : index
    %c0_123 = arith.constant 0 : index
    %c0_124 = arith.constant 0 : index
    %160 = vector.load %arg1[%c2_122, %c0_123, %c0_124] : memref<9x128x64xf32, #tpu.memory_space<vmem>>, vector<1x128x64xf32>
    %161 = vector.shape_cast %160 : vector<1x128x64xf32> to vector<128x64xf32>
    %cst_125 = arith.constant 0.000000e+00 : f32
    %162 = vector.broadcast %cst_125 : f32 to vector<128x64xf32>
    %163 = arith.cmpf ogt, %161, %162 : vector<128x64xf32>
    %cst_126 = arith.constant 0.000000e+00 : f32
    %164 = vector.broadcast %cst_126 : f32 to vector<128x64xf32>
    %165 = arith.select %163, %159, %164 : vector<128x64xi1>, vector<128x64xf32>
    %166 = arith.truncf %165 : vector<128x64xf32> to vector<128x64xbf16>
    %c1_127 = arith.constant 1 : index
    %c128_128 = arith.constant 128 : index
    %c0_129 = arith.constant 0 : index
    %167 = vector.load %arg4[%c1_127, %c128_128, %c0_129] : memref<4x576x64xbf16, #tpu.memory_space<vmem>>, vector<1x64x64xbf16>
    %168 = vector.shape_cast %167 : vector<1x64x64xbf16> to vector<64x64xbf16>
    %cst_130 = arith.constant dense<0.000000e+00> : vector<128x64xf32>
    %169 = tpu.matmul %166, %168, %cst_130 {dimension_numbers = #tpu.dot_dimension_numbers<[1], [0], [0], [1], [0, 0, 1, 1], [], []>} : vector<128x64xbf16>, vector<64x64xbf16>, vector<128x64xf32> -> vector<128x64xf32>
    %170 = arith.addf %158, %169 : vector<128x64xf32>
    %c15_131 = arith.constant 15 : index
    %c0_132 = arith.constant 0 : index
    %171 = vector.load %arg9[%c15_131, %c0_132] : memref<160x64xf32, #tpu.memory_space<vmem>>, vector<128x64xf32>
    %c3_133 = arith.constant 3 : index
    %c0_134 = arith.constant 0 : index
    %c0_135 = arith.constant 0 : index
    %172 = vector.load %arg1[%c3_133, %c0_134, %c0_135] : memref<9x128x64xf32, #tpu.memory_space<vmem>>, vector<1x128x64xf32>
    %173 = vector.shape_cast %172 : vector<1x128x64xf32> to vector<128x64xf32>
    %cst_136 = arith.constant 0.000000e+00 : f32
    %174 = vector.broadcast %cst_136 : f32 to vector<128x64xf32>
    %175 = arith.cmpf ogt, %173, %174 : vector<128x64xf32>
    %cst_137 = arith.constant 0.000000e+00 : f32
    %176 = vector.broadcast %cst_137 : f32 to vector<128x64xf32>
    %177 = arith.select %175, %171, %176 : vector<128x64xi1>, vector<128x64xf32>
    %178 = arith.truncf %177 : vector<128x64xf32> to vector<128x64xbf16>
    %c1_138 = arith.constant 1 : index
    %c192_139 = arith.constant 192 : index
    %c0_140 = arith.constant 0 : index
    %179 = vector.load %arg4[%c1_138, %c192_139, %c0_140] : memref<4x576x64xbf16, #tpu.memory_space<vmem>>, vector<1x64x64xbf16>
    %180 = vector.shape_cast %179 : vector<1x64x64xbf16> to vector<64x64xbf16>
    %cst_141 = arith.constant dense<0.000000e+00> : vector<128x64xf32>
    %181 = tpu.matmul %178, %180, %cst_141 {dimension_numbers = #tpu.dot_dimension_numbers<[1], [0], [0], [1], [0, 0, 1, 1], [], []>} : vector<128x64xbf16>, vector<64x64xbf16>, vector<128x64xf32> -> vector<128x64xf32>
    %182 = arith.addf %170, %181 : vector<128x64xf32>
    %c16_142 = arith.constant 16 : index
    %c0_143 = arith.constant 0 : index
    %183 = vector.load %arg9[%c16_142, %c0_143] : memref<160x64xf32, #tpu.memory_space<vmem>>, vector<128x64xf32>
    %c4_144 = arith.constant 4 : index
    %c0_145 = arith.constant 0 : index
    %c0_146 = arith.constant 0 : index
    %184 = vector.load %arg1[%c4_144, %c0_145, %c0_146] : memref<9x128x64xf32, #tpu.memory_space<vmem>>, vector<1x128x64xf32>
    %185 = vector.shape_cast %184 : vector<1x128x64xf32> to vector<128x64xf32>
    %cst_147 = arith.constant 0.000000e+00 : f32
    %186 = vector.broadcast %cst_147 : f32 to vector<128x64xf32>
    %187 = arith.cmpf ogt, %185, %186 : vector<128x64xf32>
    %cst_148 = arith.constant 0.000000e+00 : f32
    %188 = vector.broadcast %cst_148 : f32 to vector<128x64xf32>
    %189 = arith.select %187, %183, %188 : vector<128x64xi1>, vector<128x64xf32>
    %190 = arith.truncf %189 : vector<128x64xf32> to vector<128x64xbf16>
    %c1_149 = arith.constant 1 : index
    %c256_150 = arith.constant 256 : index
    %c0_151 = arith.constant 0 : index
    %191 = vector.load %arg4[%c1_149, %c256_150, %c0_151] : memref<4x576x64xbf16, #tpu.memory_space<vmem>>, vector<1x64x64xbf16>
    %192 = vector.shape_cast %191 : vector<1x64x64xbf16> to vector<64x64xbf16>
    %cst_152 = arith.constant dense<0.000000e+00> : vector<128x64xf32>
    %193 = tpu.matmul %190, %192, %cst_152 {dimension_numbers = #tpu.dot_dimension_numbers<[1], [0], [0], [1], [0, 0, 1, 1], [], []>} : vector<128x64xbf16>, vector<64x64xbf16>, vector<128x64xf32> -> vector<128x64xf32>
    %194 = arith.addf %182, %193 : vector<128x64xf32>
    %c17_153 = arith.constant 17 : index
    %c0_154 = arith.constant 0 : index
    %195 = vector.load %arg9[%c17_153, %c0_154] : memref<160x64xf32, #tpu.memory_space<vmem>>, vector<128x64xf32>
    %c5_155 = arith.constant 5 : index
    %c0_156 = arith.constant 0 : index
    %c0_157 = arith.constant 0 : index
    %196 = vector.load %arg1[%c5_155, %c0_156, %c0_157] : memref<9x128x64xf32, #tpu.memory_space<vmem>>, vector<1x128x64xf32>
    %197 = vector.shape_cast %196 : vector<1x128x64xf32> to vector<128x64xf32>
    %cst_158 = arith.constant 0.000000e+00 : f32
    %198 = vector.broadcast %cst_158 : f32 to vector<128x64xf32>
    %199 = arith.cmpf ogt, %197, %198 : vector<128x64xf32>
    %cst_159 = arith.constant 0.000000e+00 : f32
    %200 = vector.broadcast %cst_159 : f32 to vector<128x64xf32>
    %201 = arith.select %199, %195, %200 : vector<128x64xi1>, vector<128x64xf32>
    %202 = arith.truncf %201 : vector<128x64xf32> to vector<128x64xbf16>
    %c1_160 = arith.constant 1 : index
    %c320_161 = arith.constant 320 : index
    %c0_162 = arith.constant 0 : index
    %203 = vector.load %arg4[%c1_160, %c320_161, %c0_162] : memref<4x576x64xbf16, #tpu.memory_space<vmem>>, vector<1x64x64xbf16>
    %204 = vector.shape_cast %203 : vector<1x64x64xbf16> to vector<64x64xbf16>
    %cst_163 = arith.constant dense<0.000000e+00> : vector<128x64xf32>
    %205 = tpu.matmul %202, %204, %cst_163 {dimension_numbers = #tpu.dot_dimension_numbers<[1], [0], [0], [1], [0, 0, 1, 1], [], []>} : vector<128x64xbf16>, vector<64x64xbf16>, vector<128x64xf32> -> vector<128x64xf32>
    %206 = arith.addf %194, %205 : vector<128x64xf32>
    %c24_164 = arith.constant 24 : index
    %c0_165 = arith.constant 0 : index
    %207 = vector.load %arg9[%c24_164, %c0_165] : memref<160x64xf32, #tpu.memory_space<vmem>>, vector<128x64xf32>
    %c6_166 = arith.constant 6 : index
    %c0_167 = arith.constant 0 : index
    %c0_168 = arith.constant 0 : index
    %208 = vector.load %arg1[%c6_166, %c0_167, %c0_168] : memref<9x128x64xf32, #tpu.memory_space<vmem>>, vector<1x128x64xf32>
    %209 = vector.shape_cast %208 : vector<1x128x64xf32> to vector<128x64xf32>
    %cst_169 = arith.constant 0.000000e+00 : f32
    %210 = vector.broadcast %cst_169 : f32 to vector<128x64xf32>
    %211 = arith.cmpf ogt, %209, %210 : vector<128x64xf32>
    %cst_170 = arith.constant 0.000000e+00 : f32
    %212 = vector.broadcast %cst_170 : f32 to vector<128x64xf32>
    %213 = arith.select %211, %207, %212 : vector<128x64xi1>, vector<128x64xf32>
    %214 = arith.truncf %213 : vector<128x64xf32> to vector<128x64xbf16>
    %c1_171 = arith.constant 1 : index
    %c384_172 = arith.constant 384 : index
    %c0_173 = arith.constant 0 : index
    %215 = vector.load %arg4[%c1_171, %c384_172, %c0_173] : memref<4x576x64xbf16, #tpu.memory_space<vmem>>, vector<1x64x64xbf16>
    %216 = vector.shape_cast %215 : vector<1x64x64xbf16> to vector<64x64xbf16>
    %cst_174 = arith.constant dense<0.000000e+00> : vector<128x64xf32>
    %217 = tpu.matmul %214, %216, %cst_174 {dimension_numbers = #tpu.dot_dimension_numbers<[1], [0], [0], [1], [0, 0, 1, 1], [], []>} : vector<128x64xbf16>, vector<64x64xbf16>, vector<128x64xf32> -> vector<128x64xf32>
    %218 = arith.addf %206, %217 : vector<128x64xf32>
    %c25_175 = arith.constant 25 : index
    %c0_176 = arith.constant 0 : index
    %219 = vector.load %arg9[%c25_175, %c0_176] : memref<160x64xf32, #tpu.memory_space<vmem>>, vector<128x64xf32>
    %c7_177 = arith.constant 7 : index
    %c0_178 = arith.constant 0 : index
    %c0_179 = arith.constant 0 : index
    %220 = vector.load %arg1[%c7_177, %c0_178, %c0_179] : memref<9x128x64xf32, #tpu.memory_space<vmem>>, vector<1x128x64xf32>
    %221 = vector.shape_cast %220 : vector<1x128x64xf32> to vector<128x64xf32>
    %cst_180 = arith.constant 0.000000e+00 : f32
    %222 = vector.broadcast %cst_180 : f32 to vector<128x64xf32>
    %223 = arith.cmpf ogt, %221, %222 : vector<128x64xf32>
    %cst_181 = arith.constant 0.000000e+00 : f32
    %224 = vector.broadcast %cst_181 : f32 to vector<128x64xf32>
    %225 = arith.select %223, %219, %224 : vector<128x64xi1>, vector<128x64xf32>
    %226 = arith.truncf %225 : vector<128x64xf32> to vector<128x64xbf16>
    %c1_182 = arith.constant 1 : index
    %c448_183 = arith.constant 448 : index
    %c0_184 = arith.constant 0 : index
    %227 = vector.load %arg4[%c1_182, %c448_183, %c0_184] : memref<4x576x64xbf16, #tpu.memory_space<vmem>>, vector<1x64x64xbf16>
    %228 = vector.shape_cast %227 : vector<1x64x64xbf16> to vector<64x64xbf16>
    %cst_185 = arith.constant dense<0.000000e+00> : vector<128x64xf32>
    %229 = tpu.matmul %226, %228, %cst_185 {dimension_numbers = #tpu.dot_dimension_numbers<[1], [0], [0], [1], [0, 0, 1, 1], [], []>} : vector<128x64xbf16>, vector<64x64xbf16>, vector<128x64xf32> -> vector<128x64xf32>
    %230 = arith.addf %218, %229 : vector<128x64xf32>
    %c26_186 = arith.constant 26 : index
    %c0_187 = arith.constant 0 : index
    %231 = vector.load %arg9[%c26_186, %c0_187] : memref<160x64xf32, #tpu.memory_space<vmem>>, vector<128x64xf32>
    %c8_188 = arith.constant 8 : index
    %c0_189 = arith.constant 0 : index
    %c0_190 = arith.constant 0 : index
    %232 = vector.load %arg1[%c8_188, %c0_189, %c0_190] : memref<9x128x64xf32, #tpu.memory_space<vmem>>, vector<1x128x64xf32>
    %233 = vector.shape_cast %232 : vector<1x128x64xf32> to vector<128x64xf32>
    %cst_191 = arith.constant 0.000000e+00 : f32
    %234 = vector.broadcast %cst_191 : f32 to vector<128x64xf32>
    %235 = arith.cmpf ogt, %233, %234 : vector<128x64xf32>
    %cst_192 = arith.constant 0.000000e+00 : f32
    %236 = vector.broadcast %cst_192 : f32 to vector<128x64xf32>
    %237 = arith.select %235, %231, %236 : vector<128x64xi1>, vector<128x64xf32>
    %238 = arith.truncf %237 : vector<128x64xf32> to vector<128x64xbf16>
    %c1_193 = arith.constant 1 : index
    %c512_194 = arith.constant 512 : index
    %c0_195 = arith.constant 0 : index
    %239 = vector.load %arg4[%c1_193, %c512_194, %c0_195] : memref<4x576x64xbf16, #tpu.memory_space<vmem>>, vector<1x64x64xbf16>
    %240 = vector.shape_cast %239 : vector<1x64x64xbf16> to vector<64x64xbf16>
    %cst_196 = arith.constant dense<0.000000e+00> : vector<128x64xf32>
    %241 = tpu.matmul %238, %240, %cst_196 {dimension_numbers = #tpu.dot_dimension_numbers<[1], [0], [0], [1], [0, 0, 1, 1], [], []>} : vector<128x64xbf16>, vector<64x64xbf16>, vector<128x64xf32> -> vector<128x64xf32>
    %242 = arith.addf %230, %241 : vector<128x64xf32>
    %c1_197 = arith.constant 1 : index
    %c0_198 = arith.constant 0 : index
    %c0_199 = arith.constant 0 : index
    %243 = vector.load %arg5[%c1_197, %c0_198, %c0_199] : memref<4x1x64xf32, #tpu.memory_space<vmem>>, vector<1x1x64xf32>
    %244 = vector.shape_cast %243 : vector<1x1x64xf32> to vector<1x64xf32>
    %245 = vector.broadcast %244 : vector<1x64xf32> to vector<128x64xf32>
    %246 = arith.addf %242, %245 : vector<128x64xf32>
    %247 = arith.addf %246, %14 : vector<128x64xf32>
    %cst_200 = arith.constant 0.000000e+00 : f32
    %248 = vector.broadcast %cst_200 : f32 to vector<128x64xf32>
    %249 = arith.maximumf %247, %248 : vector<128x64xf32>
    %cst_201 = arith.constant 0.000000e+00 : f32
    %250 = vector.broadcast %cst_201 : f32 to vector<128x64xf32>
    %251 = arith.select %4, %249, %250 : vector<128x64xi1>, vector<128x64xf32>
    %c16_202 = arith.constant 16 : index
    %c0_203 = arith.constant 0 : index
    %252 = vector.load %arg9[%c16_202, %c0_203] : memref<160x64xf32, #tpu.memory_space<vmem>>, vector<128x64xf32>
    tpu.vector_store %arg9[%c16_202, %c0_203], %251 {strides = array<i32>} : memref<160x64xf32, #tpu.memory_space<vmem>>, vector<128x64xf32>,
    %cst_204 = arith.constant 0.000000e+00 : f32
    %253 = vector.broadcast %cst_204 : f32 to vector<128x64xf32>
    %c6_205 = arith.constant 6 : index
    %c0_206 = arith.constant 0 : index
    %254 = vector.load %arg9[%c6_205, %c0_206] : memref<160x64xf32, #tpu.memory_space<vmem>>, vector<128x64xf32>
    %c0_207 = arith.constant 0 : index
    %c0_208 = arith.constant 0 : index
    %c0_209 = arith.constant 0 : index
    %255 = vector.load %arg1[%c0_207, %c0_208, %c0_209] : memref<9x128x64xf32, #tpu.memory_space<vmem>>, vector<1x128x64xf32>
    %256 = vector.shape_cast %255 : vector<1x128x64xf32> to vector<128x64xf32>
    %cst_210 = arith.constant 0.000000e+00 : f32
    %257 = vector.broadcast %cst_210 : f32 to vector<128x64xf32>
    %258 = arith.cmpf ogt, %256, %257 : vector<128x64xf32>
    %cst_211 = arith.constant 0.000000e+00 : f32
    %259 = vector.broadcast %cst_211 : f32 to vector<128x64xf32>
    %260 = arith.select %258, %254, %259 : vector<128x64xi1>, vector<128x64xf32>
    %261 = arith.truncf %260 : vector<128x64xf32> to vector<128x64xbf16>
    %c2_212 = arith.constant 2 : index
    %c0_213 = arith.constant 0 : index
    %c0_214 = arith.constant 0 : index
    %262 = vector.load %arg4[%c2_212, %c0_213, %c0_214] : memref<4x576x64xbf16, #tpu.memory_space<vmem>>, vector<1x64x64xbf16>
    %263 = vector.shape_cast %262 : vector<1x64x64xbf16> to vector<64x64xbf16>
    %cst_215 = arith.constant dense<0.000000e+00> : vector<128x64xf32>
    %264 = tpu.matmul %261, %263, %cst_215 {dimension_numbers = #tpu.dot_dimension_numbers<[1], [0], [0], [1], [0, 0, 1, 1], [], []>} : vector<128x64xbf16>, vector<64x64xbf16>, vector<128x64xf32> -> vector<128x64xf32>
    %265 = arith.addf %253, %264 : vector<128x64xf32>
    %c7_216 = arith.constant 7 : index
    %c0_217 = arith.constant 0 : index
    %266 = vector.load %arg9[%c7_216, %c0_217] : memref<160x64xf32, #tpu.memory_space<vmem>>, vector<128x64xf32>
    %c1_218 = arith.constant 1 : index
    %c0_219 = arith.constant 0 : index
    %c0_220 = arith.constant 0 : index
    %267 = vector.load %arg1[%c1_218, %c0_219, %c0_220] : memref<9x128x64xf32, #tpu.memory_space<vmem>>, vector<1x128x64xf32>
    %268 = vector.shape_cast %267 : vector<1x128x64xf32> to vector<128x64xf32>
    %cst_221 = arith.constant 0.000000e+00 : f32
    %269 = vector.broadcast %cst_221 : f32 to vector<128x64xf32>
    %270 = arith.cmpf ogt, %268, %269 : vector<128x64xf32>
    %cst_222 = arith.constant 0.000000e+00 : f32
    %271 = vector.broadcast %cst_222 : f32 to vector<128x64xf32>
    %272 = arith.select %270, %266, %271 : vector<128x64xi1>, vector<128x64xf32>
    %273 = arith.truncf %272 : vector<128x64xf32> to vector<128x64xbf16>
    %c2_223 = arith.constant 2 : index
    %c64_224 = arith.constant 64 : index
    %c0_225 = arith.constant 0 : index
    %274 = vector.load %arg4[%c2_223, %c64_224, %c0_225] : memref<4x576x64xbf16, #tpu.memory_space<vmem>>, vector<1x64x64xbf16>
    %275 = vector.shape_cast %274 : vector<1x64x64xbf16> to vector<64x64xbf16>
    %cst_226 = arith.constant dense<0.000000e+00> : vector<128x64xf32>
    %276 = tpu.matmul %273, %275, %cst_226 {dimension_numbers = #tpu.dot_dimension_numbers<[1], [0], [0], [1], [0, 0, 1, 1], [], []>} : vector<128x64xbf16>, vector<64x64xbf16>, vector<128x64xf32> -> vector<128x64xf32>
    %277 = arith.addf %265, %276 : vector<128x64xf32>
    %c8_227 = arith.constant 8 : index
    %c0_228 = arith.constant 0 : index
    %278 = vector.load %arg9[%c8_227, %c0_228] : memref<160x64xf32, #tpu.memory_space<vmem>>, vector<128x64xf32>
    %c2_229 = arith.constant 2 : index
    %c0_230 = arith.constant 0 : index
    %c0_231 = arith.constant 0 : index
    %279 = vector.load %arg1[%c2_229, %c0_230, %c0_231] : memref<9x128x64xf32, #tpu.memory_space<vmem>>, vector<1x128x64xf32>
    %280 = vector.shape_cast %279 : vector<1x128x64xf32> to vector<128x64xf32>
    %cst_232 = arith.constant 0.000000e+00 : f32
    %281 = vector.broadcast %cst_232 : f32 to vector<128x64xf32>
    %282 = arith.cmpf ogt, %280, %281 : vector<128x64xf32>
    %cst_233 = arith.constant 0.000000e+00 : f32
    %283 = vector.broadcast %cst_233 : f32 to vector<128x64xf32>
    %284 = arith.select %282, %278, %283 : vector<128x64xi1>, vector<128x64xf32>
    %285 = arith.truncf %284 : vector<128x64xf32> to vector<128x64xbf16>
    %c2_234 = arith.constant 2 : index
    %c128_235 = arith.constant 128 : index
    %c0_236 = arith.constant 0 : index
    %286 = vector.load %arg4[%c2_234, %c128_235, %c0_236] : memref<4x576x64xbf16, #tpu.memory_space<vmem>>, vector<1x64x64xbf16>
    %287 = vector.shape_cast %286 : vector<1x64x64xbf16> to vector<64x64xbf16>
    %cst_237 = arith.constant dense<0.000000e+00> : vector<128x64xf32>
    %288 = tpu.matmul %285, %287, %cst_237 {dimension_numbers = #tpu.dot_dimension_numbers<[1], [0], [0], [1], [0, 0, 1, 1], [], []>} : vector<128x64xbf16>, vector<64x64xbf16>, vector<128x64xf32> -> vector<128x64xf32>
    %289 = arith.addf %277, %288 : vector<128x64xf32>
    %c15_238 = arith.constant 15 : index
    %c0_239 = arith.constant 0 : index
    %290 = vector.load %arg9[%c15_238, %c0_239] : memref<160x64xf32, #tpu.memory_space<vmem>>, vector<128x64xf32>
    %c3_240 = arith.constant 3 : index
    %c0_241 = arith.constant 0 : index
    %c0_242 = arith.constant 0 : index
    %291 = vector.load %arg1[%c3_240, %c0_241, %c0_242] : memref<9x128x64xf32, #tpu.memory_space<vmem>>, vector<1x128x64xf32>
    %292 = vector.shape_cast %291 : vector<1x128x64xf32> to vector<128x64xf32>
    %cst_243 = arith.constant 0.000000e+00 : f32
    %293 = vector.broadcast %cst_243 : f32 to vector<128x64xf32>
    %294 = arith.cmpf ogt, %292, %293 : vector<128x64xf32>
    %cst_244 = arith.constant 0.000000e+00 : f32
    %295 = vector.broadcast %cst_244 : f32 to vector<128x64xf32>
    %296 = arith.select %294, %290, %295 : vector<128x64xi1>, vector<128x64xf32>
    %297 = arith.truncf %296 : vector<128x64xf32> to vector<128x64xbf16>
    %c2_245 = arith.constant 2 : index
    %c192_246 = arith.constant 192 : index
    %c0_247 = arith.constant 0 : index
    %298 = vector.load %arg4[%c2_245, %c192_246, %c0_247] : memref<4x576x64xbf16, #tpu.memory_space<vmem>>, vector<1x64x64xbf16>
    %299 = vector.shape_cast %298 : vector<1x64x64xbf16> to vector<64x64xbf16>
    %cst_248 = arith.constant dense<0.000000e+00> : vector<128x64xf32>
    %300 = tpu.matmul %297, %299, %cst_248 {dimension_numbers = #tpu.dot_dimension_numbers<[1], [0], [0], [1], [0, 0, 1, 1], [], []>} : vector<128x64xbf16>, vector<64x64xbf16>, vector<128x64xf32> -> vector<128x64xf32>
    %301 = arith.addf %289, %300 : vector<128x64xf32>
    %c16_249 = arith.constant 16 : index
    %c0_250 = arith.constant 0 : index
    %302 = vector.load %arg9[%c16_249, %c0_250] : memref<160x64xf32, #tpu.memory_space<vmem>>, vector<128x64xf32>
    %c4_251 = arith.constant 4 : index
    %c0_252 = arith.constant 0 : index
    %c0_253 = arith.constant 0 : index
    %303 = vector.load %arg1[%c4_251, %c0_252, %c0_253] : memref<9x128x64xf32, #tpu.memory_space<vmem>>, vector<1x128x64xf32>
    %304 = vector.shape_cast %303 : vector<1x128x64xf32> to vector<128x64xf32>
    %cst_254 = arith.constant 0.000000e+00 : f32
    %305 = vector.broadcast %cst_254 : f32 to vector<128x64xf32>
    %306 = arith.cmpf ogt, %304, %305 : vector<128x64xf32>
    %cst_255 = arith.constant 0.000000e+00 : f32
    %307 = vector.broadcast %cst_255 : f32 to vector<128x64xf32>
    %308 = arith.select %306, %302, %307 : vector<128x64xi1>, vector<128x64xf32>
    %309 = arith.truncf %308 : vector<128x64xf32> to vector<128x64xbf16>
    %c2_256 = arith.constant 2 : index
    %c256_257 = arith.constant 256 : index
    %c0_258 = arith.constant 0 : index
    %310 = vector.load %arg4[%c2_256, %c256_257, %c0_258] : memref<4x576x64xbf16, #tpu.memory_space<vmem>>, vector<1x64x64xbf16>
    %311 = vector.shape_cast %310 : vector<1x64x64xbf16> to vector<64x64xbf16>
    %cst_259 = arith.constant dense<0.000000e+00> : vector<128x64xf32>
    %312 = tpu.matmul %309, %311, %cst_259 {dimension_numbers = #tpu.dot_dimension_numbers<[1], [0], [0], [1], [0, 0, 1, 1], [], []>} : vector<128x64xbf16>, vector<64x64xbf16>, vector<128x64xf32> -> vector<128x64xf32>
    %313 = arith.addf %301, %312 : vector<128x64xf32>
    %c17_260 = arith.constant 17 : index
    %c0_261 = arith.constant 0 : index
    %314 = vector.load %arg9[%c17_260, %c0_261] : memref<160x64xf32, #tpu.memory_space<vmem>>, vector<128x64xf32>
    %c5_262 = arith.constant 5 : index
    %c0_263 = arith.constant 0 : index
    %c0_264 = arith.constant 0 : index
    %315 = vector.load %arg1[%c5_262, %c0_263, %c0_264] : memref<9x128x64xf32, #tpu.memory_space<vmem>>, vector<1x128x64xf32>
    %316 = vector.shape_cast %315 : vector<1x128x64xf32> to vector<128x64xf32>
    %cst_265 = arith.constant 0.000000e+00 : f32
    %317 = vector.broadcast %cst_265 : f32 to vector<128x64xf32>
    %318 = arith.cmpf ogt, %316, %317 : vector<128x64xf32>
    %cst_266 = arith.constant 0.000000e+00 : f32
    %319 = vector.broadcast %cst_266 : f32 to vector<128x64xf32>
    %320 = arith.select %318, %314, %319 : vector<128x64xi1>, vector<128x64xf32>
    %321 = arith.truncf %320 : vector<128x64xf32> to vector<128x64xbf16>
    %c2_267 = arith.constant 2 : index
    %c320_268 = arith.constant 320 : index
    %c0_269 = arith.constant 0 : index
    %322 = vector.load %arg4[%c2_267, %c320_268, %c0_269] : memref<4x576x64xbf16, #tpu.memory_space<vmem>>, vector<1x64x64xbf16>
    %323 = vector.shape_cast %322 : vector<1x64x64xbf16> to vector<64x64xbf16>
    %cst_270 = arith.constant dense<0.000000e+00> : vector<128x64xf32>
    %324 = tpu.matmul %321, %323, %cst_270 {dimension_numbers = #tpu.dot_dimension_numbers<[1], [0], [0], [1], [0, 0, 1, 1], [], []>} : vector<128x64xbf16>, vector<64x64xbf16>, vector<128x64xf32> -> vector<128x64xf32>
    %325 = arith.addf %313, %324 : vector<128x64xf32>
    %c24_271 = arith.constant 24 : index
    %c0_272 = arith.constant 0 : index
    %326 = vector.load %arg9[%c24_271, %c0_272] : memref<160x64xf32, #tpu.memory_space<vmem>>, vector<128x64xf32>
    %c6_273 = arith.constant 6 : index
    %c0_274 = arith.constant 0 : index
    %c0_275 = arith.constant 0 : index
    %327 = vector.load %arg1[%c6_273, %c0_274, %c0_275] : memref<9x128x64xf32, #tpu.memory_space<vmem>>, vector<1x128x64xf32>
    %328 = vector.shape_cast %327 : vector<1x128x64xf32> to vector<128x64xf32>
    %cst_276 = arith.constant 0.000000e+00 : f32
    %329 = vector.broadcast %cst_276 : f32 to vector<128x64xf32>
    %330 = arith.cmpf ogt, %328, %329 : vector<128x64xf32>
    %cst_277 = arith.constant 0.000000e+00 : f32
    %331 = vector.broadcast %cst_277 : f32 to vector<128x64xf32>
    %332 = arith.select %330, %326, %331 : vector<128x64xi1>, vector<128x64xf32>
    %333 = arith.truncf %332 : vector<128x64xf32> to vector<128x64xbf16>
    %c2_278 = arith.constant 2 : index
    %c384_279 = arith.constant 384 : index
    %c0_280 = arith.constant 0 : index
    %334 = vector.load %arg4[%c2_278, %c384_279, %c0_280] : memref<4x576x64xbf16, #tpu.memory_space<vmem>>, vector<1x64x64xbf16>
    %335 = vector.shape_cast %334 : vector<1x64x64xbf16> to vector<64x64xbf16>
    %cst_281 = arith.constant dense<0.000000e+00> : vector<128x64xf32>
    %336 = tpu.matmul %333, %335, %cst_281 {dimension_numbers = #tpu.dot_dimension_numbers<[1], [0], [0], [1], [0, 0, 1, 1], [], []>} : vector<128x64xbf16>, vector<64x64xbf16>, vector<128x64xf32> -> vector<128x64xf32>
    %337 = arith.addf %325, %336 : vector<128x64xf32>
    %c25_282 = arith.constant 25 : index
    %c0_283 = arith.constant 0 : index
    %338 = vector.load %arg9[%c25_282, %c0_283] : memref<160x64xf32, #tpu.memory_space<vmem>>, vector<128x64xf32>
    %c7_284 = arith.constant 7 : index
    %c0_285 = arith.constant 0 : index
    %c0_286 = arith.constant 0 : index
    %339 = vector.load %arg1[%c7_284, %c0_285, %c0_286] : memref<9x128x64xf32, #tpu.memory_space<vmem>>, vector<1x128x64xf32>
    %340 = vector.shape_cast %339 : vector<1x128x64xf32> to vector<128x64xf32>
    %cst_287 = arith.constant 0.000000e+00 : f32
    %341 = vector.broadcast %cst_287 : f32 to vector<128x64xf32>
    %342 = arith.cmpf ogt, %340, %341 : vector<128x64xf32>
    %cst_288 = arith.constant 0.000000e+00 : f32
    %343 = vector.broadcast %cst_288 : f32 to vector<128x64xf32>
    %344 = arith.select %342, %338, %343 : vector<128x64xi1>, vector<128x64xf32>
    %345 = arith.truncf %344 : vector<128x64xf32> to vector<128x64xbf16>
    %c2_289 = arith.constant 2 : index
    %c448_290 = arith.constant 448 : index
    %c0_291 = arith.constant 0 : index
    %346 = vector.load %arg4[%c2_289, %c448_290, %c0_291] : memref<4x576x64xbf16, #tpu.memory_space<vmem>>, vector<1x64x64xbf16>
    %347 = vector.shape_cast %346 : vector<1x64x64xbf16> to vector<64x64xbf16>
    %cst_292 = arith.constant dense<0.000000e+00> : vector<128x64xf32>
    %348 = tpu.matmul %345, %347, %cst_292 {dimension_numbers = #tpu.dot_dimension_numbers<[1], [0], [0], [1], [0, 0, 1, 1], [], []>} : vector<128x64xbf16>, vector<64x64xbf16>, vector<128x64xf32> -> vector<128x64xf32>
    %349 = arith.addf %337, %348 : vector<128x64xf32>
    %c26_293 = arith.constant 26 : index
    %c0_294 = arith.constant 0 : index
    %350 = vector.load %arg9[%c26_293, %c0_294] : memref<160x64xf32, #tpu.memory_space<vmem>>, vector<128x64xf32>
    %c8_295 = arith.constant 8 : index
    %c0_296 = arith.constant 0 : index
    %c0_297 = arith.constant 0 : index
    %351 = vector.load %arg1[%c8_295, %c0_296, %c0_297] : memref<9x128x64xf32, #tpu.memory_space<vmem>>, vector<1x128x64xf32>
    %352 = vector.shape_cast %351 : vector<1x128x64xf32> to vector<128x64xf32>
    %cst_298 = arith.constant 0.000000e+00 : f32
    %353 = vector.broadcast %cst_298 : f32 to vector<128x64xf32>
    %354 = arith.cmpf ogt, %352, %353 : vector<128x64xf32>
    %cst_299 = arith.constant 0.000000e+00 : f32
    %355 = vector.broadcast %cst_299 : f32 to vector<128x64xf32>
    %356 = arith.select %354, %350, %355 : vector<128x64xi1>, vector<128x64xf32>
    %357 = arith.truncf %356 : vector<128x64xf32> to vector<128x64xbf16>
    %c2_300 = arith.constant 2 : index
    %c512_301 = arith.constant 512 : index
    %c0_302 = arith.constant 0 : index
    %358 = vector.load %arg4[%c2_300, %c512_301, %c0_302] : memref<4x576x64xbf16, #tpu.memory_space<vmem>>, vector<1x64x64xbf16>
    %359 = vector.shape_cast %358 : vector<1x64x64xbf16> to vector<64x64xbf16>
    %cst_303 = arith.constant dense<0.000000e+00> : vector<128x64xf32>
    %360 = tpu.matmul %357, %359, %cst_303 {dimension_numbers = #tpu.dot_dimension_numbers<[1], [0], [0], [1], [0, 0, 1, 1], [], []>} : vector<128x64xbf16>, vector<64x64xbf16>, vector<128x64xf32> -> vector<128x64xf32>
    %361 = arith.addf %349, %360 : vector<128x64xf32>
    %c2_304 = arith.constant 2 : index
    %c0_305 = arith.constant 0 : index
    %c0_306 = arith.constant 0 : index
    %362 = vector.load %arg5[%c2_304, %c0_305, %c0_306] : memref<4x1x64xf32, #tpu.memory_space<vmem>>, vector<1x1x64xf32>
    %363 = vector.shape_cast %362 : vector<1x1x64xf32> to vector<1x64xf32>
    %364 = vector.broadcast %363 : vector<1x64xf32> to vector<128x64xf32>
    %365 = arith.addf %361, %364 : vector<128x64xf32>
    %cst_307 = arith.constant 0.000000e+00 : f32
    %366 = vector.broadcast %cst_307 : f32 to vector<128x64xf32>
    %367 = arith.maximumf %365, %366 : vector<128x64xf32>
    %cst_308 = arith.constant 0.000000e+00 : f32
    %368 = vector.broadcast %cst_308 : f32 to vector<128x64xf32>
    %369 = arith.select %4, %367, %368 : vector<128x64xi1>, vector<128x64xf32>
    %c16_309 = arith.constant 16 : index
    %c0_310 = arith.constant 0 : index
    %370 = vector.load %arg9[%c16_309, %c0_310] : memref<160x64xf32, #tpu.memory_space<vmem>>, vector<128x64xf32>
    tpu.vector_store %arg9[%c16_309, %c0_310], %369 {strides = array<i32>} : memref<160x64xf32, #tpu.memory_space<vmem>>, vector<128x64xf32>,
    %cst_311 = arith.constant 0.000000e+00 : f32
    %371 = vector.broadcast %cst_311 : f32 to vector<128x64xf32>
    %c6_312 = arith.constant 6 : index
    %c0_313 = arith.constant 0 : index
    %372 = vector.load %arg9[%c6_312, %c0_313] : memref<160x64xf32, #tpu.memory_space<vmem>>, vector<128x64xf32>
    %c0_314 = arith.constant 0 : index
    %c0_315 = arith.constant 0 : index
    %c0_316 = arith.constant 0 : index
    %373 = vector.load %arg1[%c0_314, %c0_315, %c0_316] : memref<9x128x64xf32, #tpu.memory_space<vmem>>, vector<1x128x64xf32>
    %374 = vector.shape_cast %373 : vector<1x128x64xf32> to vector<128x64xf32>
    %cst_317 = arith.constant 0.000000e+00 : f32
    %375 = vector.broadcast %cst_317 : f32 to vector<128x64xf32>
    %376 = arith.cmpf ogt, %374, %375 : vector<128x64xf32>
    %cst_318 = arith.constant 0.000000e+00 : f32
    %377 = vector.broadcast %cst_318 : f32 to vector<128x64xf32>
    %378 = arith.select %376, %372, %377 : vector<128x64xi1>, vector<128x64xf32>
    %379 = arith.truncf %378 : vector<128x64xf32> to vector<128x64xbf16>
    %c3_319 = arith.constant 3 : index
    %c0_320 = arith.constant 0 : index
    %c0_321 = arith.constant 0 : index
    %380 = vector.load %arg4[%c3_319, %c0_320, %c0_321] : memref<4x576x64xbf16, #tpu.memory_space<vmem>>, vector<1x64x64xbf16>
    %381 = vector.shape_cast %380 : vector<1x64x64xbf16> to vector<64x64xbf16>
    %cst_322 = arith.constant dense<0.000000e+00> : vector<128x64xf32>
    %382 = tpu.matmul %379, %381, %cst_322 {dimension_numbers = #tpu.dot_dimension_numbers<[1], [0], [0], [1], [0, 0, 1, 1], [], []>} : vector<128x64xbf16>, vector<64x64xbf16>, vector<128x64xf32> -> vector<128x64xf32>
    %383 = arith.addf %371, %382 : vector<128x64xf32>
    %c7_323 = arith.constant 7 : index
    %c0_324 = arith.constant 0 : index
    %384 = vector.load %arg9[%c7_323, %c0_324] : memref<160x64xf32, #tpu.memory_space<vmem>>, vector<128x64xf32>
    %c1_325 = arith.constant 1 : index
    %c0_326 = arith.constant 0 : index
    %c0_327 = arith.constant 0 : index
    %385 = vector.load %arg1[%c1_325, %c0_326, %c0_327] : memref<9x128x64xf32, #tpu.memory_space<vmem>>, vector<1x128x64xf32>
    %386 = vector.shape_cast %385 : vector<1x128x64xf32> to vector<128x64xf32>
    %cst_328 = arith.constant 0.000000e+00 : f32
    %387 = vector.broadcast %cst_328 : f32 to vector<128x64xf32>
    %388 = arith.cmpf ogt, %386, %387 : vector<128x64xf32>
    %cst_329 = arith.constant 0.000000e+00 : f32
    %389 = vector.broadcast %cst_329 : f32 to vector<128x64xf32>
    %390 = arith.select %388, %384, %389 : vector<128x64xi1>, vector<128x64xf32>
    %391 = arith.truncf %390 : vector<128x64xf32> to vector<128x64xbf16>
    %c3_330 = arith.constant 3 : index
    %c64_331 = arith.constant 64 : index
    %c0_332 = arith.constant 0 : index
    %392 = vector.load %arg4[%c3_330, %c64_331, %c0_332] : memref<4x576x64xbf16, #tpu.memory_space<vmem>>, vector<1x64x64xbf16>
    %393 = vector.shape_cast %392 : vector<1x64x64xbf16> to vector<64x64xbf16>
    %cst_333 = arith.constant dense<0.000000e+00> : vector<128x64xf32>
    %394 = tpu.matmul %391, %393, %cst_333 {dimension_numbers = #tpu.dot_dimension_numbers<[1], [0], [0], [1], [0, 0, 1, 1], [], []>} : vector<128x64xbf16>, vector<64x64xbf16>, vector<128x64xf32> -> vector<128x64xf32>
    %395 = arith.addf %383, %394 : vector<128x64xf32>
    %c8_334 = arith.constant 8 : index
    %c0_335 = arith.constant 0 : index
    %396 = vector.load %arg9[%c8_334, %c0_335] : memref<160x64xf32, #tpu.memory_space<vmem>>, vector<128x64xf32>
    %c2_336 = arith.constant 2 : index
    %c0_337 = arith.constant 0 : index
    %c0_338 = arith.constant 0 : index
    %397 = vector.load %arg1[%c2_336, %c0_337, %c0_338] : memref<9x128x64xf32, #tpu.memory_space<vmem>>, vector<1x128x64xf32>
    %398 = vector.shape_cast %397 : vector<1x128x64xf32> to vector<128x64xf32>
    %cst_339 = arith.constant 0.000000e+00 : f32
    %399 = vector.broadcast %cst_339 : f32 to vector<128x64xf32>
    %400 = arith.cmpf ogt, %398, %399 : vector<128x64xf32>
    %cst_340 = arith.constant 0.000000e+00 : f32
    %401 = vector.broadcast %cst_340 : f32 to vector<128x64xf32>
    %402 = arith.select %400, %396, %401 : vector<128x64xi1>, vector<128x64xf32>
    %403 = arith.truncf %402 : vector<128x64xf32> to vector<128x64xbf16>
    %c3_341 = arith.constant 3 : index
    %c128_342 = arith.constant 128 : index
    %c0_343 = arith.constant 0 : index
    %404 = vector.load %arg4[%c3_341, %c128_342, %c0_343] : memref<4x576x64xbf16, #tpu.memory_space<vmem>>, vector<1x64x64xbf16>
    %405 = vector.shape_cast %404 : vector<1x64x64xbf16> to vector<64x64xbf16>
    %cst_344 = arith.constant dense<0.000000e+00> : vector<128x64xf32>
    %406 = tpu.matmul %403, %405, %cst_344 {dimension_numbers = #tpu.dot_dimension_numbers<[1], [0], [0], [1], [0, 0, 1, 1], [], []>} : vector<128x64xbf16>, vector<64x64xbf16>, vector<128x64xf32> -> vector<128x64xf32>
    %407 = arith.addf %395, %406 : vector<128x64xf32>
    %c15_345 = arith.constant 15 : index
    %c0_346 = arith.constant 0 : index
    %408 = vector.load %arg9[%c15_345, %c0_346] : memref<160x64xf32, #tpu.memory_space<vmem>>, vector<128x64xf32>
    %c3_347 = arith.constant 3 : index
    %c0_348 = arith.constant 0 : index
    %c0_349 = arith.constant 0 : index
    %409 = vector.load %arg1[%c3_347, %c0_348, %c0_349] : memref<9x128x64xf32, #tpu.memory_space<vmem>>, vector<1x128x64xf32>
    %410 = vector.shape_cast %409 : vector<1x128x64xf32> to vector<128x64xf32>
    %cst_350 = arith.constant 0.000000e+00 : f32
    %411 = vector.broadcast %cst_350 : f32 to vector<128x64xf32>
    %412 = arith.cmpf ogt, %410, %411 : vector<128x64xf32>
    %cst_351 = arith.constant 0.000000e+00 : f32
    %413 = vector.broadcast %cst_351 : f32 to vector<128x64xf32>
    %414 = arith.select %412, %408, %413 : vector<128x64xi1>, vector<128x64xf32>
    %415 = arith.truncf %414 : vector<128x64xf32> to vector<128x64xbf16>
    %c3_352 = arith.constant 3 : index
    %c192_353 = arith.constant 192 : index
    %c0_354 = arith.constant 0 : index
    %416 = vector.load %arg4[%c3_352, %c192_353, %c0_354] : memref<4x576x64xbf16, #tpu.memory_space<vmem>>, vector<1x64x64xbf16>
    %417 = vector.shape_cast %416 : vector<1x64x64xbf16> to vector<64x64xbf16>
    %cst_355 = arith.constant dense<0.000000e+00> : vector<128x64xf32>
    %418 = tpu.matmul %415, %417, %cst_355 {dimension_numbers = #tpu.dot_dimension_numbers<[1], [0], [0], [1], [0, 0, 1, 1], [], []>} : vector<128x64xbf16>, vector<64x64xbf16>, vector<128x64xf32> -> vector<128x64xf32>
    %419 = arith.addf %407, %418 : vector<128x64xf32>
    %c16_356 = arith.constant 16 : index
    %c0_357 = arith.constant 0 : index
    %420 = vector.load %arg9[%c16_356, %c0_357] : memref<160x64xf32, #tpu.memory_space<vmem>>, vector<128x64xf32>
    %c4_358 = arith.constant 4 : index
    %c0_359 = arith.constant 0 : index
    %c0_360 = arith.constant 0 : index
    %421 = vector.load %arg1[%c4_358, %c0_359, %c0_360] : memref<9x128x64xf32, #tpu.memory_space<vmem>>, vector<1x128x64xf32>
    %422 = vector.shape_cast %421 : vector<1x128x64xf32> to vector<128x64xf32>
    %cst_361 = arith.constant 0.000000e+00 : f32
    %423 = vector.broadcast %cst_361 : f32 to vector<128x64xf32>
    %424 = arith.cmpf ogt, %422, %423 : vector<128x64xf32>
    %cst_362 = arith.constant 0.000000e+00 : f32
    %425 = vector.broadcast %cst_362 : f32 to vector<128x64xf32>
    %426 = arith.select %424, %420, %425 : vector<128x64xi1>, vector<128x64xf32>
    %427 = arith.truncf %426 : vector<128x64xf32> to vector<128x64xbf16>
    %c3_363 = arith.constant 3 : index
    %c256_364 = arith.constant 256 : index
    %c0_365 = arith.constant 0 : index
    %428 = vector.load %arg4[%c3_363, %c256_364, %c0_365] : memref<4x576x64xbf16, #tpu.memory_space<vmem>>, vector<1x64x64xbf16>
    %429 = vector.shape_cast %428 : vector<1x64x64xbf16> to vector<64x64xbf16>
    %cst_366 = arith.constant dense<0.000000e+00> : vector<128x64xf32>
    %430 = tpu.matmul %427, %429, %cst_366 {dimension_numbers = #tpu.dot_dimension_numbers<[1], [0], [0], [1], [0, 0, 1, 1], [], []>} : vector<128x64xbf16>, vector<64x64xbf16>, vector<128x64xf32> -> vector<128x64xf32>
    %431 = arith.addf %419, %430 : vector<128x64xf32>
    %c17_367 = arith.constant 17 : index
    %c0_368 = arith.constant 0 : index
    %432 = vector.load %arg9[%c17_367, %c0_368] : memref<160x64xf32, #tpu.memory_space<vmem>>, vector<128x64xf32>
    %c5_369 = arith.constant 5 : index
    %c0_370 = arith.constant 0 : index
    %c0_371 = arith.constant 0 : index
    %433 = vector.load %arg1[%c5_369, %c0_370, %c0_371] : memref<9x128x64xf32, #tpu.memory_space<vmem>>, vector<1x128x64xf32>
    %434 = vector.shape_cast %433 : vector<1x128x64xf32> to vector<128x64xf32>
    %cst_372 = arith.constant 0.000000e+00 : f32
    %435 = vector.broadcast %cst_372 : f32 to vector<128x64xf32>
    %436 = arith.cmpf ogt, %434, %435 : vector<128x64xf32>
    %cst_373 = arith.constant 0.000000e+00 : f32
    %437 = vector.broadcast %cst_373 : f32 to vector<128x64xf32>
    %438 = arith.select %436, %432, %437 : vector<128x64xi1>, vector<128x64xf32>
    %439 = arith.truncf %438 : vector<128x64xf32> to vector<128x64xbf16>
    %c3_374 = arith.constant 3 : index
    %c320_375 = arith.constant 320 : index
    %c0_376 = arith.constant 0 : index
    %440 = vector.load %arg4[%c3_374, %c320_375, %c0_376] : memref<4x576x64xbf16, #tpu.memory_space<vmem>>, vector<1x64x64xbf16>
    %441 = vector.shape_cast %440 : vector<1x64x64xbf16> to vector<64x64xbf16>
    %cst_377 = arith.constant dense<0.000000e+00> : vector<128x64xf32>
    %442 = tpu.matmul %439, %441, %cst_377 {dimension_numbers = #tpu.dot_dimension_numbers<[1], [0], [0], [1], [0, 0, 1, 1], [], []>} : vector<128x64xbf16>, vector<64x64xbf16>, vector<128x64xf32> -> vector<128x64xf32>
    %443 = arith.addf %431, %442 : vector<128x64xf32>
    %c24_378 = arith.constant 24 : index
    %c0_379 = arith.constant 0 : index
    %444 = vector.load %arg9[%c24_378, %c0_379] : memref<160x64xf32, #tpu.memory_space<vmem>>, vector<128x64xf32>
    %c6_380 = arith.constant 6 : index
    %c0_381 = arith.constant 0 : index
    %c0_382 = arith.constant 0 : index
    %445 = vector.load %arg1[%c6_380, %c0_381, %c0_382] : memref<9x128x64xf32, #tpu.memory_space<vmem>>, vector<1x128x64xf32>
    %446 = vector.shape_cast %445 : vector<1x128x64xf32> to vector<128x64xf32>
    %cst_383 = arith.constant 0.000000e+00 : f32
    %447 = vector.broadcast %cst_383 : f32 to vector<128x64xf32>
    %448 = arith.cmpf ogt, %446, %447 : vector<128x64xf32>
    %cst_384 = arith.constant 0.000000e+00 : f32
    %449 = vector.broadcast %cst_384 : f32 to vector<128x64xf32>
    %450 = arith.select %448, %444, %449 : vector<128x64xi1>, vector<128x64xf32>
    %451 = arith.truncf %450 : vector<128x64xf32> to vector<128x64xbf16>
    %c3_385 = arith.constant 3 : index
    %c384_386 = arith.constant 384 : index
    %c0_387 = arith.constant 0 : index
    %452 = vector.load %arg4[%c3_385, %c384_386, %c0_387] : memref<4x576x64xbf16, #tpu.memory_space<vmem>>, vector<1x64x64xbf16>
    %453 = vector.shape_cast %452 : vector<1x64x64xbf16> to vector<64x64xbf16>
    %cst_388 = arith.constant dense<0.000000e+00> : vector<128x64xf32>
    %454 = tpu.matmul %451, %453, %cst_388 {dimension_numbers = #tpu.dot_dimension_numbers<[1], [0], [0], [1], [0, 0, 1, 1], [], []>} : vector<128x64xbf16>, vector<64x64xbf16>, vector<128x64xf32> -> vector<128x64xf32>
    %455 = arith.addf %443, %454 : vector<128x64xf32>
    %c25_389 = arith.constant 25 : index
    %c0_390 = arith.constant 0 : index
    %456 = vector.load %arg9[%c25_389, %c0_390] : memref<160x64xf32, #tpu.memory_space<vmem>>, vector<128x64xf32>
    %c7_391 = arith.constant 7 : index
    %c0_392 = arith.constant 0 : index
    %c0_393 = arith.constant 0 : index
    %457 = vector.load %arg1[%c7_391, %c0_392, %c0_393] : memref<9x128x64xf32, #tpu.memory_space<vmem>>, vector<1x128x64xf32>
    %458 = vector.shape_cast %457 : vector<1x128x64xf32> to vector<128x64xf32>
    %cst_394 = arith.constant 0.000000e+00 : f32
    %459 = vector.broadcast %cst_394 : f32 to vector<128x64xf32>
    %460 = arith.cmpf ogt, %458, %459 : vector<128x64xf32>
    %cst_395 = arith.constant 0.000000e+00 : f32
    %461 = vector.broadcast %cst_395 : f32 to vector<128x64xf32>
    %462 = arith.select %460, %456, %461 : vector<128x64xi1>, vector<128x64xf32>
    %463 = arith.truncf %462 : vector<128x64xf32> to vector<128x64xbf16>
    %c3_396 = arith.constant 3 : index
    %c448_397 = arith.constant 448 : index
    %c0_398 = arith.constant 0 : index
    %464 = vector.load %arg4[%c3_396, %c448_397, %c0_398] : memref<4x576x64xbf16, #tpu.memory_space<vmem>>, vector<1x64x64xbf16>
    %465 = vector.shape_cast %464 : vector<1x64x64xbf16> to vector<64x64xbf16>
    %cst_399 = arith.constant dense<0.000000e+00> : vector<128x64xf32>
    %466 = tpu.matmul %463, %465, %cst_399 {dimension_numbers = #tpu.dot_dimension_numbers<[1], [0], [0], [1], [0, 0, 1, 1], [], []>} : vector<128x64xbf16>, vector<64x64xbf16>, vector<128x64xf32> -> vector<128x64xf32>
    %467 = arith.addf %455, %466 : vector<128x64xf32>
    %c26_400 = arith.constant 26 : index
    %c0_401 = arith.constant 0 : index
    %468 = vector.load %arg9[%c26_400, %c0_401] : memref<160x64xf32, #tpu.memory_space<vmem>>, vector<128x64xf32>
    %c8_402 = arith.constant 8 : index
    %c0_403 = arith.constant 0 : index
    %c0_404 = arith.constant 0 : index
    %469 = vector.load %arg1[%c8_402, %c0_403, %c0_404] : memref<9x128x64xf32, #tpu.memory_space<vmem>>, vector<1x128x64xf32>
    %470 = vector.shape_cast %469 : vector<1x128x64xf32> to vector<128x64xf32>
    %cst_405 = arith.constant 0.000000e+00 : f32
    %471 = vector.broadcast %cst_405 : f32 to vector<128x64xf32>
    %472 = arith.cmpf ogt, %470, %471 : vector<128x64xf32>
    %cst_406 = arith.constant 0.000000e+00 : f32
    %473 = vector.broadcast %cst_406 : f32 to vector<128x64xf32>
    %474 = arith.select %472, %468, %473 : vector<128x64xi1>, vector<128x64xf32>
    %475 = arith.truncf %474 : vector<128x64xf32> to vector<128x64xbf16>
    %c3_407 = arith.constant 3 : index
    %c512_408 = arith.constant 512 : index
    %c0_409 = arith.constant 0 : index
    %476 = vector.load %arg4[%c3_407, %c512_408, %c0_409] : memref<4x576x64xbf16, #tpu.memory_space<vmem>>, vector<1x64x64xbf16>
    %477 = vector.shape_cast %476 : vector<1x64x64xbf16> to vector<64x64xbf16>
    %cst_410 = arith.constant dense<0.000000e+00> : vector<128x64xf32>
    %478 = tpu.matmul %475, %477, %cst_410 {dimension_numbers = #tpu.dot_dimension_numbers<[1], [0], [0], [1], [0, 0, 1, 1], [], []>} : vector<128x64xbf16>, vector<64x64xbf16>, vector<128x64xf32> -> vector<128x64xf32>
    %479 = arith.addf %467, %478 : vector<128x64xf32>
    %c3_411 = arith.constant 3 : index
    %c0_412 = arith.constant 0 : index
    %c0_413 = arith.constant 0 : index
    %480 = vector.load %arg5[%c3_411, %c0_412, %c0_413] : memref<4x1x64xf32, #tpu.memory_space<vmem>>, vector<1x1x64xf32>
    %481 = vector.shape_cast %480 : vector<1x1x64xf32> to vector<1x64xf32>
    %482 = vector.broadcast %481 : vector<1x64xf32> to vector<128x64xf32>
    %483 = arith.addf %479, %482 : vector<128x64xf32>
    %484 = arith.addf %483, %251 : vector<128x64xf32>
    %cst_414 = arith.constant 0.000000e+00 : f32
    %485 = vector.broadcast %cst_414 : f32 to vector<128x64xf32>
    %486 = arith.maximumf %484, %485 : vector<128x64xf32>
    %cst_415 = arith.constant 0.000000e+00 : f32
    %487 = vector.broadcast %cst_415 : f32 to vector<128x64xf32>
    %488 = arith.select %4, %486, %487 : vector<128x64xi1>, vector<128x64xf32>
    %c0_416 = arith.constant 0 : index
    %c0_417 = arith.constant 0 : index
    %489 = vector.load %arg6[%c0_416, %c0_417] : memref<128x64xf32, #tpu.memory_space<vmem>>, vector<128x64xf32>
    %490 = arith.mulf %488, %489 : vector<128x64xf32>
    %c63_i32 = arith.constant 63 : i32
    %491 = vector.broadcast %c63_i32 : i32 to vector<128x64xi32>
    %492 = arith.cmpi slt, %2, %491 : vector<128x64xi32>
    %cst_418 = arith.constant 0.000000e+00 : f32
    %493 = vector.broadcast %cst_418 : f32 to vector<128x64xf32>
    %494 = arith.select %492, %490, %493 : vector<128x64xi1>, vector<128x64xf32>
    %495 = vector.shape_cast %494 : vector<128x64xf32> to vector<1x128x64xf32>
    %cst_419 = arith.constant dense<0.000000e+00> : vector<1xf32>
    %496 = vector.multi_reduction <add>, %495, %cst_419 [1, 2] : vector<1x128x64xf32> to vector<1xf32>
    %497 = vector.shape_cast %496 : vector<1xf32> to vector<1x1x1xf32>
    %498 = vector.extract %497[0, 0, 0] : f32 from vector<1x1x1xf32>
    %c63_i32_420 = arith.constant 63 : i32
    %499 = vector.broadcast %c63_i32_420 : i32 to vector<128x64xi32>
    %500 = arith.cmpi sge, %2, %499 : vector<128x64xi32>
    %c126_i32_421 = arith.constant 126 : i32
    %501 = vector.broadcast %c126_i32_421 : i32 to vector<128x64xi32>
    %502 = arith.cmpi slt, %2, %501 : vector<128x64xi32>
    %503 = arith.andi %500, %502 : vector<128x64xi1>
    %cst_422 = arith.constant 0.000000e+00 : f32
    %504 = vector.broadcast %cst_422 : f32 to vector<128x64xf32>
    %505 = arith.select %503, %490, %504 : vector<128x64xi1>, vector<128x64xf32>
    %506 = vector.shape_cast %505 : vector<128x64xf32> to vector<1x128x64xf32>
    %cst_423 = arith.constant dense<0.000000e+00> : vector<1xf32>
    %507 = vector.multi_reduction <add>, %506, %cst_423 [1, 2] : vector<1x128x64xf32> to vector<1xf32>
    %508 = vector.shape_cast %507 : vector<1xf32> to vector<1x1x1xf32>
    %509 = vector.extract %508[0, 0, 0] : f32 from vector<1x1x1xf32>
    %c0_424 = arith.constant 0 : index
    %c0_425 = arith.constant 0 : index
    %510 = memref.load %arg7[%c0_424, %c0_425] : memref<1x1xf32, #tpu.memory_space<smem>>
    %511 = tpu.iota {dimensions = array<i32: 0>} : vector<2x1xi32>
    %c0_i32 = arith.constant 0 : i32
    %512 = vector.broadcast %c0_i32 : i32 to vector<2x1xi32>
    %513 = arith.cmpi eq, %511, %512 : vector<2x1xi32>
    %514 = arith.extui %513 : vector<2x1xi1> to vector<2x1xi32>
    %515 = arith.sitofp %514 : vector<2x1xi32> to vector<2x1xf32>
    %516 = vector.broadcast %498 : f32 to vector<2x1xf32>
    %517 = arith.mulf %515, %516 : vector<2x1xf32>
    %cst_426 = arith.constant 1.000000e+00 : f32
    %518 = vector.broadcast %cst_426 : f32 to vector<2x1xf32>
    %519 = arith.subf %518, %515 : vector<2x1xf32>
    %520 = vector.broadcast %509 : f32 to vector<2x1xf32>
    %521 = arith.mulf %519, %520 : vector<2x1xf32>
    %522 = arith.addf %517, %521 : vector<2x1xf32>
    %523 = vector.broadcast %510 : f32 to vector<2x1xf32>
    %524 = arith.addf %522, %523 : vector<2x1xf32>
    %cst_427 = arith.constant 0.000000e+00 : f32
    %525 = vector.broadcast %cst_427 : f32 to vector<2x1xf32>
    %526 = arith.subf %525, %524 : vector<2x1xf32>
    %527 = math.exp %526 : vector<2x1xf32>
    %cst_428 = arith.constant 1.000000e+00 : f32
    %528 = vector.broadcast %cst_428 : f32 to vector<2x1xf32>
    %529 = arith.addf %528, %527 : vector<2x1xf32>
    %cst_429 = arith.constant 1.000000e+00 : f32
    %530 = vector.broadcast %cst_429 : f32 to vector<2x1xf32>
    %531 = arith.divf %530, %529 : vector<2x1xf32>
    %c0_430 = arith.constant 0 : index
    %c0_431 = arith.constant 0 : index
    %532 = vector.load %arg8[%c0_430, %c0_431] : memref<2x1xf32, #tpu.memory_space<vmem>>, vector<2x1xf32>
    tpu.vector_store %arg8[%c0_430, %c0_431], %531 {strides = array<i32>} : memref<2x1xf32, #tpu.memory_space<vmem>>, vector<2x1xf32>,
    return
  }
}

</mosaic_0001>

<llo_original>
// kernel: resnet_forward.1
$region0: #{resnet_forward.1}
  #allocation0 [shape = 'u32[]', space=smem, size = 0x4, offset = 0x4, fixed_abs, tag = 'smem constant byte address 0x4 - core index']
  #allocation1 [shape = 'u32[144,128]{1,0:T(1,128)}', space=vmem, size = 0x12000, scoped, tag = 'internal scratch']
  #allocation2 [shape = 'f32[160,64]{1,0:T(8,128)}', space=vmem, size = 0x14000, scoped, tag = 'scratch operand']
  #allocation3 [shape = 'f32[1,1]{1,0:T(1,128)S(6)}', space=smem, size = 0x200, scoped, tag = 'scoped memory for resnet_forward.1']
  %s0 = inlined_call_operand.vmem [shape: bf16[128,16], index: 0, kind: input, shape index: {}]
  %s1 = inlined_call_operand.vmem [shape: f32[9,128,64], index: 1, kind: input, shape index: {}]
  %s2 = inlined_call_operand.vmem [shape: bf16[16,64], index: 2, kind: input, shape index: {}]
  %s3 = inlined_call_operand.vmem [shape: f32[1,64], index: 3, kind: input, shape index: {}]
  %s4 = inlined_call_operand.vmem [shape: bf16[4,576,64], index: 4, kind: input, shape index: {}]
  %s5 = inlined_call_operand.vmem [shape: f32[4,1,64], index: 5, kind: input, shape index: {}]
  %s6 = inlined_call_operand.vmem [shape: f32[128,64], index: 6, kind: input, shape index: {}]
  %s7 = inlined_call_operand.<no memory space> [shape: f32[1,1], index: 7, kind: input, shape index: {}]
  %s8 = inlined_call_operand.vmem [shape: f32[2,1], index: 8, kind: output, shape index: {}]
  %s9 = sld [smem:[#allocation0]]
  $region42: #{resnet_forward.1} parent=0
    _
  %s11 = ssub.s32 1, %s9
  %s12 = scalar_select 0, %s11, %s9
  %13 = sst [smem:[#allocation3]] %s7
  // Predicated region
  $region2: #{resnet_forward.1} parent=0 // pred_check
    _
  $region3: #{resnet_forward.1} parent=0 // pred_check_branch
    %15 = sbr.rel (0) target = $region5
  $region4: #{resnet_forward.1} parent=0 // pred_region
    _
  $region5: #{resnet_forward.1} parent=0 // pred_fallthru
    _
  // Predicated region
  $region6: #{resnet_forward.1} parent=0 // pred_check
    _
  $region7: #{resnet_forward.1} parent=0 // pred_check_branch
    %17 = sbr.rel (0) target = $region9
  $region8: #{resnet_forward.1} parent=0 // pred_region
    _
  $region9: #{resnet_forward.1} parent=0 // pred_fallthru
    _
  // Predicated region
  $region10: #{resnet_forward.1} parent=0 // pred_check
    _
  $region11: #{resnet_forward.1} parent=0 // pred_check_branch
    %19 = sbr.rel (0) target = $region13
  $region12: #{resnet_forward.1} parent=0 // pred_region
    _
  $region13: #{resnet_forward.1} parent=0 // pred_fallthru
    _
  // Predicated region
  $region14: #{resnet_forward.1} parent=0 // pred_check
    _
  $region15: #{resnet_forward.1} parent=0 // pred_check_branch
    %21 = sbr.rel (0) target = $region17
  $region16: #{resnet_forward.1} parent=0 // pred_region
    _
  $region17: #{resnet_forward.1} parent=0 // pred_fallthru
    _
  // Predicated region
  $region18: #{resnet_forward.1} parent=0 // pred_check
    _
  $region19: #{resnet_forward.1} parent=0 // pred_check_branch
    %23 = sbr.rel (0) target = $region21
  $region20: #{resnet_forward.1} parent=0 // pred_region
    _
  $region21: #{resnet_forward.1} parent=0 // pred_fallthru
    _
  // Predicated region
  $region22: #{resnet_forward.1} parent=0 // pred_check
    _
  $region23: #{resnet_forward.1} parent=0 // pred_check_branch
    %25 = sbr.rel (0) target = $region25
  $region24: #{resnet_forward.1} parent=0 // pred_region
    _
  $region25: #{resnet_forward.1} parent=0 // pred_fallthru
    _
  // Predicated region
  $region26: #{resnet_forward.1} parent=0 // pred_check
    _
  $region27: #{resnet_forward.1} parent=0 // pred_check_branch
    %27 = sbr.rel (0) target = $region29
  $region28: #{resnet_forward.1} parent=0 // pred_region
    _
  $region29: #{resnet_forward.1} parent=0 // pred_fallthru
    _
  // Predicated region
  $region30: #{resnet_forward.1} parent=0 // pred_check
    _
  $region31: #{resnet_forward.1} parent=0 // pred_check_branch
    %29 = sbr.rel (0) target = $region33
  $region32: #{resnet_forward.1} parent=0 // pred_region
    _
  $region33: #{resnet_forward.1} parent=0 // pred_fallthru
    _
  %vm31 = vcmask 523264
  %32 = vst.msk [vmem:[#allocation2] sm:$0xff] %vm31, 0.0
  %33 = vst.msk [vmem:[#allocation2 + $0x8] sm:$0xff] %vm31, 0.0
  %34 = vst.msk [vmem:[#allocation2 + $0x10] sm:$0xff] %vm31, 0.0
  %35 = vst.msk [vmem:[#allocation2 + $0x18] sm:$0xff] %vm31, 0.0
  %36 = vst.msk [vmem:[#allocation2 + $0x20] sm:$0xff] %vm31, 0.0
  %37 = vst.msk [vmem:[#allocation2 + $0x28] sm:$0xff] %vm31, 0.0
  %38 = vst.msk [vmem:[#allocation2 + $0x30] sm:$0xff] %vm31, 0.0
  %39 = vst.msk [vmem:[#allocation2 + $0x38] sm:$0xff] %vm31, 0.0
  %40 = vst.msk [vmem:[#allocation2 + $0x40] sm:$0xff] %vm31, 0.0
  %41 = vst.msk [vmem:[#allocation2 + $0x48] sm:$0xff] %vm31, 0.0
  %42 = vst.msk [vmem:[#allocation2 + $0x50] sm:$0xff] %vm31, 0.0
  %43 = vst.msk [vmem:[#allocation2 + $0x58] sm:$0xff] %vm31, 0.0
  %44 = vst.msk [vmem:[#allocation2 + $0x60] sm:$0xff] %vm31, 0.0
  %45 = vst.msk [vmem:[#allocation2 + $0x68] sm:$0xff] %vm31, 0.0
  %46 = vst.msk [vmem:[#allocation2 + $0x70] sm:$0xff] %vm31, 0.0
  %47 = vst.msk [vmem:[#allocation2 + $0x78] sm:$0xff] %vm31, 0.0
  %48 = vst.msk [vmem:[#allocation2 + $0x80] sm:$0xff] %vm31, 0.0
  %49 = vst.msk [vmem:[#allocation2 + $0x88] sm:$0xff] %vm31, 0.0
  %50 = vst.msk [vmem:[#allocation2 + $0x90] sm:$0xff] %vm31, 0.0
  %51 = vst.msk [vmem:[#allocation2 + $0x98] sm:$0xff] %vm31, 0.0
  %v52 = vlaneseq
  %v53 = vshrl.u32 %v52, 7
  %v54 = vadd.s32 %v53, 8
  %v55 = vadd.s32 %v53, 16
  %v56 = vadd.s32 %v53, 24
  %v57 = vadd.s32 %v53, 32
  %v58 = vadd.s32 %v53, 40
  %v59 = vadd.s32 %v53, 48
  %v60 = vadd.s32 %v53, 56
  %v61 = vadd.s32 %v53, 64
  %v62 = vadd.s32 %v53, 72
  %v63 = vadd.s32 %v53, 80
  %v64 = vadd.s32 %v53, 88
  %v65 = vadd.s32 %v53, 96
  %v66 = vadd.s32 %v53, 104
  %v67 = vadd.s32 %v53, 112
  %v68 = vadd.s32 %v53, 120
  %vm69 = vcmp.lt.s32.totalorder %v53, 126
  %vm70 = vcmp.lt.s32.totalorder %v54, 126
  %vm71 = vcmp.lt.s32.totalorder %v55, 126
  %vm72 = vcmp.lt.s32.totalorder %v56, 126
  %vm73 = vcmp.lt.s32.totalorder %v57, 126
  %vm74 = vcmp.lt.s32.totalorder %v58, 126
  %vm75 = vcmp.lt.s32.totalorder %v59, 126
  %vm76 = vcmp.lt.s32.totalorder %v60, 126
  %vm77 = vcmp.lt.s32.totalorder %v61, 126
  %vm78 = vcmp.lt.s32.totalorder %v62, 126
  %vm79 = vcmp.lt.s32.totalorder %v63, 126
  %vm80 = vcmp.lt.s32.totalorder %v64, 126
  %vm81 = vcmp.lt.s32.totalorder %v65, 126
  %vm82 = vcmp.lt.s32.totalorder %v66, 126
  %vm83 = vcmp.lt.s32.totalorder %v67, 126
  %vm84 = vcmp.lt.s32.totalorder %v68, 126
  %v85 = vld [vmem:[%s0] sm:$0xf]
  %v86 = vld [vmem:[%s0 + $0x4] sm:$0xf]
  %v87 = vld [vmem:[%s0 + $0x8] sm:$0xf]
  %v88 = vld [vmem:[%s0 + $0xc] sm:$0xf]
  %v89 = vld [vmem:[%s0 + $0x10] sm:$0xf]
  %v90 = vld [vmem:[%s0 + $0x14] sm:$0xf]
  %v91 = vld [vmem:[%s0 + $0x18] sm:$0xf]
  %v92 = vld [vmem:[%s0 + $0x1c] sm:$0xf]
  %v93 = vld [vmem:[%s0 + $0x20] sm:$0xf]
  %v94 = vld [vmem:[%s0 + $0x24] sm:$0xf]
  %v95 = vld [vmem:[%s0 + $0x28] sm:$0xf]
  %v96 = vld [vmem:[%s0 + $0x2c] sm:$0xf]
  %v97 = vld [vmem:[%s0 + $0x30] sm:$0xf]
  %v98 = vld [vmem:[%s0 + $0x34] sm:$0xf]
  %v99 = vld [vmem:[%s0 + $0x38] sm:$0xf]
  %v100 = vld [vmem:[%s0 + $0x3c] sm:$0xf]
  %v101 = vld [vmem:[%s2] sm:$0xf]
  %v102 = vld [vmem:[%s2 + $0x4] sm:$0xf]
  %v103 = vld [vmem:[%s3] sm:$0x1]
  %v105 = vlaneseq
  %v106 = vshrl.u32 %v105, 7
  %v107 = vsub.s32 0, %v106
  %v108 = vrot.slane %v103, %v107
  %v126 = vunpack.c.l.b16 %v85
  %v127 = vunpack.c.l.b16 %v86
  %v128 = vunpack.c.l.b16 %v87
  %v129 = vunpack.c.l.b16 %v88
  %v130 = vunpack.c.l.b16 %v89
  %v131 = vunpack.c.l.b16 %v90
  %v132 = vunpack.c.l.b16 %v91
  %v133 = vunpack.c.l.b16 %v92
  %v134 = vunpack.c.l.b16 %v93
  %v135 = vunpack.c.l.b16 %v94
  %v136 = vunpack.c.l.b16 %v95
  %v137 = vunpack.c.l.b16 %v96
  %v138 = vunpack.c.l.b16 %v97
  %v139 = vunpack.c.l.b16 %v98
  %v140 = vunpack.c.l.b16 %v99
  %v141 = vunpack.c.l.b16 %v100
  %v142 = vpack.c.b16 %v127, %v126
  %v143 = vpack.c.b16 %v129, %v128
  %v144 = vpack.c.b16 %v131, %v130
  %v145 = vpack.c.b16 %v133, %v132
  %v146 = vpack.c.b16 %v135, %v134
  %v147 = vpack.c.b16 %v137, %v136
  %v148 = vpack.c.b16 %v139, %v138
  %v149 = vpack.c.b16 %v141, %v140
  %v152 = vunpack.c.l.b16 %v101
  %v153 = vunpack.c.l.b16 %v102
  %v154 = vpack.c.b16 %v153, %v152
  %vm156 = vcmask 130048
  %v158 = vsel %vm156, %v142, 0
  %v161 = vsel %vm156, %v143, 0
  %v164 = vsel %vm156, %v144, 0
  %v167 = vsel %vm156, %v145, 0
  %v170 = vsel %vm156, %v146, 0
  %v173 = vsel %vm156, %v147, 0
  %v176 = vsel %vm156, %v148, 0
  %v179 = vsel %vm156, %v149, 0
  %181 = vmatprep.subr.bf16.mxu0 0
  %182 = vmatpush1.bf16.msra.mxu0 0
  %183 = vmatprep.subr.bf16.mxu0 0
  %184 = vmatpush1.bf16.msra.mxu0 0
  %185 = vmatprep.subr.bf16.mxu0 0
  %186 = vmatpush1.bf16.msra.mxu0 0
  %187 = vmatprep.subr.bf16.mxu0 0
  %188 = vmatpush1.bf16.msra.mxu0 0
  %189 = vmatprep.subr.bf16.mxu0 0
  %190 = vmatpush1.bf16.msra.mxu0 0
  %191 = vmatprep.subr.bf16.mxu0 0
  %192 = vmatpush1.bf16.msra.mxu0 0
  %193 = vmatprep.subr.bf16.mxu0 0
  %194 = vmatpush1.bf16.msra.mxu0 0
  %195 = vmatprep.subr.bf16.mxu0 0
  %196 = vmatpush1.bf16.msra.mxu0 %v154
  %197 = vmatprep.subr.bf16.mxu0 0
  %198 = vmatpush2.bf16.msra.mxu0 0
  %199 = vmatprep.subr.bf16.mxu0 0
  %200 = vmatpush2.bf16.msra.mxu0 0
  %201 = vmatprep.subr.bf16.mxu0 0
  %202 = vmatpush2.bf16.msra.mxu0 0
  %203 = vmatprep.subr.bf16.mxu0 0
  %204 = vmatpush2.bf16.msra.mxu0 0
  %205 = vmatprep.subr.bf16.mxu0 0
  %206 = vmatpush2.bf16.msra.mxu0 0
  %207 = vmatprep.subr.bf16.mxu0 0
  %208 = vmatpush2.bf16.msra.mxu0 0
  %209 = vmatprep.subr.bf16.mxu0 0
  %210 = vmatpush2.bf16.msra.mxu0 0
  %211 = vmatprep.subr.bf16.mxu0 0
  %212 = vmatpush2.bf16.msra.mxu0 0
  %213 = vmatprep.mubr.bf16.mxu0 0
  %214 = vmatmul.mubr.bf16.gmra.mxu0 %v158
  %v215 = vpop.f32.mrf.mxu0
  %v216 = vadd.f32 %v108, %v215
  %v217 = vpop.f32.mrf.mxu0
  %v218 = vpop.f32.mrf.mxu0
  %v219 = vadd.f32 %v108, %v218
  %v220 = vpop.f32.mrf.mxu0
  %221 = vmatprep.mubr.bf16.mxu0 0
  %222 = vmatmul.mubr.bf16.gmra.mxu0 %v161
  %v223 = vpop.f32.mrf.mxu0
  %v224 = vadd.f32 %v108, %v223
  %v225 = vpop.f32.mrf.mxu0
  %v226 = vpop.f32.mrf.mxu0
  %v227 = vadd.f32 %v108, %v226
  %v228 = vpop.f32.mrf.mxu0
  %229 = vmatprep.mubr.bf16.mxu0 0
  %230 = vmatmul.mubr.bf16.gmra.mxu0 %v164
  %v231 = vpop.f32.mrf.mxu0
  %v232 = vadd.f32 %v108, %v231
  %v233 = vpop.f32.mrf.mxu0
  %v234 = vpop.f32.mrf.mxu0
  %v235 = vadd.f32 %v108, %v234
  %v236 = vpop.f32.mrf.mxu0
  %237 = vmatprep.mubr.bf16.mxu0 0
  %238 = vmatmul.mubr.bf16.gmra.mxu0 %v167
  %v239 = vpop.f32.mrf.mxu0
  %v240 = vadd.f32 %v108, %v239
  %v241 = vpop.f32.mrf.mxu0
  %v242 = vpop.f32.mrf.mxu0
  %v243 = vadd.f32 %v108, %v242
  %v244 = vpop.f32.mrf.mxu0
  %245 = vmatprep.mubr.bf16.mxu0 0
  %246 = vmatmul.mubr.bf16.gmra.mxu0 %v170
  %v247 = vpop.f32.mrf.mxu0
  %v248 = vadd.f32 %v108, %v247
  %v249 = vpop.f32.mrf.mxu0
  %v250 = vpop.f32.mrf.mxu0
  %v251 = vadd.f32 %v108, %v250
  %v252 = vpop.f32.mrf.mxu0
  %253 = vmatprep.mubr.bf16.mxu0 0
  %254 = vmatmul.mubr.bf16.gmra.mxu0 %v173
  %v255 = vpop.f32.mrf.mxu0
  %v256 = vadd.f32 %v108, %v255
  %v257 = vpop.f32.mrf.mxu0
  %v258 = vpop.f32.mrf.mxu0
  %v259 = vadd.f32 %v108, %v258
  %v260 = vpop.f32.mrf.mxu0
  %261 = vmatprep.mubr.bf16.mxu0 0
  %262 = vmatmul.mubr.bf16.gmra.mxu0 %v176
  %v263 = vpop.f32.mrf.mxu0
  %v264 = vadd.f32 %v108, %v263
  %v265 = vpop.f32.mrf.mxu0
  %v266 = vpop.f32.mrf.mxu0
  %v267 = vadd.f32 %v108, %v266
  %v268 = vpop.f32.mrf.mxu0
  %269 = vmatprep.mubr.bf16.mxu0 0
  %270 = vmatmul.mubr.bf16.gmra.mxu0 %v179
  %v271 = vpop.f32.mrf.mxu0
  %v272 = vadd.f32 %v108, %v271
  %v273 = vpop.f32.mrf.mxu0
  %v274 = vpop.f32.mrf.mxu0
  %v275 = vadd.f32 %v108, %v274
  %v276 = vpop.f32.mrf.mxu0
  %277 = vdwg.mxu0
  %v278 = vmax.f32 %v216, 0.0
  %v279 = vmax.f32 %v219, 0.0
  %v280 = vmax.f32 %v224, 0.0
  %v281 = vmax.f32 %v227, 0.0
  %v282 = vmax.f32 %v232, 0.0
  %v283 = vmax.f32 %v235, 0.0
  %v284 = vmax.f32 %v240, 0.0
  %v285 = vmax.f32 %v243, 0.0
  %v286 = vmax.f32 %v248, 0.0
  %v287 = vmax.f32 %v251, 0.0
  %v288 = vmax.f32 %v256, 0.0
  %v289 = vmax.f32 %v259, 0.0
  %v290 = vmax.f32 %v264, 0.0
  %v291 = vmax.f32 %v267, 0.0
  %v292 = vmax.f32 %v272, 0.0
  %v293 = vmax.f32 %v275, 0.0
  %v294 = vsel %vm69, %v278, 0.0
  %v295 = vsel %vm70, %v279, 0.0
  %v296 = vsel %vm71, %v280, 0.0
  %v297 = vsel %vm72, %v281, 0.0
  %v298 = vsel %vm73, %v282, 0.0
  %v299 = vsel %vm74, %v283, 0.0
  %v300 = vsel %vm75, %v284, 0.0
  %v301 = vsel %vm76, %v285, 0.0
  %v302 = vsel %vm77, %v286, 0.0
  %v303 = vsel %vm78, %v287, 0.0
  %v304 = vsel %vm79, %v288, 0.0
  %v305 = vsel %vm80, %v289, 0.0
  %v306 = vsel %vm81, %v290, 0.0
  %v307 = vsel %vm82, %v291, 0.0
  %v308 = vsel %vm83, %v292, 0.0
  %v309 = vsel %vm84, %v293, 0.0
  %310 = vst.msk [vmem:[#allocation2 + $0x10] sm:$0xff] %vm31, %v294
  %311 = vst.msk [vmem:[#allocation2 + $0x18] sm:$0xff] %vm31, %v295
  %312 = vst.msk [vmem:[#allocation2 + $0x20] sm:$0xff] %vm31, %v296
  %313 = vst.msk [vmem:[#allocation2 + $0x28] sm:$0xff] %vm31, %v297
  %314 = vst.msk [vmem:[#allocation2 + $0x30] sm:$0xff] %vm31, %v298
  %315 = vst.msk [vmem:[#allocation2 + $0x38] sm:$0xff] %vm31, %v299
  %316 = vst.msk [vmem:[#allocation2 + $0x40] sm:$0xff] %vm31, %v300
  %317 = vst.msk [vmem:[#allocation2 + $0x48] sm:$0xff] %vm31, %v301
  %318 = vst.msk [vmem:[#allocation2 + $0x50] sm:$0xff] %vm31, %v302
  %319 = vst.msk [vmem:[#allocation2 + $0x58] sm:$0xff] %vm31, %v303
  %320 = vst.msk [vmem:[#allocation2 + $0x60] sm:$0xff] %vm31, %v304
  %321 = vst.msk [vmem:[#allocation2 + $0x68] sm:$0xff] %vm31, %v305
  %322 = vst.msk [vmem:[#allocation2 + $0x70] sm:$0xff] %vm31, %v306
  %323 = vst.msk [vmem:[#allocation2 + $0x78] sm:$0xff] %vm31, %v307
  %324 = vst.msk [vmem:[#allocation2 + $0x80] sm:$0xff] %vm31, %v308
  %325 = vst.msk [vmem:[#allocation2 + $0x88] sm:$0xff] %vm31, %v309
  %v326 = vld [vmem:[#allocation2 + $0x6] sm:$0xff]
  %v327 = vld [vmem:[#allocation2 + $0xe] sm:$0xff]
  %v328 = vld [vmem:[#allocation2 + $0x16] sm:$0xff]
  %v329 = vld [vmem:[#allocation2 + $0x1e] sm:$0xff]
  %v330 = vld [vmem:[#allocation2 + $0x26] sm:$0xff]
  %v331 = vld [vmem:[#allocation2 + $0x2e] sm:$0xff]
  %v332 = vld [vmem:[#allocation2 + $0x36] sm:$0xff]
  %v333 = vld [vmem:[#allocation2 + $0x3e] sm:$0xff]
  %v334 = vld [vmem:[#allocation2 + $0x46] sm:$0xff]
  %v335 = vld [vmem:[#allocation2 + $0x4e] sm:$0xff]
  %v336 = vld [vmem:[#allocation2 + $0x56] sm:$0xff]
  %v337 = vld [vmem:[#allocation2 + $0x5e] sm:$0xff]
  %v338 = vld [vmem:[#allocation2 + $0x66] sm:$0xff]
  %v339 = vld [vmem:[#allocation2 + $0x6e] sm:$0xff]
  %v340 = vld [vmem:[#allocation2 + $0x76] sm:$0xff]
  %v341 = vld [vmem:[#allocation2 + $0x7e] sm:$0xff]
  %v342 = vld [vmem:[%s1] sm:$0xff]
  %v343 = vld [vmem:[%s1 + $0x8] sm:$0xff]
  %v344 = vld [vmem:[%s1 + $0x10] sm:$0xff]
  %v345 = vld [vmem:[%s1 + $0x18] sm:$0xff]
  %v346 = vld [vmem:[%s1 + $0x20] sm:$0xff]
  %v347 = vld [vmem:[%s1 + $0x28] sm:$0xff]
  %v348 = vld [vmem:[%s1 + $0x30] sm:$0xff]
  %v349 = vld [vmem:[%s1 + $0x38] sm:$0xff]
  %v350 = vld [vmem:[%s1 + $0x40] sm:$0xff]
  %v351 = vld [vmem:[%s1 + $0x48] sm:$0xff]
  %v352 = vld [vmem:[%s1 + $0x50] sm:$0xff]
  %v353 = vld [vmem:[%s1 + $0x58] sm:$0xff]
  %v354 = vld [vmem:[%s1 + $0x60] sm:$0xff]
  %v355 = vld [vmem:[%s1 + $0x68] sm:$0xff]
  %v356 = vld [vmem:[%s1 + $0x70] sm:$0xff]
  %v357 = vld [vmem:[%s1 + $0x78] sm:$0xff]
  %vm358 = vcmp.gt.f32.partialorder %v342, 0.0
  %vm359 = vcmp.gt.f32.partialorder %v343, 0.0
  %vm360 = vcmp.gt.f32.partialorder %v344, 0.0
  %vm361 = vcmp.gt.f32.partialorder %v345, 0.0
  %vm362 = vcmp.gt.f32.partialorder %v346, 0.0
  %vm363 = vcmp.gt.f32.partialorder %v347, 0.0
  %vm364 = vcmp.gt.f32.partialorder %v348, 0.0
  %vm365 = vcmp.gt.f32.partialorder %v349, 0.0
  %vm366 = vcmp.gt.f32.partialorder %v350, 0.0
  %vm367 = vcmp.gt.f32.partialorder %v351, 0.0
  %vm368 = vcmp.gt.f32.partialorder %v352, 0.0
  %vm369 = vcmp.gt.f32.partialorder %v353, 0.0
  %vm370 = vcmp.gt.f32.partialorder %v354, 0.0
  %vm371 = vcmp.gt.f32.partialorder %v355, 0.0
  %vm372 = vcmp.gt.f32.partialorder %v356, 0.0
  %vm373 = vcmp.gt.f32.partialorder %v357, 0.0
  %v374 = vsel %vm358, %v326, 0.0
  %v375 = vsel %vm359, %v327, 0.0
  %v376 = vsel %vm360, %v328, 0.0
  %v377 = vsel %vm361, %v329, 0.0
  %v378 = vsel %vm362, %v330, 0.0
  %v379 = vsel %vm363, %v331, 0.0
  %v380 = vsel %vm364, %v332, 0.0
  %v381 = vsel %vm365, %v333, 0.0
  %v382 = vsel %vm366, %v334, 0.0
  %v383 = vsel %vm367, %v335, 0.0
  %v384 = vsel %vm368, %v336, 0.0
  %v385 = vsel %vm369, %v337, 0.0
  %v386 = vsel %vm370, %v338, 0.0
  %v387 = vsel %vm371, %v339, 0.0
  %v388 = vsel %vm372, %v340, 0.0
  %v389 = vsel %vm373, %v341, 0.0
  %v390 = vpack.c.bf16 %v375, %v374
  %v391 = vpack.c.bf16 %v377, %v376
  %v392 = vpack.c.bf16 %v379, %v378
  %v393 = vpack.c.bf16 %v381, %v380
  %v394 = vpack.c.bf16 %v383, %v382
  %v395 = vpack.c.bf16 %v385, %v384
  %v396 = vpack.c.bf16 %v387, %v386
  %v397 = vpack.c.bf16 %v389, %v388
  %v398 = vld [vmem:[%s4] sm:$0xf]
  %v399 = vld [vmem:[%s4 + $0x4] sm:$0xf]
  %v400 = vld [vmem:[%s4 + $0x8] sm:$0xf]
  %v401 = vld [vmem:[%s4 + $0xc] sm:$0xf]
  %v402 = vld [vmem:[%s4 + $0x10] sm:$0xf]
  %v403 = vld [vmem:[%s4 + $0x14] sm:$0xf]
  %v404 = vld [vmem:[%s4 + $0x18] sm:$0xf]
  %v405 = vld [vmem:[%s4 + $0x1c] sm:$0xf]
  %v406 = vld [vmem:[#allocation2 + $0x7] sm:$0xff]
  %v407 = vld [vmem:[#allocation2 + $0xf] sm:$0xff]
  %v408 = vld [vmem:[#allocation2 + $0x17] sm:$0xff]
  %v409 = vld [vmem:[#allocation2 + $0x1f] sm:$0xff]
  %v410 = vld [vmem:[#allocation2 + $0x27] sm:$0xff]
  %v411 = vld [vmem:[#allocation2 + $0x2f] sm:$0xff]
  %v412 = vld [vmem:[#allocation2 + $0x37] sm:$0xff]
  %v413 = vld [vmem:[#allocation2 + $0x3f] sm:$0xff]
  %v414 = vld [vmem:[#allocation2 + $0x47] sm:$0xff]
  %v415 = vld [vmem:[#allocation2 + $0x4f] sm:$0xff]
  %v416 = vld [vmem:[#allocation2 + $0x57] sm:$0xff]
  %v417 = vld [vmem:[#allocation2 + $0x5f] sm:$0xff]
  %v418 = vld [vmem:[#allocation2 + $0x67] sm:$0xff]
  %v419 = vld [vmem:[#allocation2 + $0x6f] sm:$0xff]
  %v420 = vld [vmem:[#allocation2 + $0x77] sm:$0xff]
  %v421 = vld [vmem:[#allocation2 + $0x7f] sm:$0xff]
  %s422 = scalar_lea.vmem %s1, 128
  %v423 = vld [vmem:[%s422] sm:$0xff]
  %v424 = vld [vmem:[%s422 + $0x8] sm:$0xff]
  %v425 = vld [vmem:[%s422 + $0x10] sm:$0xff]
  %v426 = vld [vmem:[%s422 + $0x18] sm:$0xff]
  %v427 = vld [vmem:[%s422 + $0x20] sm:$0xff]
  %v428 = vld [vmem:[%s422 + $0x28] sm:$0xff]
  %v429 = vld [vmem:[%s422 + $0x30] sm:$0xff]
  %v430 = vld [vmem:[%s422 + $0x38] sm:$0xff]
  %v431 = vld [vmem:[%s422 + $0x40] sm:$0xff]
  %v432 = vld [vmem:[%s422 + $0x48] sm:$0xff]
  %v433 = vld [vmem:[%s422 + $0x50] sm:$0xff]
  %v434 = vld [vmem:[%s422 + $0x58] sm:$0xff]
  %v435 = vld [vmem:[%s422 + $0x60] sm:$0xff]
  %v436 = vld [vmem:[%s422 + $0x68] sm:$0xff]
  %v437 = vld [vmem:[%s422 + $0x70] sm:$0xff]
  %v438 = vld [vmem:[%s422 + $0x78] sm:$0xff]
  %vm439 = vcmp.gt.f32.partialorder %v423, 0.0
  %vm440 = vcmp.gt.f32.partialorder %v424, 0.0
  %vm441 = vcmp.gt.f32.partialorder %v425, 0.0
  %vm442 = vcmp.gt.f32.partialorder %v426, 0.0
  %vm443 = vcmp.gt.f32.partialorder %v427, 0.0
  %vm444 = vcmp.gt.f32.partialorder %v428, 0.0
  %vm445 = vcmp.gt.f32.partialorder %v429, 0.0
  %vm446 = vcmp.gt.f32.partialorder %v430, 0.0
  %vm447 = vcmp.gt.f32.partialorder %v431, 0.0
  %vm448 = vcmp.gt.f32.partialorder %v432, 0.0
  %vm449 = vcmp.gt.f32.partialorder %v433, 0.0
  %vm450 = vcmp.gt.f32.partialorder %v434, 0.0
  %vm451 = vcmp.gt.f32.partialorder %v435, 0.0
  %vm452 = vcmp.gt.f32.partialorder %v436, 0.0
  %vm453 = vcmp.gt.f32.partialorder %v437, 0.0
  %vm454 = vcmp.gt.f32.partialorder %v438, 0.0
  %v455 = vsel %vm439, %v406, 0.0
  %v456 = vsel %vm440, %v407, 0.0
  %v457 = vsel %vm441, %v408, 0.0
  %v458 = vsel %vm442, %v409, 0.0
  %v459 = vsel %vm443, %v410, 0.0
  %v460 = vsel %vm444, %v411, 0.0
  %v461 = vsel %vm445, %v412, 0.0
  %v462 = vsel %vm446, %v413, 0.0
  %v463 = vsel %vm447, %v414, 0.0
  %v464 = vsel %vm448, %v415, 0.0
  %v465 = vsel %vm449, %v416, 0.0
  %v466 = vsel %vm450, %v417, 0.0
  %v467 = vsel %vm451, %v418, 0.0
  %v468 = vsel %vm452, %v419, 0.0
  %v469 = vsel %vm453, %v420, 0.0
  %v470 = vsel %vm454, %v421, 0.0
  %v471 = vpack.c.bf16 %v456, %v455
  %v472 = vpack.c.bf16 %v458, %v457
  %v473 = vpack.c.bf16 %v460, %v459
  %v474 = vpack.c.bf16 %v462, %v461
  %v475 = vpack.c.bf16 %v464, %v463
  %v476 = vpack.c.bf16 %v466, %v465
  %v477 = vpack.c.bf16 %v468, %v467
  %v478 = vpack.c.bf16 %v470, %v469
  %v479 = vld [vmem:[%s4 + $0x20] sm:$0xf]
  %v480 = vld [vmem:[%s4 + $0x24] sm:$0xf]
  %v481 = vld [vmem:[%s4 + $0x28] sm:$0xf]
  %v482 = vld [vmem:[%s4 + $0x2c] sm:$0xf]
  %v483 = vld [vmem:[%s4 + $0x30] sm:$0xf]
  %v484 = vld [vmem:[%s4 + $0x34] sm:$0xf]
  %v485 = vld [vmem:[%s4 + $0x38] sm:$0xf]
  %v486 = vld [vmem:[%s4 + $0x3c] sm:$0xf]
  %v495 = vunpack.c.l.b16 %v479
  %v496 = vunpack.c.l.b16 %v480
  %v497 = vunpack.c.l.b16 %v481
  %v498 = vunpack.c.l.b16 %v482
  %v499 = vunpack.c.l.b16 %v483
  %v500 = vunpack.c.l.b16 %v484
  %v501 = vunpack.c.l.b16 %v485
  %v502 = vunpack.c.l.b16 %v486
  %v503 = vpack.c.b16 %v496, %v495
  %v504 = vpack.c.b16 %v498, %v497
  %v505 = vpack.c.b16 %v500, %v499
  %v506 = vpack.c.b16 %v502, %v501
  %v512 = vsel %vm31, %v471, 0
  %v515 = vsel %vm31, %v472, 0
  %v518 = vsel %vm31, %v473, 0
  %v521 = vsel %vm31, %v474, 0
  %v524 = vsel %vm31, %v475, 0
  %v527 = vsel %vm31, %v476, 0
  %v530 = vsel %vm31, %v477, 0
  %v533 = vsel %vm31, %v478, 0
  %535 = vmatprep.subr.bf16.mxu0 0
  %536 = vmatpush1.bf16.msra.mxu0 0
  %537 = vmatprep.subr.bf16.mxu0 0
  %538 = vmatpush1.bf16.msra.mxu0 0
  %539 = vmatprep.subr.bf16.mxu0 0
  %540 = vmatpush1.bf16.msra.mxu0 0
  %541 = vmatprep.subr.bf16.mxu0 0
  %542 = vmatpush1.bf16.msra.mxu0 0
  %543 = vmatprep.subr.bf16.mxu0 0
  %544 = vmatpush1.bf16.msra.mxu0 %v506
  %545 = vmatprep.subr.bf16.mxu0 0
  %546 = vmatpush1.bf16.msra.mxu0 %v505
  %547 = vmatprep.subr.bf16.mxu0 0
  %548 = vmatpush1.bf16.msra.mxu0 %v504
  %549 = vmatprep.subr.bf16.mxu0 0
  %550 = vmatpush1.bf16.msra.mxu0 %v503
  %551 = vmatprep.subr.bf16.mxu0 0
  %552 = vmatpush2.bf16.msra.mxu0 0
  %553 = vmatprep.subr.bf16.mxu0 0
  %554 = vmatpush2.bf16.msra.mxu0 0
  %555 = vmatprep.subr.bf16.mxu0 0
  %556 = vmatpush2.bf16.msra.mxu0 0
  %557 = vmatprep.subr.bf16.mxu0 0
  %558 = vmatpush2.bf16.msra.mxu0 0
  %559 = vmatprep.subr.bf16.mxu0 0
  %560 = vmatpush2.bf16.msra.mxu0 0
  %561 = vmatprep.subr.bf16.mxu0 0
  %562 = vmatpush2.bf16.msra.mxu0 0
  %563 = vmatprep.subr.bf16.mxu0 0
  %564 = vmatpush2.bf16.msra.mxu0 0
  %565 = vmatprep.subr.bf16.mxu0 0
  %566 = vmatpush2.bf16.msra.mxu0 0
  %567 = vmatprep.mubr.bf16.mxu0 0
  %568 = vmatmul.mubr.bf16.gmra.mxu0 %v512
  %v569 = vpop.f32.mrf.mxu0
  %v570 = vadd.f32 0.0, %v569
  %v571 = vpop.f32.mrf.mxu0
  %v572 = vpop.f32.mrf.mxu0
  %v573 = vadd.f32 0.0, %v572
  %v574 = vpop.f32.mrf.mxu0
  %575 = vmatprep.mubr.bf16.mxu0 0
  %576 = vmatmul.mubr.bf16.gmra.mxu0 %v515
  %v577 = vpop.f32.mrf.mxu0
  %v578 = vadd.f32 0.0, %v577
  %v579 = vpop.f32.mrf.mxu0
  %v580 = vpop.f32.mrf.mxu0
  %v581 = vadd.f32 0.0, %v580
  %v582 = vpop.f32.mrf.mxu0
  %583 = vmatprep.mubr.bf16.mxu0 0
  %584 = vmatmul.mubr.bf16.gmra.mxu0 %v518
  %v585 = vpop.f32.mrf.mxu0
  %v586 = vadd.f32 0.0, %v585
  %v587 = vpop.f32.mrf.mxu0
  %v588 = vpop.f32.mrf.mxu0
  %v589 = vadd.f32 0.0, %v588
  %v590 = vpop.f32.mrf.mxu0
  %591 = vmatprep.mubr.bf16.mxu0 0
  %592 = vmatmul.mubr.bf16.gmra.mxu0 %v521
  %v593 = vpop.f32.mrf.mxu0
  %v594 = vadd.f32 0.0, %v593
  %v595 = vpop.f32.mrf.mxu0
  %v596 = vpop.f32.mrf.mxu0
  %v597 = vadd.f32 0.0, %v596
  %v598 = vpop.f32.mrf.mxu0
  %599 = vmatprep.mubr.bf16.mxu0 0
  %600 = vmatmul.mubr.bf16.gmra.mxu0 %v524
  %v601 = vpop.f32.mrf.mxu0
  %v602 = vadd.f32 0.0, %v601
  %v603 = vpop.f32.mrf.mxu0
  %v604 = vpop.f32.mrf.mxu0
  %v605 = vadd.f32 0.0, %v604
  %v606 = vpop.f32.mrf.mxu0
  %607 = vmatprep.mubr.bf16.mxu0 0
  %608 = vmatmul.mubr.bf16.gmra.mxu0 %v527
  %v609 = vpop.f32.mrf.mxu0
  %v610 = vadd.f32 0.0, %v609
  %v611 = vpop.f32.mrf.mxu0
  %v612 = vpop.f32.mrf.mxu0
  %v613 = vadd.f32 0.0, %v612
  %v614 = vpop.f32.mrf.mxu0
  %615 = vmatprep.mubr.bf16.mxu0 0
  %616 = vmatmul.mubr.bf16.gmra.mxu0 %v530
  %v617 = vpop.f32.mrf.mxu0
  %v618 = vadd.f32 0.0, %v617
  %v619 = vpop.f32.mrf.mxu0
  %v620 = vpop.f32.mrf.mxu0
  %v621 = vadd.f32 0.0, %v620
  %v622 = vpop.f32.mrf.mxu0
  %623 = vmatprep.mubr.bf16.mxu0 0
  %624 = vmatmul.mubr.bf16.gmra.mxu0 %v533
  %v625 = vpop.f32.mrf.mxu0
  %v626 = vadd.f32 0.0, %v625
  %v627 = vpop.f32.mrf.mxu0
  %v628 = vpop.f32.mrf.mxu0
  %v629 = vadd.f32 0.0, %v628
  %v630 = vpop.f32.mrf.mxu0
  %631 = vdwg.mxu0
  %v640 = vunpack.c.l.b16 %v398
  %v641 = vunpack.c.l.b16 %v399
  %v642 = vunpack.c.l.b16 %v400
  %v643 = vunpack.c.l.b16 %v401
  %v644 = vunpack.c.l.b16 %v402
  %v645 = vunpack.c.l.b16 %v403
  %v646 = vunpack.c.l.b16 %v404
  %v647 = vunpack.c.l.b16 %v405
  %v648 = vpack.c.b16 %v641, %v640
  %v649 = vpack.c.b16 %v643, %v642
  %v650 = vpack.c.b16 %v645, %v644
  %v651 = vpack.c.b16 %v647, %v646
  %v657 = vsel %vm31, %v390, 0
  %v660 = vsel %vm31, %v391, 0
  %v663 = vsel %vm31, %v392, 0
  %v666 = vsel %vm31, %v393, 0
  %v669 = vsel %vm31, %v394, 0
  %v672 = vsel %vm31, %v395, 0
  %v675 = vsel %vm31, %v396, 0
  %v678 = vsel %vm31, %v397, 0
  %680 = vmatprep.subr.bf16.mxu0 0
  %681 = vmatpush1.bf16.msra.mxu0 0
  %682 = vmatprep.subr.bf16.mxu0 0
  %683 = vmatpush1.bf16.msra.mxu0 0
  %684 = vmatprep.subr.bf16.mxu0 0
  %685 = vmatpush1.bf16.msra.mxu0 0
  %686 = vmatprep.subr.bf16.mxu0 0
  %687 = vmatpush1.bf16.msra.mxu0 0
  %688 = vmatprep.subr.bf16.mxu0 0
  %689 = vmatpush1.bf16.msra.mxu0 %v651
  %690 = vmatprep.subr.bf16.mxu0 0
  %691 = vmatpush1.bf16.msra.mxu0 %v650
  %692 = vmatprep.subr.bf16.mxu0 0
  %693 = vmatpush1.bf16.msra.mxu0 %v649
  %694 = vmatprep.subr.bf16.mxu0 0
  %695 = vmatpush1.bf16.msra.mxu0 %v648
  %696 = vmatprep.subr.bf16.mxu0 0
  %697 = vmatpush2.bf16.msra.mxu0 0
  %698 = vmatprep.subr.bf16.mxu0 0
  %699 = vmatpush2.bf16.msra.mxu0 0
  %700 = vmatprep.subr.bf16.mxu0 0
  %701 = vmatpush2.bf16.msra.mxu0 0
  %702 = vmatprep.subr.bf16.mxu0 0
  %703 = vmatpush2.bf16.msra.mxu0 0
  %704 = vmatprep.subr.bf16.mxu0 0
  %705 = vmatpush2.bf16.msra.mxu0 0
  %706 = vmatprep.subr.bf16.mxu0 0
  %707 = vmatpush2.bf16.msra.mxu0 0
  %708 = vmatprep.subr.bf16.mxu0 0
  %709 = vmatpush2.bf16.msra.mxu0 0
  %710 = vmatprep.subr.bf16.mxu0 0
  %711 = vmatpush2.bf16.msra.mxu0 0
  %712 = vmatprep.mubr.bf16.mxu0 0
  %713 = vmatmul.mubr.bf16.gmra.mxu0 %v657
  %v714 = vpop.f32.mrf.mxu0
  %v715 = vadd.f32 %v570, %v714
  %v716 = vpop.f32.mrf.mxu0
  %v717 = vpop.f32.mrf.mxu0
  %v718 = vadd.f32 %v573, %v717
  %v719 = vpop.f32.mrf.mxu0
  %720 = vmatprep.mubr.bf16.mxu0 0
  %721 = vmatmul.mubr.bf16.gmra.mxu0 %v660
  %v722 = vpop.f32.mrf.mxu0
  %v723 = vadd.f32 %v578, %v722
  %v724 = vpop.f32.mrf.mxu0
  %v725 = vpop.f32.mrf.mxu0
  %v726 = vadd.f32 %v581, %v725
  %v727 = vpop.f32.mrf.mxu0
  %728 = vmatprep.mubr.bf16.mxu0 0
  %729 = vmatmul.mubr.bf16.gmra.mxu0 %v663
  %v730 = vpop.f32.mrf.mxu0
  %v731 = vadd.f32 %v586, %v730
  %v732 = vpop.f32.mrf.mxu0
  %v733 = vpop.f32.mrf.mxu0
  %v734 = vadd.f32 %v589, %v733
  %v735 = vpop.f32.mrf.mxu0
  %736 = vmatprep.mubr.bf16.mxu0 0
  %737 = vmatmul.mubr.bf16.gmra.mxu0 %v666
  %v738 = vpop.f32.mrf.mxu0
  %v739 = vadd.f32 %v594, %v738
  %v740 = vpop.f32.mrf.mxu0
  %v741 = vpop.f32.mrf.mxu0
  %v742 = vadd.f32 %v597, %v741
  %v743 = vpop.f32.mrf.mxu0
  %744 = vmatprep.mubr.bf16.mxu0 0
  %745 = vmatmul.mubr.bf16.gmra.mxu0 %v669
  %v746 = vpop.f32.mrf.mxu0
  %v747 = vadd.f32 %v602, %v746
  %v748 = vpop.f32.mrf.mxu0
  %v749 = vpop.f32.mrf.mxu0
  %v750 = vadd.f32 %v605, %v749
  %v751 = vpop.f32.mrf.mxu0
  %752 = vmatprep.mubr.bf16.mxu0 0
  %753 = vmatmul.mubr.bf16.gmra.mxu0 %v672
  %v754 = vpop.f32.mrf.mxu0
  %v755 = vadd.f32 %v610, %v754
  %v756 = vpop.f32.mrf.mxu0
  %v757 = vpop.f32.mrf.mxu0
  %v758 = vadd.f32 %v613, %v757
  %v759 = vpop.f32.mrf.mxu0
  %760 = vmatprep.mubr.bf16.mxu0 0
  %761 = vmatmul.mubr.bf16.gmra.mxu0 %v675
  %v762 = vpop.f32.mrf.mxu0
  %v763 = vadd.f32 %v618, %v762
  %v764 = vpop.f32.mrf.mxu0
  %v765 = vpop.f32.mrf.mxu0
  %v766 = vadd.f32 %v621, %v765
  %v767 = vpop.f32.mrf.mxu0
  %768 = vmatprep.mubr.bf16.mxu0 0
  %769 = vmatmul.mubr.bf16.gmra.mxu0 %v678
  %v770 = vpop.f32.mrf.mxu0
  %v771 = vadd.f32 %v626, %v770
  %v772 = vpop.f32.mrf.mxu0
  %v773 = vpop.f32.mrf.mxu0
  %v774 = vadd.f32 %v629, %v773
  %v775 = vpop.f32.mrf.mxu0
  %776 = vdwg.mxu0
  %v777 = vld [vmem:[#allocation2 + $0x8] sm:$0xff]
  %v778 = vld [vmem:[#allocation2 + $0x10] sm:$0xff]
  %v779 = vld [vmem:[#allocation2 + $0x18] sm:$0xff]
  %v780 = vld [vmem:[#allocation2 + $0x20] sm:$0xff]
  %v781 = vld [vmem:[#allocation2 + $0x28] sm:$0xff]
  %v782 = vld [vmem:[#allocation2 + $0x30] sm:$0xff]
  %v783 = vld [vmem:[#allocation2 + $0x38] sm:$0xff]
  %v784 = vld [vmem:[#allocation2 + $0x40] sm:$0xff]
  %v785 = vld [vmem:[#allocation2 + $0x48] sm:$0xff]
  %v786 = vld [vmem:[#allocation2 + $0x50] sm:$0xff]
  %v787 = vld [vmem:[#allocation2 + $0x58] sm:$0xff]
  %v788 = vld [vmem:[#allocation2 + $0x60] sm:$0xff]
  %v789 = vld [vmem:[#allocation2 + $0x68] sm:$0xff]
  %v790 = vld [vmem:[#allocation2 + $0x70] sm:$0xff]
  %v791 = vld [vmem:[#allocation2 + $0x78] sm:$0xff]
  %v792 = vld [vmem:[#allocation2 + $0x80] sm:$0xff]
  %s793 = scalar_lea.vmem %s1, 256
  %v794 = vld [vmem:[%s793] sm:$0xff]
  %v795 = vld [vmem:[%s793 + $0x8] sm:$0xff]
  %v796 = vld [vmem:[%s793 + $0x10] sm:$0xff]
  %v797 = vld [vmem:[%s793 + $0x18] sm:$0xff]
  %v798 = vld [vmem:[%s793 + $0x20] sm:$0xff]
  %v799 = vld [vmem:[%s793 + $0x28] sm:$0xff]
  %v800 = vld [vmem:[%s793 + $0x30] sm:$0xff]
  %v801 = vld [vmem:[%s793 + $0x38] sm:$0xff]
  %v802 = vld [vmem:[%s793 + $0x40] sm:$0xff]
  %v803 = vld [vmem:[%s793 + $0x48] sm:$0xff]
  %v804 = vld [vmem:[%s793 + $0x50] sm:$0xff]
  %v805 = vld [vmem:[%s793 + $0x58] sm:$0xff]
  %v806 = vld [vmem:[%s793 + $0x60] sm:$0xff]
  %v807 = vld [vmem:[%s793 + $0x68] sm:$0xff]
  %v808 = vld [vmem:[%s793 + $0x70] sm:$0xff]
  %v809 = vld [vmem:[%s793 + $0x78] sm:$0xff]
  %vm810 = vcmp.gt.f32.partialorder %v794, 0.0
  %vm811 = vcmp.gt.f32.partialorder %v795, 0.0
  %vm812 = vcmp.gt.f32.partialorder %v796, 0.0
  %vm813 = vcmp.gt.f32.partialorder %v797, 0.0
  %vm814 = vcmp.gt.f32.partialorder %v798, 0.0
  %vm815 = vcmp.gt.f32.partialorder %v799, 0.0
  %vm816 = vcmp.gt.f32.partialorder %v800, 0.0
  %vm817 = vcmp.gt.f32.partialorder %v801, 0.0
  %vm818 = vcmp.gt.f32.partialorder %v802, 0.0
  %vm819 = vcmp.gt.f32.partialorder %v803, 0.0
  %vm820 = vcmp.gt.f32.partialorder %v804, 0.0
  %vm821 = vcmp.gt.f32.partialorder %v805, 0.0
  %vm822 = vcmp.gt.f32.partialorder %v806, 0.0
  %vm823 = vcmp.gt.f32.partialorder %v807, 0.0
  %vm824 = vcmp.gt.f32.partialorder %v808, 0.0
  %vm825 = vcmp.gt.f32.partialorder %v809, 0.0
  %v826 = vsel %vm810, %v777, 0.0
  %v827 = vsel %vm811, %v778, 0.0
  %v828 = vsel %vm812, %v779, 0.0
  %v829 = vsel %vm813, %v780, 0.0
  %v830 = vsel %vm814, %v781, 0.0
  %v831 = vsel %vm815, %v782, 0.0
  %v832 = vsel %vm816, %v783, 0.0
  %v833 = vsel %vm817, %v784, 0.0
  %v834 = vsel %vm818, %v785, 0.0
  %v835 = vsel %vm819, %v786, 0.0
  %v836 = vsel %vm820, %v787, 0.0
  %v837 = vsel %vm821, %v788, 0.0
  %v838 = vsel %vm822, %v789, 0.0
  %v839 = vsel %vm823, %v790, 0.0
  %v840 = vsel %vm824, %v791, 0.0
  %v841 = vsel %vm825, %v792, 0.0
  %v842 = vpack.c.bf16 %v827, %v826
  %v843 = vpack.c.bf16 %v829, %v828
  %v844 = vpack.c.bf16 %v831, %v830
  %v845 = vpack.c.bf16 %v833, %v832
  %v846 = vpack.c.bf16 %v835, %v834
  %v847 = vpack.c.bf16 %v837, %v836
  %v848 = vpack.c.bf16 %v839, %v838
  %v849 = vpack.c.bf16 %v841, %v840
  %v850 = vld [vmem:[%s4 + $0x40] sm:$0xf]
  %v851 = vld [vmem:[%s4 + $0x44] sm:$0xf]
  %v852 = vld [vmem:[%s4 + $0x48] sm:$0xf]
  %v853 = vld [vmem:[%s4 + $0x4c] sm:$0xf]
  %v854 = vld [vmem:[%s4 + $0x50] sm:$0xf]
  %v855 = vld [vmem:[%s4 + $0x54] sm:$0xf]
  %v856 = vld [vmem:[%s4 + $0x58] sm:$0xf]
  %v857 = vld [vmem:[%s4 + $0x5c] sm:$0xf]
  %v866 = vunpack.c.l.b16 %v850
  %v867 = vunpack.c.l.b16 %v851
  %v868 = vunpack.c.l.b16 %v852
  %v869 = vunpack.c.l.b16 %v853
  %v870 = vunpack.c.l.b16 %v854
  %v871 = vunpack.c.l.b16 %v855
  %v872 = vunpack.c.l.b16 %v856
  %v873 = vunpack.c.l.b16 %v857
  %v874 = vpack.c.b16 %v867, %v866
  %v875 = vpack.c.b16 %v869, %v868
  %v876 = vpack.c.b16 %v871, %v870
  %v877 = vpack.c.b16 %v873, %v872
  %v883 = vsel %vm31, %v842, 0
  %v886 = vsel %vm31, %v843, 0
  %v889 = vsel %vm31, %v844, 0
  %v892 = vsel %vm31, %v845, 0
  %v895 = vsel %vm31, %v846, 0
  %v898 = vsel %vm31, %v847, 0
  %v901 = vsel %vm31, %v848, 0
  %v904 = vsel %vm31, %v849, 0
  %906 = vmatprep.subr.bf16.mxu0 0
  %907 = vmatpush1.bf16.msra.mxu0 0
  %908 = vmatprep.subr.bf16.mxu0 0
  %909 = vmatpush1.bf16.msra.mxu0 0
  %910 = vmatprep.subr.bf16.mxu0 0
  %911 = vmatpush1.bf16.msra.mxu0 0
  %912 = vmatprep.subr.bf16.mxu0 0
  %913 = vmatpush1.bf16.msra.mxu0 0
  %914 = vmatprep.subr.bf16.mxu0 0
  %915 = vmatpush1.bf16.msra.mxu0 %v877
  %916 = vmatprep.subr.bf16.mxu0 0
  %917 = vmatpush1.bf16.msra.mxu0 %v876
  %918 = vmatprep.subr.bf16.mxu0 0
  %919 = vmatpush1.bf16.msra.mxu0 %v875
  %920 = vmatprep.subr.bf16.mxu0 0
  %921 = vmatpush1.bf16.msra.mxu0 %v874
  %922 = vmatprep.subr.bf16.mxu0 0
  %923 = vmatpush2.bf16.msra.mxu0 0
  %924 = vmatprep.subr.bf16.mxu0 0
  %925 = vmatpush2.bf16.msra.mxu0 0
  %926 = vmatprep.subr.bf16.mxu0 0
  %927 = vmatpush2.bf16.msra.mxu0 0
  %928 = vmatprep.subr.bf16.mxu0 0
  %929 = vmatpush2.bf16.msra.mxu0 0
  %930 = vmatprep.subr.bf16.mxu0 0
  %931 = vmatpush2.bf16.msra.mxu0 0
  %932 = vmatprep.subr.bf16.mxu0 0
  %933 = vmatpush2.bf16.msra.mxu0 0
  %934 = vmatprep.subr.bf16.mxu0 0
  %935 = vmatpush2.bf16.msra.mxu0 0
  %936 = vmatprep.subr.bf16.mxu0 0
  %937 = vmatpush2.bf16.msra.mxu0 0
  %938 = vmatprep.mubr.bf16.mxu0 0
  %939 = vmatmul.mubr.bf16.gmra.mxu0 %v883
  %v940 = vpop.f32.mrf.mxu0
  %v941 = vadd.f32 0.0, %v940
  %v942 = vpop.f32.mrf.mxu0
  %v943 = vpop.f32.mrf.mxu0
  %v944 = vadd.f32 0.0, %v943
  %v945 = vpop.f32.mrf.mxu0
  %946 = vmatprep.mubr.bf16.mxu0 0
  %947 = vmatmul.mubr.bf16.gmra.mxu0 %v886
  %v948 = vpop.f32.mrf.mxu0
  %v949 = vadd.f32 0.0, %v948
  %v950 = vpop.f32.mrf.mxu0
  %v951 = vpop.f32.mrf.mxu0
  %v952 = vadd.f32 0.0, %v951
  %v953 = vpop.f32.mrf.mxu0
  %954 = vmatprep.mubr.bf16.mxu0 0
  %955 = vmatmul.mubr.bf16.gmra.mxu0 %v889
  %v956 = vpop.f32.mrf.mxu0
  %v957 = vadd.f32 0.0, %v956
  %v958 = vpop.f32.mrf.mxu0
  %v959 = vpop.f32.mrf.mxu0
  %v960 = vadd.f32 0.0, %v959
  %v961 = vpop.f32.mrf.mxu0
  %962 = vmatprep.mubr.bf16.mxu0 0
  %963 = vmatmul.mubr.bf16.gmra.mxu0 %v892
  %v964 = vpop.f32.mrf.mxu0
  %v965 = vadd.f32 0.0, %v964
  %v966 = vpop.f32.mrf.mxu0
  %v967 = vpop.f32.mrf.mxu0
  %v968 = vadd.f32 0.0, %v967
  %v969 = vpop.f32.mrf.mxu0
  %970 = vmatprep.mubr.bf16.mxu0 0
  %971 = vmatmul.mubr.bf16.gmra.mxu0 %v895
  %v972 = vpop.f32.mrf.mxu0
  %v973 = vadd.f32 0.0, %v972
  %v974 = vpop.f32.mrf.mxu0
  %v975 = vpop.f32.mrf.mxu0
  %v976 = vadd.f32 0.0, %v975
  %v977 = vpop.f32.mrf.mxu0
  %978 = vmatprep.mubr.bf16.mxu0 0
  %979 = vmatmul.mubr.bf16.gmra.mxu0 %v898
  %v980 = vpop.f32.mrf.mxu0
  %v981 = vadd.f32 0.0, %v980
  %v982 = vpop.f32.mrf.mxu0
  %v983 = vpop.f32.mrf.mxu0
  %v984 = vadd.f32 0.0, %v983
  %v985 = vpop.f32.mrf.mxu0
  %986 = vmatprep.mubr.bf16.mxu0 0
  %987 = vmatmul.mubr.bf16.gmra.mxu0 %v901
  %v988 = vpop.f32.mrf.mxu0
  %v989 = vadd.f32 0.0, %v988
  %v990 = vpop.f32.mrf.mxu0
  %v991 = vpop.f32.mrf.mxu0
  %v992 = vadd.f32 0.0, %v991
  %v993 = vpop.f32.mrf.mxu0
  %994 = vmatprep.mubr.bf16.mxu0 0
  %995 = vmatmul.mubr.bf16.gmra.mxu0 %v904
  %v996 = vpop.f32.mrf.mxu0
  %v997 = vadd.f32 0.0, %v996
  %v998 = vpop.f32.mrf.mxu0
  %v999 = vpop.f32.mrf.mxu0
  %v1000 = vadd.f32 0.0, %v999
  %v1001 = vpop.f32.mrf.mxu0
  %1002 = vdwg.mxu0
  %v1003 = vadd.f32 %v715, %v941
  %v1004 = vadd.f32 %v718, %v944
  %v1005 = vadd.f32 %v723, %v949
  %v1006 = vadd.f32 %v726, %v952
  %v1007 = vadd.f32 %v731, %v957
  %v1008 = vadd.f32 %v734, %v960
  %v1009 = vadd.f32 %v739, %v965
  %v1010 = vadd.f32 %v742, %v968
  %v1011 = vadd.f32 %v747, %v973
  %v1012 = vadd.f32 %v750, %v976
  %v1013 = vadd.f32 %v755, %v981
  %v1014 = vadd.f32 %v758, %v984
  %v1015 = vadd.f32 %v763, %v989
  %v1016 = vadd.f32 %v766, %v992
  %v1017 = vadd.f32 %v771, %v997
  %v1018 = vadd.f32 %v774, %v1000
  %v1019 = vld [vmem:[#allocation2 + $0xf] sm:$0xff]
  %v1020 = vld [vmem:[#allocation2 + $0x17] sm:$0xff]
  %v1021 = vld [vmem:[#allocation2 + $0x1f] sm:$0xff]
  %v1022 = vld [vmem:[#allocation2 + $0x27] sm:$0xff]
  %v1023 = vld [vmem:[#allocation2 + $0x2f] sm:$0xff]
  %v1024 = vld [vmem:[#allocation2 + $0x37] sm:$0xff]
  %v1025 = vld [vmem:[#allocation2 + $0x3f] sm:$0xff]
  %v1026 = vld [vmem:[#allocation2 + $0x47] sm:$0xff]
  %v1027 = vld [vmem:[#allocation2 + $0x4f] sm:$0xff]
  %v1028 = vld [vmem:[#allocation2 + $0x57] sm:$0xff]
  %v1029 = vld [vmem:[#allocation2 + $0x5f] sm:$0xff]
  %v1030 = vld [vmem:[#allocation2 + $0x67] sm:$0xff]
  %v1031 = vld [vmem:[#allocation2 + $0x6f] sm:$0xff]
  %v1032 = vld [vmem:[#allocation2 + $0x77] sm:$0xff]
  %v1033 = vld [vmem:[#allocation2 + $0x7f] sm:$0xff]
  %v1034 = vld [vmem:[#allocation2 + $0x87] sm:$0xff]
  %s1035 = scalar_lea.vmem %s1, 384
  %v1036 = vld [vmem:[%s1035] sm:$0xff]
  %v1037 = vld [vmem:[%s1035 + $0x8] sm:$0xff]
  %v1038 = vld [vmem:[%s1035 + $0x10] sm:$0xff]
  %v1039 = vld [vmem:[%s1035 + $0x18] sm:$0xff]
  %v1040 = vld [vmem:[%s1035 + $0x20] sm:$0xff]
  %v1041 = vld [vmem:[%s1035 + $0x28] sm:$0xff]
  %v1042 = vld [vmem:[%s1035 + $0x30] sm:$0xff]
  %v1043 = vld [vmem:[%s1035 + $0x38] sm:$0xff]
  %v1044 = vld [vmem:[%s1035 + $0x40] sm:$0xff]
  %v1045 = vld [vmem:[%s1035 + $0x48] sm:$0xff]
  %v1046 = vld [vmem:[%s1035 + $0x50] sm:$0xff]
  %v1047 = vld [vmem:[%s1035 + $0x58] sm:$0xff]
  %v1048 = vld [vmem:[%s1035 + $0x60] sm:$0xff]
  %v1049 = vld [vmem:[%s1035 + $0x68] sm:$0xff]
  %v1050 = vld [vmem:[%s1035 + $0x70] sm:$0xff]
  %v1051 = vld [vmem:[%s1035 + $0x78] sm:$0xff]
  %vm1052 = vcmp.gt.f32.partialorder %v1036, 0.0
  %vm1053 = vcmp.gt.f32.partialorder %v1037, 0.0
  %vm1054 = vcmp.gt.f32.partialorder %v1038, 0.0
  %vm1055 = vcmp.gt.f32.partialorder %v1039, 0.0
  %vm1056 = vcmp.gt.f32.partialorder %v1040, 0.0
  %vm1057 = vcmp.gt.f32.partialorder %v1041, 0.0
  %vm1058 = vcmp.gt.f32.partialorder %v1042, 0.0
  %vm1059 = vcmp.gt.f32.partialorder %v1043, 0.0
  %vm1060 = vcmp.gt.f32.partialorder %v1044, 0.0
  %vm1061 = vcmp.gt.f32.partialorder %v1045, 0.0
  %vm1062 = vcmp.gt.f32.partialorder %v1046, 0.0
  %vm1063 = vcmp.gt.f32.partialorder %v1047, 0.0
  %vm1064 = vcmp.gt.f32.partialorder %v1048, 0.0
  %vm1065 = vcmp.gt.f32.partialorder %v1049, 0.0
  %vm1066 = vcmp.gt.f32.partialorder %v1050, 0.0
  %vm1067 = vcmp.gt.f32.partialorder %v1051, 0.0
  %v1068 = vsel %vm1052, %v1019, 0.0
  %v1069 = vsel %vm1053, %v1020, 0.0
  %v1070 = vsel %vm1054, %v1021, 0.0
  %v1071 = vsel %vm1055, %v1022, 0.0
  %v1072 = vsel %vm1056, %v1023, 0.0
  %v1073 = vsel %vm1057, %v1024, 0.0
  %v1074 = vsel %vm1058, %v1025, 0.0
  %v1075 = vsel %vm1059, %v1026, 0.0
  %v1076 = vsel %vm1060, %v1027, 0.0
  %v1077 = vsel %vm1061, %v1028, 0.0
  %v1078 = vsel %vm1062, %v1029, 0.0
  %v1079 = vsel %vm1063, %v1030, 0.0
  %v1080 = vsel %vm1064, %v1031, 0.0
  %v1081 = vsel %vm1065, %v1032, 0.0
  %v1082 = vsel %vm1066, %v1033, 0.0
  %v1083 = vsel %vm1067, %v1034, 0.0
  %v1084 = vpack.c.bf16 %v1069, %v1068
  %v1085 = vpack.c.bf16 %v1071, %v1070
  %v1086 = vpack.c.bf16 %v1073, %v1072
  %v1087 = vpack.c.bf16 %v1075, %v1074
  %v1088 = vpack.c.bf16 %v1077, %v1076
  %v1089 = vpack.c.bf16 %v1079, %v1078
  %v1090 = vpack.c.bf16 %v1081, %v1080
  %v1091 = vpack.c.bf16 %v1083, %v1082
  %v1092 = vld [vmem:[%s4 + $0x60] sm:$0xf]
  %v1093 = vld [vmem:[%s4 + $0x64] sm:$0xf]
  %v1094 = vld [vmem:[%s4 + $0x68] sm:$0xf]
  %v1095 = vld [vmem:[%s4 + $0x6c] sm:$0xf]
  %v1096 = vld [vmem:[%s4 + $0x70] sm:$0xf]
  %v1097 = vld [vmem:[%s4 + $0x74] sm:$0xf]
  %v1098 = vld [vmem:[%s4 + $0x78] sm:$0xf]
  %v1099 = vld [vmem:[%s4 + $0x7c] sm:$0xf]
  %v1108 = vunpack.c.l.b16 %v1092
  %v1109 = vunpack.c.l.b16 %v1093
  %v1110 = vunpack.c.l.b16 %v1094
  %v1111 = vunpack.c.l.b16 %v1095
  %v1112 = vunpack.c.l.b16 %v1096
  %v1113 = vunpack.c.l.b16 %v1097
  %v1114 = vunpack.c.l.b16 %v1098
  %v1115 = vunpack.c.l.b16 %v1099
  %v1116 = vpack.c.b16 %v1109, %v1108
  %v1117 = vpack.c.b16 %v1111, %v1110
  %v1118 = vpack.c.b16 %v1113, %v1112
  %v1119 = vpack.c.b16 %v1115, %v1114
  %v1125 = vsel %vm31, %v1084, 0
  %v1128 = vsel %vm31, %v1085, 0
  %v1131 = vsel %vm31, %v1086, 0
  %v1134 = vsel %vm31, %v1087, 0
  %v1137 = vsel %vm31, %v1088, 0
  %v1140 = vsel %vm31, %v1089, 0
  %v1143 = vsel %vm31, %v1090, 0
  %v1146 = vsel %vm31, %v1091, 0
  %1148 = vmatprep.subr.bf16.mxu0 0
  %1149 = vmatpush1.bf16.msra.mxu0 0
  %1150 = vmatprep.subr.bf16.mxu0 0
  %1151 = vmatpush1.bf16.msra.mxu0 0
  %1152 = vmatprep.subr.bf16.mxu0 0
  %1153 = vmatpush1.bf16.msra.mxu0 0
  %1154 = vmatprep.subr.bf16.mxu0 0
  %1155 = vmatpush1.bf16.msra.mxu0 0
  %1156 = vmatprep.subr.bf16.mxu0 0
  %1157 = vmatpush1.bf16.msra.mxu0 %v1119
  %1158 = vmatprep.subr.bf16.mxu0 0
  %1159 = vmatpush1.bf16.msra.mxu0 %v1118
  %1160 = vmatprep.subr.bf16.mxu0 0
  %1161 = vmatpush1.bf16.msra.mxu0 %v1117
  %1162 = vmatprep.subr.bf16.mxu0 0
  %1163 = vmatpush1.bf16.msra.mxu0 %v1116
  %1164 = vmatprep.subr.bf16.mxu0 0
  %1165 = vmatpush2.bf16.msra.mxu0 0
  %1166 = vmatprep.subr.bf16.mxu0 0
  %1167 = vmatpush2.bf16.msra.mxu0 0
  %1168 = vmatprep.subr.bf16.mxu0 0
  %1169 = vmatpush2.bf16.msra.mxu0 0
  %1170 = vmatprep.subr.bf16.mxu0 0
  %1171 = vmatpush2.bf16.msra.mxu0 0
  %1172 = vmatprep.subr.bf16.mxu0 0
  %1173 = vmatpush2.bf16.msra.mxu0 0
  %1174 = vmatprep.subr.bf16.mxu0 0
  %1175 = vmatpush2.bf16.msra.mxu0 0
  %1176 = vmatprep.subr.bf16.mxu0 0
  %1177 = vmatpush2.bf16.msra.mxu0 0
  %1178 = vmatprep.subr.bf16.mxu0 0
  %1179 = vmatpush2.bf16.msra.mxu0 0
  %1180 = vmatprep.mubr.bf16.mxu0 0
  %1181 = vmatmul.mubr.bf16.gmra.mxu0 %v1125
  %v1182 = vpop.f32.mrf.mxu0
  %v1183 = vadd.f32 0.0, %v1182
  %v1184 = vpop.f32.mrf.mxu0
  %v1185 = vpop.f32.mrf.mxu0
  %v1186 = vadd.f32 0.0, %v1185
  %v1187 = vpop.f32.mrf.mxu0
  %1188 = vmatprep.mubr.bf16.mxu0 0
  %1189 = vmatmul.mubr.bf16.gmra.mxu0 %v1128
  %v1190 = vpop.f32.mrf.mxu0
  %v1191 = vadd.f32 0.0, %v1190
  %v1192 = vpop.f32.mrf.mxu0
  %v1193 = vpop.f32.mrf.mxu0
  %v1194 = vadd.f32 0.0, %v1193
  %v1195 = vpop.f32.mrf.mxu0
  %1196 = vmatprep.mubr.bf16.mxu0 0
  %1197 = vmatmul.mubr.bf16.gmra.mxu0 %v1131
  %v1198 = vpop.f32.mrf.mxu0
  %v1199 = vadd.f32 0.0, %v1198
  %v1200 = vpop.f32.mrf.mxu0
  %v1201 = vpop.f32.mrf.mxu0
  %v1202 = vadd.f32 0.0, %v1201
  %v1203 = vpop.f32.mrf.mxu0
  %1204 = vmatprep.mubr.bf16.mxu0 0
  %1205 = vmatmul.mubr.bf16.gmra.mxu0 %v1134
  %v1206 = vpop.f32.mrf.mxu0
  %v1207 = vadd.f32 0.0, %v1206
  %v1208 = vpop.f32.mrf.mxu0
  %v1209 = vpop.f32.mrf.mxu0
  %v1210 = vadd.f32 0.0, %v1209
  %v1211 = vpop.f32.mrf.mxu0
  %1212 = vmatprep.mubr.bf16.mxu0 0
  %1213 = vmatmul.mubr.bf16.gmra.mxu0 %v1137
  %v1214 = vpop.f32.mrf.mxu0
  %v1215 = vadd.f32 0.0, %v1214
  %v1216 = vpop.f32.mrf.mxu0
  %v1217 = vpop.f32.mrf.mxu0
  %v1218 = vadd.f32 0.0, %v1217
  %v1219 = vpop.f32.mrf.mxu0
  %1220 = vmatprep.mubr.bf16.mxu0 0
  %1221 = vmatmul.mubr.bf16.gmra.mxu0 %v1140
  %v1222 = vpop.f32.mrf.mxu0
  %v1223 = vadd.f32 0.0, %v1222
  %v1224 = vpop.f32.mrf.mxu0
  %v1225 = vpop.f32.mrf.mxu0
  %v1226 = vadd.f32 0.0, %v1225
  %v1227 = vpop.f32.mrf.mxu0
  %1228 = vmatprep.mubr.bf16.mxu0 0
  %1229 = vmatmul.mubr.bf16.gmra.mxu0 %v1143
  %v1230 = vpop.f32.mrf.mxu0
  %v1231 = vadd.f32 0.0, %v1230
  %v1232 = vpop.f32.mrf.mxu0
  %v1233 = vpop.f32.mrf.mxu0
  %v1234 = vadd.f32 0.0, %v1233
  %v1235 = vpop.f32.mrf.mxu0
  %1236 = vmatprep.mubr.bf16.mxu0 0
  %1237 = vmatmul.mubr.bf16.gmra.mxu0 %v1146
  %v1238 = vpop.f32.mrf.mxu0
  %v1239 = vadd.f32 0.0, %v1238
  %v1240 = vpop.f32.mrf.mxu0
  %v1241 = vpop.f32.mrf.mxu0
  %v1242 = vadd.f32 0.0, %v1241
  %v1243 = vpop.f32.mrf.mxu0
  %1244 = vdwg.mxu0
  %v1245 = vadd.f32 %v1003, %v1183
  %v1246 = vadd.f32 %v1004, %v1186
  %v1247 = vadd.f32 %v1005, %v1191
  %v1248 = vadd.f32 %v1006, %v1194
  %v1249 = vadd.f32 %v1007, %v1199
  %v1250 = vadd.f32 %v1008, %v1202
  %v1251 = vadd.f32 %v1009, %v1207
  %v1252 = vadd.f32 %v1010, %v1210
  %v1253 = vadd.f32 %v1011, %v1215
  %v1254 = vadd.f32 %v1012, %v1218
  %v1255 = vadd.f32 %v1013, %v1223
  %v1256 = vadd.f32 %v1014, %v1226
  %v1257 = vadd.f32 %v1015, %v1231
  %v1258 = vadd.f32 %v1016, %v1234
  %v1259 = vadd.f32 %v1017, %v1239
  %v1260 = vadd.f32 %v1018, %v1242
  %v1261 = vld [vmem:[#allocation2 + $0x10] sm:$0xff]
  %v1262 = vld [vmem:[#allocation2 + $0x18] sm:$0xff]
  %v1263 = vld [vmem:[#allocation2 + $0x20] sm:$0xff]
  %v1264 = vld [vmem:[#allocation2 + $0x28] sm:$0xff]
  %v1265 = vld [vmem:[#allocation2 + $0x30] sm:$0xff]
  %v1266 = vld [vmem:[#allocation2 + $0x38] sm:$0xff]
  %v1267 = vld [vmem:[#allocation2 + $0x40] sm:$0xff]
  %v1268 = vld [vmem:[#allocation2 + $0x48] sm:$0xff]
  %v1269 = vld [vmem:[#allocation2 + $0x50] sm:$0xff]
  %v1270 = vld [vmem:[#allocation2 + $0x58] sm:$0xff]
  %v1271 = vld [vmem:[#allocation2 + $0x60] sm:$0xff]
  %v1272 = vld [vmem:[#allocation2 + $0x68] sm:$0xff]
  %v1273 = vld [vmem:[#allocation2 + $0x70] sm:$0xff]
  %v1274 = vld [vmem:[#allocation2 + $0x78] sm:$0xff]
  %v1275 = vld [vmem:[#allocation2 + $0x80] sm:$0xff]
  %v1276 = vld [vmem:[#allocation2 + $0x88] sm:$0xff]
  %s1277 = scalar_lea.vmem %s1, 512
  %v1278 = vld [vmem:[%s1277] sm:$0xff]
  %v1279 = vld [vmem:[%s1277 + $0x8] sm:$0xff]
  %v1280 = vld [vmem:[%s1277 + $0x10] sm:$0xff]
  %v1281 = vld [vmem:[%s1277 + $0x18] sm:$0xff]
  %v1282 = vld [vmem:[%s1277 + $0x20] sm:$0xff]
  %v1283 = vld [vmem:[%s1277 + $0x28] sm:$0xff]
  %v1284 = vld [vmem:[%s1277 + $0x30] sm:$0xff]
  %v1285 = vld [vmem:[%s1277 + $0x38] sm:$0xff]
  %v1286 = vld [vmem:[%s1277 + $0x40] sm:$0xff]
  %v1287 = vld [vmem:[%s1277 + $0x48] sm:$0xff]
  %v1288 = vld [vmem:[%s1277 + $0x50] sm:$0xff]
  %v1289 = vld [vmem:[%s1277 + $0x58] sm:$0xff]
  %v1290 = vld [vmem:[%s1277 + $0x60] sm:$0xff]
  %v1291 = vld [vmem:[%s1277 + $0x68] sm:$0xff]
  %v1292 = vld [vmem:[%s1277 + $0x70] sm:$0xff]
  %v1293 = vld [vmem:[%s1277 + $0x78] sm:$0xff]
  %vm1294 = vcmp.gt.f32.partialorder %v1278, 0.0
  %vm1295 = vcmp.gt.f32.partialorder %v1279, 0.0
  %vm1296 = vcmp.gt.f32.partialorder %v1280, 0.0
  %vm1297 = vcmp.gt.f32.partialorder %v1281, 0.0
  %vm1298 = vcmp.gt.f32.partialorder %v1282, 0.0
  %vm1299 = vcmp.gt.f32.partialorder %v1283, 0.0
  %vm1300 = vcmp.gt.f32.partialorder %v1284, 0.0
  %vm1301 = vcmp.gt.f32.partialorder %v1285, 0.0
  %vm1302 = vcmp.gt.f32.partialorder %v1286, 0.0
  %vm1303 = vcmp.gt.f32.partialorder %v1287, 0.0
  %vm1304 = vcmp.gt.f32.partialorder %v1288, 0.0
  %vm1305 = vcmp.gt.f32.partialorder %v1289, 0.0
  %vm1306 = vcmp.gt.f32.partialorder %v1290, 0.0
  %vm1307 = vcmp.gt.f32.partialorder %v1291, 0.0
  %vm1308 = vcmp.gt.f32.partialorder %v1292, 0.0
  %vm1309 = vcmp.gt.f32.partialorder %v1293, 0.0
  %v1310 = vsel %vm1294, %v1261, 0.0
  %v1311 = vsel %vm1295, %v1262, 0.0
  %v1312 = vsel %vm1296, %v1263, 0.0
  %v1313 = vsel %vm1297, %v1264, 0.0
  %v1314 = vsel %vm1298, %v1265, 0.0
  %v1315 = vsel %vm1299, %v1266, 0.0
  %v1316 = vsel %vm1300, %v1267, 0.0
  %v1317 = vsel %vm1301, %v1268, 0.0
  %v1318 = vsel %vm1302, %v1269, 0.0
  %v1319 = vsel %vm1303, %v1270, 0.0
  %v1320 = vsel %vm1304, %v1271, 0.0
  %v1321 = vsel %vm1305, %v1272, 0.0
  %v1322 = vsel %vm1306, %v1273, 0.0
  %v1323 = vsel %vm1307, %v1274, 0.0
  %v1324 = vsel %vm1308, %v1275, 0.0
  %v1325 = vsel %vm1309, %v1276, 0.0
  %v1326 = vpack.c.bf16 %v1311, %v1310
  %v1327 = vpack.c.bf16 %v1313, %v1312
  %v1328 = vpack.c.bf16 %v1315, %v1314
  %v1329 = vpack.c.bf16 %v1317, %v1316
  %v1330 = vpack.c.bf16 %v1319, %v1318
  %v1331 = vpack.c.bf16 %v1321, %v1320
  %v1332 = vpack.c.bf16 %v1323, %v1322
  %v1333 = vpack.c.bf16 %v1325, %v1324
  %v1334 = vld [vmem:[%s4 + $0x80] sm:$0xf]
  %v1335 = vld [vmem:[%s4 + $0x84] sm:$0xf]
  %v1336 = vld [vmem:[%s4 + $0x88] sm:$0xf]
  %v1337 = vld [vmem:[%s4 + $0x8c] sm:$0xf]
  %v1338 = vld [vmem:[%s4 + $0x90] sm:$0xf]
  %v1339 = vld [vmem:[%s4 + $0x94] sm:$0xf]
  %v1340 = vld [vmem:[%s4 + $0x98] sm:$0xf]
  %v1341 = vld [vmem:[%s4 + $0x9c] sm:$0xf]
  %v1350 = vunpack.c.l.b16 %v1334
  %v1351 = vunpack.c.l.b16 %v1335
  %v1352 = vunpack.c.l.b16 %v1336
  %v1353 = vunpack.c.l.b16 %v1337
  %v1354 = vunpack.c.l.b16 %v1338
  %v1355 = vunpack.c.l.b16 %v1339
  %v1356 = vunpack.c.l.b16 %v1340
  %v1357 = vunpack.c.l.b16 %v1341
  %v1358 = vpack.c.b16 %v1351, %v1350
  %v1359 = vpack.c.b16 %v1353, %v1352
  %v1360 = vpack.c.b16 %v1355, %v1354
  %v1361 = vpack.c.b16 %v1357, %v1356
  %v1367 = vsel %vm31, %v1326, 0
  %v1370 = vsel %vm31, %v1327, 0
  %v1373 = vsel %vm31, %v1328, 0
  %v1376 = vsel %vm31, %v1329, 0
  %v1379 = vsel %vm31, %v1330, 0
  %v1382 = vsel %vm31, %v1331, 0
  %v1385 = vsel %vm31, %v1332, 0
  %v1388 = vsel %vm31, %v1333, 0
  %1390 = vmatprep.subr.bf16.mxu0 0
  %1391 = vmatpush1.bf16.msra.mxu0 0
  %1392 = vmatprep.subr.bf16.mxu0 0
  %1393 = vmatpush1.bf16.msra.mxu0 0
  %1394 = vmatprep.subr.bf16.mxu0 0
  %1395 = vmatpush1.bf16.msra.mxu0 0
  %1396 = vmatprep.subr.bf16.mxu0 0
  %1397 = vmatpush1.bf16.msra.mxu0 0
  %1398 = vmatprep.subr.bf16.mxu0 0
  %1399 = vmatpush1.bf16.msra.mxu0 %v1361
  %1400 = vmatprep.subr.bf16.mxu0 0
  %1401 = vmatpush1.bf16.msra.mxu0 %v1360
  %1402 = vmatprep.subr.bf16.mxu0 0
  %1403 = vmatpush1.bf16.msra.mxu0 %v1359
  %1404 = vmatprep.subr.bf16.mxu0 0
  %1405 = vmatpush1.bf16.msra.mxu0 %v1358
  %1406 = vmatprep.subr.bf16.mxu0 0
  %1407 = vmatpush2.bf16.msra.mxu0 0
  %1408 = vmatprep.subr.bf16.mxu0 0
  %1409 = vmatpush2.bf16.msra.mxu0 0
  %1410 = vmatprep.subr.bf16.mxu0 0
  %1411 = vmatpush2.bf16.msra.mxu0 0
  %1412 = vmatprep.subr.bf16.mxu0 0
  %1413 = vmatpush2.bf16.msra.mxu0 0
  %1414 = vmatprep.subr.bf16.mxu0 0
  %1415 = vmatpush2.bf16.msra.mxu0 0
  %1416 = vmatprep.subr.bf16.mxu0 0
  %1417 = vmatpush2.bf16.msra.mxu0 0
  %1418 = vmatprep.subr.bf16.mxu0 0
  %1419 = vmatpush2.bf16.msra.mxu0 0
  %1420 = vmatprep.subr.bf16.mxu0 0
  %1421 = vmatpush2.bf16.msra.mxu0 0
  %1422 = vmatprep.mubr.bf16.mxu0 0
  %1423 = vmatmul.mubr.bf16.gmra.mxu0 %v1367
  %v1424 = vpop.f32.mrf.mxu0
  %v1425 = vadd.f32 0.0, %v1424
  %v1426 = vpop.f32.mrf.mxu0
  %v1427 = vpop.f32.mrf.mxu0
  %v1428 = vadd.f32 0.0, %v1427
  %v1429 = vpop.f32.mrf.mxu0
  %1430 = vmatprep.mubr.bf16.mxu0 0
  %1431 = vmatmul.mubr.bf16.gmra.mxu0 %v1370
  %v1432 = vpop.f32.mrf.mxu0
  %v1433 = vadd.f32 0.0, %v1432
  %v1434 = vpop.f32.mrf.mxu0
  %v1435 = vpop.f32.mrf.mxu0
  %v1436 = vadd.f32 0.0, %v1435
  %v1437 = vpop.f32.mrf.mxu0
  %1438 = vmatprep.mubr.bf16.mxu0 0
  %1439 = vmatmul.mubr.bf16.gmra.mxu0 %v1373
  %v1440 = vpop.f32.mrf.mxu0
  %v1441 = vadd.f32 0.0, %v1440
  %v1442 = vpop.f32.mrf.mxu0
  %v1443 = vpop.f32.mrf.mxu0
  %v1444 = vadd.f32 0.0, %v1443
  %v1445 = vpop.f32.mrf.mxu0
  %1446 = vmatprep.mubr.bf16.mxu0 0
  %1447 = vmatmul.mubr.bf16.gmra.mxu0 %v1376
  %v1448 = vpop.f32.mrf.mxu0
  %v1449 = vadd.f32 0.0, %v1448
  %v1450 = vpop.f32.mrf.mxu0
  %v1451 = vpop.f32.mrf.mxu0
  %v1452 = vadd.f32 0.0, %v1451
  %v1453 = vpop.f32.mrf.mxu0
  %1454 = vmatprep.mubr.bf16.mxu0 0
  %1455 = vmatmul.mubr.bf16.gmra.mxu0 %v1379
  %v1456 = vpop.f32.mrf.mxu0
  %v1457 = vadd.f32 0.0, %v1456
  %v1458 = vpop.f32.mrf.mxu0
  %v1459 = vpop.f32.mrf.mxu0
  %v1460 = vadd.f32 0.0, %v1459
  %v1461 = vpop.f32.mrf.mxu0
  %1462 = vmatprep.mubr.bf16.mxu0 0
  %1463 = vmatmul.mubr.bf16.gmra.mxu0 %v1382
  %v1464 = vpop.f32.mrf.mxu0
  %v1465 = vadd.f32 0.0, %v1464
  %v1466 = vpop.f32.mrf.mxu0
  %v1467 = vpop.f32.mrf.mxu0
  %v1468 = vadd.f32 0.0, %v1467
  %v1469 = vpop.f32.mrf.mxu0
  %1470 = vmatprep.mubr.bf16.mxu0 0
  %1471 = vmatmul.mubr.bf16.gmra.mxu0 %v1385
  %v1472 = vpop.f32.mrf.mxu0
  %v1473 = vadd.f32 0.0, %v1472
  %v1474 = vpop.f32.mrf.mxu0
  %v1475 = vpop.f32.mrf.mxu0
  %v1476 = vadd.f32 0.0, %v1475
  %v1477 = vpop.f32.mrf.mxu0
  %1478 = vmatprep.mubr.bf16.mxu0 0
  %1479 = vmatmul.mubr.bf16.gmra.mxu0 %v1388
  %v1480 = vpop.f32.mrf.mxu0
  %v1481 = vadd.f32 0.0, %v1480
  %v1482 = vpop.f32.mrf.mxu0
  %v1483 = vpop.f32.mrf.mxu0
  %v1484 = vadd.f32 0.0, %v1483
  %v1485 = vpop.f32.mrf.mxu0
  %1486 = vdwg.mxu0
  %v1487 = vadd.f32 %v1245, %v1425
  %v1488 = vadd.f32 %v1246, %v1428
  %v1489 = vadd.f32 %v1247, %v1433
  %v1490 = vadd.f32 %v1248, %v1436
  %v1491 = vadd.f32 %v1249, %v1441
  %v1492 = vadd.f32 %v1250, %v1444
  %v1493 = vadd.f32 %v1251, %v1449
  %v1494 = vadd.f32 %v1252, %v1452
  %v1495 = vadd.f32 %v1253, %v1457
  %v1496 = vadd.f32 %v1254, %v1460
  %v1497 = vadd.f32 %v1255, %v1465
  %v1498 = vadd.f32 %v1256, %v1468
  %v1499 = vadd.f32 %v1257, %v1473
  %v1500 = vadd.f32 %v1258, %v1476
  %v1501 = vadd.f32 %v1259, %v1481
  %v1502 = vadd.f32 %v1260, %v1484
  %v1503 = vld [vmem:[#allocation2 + $0x11] sm:$0xff]
  %v1504 = vld [vmem:[#allocation2 + $0x19] sm:$0xff]
  %v1505 = vld [vmem:[#allocation2 + $0x21] sm:$0xff]
  %v1506 = vld [vmem:[#allocation2 + $0x29] sm:$0xff]
  %v1507 = vld [vmem:[#allocation2 + $0x31] sm:$0xff]
  %v1508 = vld [vmem:[#allocation2 + $0x39] sm:$0xff]
  %v1509 = vld [vmem:[#allocation2 + $0x41] sm:$0xff]
  %v1510 = vld [vmem:[#allocation2 + $0x49] sm:$0xff]
  %v1511 = vld [vmem:[#allocation2 + $0x51] sm:$0xff]
  %v1512 = vld [vmem:[#allocation2 + $0x59] sm:$0xff]
  %v1513 = vld [vmem:[#allocation2 + $0x61] sm:$0xff]
  %v1514 = vld [vmem:[#allocation2 + $0x69] sm:$0xff]
  %v1515 = vld [vmem:[#allocation2 + $0x71] sm:$0xff]
  %v1516 = vld [vmem:[#allocation2 + $0x79] sm:$0xff]
  %v1517 = vld [vmem:[#allocation2 + $0x81] sm:$0xff]
  %v1518 = vld [vmem:[#allocation2 + $0x89] sm:$0xff]
  %s1519 = scalar_lea.vmem %s1, 640
  %v1520 = vld [vmem:[%s1519] sm:$0xff]
  %v1521 = vld [vmem:[%s1519 + $0x8] sm:$0xff]
  %v1522 = vld [vmem:[%s1519 + $0x10] sm:$0xff]
  %v1523 = vld [vmem:[%s1519 + $0x18] sm:$0xff]
  %v1524 = vld [vmem:[%s1519 + $0x20] sm:$0xff]
  %v1525 = vld [vmem:[%s1519 + $0x28] sm:$0xff]
  %v1526 = vld [vmem:[%s1519 + $0x30] sm:$0xff]
  %v1527 = vld [vmem:[%s1519 + $0x38] sm:$0xff]
  %v1528 = vld [vmem:[%s1519 + $0x40] sm:$0xff]
  %v1529 = vld [vmem:[%s1519 + $0x48] sm:$0xff]
  %v1530 = vld [vmem:[%s1519 + $0x50] sm:$0xff]
  %v1531 = vld [vmem:[%s1519 + $0x58] sm:$0xff]
  %v1532 = vld [vmem:[%s1519 + $0x60] sm:$0xff]
  %v1533 = vld [vmem:[%s1519 + $0x68] sm:$0xff]
  %v1534 = vld [vmem:[%s1519 + $0x70] sm:$0xff]
  %v1535 = vld [vmem:[%s1519 + $0x78] sm:$0xff]
  %vm1536 = vcmp.gt.f32.partialorder %v1520, 0.0
  %vm1537 = vcmp.gt.f32.partialorder %v1521, 0.0
  %vm1538 = vcmp.gt.f32.partialorder %v1522, 0.0
  %vm1539 = vcmp.gt.f32.partialorder %v1523, 0.0
  %vm1540 = vcmp.gt.f32.partialorder %v1524, 0.0
  %vm1541 = vcmp.gt.f32.partialorder %v1525, 0.0
  %vm1542 = vcmp.gt.f32.partialorder %v1526, 0.0
  %vm1543 = vcmp.gt.f32.partialorder %v1527, 0.0
  %vm1544 = vcmp.gt.f32.partialorder %v1528, 0.0
  %vm1545 = vcmp.gt.f32.partialorder %v1529, 0.0
  %vm1546 = vcmp.gt.f32.partialorder %v1530, 0.0
  %vm1547 = vcmp.gt.f32.partialorder %v1531, 0.0
  %vm1548 = vcmp.gt.f32.partialorder %v1532, 0.0
  %vm1549 = vcmp.gt.f32.partialorder %v1533, 0.0
  %vm1550 = vcmp.gt.f32.partialorder %v1534, 0.0
  %vm1551 = vcmp.gt.f32.partialorder %v1535, 0.0
  %v1552 = vsel %vm1536, %v1503, 0.0
  %v1553 = vsel %vm1537, %v1504, 0.0
  %v1554 = vsel %vm1538, %v1505, 0.0
  %v1555 = vsel %vm1539, %v1506, 0.0
  %v1556 = vsel %vm1540, %v1507, 0.0
  %v1557 = vsel %vm1541, %v1508, 0.0
  %v1558 = vsel %vm1542, %v1509, 0.0
  %v1559 = vsel %vm1543, %v1510, 0.0
  %v1560 = vsel %vm1544, %v1511, 0.0
  %v1561 = vsel %vm1545, %v1512, 0.0
  %v1562 = vsel %vm1546, %v1513, 0.0
  %v1563 = vsel %vm1547, %v1514, 0.0
  %v1564 = vsel %vm1548, %v1515, 0.0
  %v1565 = vsel %vm1549, %v1516, 0.0
  %v1566 = vsel %vm1550, %v1517, 0.0
  %v1567 = vsel %vm1551, %v1518, 0.0
  %v1568 = vpack.c.bf16 %v1553, %v1552
  %v1569 = vpack.c.bf16 %v1555, %v1554
  %v1570 = vpack.c.bf16 %v1557, %v1556
  %v1571 = vpack.c.bf16 %v1559, %v1558
  %v1572 = vpack.c.bf16 %v1561, %v1560
  %v1573 = vpack.c.bf16 %v1563, %v1562
  %v1574 = vpack.c.bf16 %v1565, %v1564
  %v1575 = vpack.c.bf16 %v1567, %v1566
  %v1576 = vld [vmem:[%s4 + $0xa0] sm:$0xf]
  %v1577 = vld [vmem:[%s4 + $0xa4] sm:$0xf]
  %v1578 = vld [vmem:[%s4 + $0xa8] sm:$0xf]
  %v1579 = vld [vmem:[%s4 + $0xac] sm:$0xf]
  %v1580 = vld [vmem:[%s4 + $0xb0] sm:$0xf]
  %v1581 = vld [vmem:[%s4 + $0xb4] sm:$0xf]
  %v1582 = vld [vmem:[%s4 + $0xb8] sm:$0xf]
  %v1583 = vld [vmem:[%s4 + $0xbc] sm:$0xf]
  %v1592 = vunpack.c.l.b16 %v1576
  %v1593 = vunpack.c.l.b16 %v1577
  %v1594 = vunpack.c.l.b16 %v1578
  %v1595 = vunpack.c.l.b16 %v1579
  %v1596 = vunpack.c.l.b16 %v1580
  %v1597 = vunpack.c.l.b16 %v1581
  %v1598 = vunpack.c.l.b16 %v1582
  %v1599 = vunpack.c.l.b16 %v1583
  %v1600 = vpack.c.b16 %v1593, %v1592
  %v1601 = vpack.c.b16 %v1595, %v1594
  %v1602 = vpack.c.b16 %v1597, %v1596
  %v1603 = vpack.c.b16 %v1599, %v1598
  %v1609 = vsel %vm31, %v1568, 0
  %v1612 = vsel %vm31, %v1569, 0
  %v1615 = vsel %vm31, %v1570, 0
  %v1618 = vsel %vm31, %v1571, 0
  %v1621 = vsel %vm31, %v1572, 0
  %v1624 = vsel %vm31, %v1573, 0
  %v1627 = vsel %vm31, %v1574, 0
  %v1630 = vsel %vm31, %v1575, 0
  %1632 = vmatprep.subr.bf16.mxu0 0
  %1633 = vmatpush1.bf16.msra.mxu0 0
  %1634 = vmatprep.subr.bf16.mxu0 0
  %1635 = vmatpush1.bf16.msra.mxu0 0
  %1636 = vmatprep.subr.bf16.mxu0 0
  %1637 = vmatpush1.bf16.msra.mxu0 0
  %1638 = vmatprep.subr.bf16.mxu0 0
  %1639 = vmatpush1.bf16.msra.mxu0 0
  %1640 = vmatprep.subr.bf16.mxu0 0
  %1641 = vmatpush1.bf16.msra.mxu0 %v1603
  %1642 = vmatprep.subr.bf16.mxu0 0
  %1643 = vmatpush1.bf16.msra.mxu0 %v1602
  %1644 = vmatprep.subr.bf16.mxu0 0
  %1645 = vmatpush1.bf16.msra.mxu0 %v1601
  %1646 = vmatprep.subr.bf16.mxu0 0
  %1647 = vmatpush1.bf16.msra.mxu0 %v1600
  %1648 = vmatprep.subr.bf16.mxu0 0
  %1649 = vmatpush2.bf16.msra.mxu0 0
  %1650 = vmatprep.subr.bf16.mxu0 0
  %1651 = vmatpush2.bf16.msra.mxu0 0
  %1652 = vmatprep.subr.bf16.mxu0 0
  %1653 = vmatpush2.bf16.msra.mxu0 0
  %1654 = vmatprep.subr.bf16.mxu0 0
  %1655 = vmatpush2.bf16.msra.mxu0 0
  %1656 = vmatprep.subr.bf16.mxu0 0
  %1657 = vmatpush2.bf16.msra.mxu0 0
  %1658 = vmatprep.subr.bf16.mxu0 0
  %1659 = vmatpush2.bf16.msra.mxu0 0
  %1660 = vmatprep.subr.bf16.mxu0 0
  %1661 = vmatpush2.bf16.msra.mxu0 0
  %1662 = vmatprep.subr.bf16.mxu0 0
  %1663 = vmatpush2.bf16.msra.mxu0 0
  %1664 = vmatprep.mubr.bf16.mxu0 0
  %1665 = vmatmul.mubr.bf16.gmra.mxu0 %v1609
  %v1666 = vpop.f32.mrf.mxu0
  %v1667 = vadd.f32 0.0, %v1666
  %v1668 = vpop.f32.mrf.mxu0
  %v1669 = vpop.f32.mrf.mxu0
  %v1670 = vadd.f32 0.0, %v1669
  %v1671 = vpop.f32.mrf.mxu0
  %1672 = vmatprep.mubr.bf16.mxu0 0
  %1673 = vmatmul.mubr.bf16.gmra.mxu0 %v1612
  %v1674 = vpop.f32.mrf.mxu0
  %v1675 = vadd.f32 0.0, %v1674
  %v1676 = vpop.f32.mrf.mxu0
  %v1677 = vpop.f32.mrf.mxu0
  %v1678 = vadd.f32 0.0, %v1677
  %v1679 = vpop.f32.mrf.mxu0
  %1680 = vmatprep.mubr.bf16.mxu0 0
  %1681 = vmatmul.mubr.bf16.gmra.mxu0 %v1615
  %v1682 = vpop.f32.mrf.mxu0
  %v1683 = vadd.f32 0.0, %v1682
  %v1684 = vpop.f32.mrf.mxu0
  %v1685 = vpop.f32.mrf.mxu0
  %v1686 = vadd.f32 0.0, %v1685
  %v1687 = vpop.f32.mrf.mxu0
  %1688 = vmatprep.mubr.bf16.mxu0 0
  %1689 = vmatmul.mubr.bf16.gmra.mxu0 %v1618
  %v1690 = vpop.f32.mrf.mxu0
  %v1691 = vadd.f32 0.0, %v1690
  %v1692 = vpop.f32.mrf.mxu0
  %v1693 = vpop.f32.mrf.mxu0
  %v1694 = vadd.f32 0.0, %v1693
  %v1695 = vpop.f32.mrf.mxu0
  %1696 = vmatprep.mubr.bf16.mxu0 0
  %1697 = vmatmul.mubr.bf16.gmra.mxu0 %v1621
  %v1698 = vpop.f32.mrf.mxu0
  %v1699 = vadd.f32 0.0, %v1698
  %v1700 = vpop.f32.mrf.mxu0
  %v1701 = vpop.f32.mrf.mxu0
  %v1702 = vadd.f32 0.0, %v1701
  %v1703 = vpop.f32.mrf.mxu0
  %1704 = vmatprep.mubr.bf16.mxu0 0
  %1705 = vmatmul.mubr.bf16.gmra.mxu0 %v1624
  %v1706 = vpop.f32.mrf.mxu0
  %v1707 = vadd.f32 0.0, %v1706
  %v1708 = vpop.f32.mrf.mxu0
  %v1709 = vpop.f32.mrf.mxu0
  %v1710 = vadd.f32 0.0, %v1709
  %v1711 = vpop.f32.mrf.mxu0
  %1712 = vmatprep.mubr.bf16.mxu0 0
  %1713 = vmatmul.mubr.bf16.gmra.mxu0 %v1627
  %v1714 = vpop.f32.mrf.mxu0
  %v1715 = vadd.f32 0.0, %v1714
  %v1716 = vpop.f32.mrf.mxu0
  %v1717 = vpop.f32.mrf.mxu0
  %v1718 = vadd.f32 0.0, %v1717
  %v1719 = vpop.f32.mrf.mxu0
  %1720 = vmatprep.mubr.bf16.mxu0 0
  %1721 = vmatmul.mubr.bf16.gmra.mxu0 %v1630
  %v1722 = vpop.f32.mrf.mxu0
  %v1723 = vadd.f32 0.0, %v1722
  %v1724 = vpop.f32.mrf.mxu0
  %v1725 = vpop.f32.mrf.mxu0
  %v1726 = vadd.f32 0.0, %v1725
  %v1727 = vpop.f32.mrf.mxu0
  %1728 = vdwg.mxu0
  %v1729 = vadd.f32 %v1487, %v1667
  %v1730 = vadd.f32 %v1488, %v1670
  %v1731 = vadd.f32 %v1489, %v1675
  %v1732 = vadd.f32 %v1490, %v1678
  %v1733 = vadd.f32 %v1491, %v1683
  %v1734 = vadd.f32 %v1492, %v1686
  %v1735 = vadd.f32 %v1493, %v1691
  %v1736 = vadd.f32 %v1494, %v1694
  %v1737 = vadd.f32 %v1495, %v1699
  %v1738 = vadd.f32 %v1496, %v1702
  %v1739 = vadd.f32 %v1497, %v1707
  %v1740 = vadd.f32 %v1498, %v1710
  %v1741 = vadd.f32 %v1499, %v1715
  %v1742 = vadd.f32 %v1500, %v1718
  %v1743 = vadd.f32 %v1501, %v1723
  %v1744 = vadd.f32 %v1502, %v1726
  %v1745 = vld [vmem:[#allocation2 + $0x18] sm:$0xff]
  %v1746 = vld [vmem:[#allocation2 + $0x20] sm:$0xff]
  %v1747 = vld [vmem:[#allocation2 + $0x28] sm:$0xff]
  %v1748 = vld [vmem:[#allocation2 + $0x30] sm:$0xff]
  %v1749 = vld [vmem:[#allocation2 + $0x38] sm:$0xff]
  %v1750 = vld [vmem:[#allocation2 + $0x40] sm:$0xff]
  %v1751 = vld [vmem:[#allocation2 + $0x48] sm:$0xff]
  %v1752 = vld [vmem:[#allocation2 + $0x50] sm:$0xff]
  %v1753 = vld [vmem:[#allocation2 + $0x58] sm:$0xff]
  %v1754 = vld [vmem:[#allocation2 + $0x60] sm:$0xff]
  %v1755 = vld [vmem:[#allocation2 + $0x68] sm:$0xff]
  %v1756 = vld [vmem:[#allocation2 + $0x70] sm:$0xff]
  %v1757 = vld [vmem:[#allocation2 + $0x78] sm:$0xff]
  %v1758 = vld [vmem:[#allocation2 + $0x80] sm:$0xff]
  %v1759 = vld [vmem:[#allocation2 + $0x88] sm:$0xff]
  %v1760 = vld [vmem:[#allocation2 + $0x90] sm:$0xff]
  %s1761 = scalar_lea.vmem %s1, 768
  %v1762 = vld [vmem:[%s1761] sm:$0xff]
  %v1763 = vld [vmem:[%s1761 + $0x8] sm:$0xff]
  %v1764 = vld [vmem:[%s1761 + $0x10] sm:$0xff]
  %v1765 = vld [vmem:[%s1761 + $0x18] sm:$0xff]
  %v1766 = vld [vmem:[%s1761 + $0x20] sm:$0xff]
  %v1767 = vld [vmem:[%s1761 + $0x28] sm:$0xff]
  %v1768 = vld [vmem:[%s1761 + $0x30] sm:$0xff]
  %v1769 = vld [vmem:[%s1761 + $0x38] sm:$0xff]
  %v1770 = vld [vmem:[%s1761 + $0x40] sm:$0xff]
  %v1771 = vld [vmem:[%s1761 + $0x48] sm:$0xff]
  %v1772 = vld [vmem:[%s1761 + $0x50] sm:$0xff]
  %v1773 = vld [vmem:[%s1761 + $0x58] sm:$0xff]
  %v1774 = vld [vmem:[%s1761 + $0x60] sm:$0xff]
  %v1775 = vld [vmem:[%s1761 + $0x68] sm:$0xff]
  %v1776 = vld [vmem:[%s1761 + $0x70] sm:$0xff]
  %v1777 = vld [vmem:[%s1761 + $0x78] sm:$0xff]
  %vm1778 = vcmp.gt.f32.partialorder %v1762, 0.0
  %vm1779 = vcmp.gt.f32.partialorder %v1763, 0.0
  %vm1780 = vcmp.gt.f32.partialorder %v1764, 0.0
  %vm1781 = vcmp.gt.f32.partialorder %v1765, 0.0
  %vm1782 = vcmp.gt.f32.partialorder %v1766, 0.0
  %vm1783 = vcmp.gt.f32.partialorder %v1767, 0.0
  %vm1784 = vcmp.gt.f32.partialorder %v1768, 0.0
  %vm1785 = vcmp.gt.f32.partialorder %v1769, 0.0
  %vm1786 = vcmp.gt.f32.partialorder %v1770, 0.0
  %vm1787 = vcmp.gt.f32.partialorder %v1771, 0.0
  %vm1788 = vcmp.gt.f32.partialorder %v1772, 0.0
  %vm1789 = vcmp.gt.f32.partialorder %v1773, 0.0
  %vm1790 = vcmp.gt.f32.partialorder %v1774, 0.0
  %vm1791 = vcmp.gt.f32.partialorder %v1775, 0.0
  %vm1792 = vcmp.gt.f32.partialorder %v1776, 0.0
  %vm1793 = vcmp.gt.f32.partialorder %v1777, 0.0
  %v1794 = vsel %vm1778, %v1745, 0.0
  %v1795 = vsel %vm1779, %v1746, 0.0
  %v1796 = vsel %vm1780, %v1747, 0.0
  %v1797 = vsel %vm1781, %v1748, 0.0
  %v1798 = vsel %vm1782, %v1749, 0.0
  %v1799 = vsel %vm1783, %v1750, 0.0
  %v1800 = vsel %vm1784, %v1751, 0.0
  %v1801 = vsel %vm1785, %v1752, 0.0
  %v1802 = vsel %vm1786, %v1753, 0.0
  %v1803 = vsel %vm1787, %v1754, 0.0
  %v1804 = vsel %vm1788, %v1755, 0.0
  %v1805 = vsel %vm1789, %v1756, 0.0
  %v1806 = vsel %vm1790, %v1757, 0.0
  %v1807 = vsel %vm1791, %v1758, 0.0
  %v1808 = vsel %vm1792, %v1759, 0.0
  %v1809 = vsel %vm1793, %v1760, 0.0
  %v1810 = vpack.c.bf16 %v1795, %v1794
  %v1811 = vpack.c.bf16 %v1797, %v1796
  %v1812 = vpack.c.bf16 %v1799, %v1798
  %v1813 = vpack.c.bf16 %v1801, %v1800
  %v1814 = vpack.c.bf16 %v1803, %v1802
  %v1815 = vpack.c.bf16 %v1805, %v1804
  %v1816 = vpack.c.bf16 %v1807, %v1806
  %v1817 = vpack.c.bf16 %v1809, %v1808
  %v1818 = vld [vmem:[%s4 + $0xc0] sm:$0xf]
  %v1819 = vld [vmem:[%s4 + $0xc4] sm:$0xf]
  %v1820 = vld [vmem:[%s4 + $0xc8] sm:$0xf]
  %v1821 = vld [vmem:[%s4 + $0xcc] sm:$0xf]
  %v1822 = vld [vmem:[%s4 + $0xd0] sm:$0xf]
  %v1823 = vld [vmem:[%s4 + $0xd4] sm:$0xf]
  %v1824 = vld [vmem:[%s4 + $0xd8] sm:$0xf]
  %v1825 = vld [vmem:[%s4 + $0xdc] sm:$0xf]
  %v1834 = vunpack.c.l.b16 %v1818
  %v1835 = vunpack.c.l.b16 %v1819
  %v1836 = vunpack.c.l.b16 %v1820
  %v1837 = vunpack.c.l.b16 %v1821
  %v1838 = vunpack.c.l.b16 %v1822
  %v1839 = vunpack.c.l.b16 %v1823
  %v1840 = vunpack.c.l.b16 %v1824
  %v1841 = vunpack.c.l.b16 %v1825
  %v1842 = vpack.c.b16 %v1835, %v1834
  %v1843 = vpack.c.b16 %v1837, %v1836
  %v1844 = vpack.c.b16 %v1839, %v1838
  %v1845 = vpack.c.b16 %v1841, %v1840
  %v1851 = vsel %vm31, %v1810, 0
  %v1854 = vsel %vm31, %v1811, 0
  %v1857 = vsel %vm31, %v1812, 0
  %v1860 = vsel %vm31, %v1813, 0
  %v1863 = vsel %vm31, %v1814, 0
  %v1866 = vsel %vm31, %v1815, 0
  %v1869 = vsel %vm31, %v1816, 0
  %v1872 = vsel %vm31, %v1817, 0
  %1874 = vmatprep.subr.bf16.mxu0 0
  %1875 = vmatpush1.bf16.msra.mxu0 0
  %1876 = vmatprep.subr.bf16.mxu0 0
  %1877 = vmatpush1.bf16.msra.mxu0 0
  %1878 = vmatprep.subr.bf16.mxu0 0
  %1879 = vmatpush1.bf16.msra.mxu0 0
  %1880 = vmatprep.subr.bf16.mxu0 0
  %1881 = vmatpush1.bf16.msra.mxu0 0
  %1882 = vmatprep.subr.bf16.mxu0 0
  %1883 = vmatpush1.bf16.msra.mxu0 %v1845
  %1884 = vmatprep.subr.bf16.mxu0 0
  %1885 = vmatpush1.bf16.msra.mxu0 %v1844
  %1886 = vmatprep.subr.bf16.mxu0 0
  %1887 = vmatpush1.bf16.msra.mxu0 %v1843
  %1888 = vmatprep.subr.bf16.mxu0 0
  %1889 = vmatpush1.bf16.msra.mxu0 %v1842
  %1890 = vmatprep.subr.bf16.mxu0 0
  %1891 = vmatpush2.bf16.msra.mxu0 0
  %1892 = vmatprep.subr.bf16.mxu0 0
  %1893 = vmatpush2.bf16.msra.mxu0 0
  %1894 = vmatprep.subr.bf16.mxu0 0
  %1895 = vmatpush2.bf16.msra.mxu0 0
  %1896 = vmatprep.subr.bf16.mxu0 0
  %1897 = vmatpush2.bf16.msra.mxu0 0
  %1898 = vmatprep.subr.bf16.mxu0 0
  %1899 = vmatpush2.bf16.msra.mxu0 0
  %1900 = vmatprep.subr.bf16.mxu0 0
  %1901 = vmatpush2.bf16.msra.mxu0 0
  %1902 = vmatprep.subr.bf16.mxu0 0
  %1903 = vmatpush2.bf16.msra.mxu0 0
  %1904 = vmatprep.subr.bf16.mxu0 0
  %1905 = vmatpush2.bf16.msra.mxu0 0
  %1906 = vmatprep.mubr.bf16.mxu0 0
  %1907 = vmatmul.mubr.bf16.gmra.mxu0 %v1851
  %v1908 = vpop.f32.mrf.mxu0
  %v1909 = vadd.f32 0.0, %v1908
  %v1910 = vpop.f32.mrf.mxu0
  %v1911 = vpop.f32.mrf.mxu0
  %v1912 = vadd.f32 0.0, %v1911
  %v1913 = vpop.f32.mrf.mxu0
  %1914 = vmatprep.mubr.bf16.mxu0 0
  %1915 = vmatmul.mubr.bf16.gmra.mxu0 %v1854
  %v1916 = vpop.f32.mrf.mxu0
  %v1917 = vadd.f32 0.0, %v1916
  %v1918 = vpop.f32.mrf.mxu0
  %v1919 = vpop.f32.mrf.mxu0
  %v1920 = vadd.f32 0.0, %v1919
  %v1921 = vpop.f32.mrf.mxu0
  %1922 = vmatprep.mubr.bf16.mxu0 0
  %1923 = vmatmul.mubr.bf16.gmra.mxu0 %v1857
  %v1924 = vpop.f32.mrf.mxu0
  %v1925 = vadd.f32 0.0, %v1924
  %v1926 = vpop.f32.mrf.mxu0
  %v1927 = vpop.f32.mrf.mxu0
  %v1928 = vadd.f32 0.0, %v1927
  %v1929 = vpop.f32.mrf.mxu0
  %1930 = vmatprep.mubr.bf16.mxu0 0
  %1931 = vmatmul.mubr.bf16.gmra.mxu0 %v1860
  %v1932 = vpop.f32.mrf.mxu0
  %v1933 = vadd.f32 0.0, %v1932
  %v1934 = vpop.f32.mrf.mxu0
  %v1935 = vpop.f32.mrf.mxu0
  %v1936 = vadd.f32 0.0, %v1935
  %v1937 = vpop.f32.mrf.mxu0
  %1938 = vmatprep.mubr.bf16.mxu0 0
  %1939 = vmatmul.mubr.bf16.gmra.mxu0 %v1863
  %v1940 = vpop.f32.mrf.mxu0
  %v1941 = vadd.f32 0.0, %v1940
  %v1942 = vpop.f32.mrf.mxu0
  %v1943 = vpop.f32.mrf.mxu0
  %v1944 = vadd.f32 0.0, %v1943
  %v1945 = vpop.f32.mrf.mxu0
  %1946 = vmatprep.mubr.bf16.mxu0 0
  %1947 = vmatmul.mubr.bf16.gmra.mxu0 %v1866
  %v1948 = vpop.f32.mrf.mxu0
  %v1949 = vadd.f32 0.0, %v1948
  %v1950 = vpop.f32.mrf.mxu0
  %v1951 = vpop.f32.mrf.mxu0
  %v1952 = vadd.f32 0.0, %v1951
  %v1953 = vpop.f32.mrf.mxu0
  %1954 = vmatprep.mubr.bf16.mxu0 0
  %1955 = vmatmul.mubr.bf16.gmra.mxu0 %v1869
  %v1956 = vpop.f32.mrf.mxu0
  %v1957 = vadd.f32 0.0, %v1956
  %v1958 = vpop.f32.mrf.mxu0
  %v1959 = vpop.f32.mrf.mxu0
  %v1960 = vadd.f32 0.0, %v1959
  %v1961 = vpop.f32.mrf.mxu0
  %1962 = vmatprep.mubr.bf16.mxu0 0
  %1963 = vmatmul.mubr.bf16.gmra.mxu0 %v1872
  %v1964 = vpop.f32.mrf.mxu0
  %v1965 = vadd.f32 0.0, %v1964
  %v1966 = vpop.f32.mrf.mxu0
  %v1967 = vpop.f32.mrf.mxu0
  %v1968 = vadd.f32 0.0, %v1967
  %v1969 = vpop.f32.mrf.mxu0
  %1970 = vdwg.mxu0
  %v1971 = vadd.f32 %v1729, %v1909
  %v1972 = vadd.f32 %v1730, %v1912
  %v1973 = vadd.f32 %v1731, %v1917
  %v1974 = vadd.f32 %v1732, %v1920
  %v1975 = vadd.f32 %v1733, %v1925
  %v1976 = vadd.f32 %v1734, %v1928
  %v1977 = vadd.f32 %v1735, %v1933
  %v1978 = vadd.f32 %v1736, %v1936
  %v1979 = vadd.f32 %v1737, %v1941
  %v1980 = vadd.f32 %v1738, %v1944
  %v1981 = vadd.f32 %v1739, %v1949
  %v1982 = vadd.f32 %v1740, %v1952
  %v1983 = vadd.f32 %v1741, %v1957
  %v1984 = vadd.f32 %v1742, %v1960
  %v1985 = vadd.f32 %v1743, %v1965
  %v1986 = vadd.f32 %v1744, %v1968
  %v1987 = vld [vmem:[#allocation2 + $0x19] sm:$0xff]
  %v1988 = vld [vmem:[#allocation2 + $0x21] sm:$0xff]
  %v1989 = vld [vmem:[#allocation2 + $0x29] sm:$0xff]
  %v1990 = vld [vmem:[#allocation2 + $0x31] sm:$0xff]
  %v1991 = vld [vmem:[#allocation2 + $0x39] sm:$0xff]
  %v1992 = vld [vmem:[#allocation2 + $0x41] sm:$0xff]
  %v1993 = vld [vmem:[#allocation2 + $0x49] sm:$0xff]
  %v1994 = vld [vmem:[#allocation2 + $0x51] sm:$0xff]
  %v1995 = vld [vmem:[#allocation2 + $0x59] sm:$0xff]
  %v1996 = vld [vmem:[#allocation2 + $0x61] sm:$0xff]
  %v1997 = vld [vmem:[#allocation2 + $0x69] sm:$0xff]
  %v1998 = vld [vmem:[#allocation2 + $0x71] sm:$0xff]
  %v1999 = vld [vmem:[#allocation2 + $0x79] sm:$0xff]
  %v2000 = vld [vmem:[#allocation2 + $0x81] sm:$0xff]
  %v2001 = vld [vmem:[#allocation2 + $0x89] sm:$0xff]
  %v2002 = vld [vmem:[#allocation2 + $0x91] sm:$0xff]
  %s2003 = scalar_lea.vmem %s1, 896
  %v2004 = vld [vmem:[%s2003] sm:$0xff]
  %v2005 = vld [vmem:[%s2003 + $0x8] sm:$0xff]
  %v2006 = vld [vmem:[%s2003 + $0x10] sm:$0xff]
  %v2007 = vld [vmem:[%s2003 + $0x18] sm:$0xff]
  %v2008 = vld [vmem:[%s2003 + $0x20] sm:$0xff]
  %v2009 = vld [vmem:[%s2003 + $0x28] sm:$0xff]
  %v2010 = vld [vmem:[%s2003 + $0x30] sm:$0xff]
  %v2011 = vld [vmem:[%s2003 + $0x38] sm:$0xff]
  %v2012 = vld [vmem:[%s2003 + $0x40] sm:$0xff]
  %v2013 = vld [vmem:[%s2003 + $0x48] sm:$0xff]
  %v2014 = vld [vmem:[%s2003 + $0x50] sm:$0xff]
  %v2015 = vld [vmem:[%s2003 + $0x58] sm:$0xff]
  %v2016 = vld [vmem:[%s2003 + $0x60] sm:$0xff]
  %v2017 = vld [vmem:[%s2003 + $0x68] sm:$0xff]
  %v2018 = vld [vmem:[%s2003 + $0x70] sm:$0xff]
  %v2019 = vld [vmem:[%s2003 + $0x78] sm:$0xff]
  %vm2020 = vcmp.gt.f32.partialorder %v2004, 0.0
  %vm2021 = vcmp.gt.f32.partialorder %v2005, 0.0
  %vm2022 = vcmp.gt.f32.partialorder %v2006, 0.0
  %vm2023 = vcmp.gt.f32.partialorder %v2007, 0.0
  %vm2024 = vcmp.gt.f32.partialorder %v2008, 0.0
  %vm2025 = vcmp.gt.f32.partialorder %v2009, 0.0
  %vm2026 = vcmp.gt.f32.partialorder %v2010, 0.0
  %vm2027 = vcmp.gt.f32.partialorder %v2011, 0.0
  %vm2028 = vcmp.gt.f32.partialorder %v2012, 0.0
  %vm2029 = vcmp.gt.f32.partialorder %v2013, 0.0
  %vm2030 = vcmp.gt.f32.partialorder %v2014, 0.0
  %vm2031 = vcmp.gt.f32.partialorder %v2015, 0.0
  %vm2032 = vcmp.gt.f32.partialorder %v2016, 0.0
  %vm2033 = vcmp.gt.f32.partialorder %v2017, 0.0
  %vm2034 = vcmp.gt.f32.partialorder %v2018, 0.0
  %vm2035 = vcmp.gt.f32.partialorder %v2019, 0.0
  %v2036 = vsel %vm2020, %v1987, 0.0
  %v2037 = vsel %vm2021, %v1988, 0.0
  %v2038 = vsel %vm2022, %v1989, 0.0
  %v2039 = vsel %vm2023, %v1990, 0.0
  %v2040 = vsel %vm2024, %v1991, 0.0
  %v2041 = vsel %vm2025, %v1992, 0.0
  %v2042 = vsel %vm2026, %v1993, 0.0
  %v2043 = vsel %vm2027, %v1994, 0.0
  %v2044 = vsel %vm2028, %v1995, 0.0
  %v2045 = vsel %vm2029, %v1996, 0.0
  %v2046 = vsel %vm2030, %v1997, 0.0
  %v2047 = vsel %vm2031, %v1998, 0.0
  %v2048 = vsel %vm2032, %v1999, 0.0
  %v2049 = vsel %vm2033, %v2000, 0.0
  %v2050 = vsel %vm2034, %v2001, 0.0
  %v2051 = vsel %vm2035, %v2002, 0.0
  %v2052 = vpack.c.bf16 %v2037, %v2036
  %v2053 = vpack.c.bf16 %v2039, %v2038
  %v2054 = vpack.c.bf16 %v2041, %v2040
  %v2055 = vpack.c.bf16 %v2043, %v2042
  %v2056 = vpack.c.bf16 %v2045, %v2044
  %v2057 = vpack.c.bf16 %v2047, %v2046
  %v2058 = vpack.c.bf16 %v2049, %v2048
  %v2059 = vpack.c.bf16 %v2051, %v2050
  %v2060 = vld [vmem:[%s4 + $0xe0] sm:$0xf]
  %v2061 = vld [vmem:[%s4 + $0xe4] sm:$0xf]
  %v2062 = vld [vmem:[%s4 + $0xe8] sm:$0xf]
  %v2063 = vld [vmem:[%s4 + $0xec] sm:$0xf]
  %v2064 = vld [vmem:[%s4 + $0xf0] sm:$0xf]
  %v2065 = vld [vmem:[%s4 + $0xf4] sm:$0xf]
  %v2066 = vld [vmem:[%s4 + $0xf8] sm:$0xf]
  %v2067 = vld [vmem:[%s4 + $0xfc] sm:$0xf]
  %v2076 = vunpack.c.l.b16 %v2060
  %v2077 = vunpack.c.l.b16 %v2061
  %v2078 = vunpack.c.l.b16 %v2062
  %v2079 = vunpack.c.l.b16 %v2063
  %v2080 = vunpack.c.l.b16 %v2064
  %v2081 = vunpack.c.l.b16 %v2065
  %v2082 = vunpack.c.l.b16 %v2066
  %v2083 = vunpack.c.l.b16 %v2067
  %v2084 = vpack.c.b16 %v2077, %v2076
  %v2085 = vpack.c.b16 %v2079, %v2078
  %v2086 = vpack.c.b16 %v2081, %v2080
  %v2087 = vpack.c.b16 %v2083, %v2082
  %v2093 = vsel %vm31, %v2052, 0
  %v2096 = vsel %vm31, %v2053, 0
  %v2099 = vsel %vm31, %v2054, 0
  %v2102 = vsel %vm31, %v2055, 0
  %v2105 = vsel %vm31, %v2056, 0
  %v2108 = vsel %vm31, %v2057, 0
  %v2111 = vsel %vm31, %v2058, 0
  %v2114 = vsel %vm31, %v2059, 0
  %2116 = vmatprep.subr.bf16.mxu0 0
  %2117 = vmatpush1.bf16.msra.mxu0 0
  %2118 = vmatprep.subr.bf16.mxu0 0
  %2119 = vmatpush1.bf16.msra.mxu0 0
  %2120 = vmatprep.subr.bf16.mxu0 0
  %2121 = vmatpush1.bf16.msra.mxu0 0
  %2122 = vmatprep.subr.bf16.mxu0 0
  %2123 = vmatpush1.bf16.msra.mxu0 0
  %2124 = vmatprep.subr.bf16.mxu0 0
  %2125 = vmatpush1.bf16.msra.mxu0 %v2087
  %2126 = vmatprep.subr.bf16.mxu0 0
  %2127 = vmatpush1.bf16.msra.mxu0 %v2086
  %2128 = vmatprep.subr.bf16.mxu0 0
  %2129 = vmatpush1.bf16.msra.mxu0 %v2085
  %2130 = vmatprep.subr.bf16.mxu0 0
  %2131 = vmatpush1.bf16.msra.mxu0 %v2084
  %2132 = vmatprep.subr.bf16.mxu0 0
  %2133 = vmatpush2.bf16.msra.mxu0 0
  %2134 = vmatprep.subr.bf16.mxu0 0
  %2135 = vmatpush2.bf16.msra.mxu0 0
  %2136 = vmatprep.subr.bf16.mxu0 0
  %2137 = vmatpush2.bf16.msra.mxu0 0
  %2138 = vmatprep.subr.bf16.mxu0 0
  %2139 = vmatpush2.bf16.msra.mxu0 0
  %2140 = vmatprep.subr.bf16.mxu0 0
  %2141 = vmatpush2.bf16.msra.mxu0 0
  %2142 = vmatprep.subr.bf16.mxu0 0
  %2143 = vmatpush2.bf16.msra.mxu0 0
  %2144 = vmatprep.subr.bf16.mxu0 0
  %2145 = vmatpush2.bf16.msra.mxu0 0
  %2146 = vmatprep.subr.bf16.mxu0 0
  %2147 = vmatpush2.bf16.msra.mxu0 0
  %2148 = vmatprep.mubr.bf16.mxu0 0
  %2149 = vmatmul.mubr.bf16.gmra.mxu0 %v2093
  %v2150 = vpop.f32.mrf.mxu0
  %v2151 = vadd.f32 0.0, %v2150
  %v2152 = vpop.f32.mrf.mxu0
  %v2153 = vpop.f32.mrf.mxu0
  %v2154 = vadd.f32 0.0, %v2153
  %v2155 = vpop.f32.mrf.mxu0
  %2156 = vmatprep.mubr.bf16.mxu0 0
  %2157 = vmatmul.mubr.bf16.gmra.mxu0 %v2096
  %v2158 = vpop.f32.mrf.mxu0
  %v2159 = vadd.f32 0.0, %v2158
  %v2160 = vpop.f32.mrf.mxu0
  %v2161 = vpop.f32.mrf.mxu0
  %v2162 = vadd.f32 0.0, %v2161
  %v2163 = vpop.f32.mrf.mxu0
  %2164 = vmatprep.mubr.bf16.mxu0 0
  %2165 = vmatmul.mubr.bf16.gmra.mxu0 %v2099
  %v2166 = vpop.f32.mrf.mxu0
  %v2167 = vadd.f32 0.0, %v2166
  %v2168 = vpop.f32.mrf.mxu0
  %v2169 = vpop.f32.mrf.mxu0
  %v2170 = vadd.f32 0.0, %v2169
  %v2171 = vpop.f32.mrf.mxu0
  %2172 = vmatprep.mubr.bf16.mxu0 0
  %2173 = vmatmul.mubr.bf16.gmra.mxu0 %v2102
  %v2174 = vpop.f32.mrf.mxu0
  %v2175 = vadd.f32 0.0, %v2174
  %v2176 = vpop.f32.mrf.mxu0
  %v2177 = vpop.f32.mrf.mxu0
  %v2178 = vadd.f32 0.0, %v2177
  %v2179 = vpop.f32.mrf.mxu0
  %2180 = vmatprep.mubr.bf16.mxu0 0
  %2181 = vmatmul.mubr.bf16.gmra.mxu0 %v2105
  %v2182 = vpop.f32.mrf.mxu0
  %v2183 = vadd.f32 0.0, %v2182
  %v2184 = vpop.f32.mrf.mxu0
  %v2185 = vpop.f32.mrf.mxu0
  %v2186 = vadd.f32 0.0, %v2185
  %v2187 = vpop.f32.mrf.mxu0
  %2188 = vmatprep.mubr.bf16.mxu0 0
  %2189 = vmatmul.mubr.bf16.gmra.mxu0 %v2108
  %v2190 = vpop.f32.mrf.mxu0
  %v2191 = vadd.f32 0.0, %v2190
  %v2192 = vpop.f32.mrf.mxu0
  %v2193 = vpop.f32.mrf.mxu0
  %v2194 = vadd.f32 0.0, %v2193
  %v2195 = vpop.f32.mrf.mxu0
  %2196 = vmatprep.mubr.bf16.mxu0 0
  %2197 = vmatmul.mubr.bf16.gmra.mxu0 %v2111
  %v2198 = vpop.f32.mrf.mxu0
  %v2199 = vadd.f32 0.0, %v2198
  %v2200 = vpop.f32.mrf.mxu0
  %v2201 = vpop.f32.mrf.mxu0
  %v2202 = vadd.f32 0.0, %v2201
  %v2203 = vpop.f32.mrf.mxu0
  %2204 = vmatprep.mubr.bf16.mxu0 0
  %2205 = vmatmul.mubr.bf16.gmra.mxu0 %v2114
  %v2206 = vpop.f32.mrf.mxu0
  %v2207 = vadd.f32 0.0, %v2206
  %v2208 = vpop.f32.mrf.mxu0
  %v2209 = vpop.f32.mrf.mxu0
  %v2210 = vadd.f32 0.0, %v2209
  %v2211 = vpop.f32.mrf.mxu0
  %2212 = vdwg.mxu0
  %v2213 = vadd.f32 %v1971, %v2151
  %v2214 = vadd.f32 %v1972, %v2154
  %v2215 = vadd.f32 %v1973, %v2159
  %v2216 = vadd.f32 %v1974, %v2162
  %v2217 = vadd.f32 %v1975, %v2167
  %v2218 = vadd.f32 %v1976, %v2170
  %v2219 = vadd.f32 %v1977, %v2175
  %v2220 = vadd.f32 %v1978, %v2178
  %v2221 = vadd.f32 %v1979, %v2183
  %v2222 = vadd.f32 %v1980, %v2186
  %v2223 = vadd.f32 %v1981, %v2191
  %v2224 = vadd.f32 %v1982, %v2194
  %v2225 = vadd.f32 %v1983, %v2199
  %v2226 = vadd.f32 %v1984, %v2202
  %v2227 = vadd.f32 %v1985, %v2207
  %v2228 = vadd.f32 %v1986, %v2210
  %v2229 = vld [vmem:[#allocation2 + $0x1a] sm:$0xff]
  %v2230 = vld [vmem:[#allocation2 + $0x22] sm:$0xff]
  %v2231 = vld [vmem:[#allocation2 + $0x2a] sm:$0xff]
  %v2232 = vld [vmem:[#allocation2 + $0x32] sm:$0xff]
  %v2233 = vld [vmem:[#allocation2 + $0x3a] sm:$0xff]
  %v2234 = vld [vmem:[#allocation2 + $0x42] sm:$0xff]
  %v2235 = vld [vmem:[#allocation2 + $0x4a] sm:$0xff]
  %v2236 = vld [vmem:[#allocation2 + $0x52] sm:$0xff]
  %v2237 = vld [vmem:[#allocation2 + $0x5a] sm:$0xff]
  %v2238 = vld [vmem:[#allocation2 + $0x62] sm:$0xff]
  %v2239 = vld [vmem:[#allocation2 + $0x6a] sm:$0xff]
  %v2240 = vld [vmem:[#allocation2 + $0x72] sm:$0xff]
  %v2241 = vld [vmem:[#allocation2 + $0x7a] sm:$0xff]
  %v2242 = vld [vmem:[#allocation2 + $0x82] sm:$0xff]
  %v2243 = vld [vmem:[#allocation2 + $0x8a] sm:$0xff]
  %v2244 = vld [vmem:[#allocation2 + $0x92] sm:$0xff]
  %s2245 = scalar_lea.vmem %s1, 1024
  %v2246 = vld [vmem:[%s2245] sm:$0xff]
  %v2247 = vld [vmem:[%s2245 + $0x8] sm:$0xff]
  %v2248 = vld [vmem:[%s2245 + $0x10] sm:$0xff]
  %v2249 = vld [vmem:[%s2245 + $0x18] sm:$0xff]
  %v2250 = vld [vmem:[%s2245 + $0x20] sm:$0xff]
  %v2251 = vld [vmem:[%s2245 + $0x28] sm:$0xff]
  %v2252 = vld [vmem:[%s2245 + $0x30] sm:$0xff]
  %v2253 = vld [vmem:[%s2245 + $0x38] sm:$0xff]
  %v2254 = vld [vmem:[%s2245 + $0x40] sm:$0xff]
  %v2255 = vld [vmem:[%s2245 + $0x48] sm:$0xff]
  %v2256 = vld [vmem:[%s2245 + $0x50] sm:$0xff]
  %v2257 = vld [vmem:[%s2245 + $0x58] sm:$0xff]
  %v2258 = vld [vmem:[%s2245 + $0x60] sm:$0xff]
  %v2259 = vld [vmem:[%s2245 + $0x68] sm:$0xff]
  %v2260 = vld [vmem:[%s2245 + $0x70] sm:$0xff]
  %v2261 = vld [vmem:[%s2245 + $0x78] sm:$0xff]
  %vm2262 = vcmp.gt.f32.partialorder %v2246, 0.0
  %vm2263 = vcmp.gt.f32.partialorder %v2247, 0.0
  %vm2264 = vcmp.gt.f32.partialorder %v2248, 0.0
  %vm2265 = vcmp.gt.f32.partialorder %v2249, 0.0
  %vm2266 = vcmp.gt.f32.partialorder %v2250, 0.0
  %vm2267 = vcmp.gt.f32.partialorder %v2251, 0.0
  %vm2268 = vcmp.gt.f32.partialorder %v2252, 0.0
  %vm2269 = vcmp.gt.f32.partialorder %v2253, 0.0
  %vm2270 = vcmp.gt.f32.partialorder %v2254, 0.0
  %vm2271 = vcmp.gt.f32.partialorder %v2255, 0.0
  %vm2272 = vcmp.gt.f32.partialorder %v2256, 0.0
  %vm2273 = vcmp.gt.f32.partialorder %v2257, 0.0
  %vm2274 = vcmp.gt.f32.partialorder %v2258, 0.0
  %vm2275 = vcmp.gt.f32.partialorder %v2259, 0.0
  %vm2276 = vcmp.gt.f32.partialorder %v2260, 0.0
  %vm2277 = vcmp.gt.f32.partialorder %v2261, 0.0
  %v2278 = vsel %vm2262, %v2229, 0.0
  %v2279 = vsel %vm2263, %v2230, 0.0
  %v2280 = vsel %vm2264, %v2231, 0.0
  %v2281 = vsel %vm2265, %v2232, 0.0
  %v2282 = vsel %vm2266, %v2233, 0.0
  %v2283 = vsel %vm2267, %v2234, 0.0
  %v2284 = vsel %vm2268, %v2235, 0.0
  %v2285 = vsel %vm2269, %v2236, 0.0
  %v2286 = vsel %vm2270, %v2237, 0.0
  %v2287 = vsel %vm2271, %v2238, 0.0
  %v2288 = vsel %vm2272, %v2239, 0.0
  %v2289 = vsel %vm2273, %v2240, 0.0
  %v2290 = vsel %vm2274, %v2241, 0.0
  %v2291 = vsel %vm2275, %v2242, 0.0
  %v2292 = vsel %vm2276, %v2243, 0.0
  %v2293 = vsel %vm2277, %v2244, 0.0
  %v2294 = vpack.c.bf16 %v2279, %v2278
  %v2295 = vpack.c.bf16 %v2281, %v2280
  %v2296 = vpack.c.bf16 %v2283, %v2282
  %v2297 = vpack.c.bf16 %v2285, %v2284
  %v2298 = vpack.c.bf16 %v2287, %v2286
  %v2299 = vpack.c.bf16 %v2289, %v2288
  %v2300 = vpack.c.bf16 %v2291, %v2290
  %v2301 = vpack.c.bf16 %v2293, %v2292
  %v2302 = vld [vmem:[%s4 + $0x100] sm:$0xf]
  %v2303 = vld [vmem:[%s4 + $0x104] sm:$0xf]
  %v2304 = vld [vmem:[%s4 + $0x108] sm:$0xf]
  %v2305 = vld [vmem:[%s4 + $0x10c] sm:$0xf]
  %v2306 = vld [vmem:[%s4 + $0x110] sm:$0xf]
  %v2307 = vld [vmem:[%s4 + $0x114] sm:$0xf]
  %v2308 = vld [vmem:[%s4 + $0x118] sm:$0xf]
  %v2309 = vld [vmem:[%s4 + $0x11c] sm:$0xf]
  %v2318 = vunpack.c.l.b16 %v2302
  %v2319 = vunpack.c.l.b16 %v2303
  %v2320 = vunpack.c.l.b16 %v2304
  %v2321 = vunpack.c.l.b16 %v2305
  %v2322 = vunpack.c.l.b16 %v2306
  %v2323 = vunpack.c.l.b16 %v2307
  %v2324 = vunpack.c.l.b16 %v2308
  %v2325 = vunpack.c.l.b16 %v2309
  %v2326 = vpack.c.b16 %v2319, %v2318
  %v2327 = vpack.c.b16 %v2321, %v2320
  %v2328 = vpack.c.b16 %v2323, %v2322
  %v2329 = vpack.c.b16 %v2325, %v2324
  %v2335 = vsel %vm31, %v2294, 0
  %v2338 = vsel %vm31, %v2295, 0
  %v2341 = vsel %vm31, %v2296, 0
  %v2344 = vsel %vm31, %v2297, 0
  %v2347 = vsel %vm31, %v2298, 0
  %v2350 = vsel %vm31, %v2299, 0
  %v2353 = vsel %vm31, %v2300, 0
  %v2356 = vsel %vm31, %v2301, 0
  %2358 = vmatprep.subr.bf16.mxu0 0
  %2359 = vmatpush1.bf16.msra.mxu0 0
  %2360 = vmatprep.subr.bf16.mxu0 0
  %2361 = vmatpush1.bf16.msra.mxu0 0
  %2362 = vmatprep.subr.bf16.mxu0 0
  %2363 = vmatpush1.bf16.msra.mxu0 0
  %2364 = vmatprep.subr.bf16.mxu0 0
  %2365 = vmatpush1.bf16.msra.mxu0 0
  %2366 = vmatprep.subr.bf16.mxu0 0
  %2367 = vmatpush1.bf16.msra.mxu0 %v2329
  %2368 = vmatprep.subr.bf16.mxu0 0
  %2369 = vmatpush1.bf16.msra.mxu0 %v2328
  %2370 = vmatprep.subr.bf16.mxu0 0
  %2371 = vmatpush1.bf16.msra.mxu0 %v2327
  %2372 = vmatprep.subr.bf16.mxu0 0
  %2373 = vmatpush1.bf16.msra.mxu0 %v2326
  %2374 = vmatprep.subr.bf16.mxu0 0
  %2375 = vmatpush2.bf16.msra.mxu0 0
  %2376 = vmatprep.subr.bf16.mxu0 0
  %2377 = vmatpush2.bf16.msra.mxu0 0
  %2378 = vmatprep.subr.bf16.mxu0 0
  %2379 = vmatpush2.bf16.msra.mxu0 0
  %2380 = vmatprep.subr.bf16.mxu0 0
  %2381 = vmatpush2.bf16.msra.mxu0 0
  %2382 = vmatprep.subr.bf16.mxu0 0
  %2383 = vmatpush2.bf16.msra.mxu0 0
  %2384 = vmatprep.subr.bf16.mxu0 0
  %2385 = vmatpush2.bf16.msra.mxu0 0
  %2386 = vmatprep.subr.bf16.mxu0 0
  %2387 = vmatpush2.bf16.msra.mxu0 0
  %2388 = vmatprep.subr.bf16.mxu0 0
  %2389 = vmatpush2.bf16.msra.mxu0 0
  %2390 = vmatprep.mubr.bf16.mxu0 0
  %2391 = vmatmul.mubr.bf16.gmra.mxu0 %v2335
  %v2392 = vpop.f32.mrf.mxu0
  %v2393 = vadd.f32 0.0, %v2392
  %v2394 = vpop.f32.mrf.mxu0
  %v2395 = vpop.f32.mrf.mxu0
  %v2396 = vadd.f32 0.0, %v2395
  %v2397 = vpop.f32.mrf.mxu0
  %2398 = vmatprep.mubr.bf16.mxu0 0
  %2399 = vmatmul.mubr.bf16.gmra.mxu0 %v2338
  %v2400 = vpop.f32.mrf.mxu0
  %v2401 = vadd.f32 0.0, %v2400
  %v2402 = vpop.f32.mrf.mxu0
  %v2403 = vpop.f32.mrf.mxu0
  %v2404 = vadd.f32 0.0, %v2403
  %v2405 = vpop.f32.mrf.mxu0
  %2406 = vmatprep.mubr.bf16.mxu0 0
  %2407 = vmatmul.mubr.bf16.gmra.mxu0 %v2341
  %v2408 = vpop.f32.mrf.mxu0
  %v2409 = vadd.f32 0.0, %v2408
  %v2410 = vpop.f32.mrf.mxu0
  %v2411 = vpop.f32.mrf.mxu0
  %v2412 = vadd.f32 0.0, %v2411
  %v2413 = vpop.f32.mrf.mxu0
  %2414 = vmatprep.mubr.bf16.mxu0 0
  %2415 = vmatmul.mubr.bf16.gmra.mxu0 %v2344
  %v2416 = vpop.f32.mrf.mxu0
  %v2417 = vadd.f32 0.0, %v2416
  %v2418 = vpop.f32.mrf.mxu0
  %v2419 = vpop.f32.mrf.mxu0
  %v2420 = vadd.f32 0.0, %v2419
  %v2421 = vpop.f32.mrf.mxu0
  %2422 = vmatprep.mubr.bf16.mxu0 0
  %2423 = vmatmul.mubr.bf16.gmra.mxu0 %v2347
  %v2424 = vpop.f32.mrf.mxu0
  %v2425 = vadd.f32 0.0, %v2424
  %v2426 = vpop.f32.mrf.mxu0
  %v2427 = vpop.f32.mrf.mxu0
  %v2428 = vadd.f32 0.0, %v2427
  %v2429 = vpop.f32.mrf.mxu0
  %2430 = vmatprep.mubr.bf16.mxu0 0
  %2431 = vmatmul.mubr.bf16.gmra.mxu0 %v2350
  %v2432 = vpop.f32.mrf.mxu0
  %v2433 = vadd.f32 0.0, %v2432
  %v2434 = vpop.f32.mrf.mxu0
  %v2435 = vpop.f32.mrf.mxu0
  %v2436 = vadd.f32 0.0, %v2435
  %v2437 = vpop.f32.mrf.mxu0
  %2438 = vmatprep.mubr.bf16.mxu0 0
  %2439 = vmatmul.mubr.bf16.gmra.mxu0 %v2353
  %v2440 = vpop.f32.mrf.mxu0
  %v2441 = vadd.f32 0.0, %v2440
  %v2442 = vpop.f32.mrf.mxu0
  %v2443 = vpop.f32.mrf.mxu0
  %v2444 = vadd.f32 0.0, %v2443
  %v2445 = vpop.f32.mrf.mxu0
  %2446 = vmatprep.mubr.bf16.mxu0 0
  %2447 = vmatmul.mubr.bf16.gmra.mxu0 %v2356
  %v2448 = vpop.f32.mrf.mxu0
  %v2449 = vadd.f32 0.0, %v2448
  %v2450 = vpop.f32.mrf.mxu0
  %v2451 = vpop.f32.mrf.mxu0
  %v2452 = vadd.f32 0.0, %v2451
  %v2453 = vpop.f32.mrf.mxu0
  %2454 = vdwg.mxu0
  %v2455 = vadd.f32 %v2213, %v2393
  %v2456 = vadd.f32 %v2214, %v2396
  %v2457 = vadd.f32 %v2215, %v2401
  %v2458 = vadd.f32 %v2216, %v2404
  %v2459 = vadd.f32 %v2217, %v2409
  %v2460 = vadd.f32 %v2218, %v2412
  %v2461 = vadd.f32 %v2219, %v2417
  %v2462 = vadd.f32 %v2220, %v2420
  %v2463 = vadd.f32 %v2221, %v2425
  %v2464 = vadd.f32 %v2222, %v2428
  %v2465 = vadd.f32 %v2223, %v2433
  %v2466 = vadd.f32 %v2224, %v2436
  %v2467 = vadd.f32 %v2225, %v2441
  %v2468 = vadd.f32 %v2226, %v2444
  %v2469 = vadd.f32 %v2227, %v2449
  %v2470 = vadd.f32 %v2228, %v2452
  %v2471 = vld [vmem:[%s5] sm:$0x1]
  %v2473 = vlaneseq
  %v2474 = vshrl.u32 %v2473, 7
  %v2475 = vsub.s32 0, %v2474
  %v2476 = vrot.slane %v2471, %v2475
  %v2478 = vadd.f32 %v2455, %v2476
  %v2479 = vadd.f32 %v2456, %v2476
  %v2480 = vadd.f32 %v2457, %v2476
  %v2481 = vadd.f32 %v2458, %v2476
  %v2482 = vadd.f32 %v2459, %v2476
  %v2483 = vadd.f32 %v2460, %v2476
  %v2484 = vadd.f32 %v2461, %v2476
  %v2485 = vadd.f32 %v2462, %v2476
  %v2486 = vadd.f32 %v2463, %v2476
  %v2487 = vadd.f32 %v2464, %v2476
  %v2488 = vadd.f32 %v2465, %v2476
  %v2489 = vadd.f32 %v2466, %v2476
  %v2490 = vadd.f32 %v2467, %v2476
  %v2491 = vadd.f32 %v2468, %v2476
  %v2492 = vadd.f32 %v2469, %v2476
  %v2493 = vadd.f32 %v2470, %v2476
  %v2494 = vmax.f32 %v2478, 0.0
  %v2495 = vmax.f32 %v2479, 0.0
  %v2496 = vmax.f32 %v2480, 0.0
  %v2497 = vmax.f32 %v2481, 0.0
  %v2498 = vmax.f32 %v2482, 0.0
  %v2499 = vmax.f32 %v2483, 0.0
  %v2500 = vmax.f32 %v2484, 0.0
  %v2501 = vmax.f32 %v2485, 0.0
  %v2502 = vmax.f32 %v2486, 0.0
  %v2503 = vmax.f32 %v2487, 0.0
  %v2504 = vmax.f32 %v2488, 0.0
  %v2505 = vmax.f32 %v2489, 0.0
  %v2506 = vmax.f32 %v2490, 0.0
  %v2507 = vmax.f32 %v2491, 0.0
  %v2508 = vmax.f32 %v2492, 0.0
  %v2509 = vmax.f32 %v2493, 0.0
  %v2510 = vsel %vm69, %v2494, 0.0
  %v2511 = vsel %vm70, %v2495, 0.0
  %v2512 = vsel %vm71, %v2496, 0.0
  %v2513 = vsel %vm72, %v2497, 0.0
  %v2514 = vsel %vm73, %v2498, 0.0
  %v2515 = vsel %vm74, %v2499, 0.0
  %v2516 = vsel %vm75, %v2500, 0.0
  %v2517 = vsel %vm76, %v2501, 0.0
  %v2518 = vsel %vm77, %v2502, 0.0
  %v2519 = vsel %vm78, %v2503, 0.0
  %v2520 = vsel %vm79, %v2504, 0.0
  %v2521 = vsel %vm80, %v2505, 0.0
  %v2522 = vsel %vm81, %v2506, 0.0
  %v2523 = vsel %vm82, %v2507, 0.0
  %v2524 = vsel %vm83, %v2508, 0.0
  %v2525 = vsel %vm84, %v2509, 0.0
  %2526 = vst.msk [vmem:[#allocation2 + $0x10] sm:$0xff] %vm31, %v2510
  %2527 = vst.msk [vmem:[#allocation2 + $0x18] sm:$0xff] %vm31, %v2511
  %2528 = vst.msk [vmem:[#allocation2 + $0x20] sm:$0xff] %vm31, %v2512
  %2529 = vst.msk [vmem:[#allocation2 + $0x28] sm:$0xff] %vm31, %v2513
  %2530 = vst.msk [vmem:[#allocation2 + $0x30] sm:$0xff] %vm31, %v2514
  %2531 = vst.msk [vmem:[#allocation2 + $0x38] sm:$0xff] %vm31, %v2515
  %2532 = vst.msk [vmem:[#allocation2 + $0x40] sm:$0xff] %vm31, %v2516
  %2533 = vst.msk [vmem:[#allocation2 + $0x48] sm:$0xff] %vm31, %v2517
  %2534 = vst.msk [vmem:[#allocation2 + $0x50] sm:$0xff] %vm31, %v2518
  %2535 = vst.msk [vmem:[#allocation2 + $0x58] sm:$0xff] %vm31, %v2519
  %2536 = vst.msk [vmem:[#allocation2 + $0x60] sm:$0xff] %vm31, %v2520
  %2537 = vst.msk [vmem:[#allocation2 + $0x68] sm:$0xff] %vm31, %v2521
  %2538 = vst.msk [vmem:[#allocation2 + $0x70] sm:$0xff] %vm31, %v2522
  %2539 = vst.msk [vmem:[#allocation2 + $0x78] sm:$0xff] %vm31, %v2523
  %2540 = vst.msk [vmem:[#allocation2 + $0x80] sm:$0xff] %vm31, %v2524
  %2541 = vst.msk [vmem:[#allocation2 + $0x88] sm:$0xff] %vm31, %v2525
  %v2542 = vld [vmem:[#allocation2 + $0x6] sm:$0xff]
  %v2543 = vld [vmem:[#allocation2 + $0xe] sm:$0xff]
  %v2544 = vld [vmem:[#allocation2 + $0x16] sm:$0xff]
  %v2545 = vld [vmem:[#allocation2 + $0x1e] sm:$0xff]
  %v2546 = vld [vmem:[#allocation2 + $0x26] sm:$0xff]
  %v2547 = vld [vmem:[#allocation2 + $0x2e] sm:$0xff]
  %v2548 = vld [vmem:[#allocation2 + $0x36] sm:$0xff]
  %v2549 = vld [vmem:[#allocation2 + $0x3e] sm:$0xff]
  %v2550 = vld [vmem:[#allocation2 + $0x46] sm:$0xff]
  %v2551 = vld [vmem:[#allocation2 + $0x4e] sm:$0xff]
  %v2552 = vld [vmem:[#allocation2 + $0x56] sm:$0xff]
  %v2553 = vld [vmem:[#allocation2 + $0x5e] sm:$0xff]
  %v2554 = vld [vmem:[#allocation2 + $0x66] sm:$0xff]
  %v2555 = vld [vmem:[#allocation2 + $0x6e] sm:$0xff]
  %v2556 = vld [vmem:[#allocation2 + $0x76] sm:$0xff]
  %v2557 = vld [vmem:[#allocation2 + $0x7e] sm:$0xff]
  %v2558 = vld [vmem:[%s1] sm:$0xff]
  %v2559 = vld [vmem:[%s1 + $0x8] sm:$0xff]
  %v2560 = vld [vmem:[%s1 + $0x10] sm:$0xff]
  %v2561 = vld [vmem:[%s1 + $0x18] sm:$0xff]
  %v2562 = vld [vmem:[%s1 + $0x20] sm:$0xff]
  %v2563 = vld [vmem:[%s1 + $0x28] sm:$0xff]
  %v2564 = vld [vmem:[%s1 + $0x30] sm:$0xff]
  %v2565 = vld [vmem:[%s1 + $0x38] sm:$0xff]
  %v2566 = vld [vmem:[%s1 + $0x40] sm:$0xff]
  %v2567 = vld [vmem:[%s1 + $0x48] sm:$0xff]
  %v2568 = vld [vmem:[%s1 + $0x50] sm:$0xff]
  %v2569 = vld [vmem:[%s1 + $0x58] sm:$0xff]
  %v2570 = vld [vmem:[%s1 + $0x60] sm:$0xff]
  %v2571 = vld [vmem:[%s1 + $0x68] sm:$0xff]
  %v2572 = vld [vmem:[%s1 + $0x70] sm:$0xff]
  %v2573 = vld [vmem:[%s1 + $0x78] sm:$0xff]
  %vm2574 = vcmp.gt.f32.partialorder %v2558, 0.0
  %vm2575 = vcmp.gt.f32.partialorder %v2559, 0.0
  %vm2576 = vcmp.gt.f32.partialorder %v2560, 0.0
  %vm2577 = vcmp.gt.f32.partialorder %v2561, 0.0
  %vm2578 = vcmp.gt.f32.partialorder %v2562, 0.0
  %vm2579 = vcmp.gt.f32.partialorder %v2563, 0.0
  %vm2580 = vcmp.gt.f32.partialorder %v2564, 0.0
  %vm2581 = vcmp.gt.f32.partialorder %v2565, 0.0
  %vm2582 = vcmp.gt.f32.partialorder %v2566, 0.0
  %vm2583 = vcmp.gt.f32.partialorder %v2567, 0.0
  %vm2584 = vcmp.gt.f32.partialorder %v2568, 0.0
  %vm2585 = vcmp.gt.f32.partialorder %v2569, 0.0
  %vm2586 = vcmp.gt.f32.partialorder %v2570, 0.0
  %vm2587 = vcmp.gt.f32.partialorder %v2571, 0.0
  %vm2588 = vcmp.gt.f32.partialorder %v2572, 0.0
  %vm2589 = vcmp.gt.f32.partialorder %v2573, 0.0
  %v2590 = vsel %vm2574, %v2542, 0.0
  %v2591 = vsel %vm2575, %v2543, 0.0
  %v2592 = vsel %vm2576, %v2544, 0.0
  %v2593 = vsel %vm2577, %v2545, 0.0
  %v2594 = vsel %vm2578, %v2546, 0.0
  %v2595 = vsel %vm2579, %v2547, 0.0
  %v2596 = vsel %vm2580, %v2548, 0.0
  %v2597 = vsel %vm2581, %v2549, 0.0
  %v2598 = vsel %vm2582, %v2550, 0.0
  %v2599 = vsel %vm2583, %v2551, 0.0
  %v2600 = vsel %vm2584, %v2552, 0.0
  %v2601 = vsel %vm2585, %v2553, 0.0
  %v2602 = vsel %vm2586, %v2554, 0.0
  %v2603 = vsel %vm2587, %v2555, 0.0
  %v2604 = vsel %vm2588, %v2556, 0.0
  %v2605 = vsel %vm2589, %v2557, 0.0
  %v2606 = vpack.c.bf16 %v2591, %v2590
  %v2607 = vpack.c.bf16 %v2593, %v2592
  %v2608 = vpack.c.bf16 %v2595, %v2594
  %v2609 = vpack.c.bf16 %v2597, %v2596
  %v2610 = vpack.c.bf16 %v2599, %v2598
  %v2611 = vpack.c.bf16 %v2601, %v2600
  %v2612 = vpack.c.bf16 %v2603, %v2602
  %v2613 = vpack.c.bf16 %v2605, %v2604
  %s2614 = scalar_lea.vmem %s4, 288
  %v2615 = vld [vmem:[%s2614] sm:$0xf]
  %v2616 = vld [vmem:[%s2614 + $0x4] sm:$0xf]
  %v2617 = vld [vmem:[%s2614 + $0x8] sm:$0xf]
  %v2618 = vld [vmem:[%s2614 + $0xc] sm:$0xf]
  %v2619 = vld [vmem:[%s2614 + $0x10] sm:$0xf]
  %v2620 = vld [vmem:[%s2614 + $0x14] sm:$0xf]
  %v2621 = vld [vmem:[%s2614 + $0x18] sm:$0xf]
  %v2622 = vld [vmem:[%s2614 + $0x1c] sm:$0xf]
  %v2623 = vld [vmem:[#allocation2 + $0x7] sm:$0xff]
  %v2624 = vld [vmem:[#allocation2 + $0xf] sm:$0xff]
  %v2625 = vld [vmem:[#allocation2 + $0x17] sm:$0xff]
  %v2626 = vld [vmem:[#allocation2 + $0x1f] sm:$0xff]
  %v2627 = vld [vmem:[#allocation2 + $0x27] sm:$0xff]
  %v2628 = vld [vmem:[#allocation2 + $0x2f] sm:$0xff]
  %v2629 = vld [vmem:[#allocation2 + $0x37] sm:$0xff]
  %v2630 = vld [vmem:[#allocation2 + $0x3f] sm:$0xff]
  %v2631 = vld [vmem:[#allocation2 + $0x47] sm:$0xff]
  %v2632 = vld [vmem:[#allocation2 + $0x4f] sm:$0xff]
  %v2633 = vld [vmem:[#allocation2 + $0x57] sm:$0xff]
  %v2634 = vld [vmem:[#allocation2 + $0x5f] sm:$0xff]
  %v2635 = vld [vmem:[#allocation2 + $0x67] sm:$0xff]
  %v2636 = vld [vmem:[#allocation2 + $0x6f] sm:$0xff]
  %v2637 = vld [vmem:[#allocation2 + $0x77] sm:$0xff]
  %v2638 = vld [vmem:[#allocation2 + $0x7f] sm:$0xff]
  %v2639 = vld [vmem:[%s422] sm:$0xff]
  %v2640 = vld [vmem:[%s422 + $0x8] sm:$0xff]
  %v2641 = vld [vmem:[%s422 + $0x10] sm:$0xff]
  %v2642 = vld [vmem:[%s422 + $0x18] sm:$0xff]
  %v2643 = vld [vmem:[%s422 + $0x20] sm:$0xff]
  %v2644 = vld [vmem:[%s422 + $0x28] sm:$0xff]
  %v2645 = vld [vmem:[%s422 + $0x30] sm:$0xff]
  %v2646 = vld [vmem:[%s422 + $0x38] sm:$0xff]
  %v2647 = vld [vmem:[%s422 + $0x40] sm:$0xff]
  %v2648 = vld [vmem:[%s422 + $0x48] sm:$0xff]
  %v2649 = vld [vmem:[%s422 + $0x50] sm:$0xff]
  %v2650 = vld [vmem:[%s422 + $0x58] sm:$0xff]
  %v2651 = vld [vmem:[%s422 + $0x60] sm:$0xff]
  %v2652 = vld [vmem:[%s422 + $0x68] sm:$0xff]
  %v2653 = vld [vmem:[%s422 + $0x70] sm:$0xff]
  %v2654 = vld [vmem:[%s422 + $0x78] sm:$0xff]
  %vm2655 = vcmp.gt.f32.partialorder %v2639, 0.0
  %vm2656 = vcmp.gt.f32.partialorder %v2640, 0.0
  %vm2657 = vcmp.gt.f32.partialorder %v2641, 0.0
  %vm2658 = vcmp.gt.f32.partialorder %v2642, 0.0
  %vm2659 = vcmp.gt.f32.partialorder %v2643, 0.0
  %vm2660 = vcmp.gt.f32.partialorder %v2644, 0.0
  %vm2661 = vcmp.gt.f32.partialorder %v2645, 0.0
  %vm2662 = vcmp.gt.f32.partialorder %v2646, 0.0
  %vm2663 = vcmp.gt.f32.partialorder %v2647, 0.0
  %vm2664 = vcmp.gt.f32.partialorder %v2648, 0.0
  %vm2665 = vcmp.gt.f32.partialorder %v2649, 0.0
  %vm2666 = vcmp.gt.f32.partialorder %v2650, 0.0
  %vm2667 = vcmp.gt.f32.partialorder %v2651, 0.0
  %vm2668 = vcmp.gt.f32.partialorder %v2652, 0.0
  %vm2669 = vcmp.gt.f32.partialorder %v2653, 0.0
  %vm2670 = vcmp.gt.f32.partialorder %v2654, 0.0
  %v2671 = vsel %vm2655, %v2623, 0.0
  %v2672 = vsel %vm2656, %v2624, 0.0
  %v2673 = vsel %vm2657, %v2625, 0.0
  %v2674 = vsel %vm2658, %v2626, 0.0
  %v2675 = vsel %vm2659, %v2627, 0.0
  %v2676 = vsel %vm2660, %v2628, 0.0
  %v2677 = vsel %vm2661, %v2629, 0.0
  %v2678 = vsel %vm2662, %v2630, 0.0
  %v2679 = vsel %vm2663, %v2631, 0.0
  %v2680 = vsel %vm2664, %v2632, 0.0
  %v2681 = vsel %vm2665, %v2633, 0.0
  %v2682 = vsel %vm2666, %v2634, 0.0
  %v2683 = vsel %vm2667, %v2635, 0.0
  %v2684 = vsel %vm2668, %v2636, 0.0
  %v2685 = vsel %vm2669, %v2637, 0.0
  %v2686 = vsel %vm2670, %v2638, 0.0
  %v2687 = vpack.c.bf16 %v2672, %v2671
  %v2688 = vpack.c.bf16 %v2674, %v2673
  %v2689 = vpack.c.bf16 %v2676, %v2675
  %v2690 = vpack.c.bf16 %v2678, %v2677
  %v2691 = vpack.c.bf16 %v2680, %v2679
  %v2692 = vpack.c.bf16 %v2682, %v2681
  %v2693 = vpack.c.bf16 %v2684, %v2683
  %v2694 = vpack.c.bf16 %v2686, %v2685
  %v2695 = vld [vmem:[%s2614 + $0x20] sm:$0xf]
  %v2696 = vld [vmem:[%s2614 + $0x24] sm:$0xf]
  %v2697 = vld [vmem:[%s2614 + $0x28] sm:$0xf]
  %v2698 = vld [vmem:[%s2614 + $0x2c] sm:$0xf]
  %v2699 = vld [vmem:[%s2614 + $0x30] sm:$0xf]
  %v2700 = vld [vmem:[%s2614 + $0x34] sm:$0xf]
  %v2701 = vld [vmem:[%s2614 + $0x38] sm:$0xf]
  %v2702 = vld [vmem:[%s2614 + $0x3c] sm:$0xf]
  %v2711 = vunpack.c.l.b16 %v2695
  %v2712 = vunpack.c.l.b16 %v2696
  %v2713 = vunpack.c.l.b16 %v2697
  %v2714 = vunpack.c.l.b16 %v2698
  %v2715 = vunpack.c.l.b16 %v2699
  %v2716 = vunpack.c.l.b16 %v2700
  %v2717 = vunpack.c.l.b16 %v2701
  %v2718 = vunpack.c.l.b16 %v2702
  %v2719 = vpack.c.b16 %v2712, %v2711
  %v2720 = vpack.c.b16 %v2714, %v2713
  %v2721 = vpack.c.b16 %v2716, %v2715
  %v2722 = vpack.c.b16 %v2718, %v2717
  %v2728 = vsel %vm31, %v2687, 0
  %v2731 = vsel %vm31, %v2688, 0
  %v2734 = vsel %vm31, %v2689, 0
  %v2737 = vsel %vm31, %v2690, 0
  %v2740 = vsel %vm31, %v2691, 0
  %v2743 = vsel %vm31, %v2692, 0
  %v2746 = vsel %vm31, %v2693, 0
  %v2749 = vsel %vm31, %v2694, 0
  %2751 = vmatprep.subr.bf16.mxu0 0
  %2752 = vmatpush1.bf16.msra.mxu0 0
  %2753 = vmatprep.subr.bf16.mxu0 0
  %2754 = vmatpush1.bf16.msra.mxu0 0
  %2755 = vmatprep.subr.bf16.mxu0 0
  %2756 = vmatpush1.bf16.msra.mxu0 0
  %2757 = vmatprep.subr.bf16.mxu0 0
  %2758 = vmatpush1.bf16.msra.mxu0 0
  %2759 = vmatprep.subr.bf16.mxu0 0
  %2760 = vmatpush1.bf16.msra.mxu0 %v2722
  %2761 = vmatprep.subr.bf16.mxu0 0
  %2762 = vmatpush1.bf16.msra.mxu0 %v2721
  %2763 = vmatprep.subr.bf16.mxu0 0
  %2764 = vmatpush1.bf16.msra.mxu0 %v2720
  %2765 = vmatprep.subr.bf16.mxu0 0
  %2766 = vmatpush1.bf16.msra.mxu0 %v2719
  %2767 = vmatprep.subr.bf16.mxu0 0
  %2768 = vmatpush2.bf16.msra.mxu0 0
  %2769 = vmatprep.subr.bf16.mxu0 0
  %2770 = vmatpush2.bf16.msra.mxu0 0
  %2771 = vmatprep.subr.bf16.mxu0 0
  %2772 = vmatpush2.bf16.msra.mxu0 0
  %2773 = vmatprep.subr.bf16.mxu0 0
  %2774 = vmatpush2.bf16.msra.mxu0 0
  %2775 = vmatprep.subr.bf16.mxu0 0
  %2776 = vmatpush2.bf16.msra.mxu0 0
  %2777 = vmatprep.subr.bf16.mxu0 0
  %2778 = vmatpush2.bf16.msra.mxu0 0
  %2779 = vmatprep.subr.bf16.mxu0 0
  %2780 = vmatpush2.bf16.msra.mxu0 0
  %2781 = vmatprep.subr.bf16.mxu0 0
  %2782 = vmatpush2.bf16.msra.mxu0 0
  %2783 = vmatprep.mubr.bf16.mxu0 0
  %2784 = vmatmul.mubr.bf16.gmra.mxu0 %v2728
  %v2785 = vpop.f32.mrf.mxu0
  %v2786 = vadd.f32 0.0, %v2785
  %v2787 = vpop.f32.mrf.mxu0
  %v2788 = vpop.f32.mrf.mxu0
  %v2789 = vadd.f32 0.0, %v2788
  %v2790 = vpop.f32.mrf.mxu0
  %2791 = vmatprep.mubr.bf16.mxu0 0
  %2792 = vmatmul.mubr.bf16.gmra.mxu0 %v2731
  %v2793 = vpop.f32.mrf.mxu0
  %v2794 = vadd.f32 0.0, %v2793
  %v2795 = vpop.f32.mrf.mxu0
  %v2796 = vpop.f32.mrf.mxu0
  %v2797 = vadd.f32 0.0, %v2796
  %v2798 = vpop.f32.mrf.mxu0
  %2799 = vmatprep.mubr.bf16.mxu0 0
  %2800 = vmatmul.mubr.bf16.gmra.mxu0 %v2734
  %v2801 = vpop.f32.mrf.mxu0
  %v2802 = vadd.f32 0.0, %v2801
  %v2803 = vpop.f32.mrf.mxu0
  %v2804 = vpop.f32.mrf.mxu0
  %v2805 = vadd.f32 0.0, %v2804
  %v2806 = vpop.f32.mrf.mxu0
  %2807 = vmatprep.mubr.bf16.mxu0 0
  %2808 = vmatmul.mubr.bf16.gmra.mxu0 %v2737
  %v2809 = vpop.f32.mrf.mxu0
  %v2810 = vadd.f32 0.0, %v2809
  %v2811 = vpop.f32.mrf.mxu0
  %v2812 = vpop.f32.mrf.mxu0
  %v2813 = vadd.f32 0.0, %v2812
  %v2814 = vpop.f32.mrf.mxu0
  %2815 = vmatprep.mubr.bf16.mxu0 0
  %2816 = vmatmul.mubr.bf16.gmra.mxu0 %v2740
  %v2817 = vpop.f32.mrf.mxu0
  %v2818 = vadd.f32 0.0, %v2817
  %v2819 = vpop.f32.mrf.mxu0
  %v2820 = vpop.f32.mrf.mxu0
  %v2821 = vadd.f32 0.0, %v2820
  %v2822 = vpop.f32.mrf.mxu0
  %2823 = vmatprep.mubr.bf16.mxu0 0
  %2824 = vmatmul.mubr.bf16.gmra.mxu0 %v2743
  %v2825 = vpop.f32.mrf.mxu0
  %v2826 = vadd.f32 0.0, %v2825
  %v2827 = vpop.f32.mrf.mxu0
  %v2828 = vpop.f32.mrf.mxu0
  %v2829 = vadd.f32 0.0, %v2828
  %v2830 = vpop.f32.mrf.mxu0
  %2831 = vmatprep.mubr.bf16.mxu0 0
  %2832 = vmatmul.mubr.bf16.gmra.mxu0 %v2746
  %v2833 = vpop.f32.mrf.mxu0
  %v2834 = vadd.f32 0.0, %v2833
  %v2835 = vpop.f32.mrf.mxu0
  %v2836 = vpop.f32.mrf.mxu0
  %v2837 = vadd.f32 0.0, %v2836
  %v2838 = vpop.f32.mrf.mxu0
  %2839 = vmatprep.mubr.bf16.mxu0 0
  %2840 = vmatmul.mubr.bf16.gmra.mxu0 %v2749
  %v2841 = vpop.f32.mrf.mxu0
  %v2842 = vadd.f32 0.0, %v2841
  %v2843 = vpop.f32.mrf.mxu0
  %v2844 = vpop.f32.mrf.mxu0
  %v2845 = vadd.f32 0.0, %v2844
  %v2846 = vpop.f32.mrf.mxu0
  %2847 = vdwg.mxu0
  %v2856 = vunpack.c.l.b16 %v2615
  %v2857 = vunpack.c.l.b16 %v2616
  %v2858 = vunpack.c.l.b16 %v2617
  %v2859 = vunpack.c.l.b16 %v2618
  %v2860 = vunpack.c.l.b16 %v2619
  %v2861 = vunpack.c.l.b16 %v2620
  %v2862 = vunpack.c.l.b16 %v2621
  %v2863 = vunpack.c.l.b16 %v2622
  %v2864 = vpack.c.b16 %v2857, %v2856
  %v2865 = vpack.c.b16 %v2859, %v2858
  %v2866 = vpack.c.b16 %v2861, %v2860
  %v2867 = vpack.c.b16 %v2863, %v2862
  %v2873 = vsel %vm31, %v2606, 0
  %v2876 = vsel %vm31, %v2607, 0
  %v2879 = vsel %vm31, %v2608, 0
  %v2882 = vsel %vm31, %v2609, 0
  %v2885 = vsel %vm31, %v2610, 0
  %v2888 = vsel %vm31, %v2611, 0
  %v2891 = vsel %vm31, %v2612, 0
  %v2894 = vsel %vm31, %v2613, 0
  %2896 = vmatprep.subr.bf16.mxu0 0
  %2897 = vmatpush1.bf16.msra.mxu0 0
  %2898 = vmatprep.subr.bf16.mxu0 0
  %2899 = vmatpush1.bf16.msra.mxu0 0
  %2900 = vmatprep.subr.bf16.mxu0 0
  %2901 = vmatpush1.bf16.msra.mxu0 0
  %2902 = vmatprep.subr.bf16.mxu0 0
  %2903 = vmatpush1.bf16.msra.mxu0 0
  %2904 = vmatprep.subr.bf16.mxu0 0
  %2905 = vmatpush1.bf16.msra.mxu0 %v2867
  %2906 = vmatprep.subr.bf16.mxu0 0
  %2907 = vmatpush1.bf16.msra.mxu0 %v2866
  %2908 = vmatprep.subr.bf16.mxu0 0
  %2909 = vmatpush1.bf16.msra.mxu0 %v2865
  %2910 = vmatprep.subr.bf16.mxu0 0
  %2911 = vmatpush1.bf16.msra.mxu0 %v2864
  %2912 = vmatprep.subr.bf16.mxu0 0
  %2913 = vmatpush2.bf16.msra.mxu0 0
  %2914 = vmatprep.subr.bf16.mxu0 0
  %2915 = vmatpush2.bf16.msra.mxu0 0
  %2916 = vmatprep.subr.bf16.mxu0 0
  %2917 = vmatpush2.bf16.msra.mxu0 0
  %2918 = vmatprep.subr.bf16.mxu0 0
  %2919 = vmatpush2.bf16.msra.mxu0 0
  %2920 = vmatprep.subr.bf16.mxu0 0
  %2921 = vmatpush2.bf16.msra.mxu0 0
  %2922 = vmatprep.subr.bf16.mxu0 0
  %2923 = vmatpush2.bf16.msra.mxu0 0
  %2924 = vmatprep.subr.bf16.mxu0 0
  %2925 = vmatpush2.bf16.msra.mxu0 0
  %2926 = vmatprep.subr.bf16.mxu0 0
  %2927 = vmatpush2.bf16.msra.mxu0 0
  %2928 = vmatprep.mubr.bf16.mxu0 0
  %2929 = vmatmul.mubr.bf16.gmra.mxu0 %v2873
  %v2930 = vpop.f32.mrf.mxu0
  %v2931 = vadd.f32 %v2786, %v2930
  %v2932 = vpop.f32.mrf.mxu0
  %v2933 = vpop.f32.mrf.mxu0
  %v2934 = vadd.f32 %v2789, %v2933
  %v2935 = vpop.f32.mrf.mxu0
  %2936 = vmatprep.mubr.bf16.mxu0 0
  %2937 = vmatmul.mubr.bf16.gmra.mxu0 %v2876
  %v2938 = vpop.f32.mrf.mxu0
  %v2939 = vadd.f32 %v2794, %v2938
  %v2940 = vpop.f32.mrf.mxu0
  %v2941 = vpop.f32.mrf.mxu0
  %v2942 = vadd.f32 %v2797, %v2941
  %v2943 = vpop.f32.mrf.mxu0
  %2944 = vmatprep.mubr.bf16.mxu0 0
  %2945 = vmatmul.mubr.bf16.gmra.mxu0 %v2879
  %v2946 = vpop.f32.mrf.mxu0
  %v2947 = vadd.f32 %v2802, %v2946
  %v2948 = vpop.f32.mrf.mxu0
  %v2949 = vpop.f32.mrf.mxu0
  %v2950 = vadd.f32 %v2805, %v2949
  %v2951 = vpop.f32.mrf.mxu0
  %2952 = vmatprep.mubr.bf16.mxu0 0
  %2953 = vmatmul.mubr.bf16.gmra.mxu0 %v2882
  %v2954 = vpop.f32.mrf.mxu0
  %v2955 = vadd.f32 %v2810, %v2954
  %v2956 = vpop.f32.mrf.mxu0
  %v2957 = vpop.f32.mrf.mxu0
  %v2958 = vadd.f32 %v2813, %v2957
  %v2959 = vpop.f32.mrf.mxu0
  %2960 = vmatprep.mubr.bf16.mxu0 0
  %2961 = vmatmul.mubr.bf16.gmra.mxu0 %v2885
  %v2962 = vpop.f32.mrf.mxu0
  %v2963 = vadd.f32 %v2818, %v2962
  %v2964 = vpop.f32.mrf.mxu0
  %v2965 = vpop.f32.mrf.mxu0
  %v2966 = vadd.f32 %v2821, %v2965
  %v2967 = vpop.f32.mrf.mxu0
  %2968 = vmatprep.mubr.bf16.mxu0 0
  %2969 = vmatmul.mubr.bf16.gmra.mxu0 %v2888
  %v2970 = vpop.f32.mrf.mxu0
  %v2971 = vadd.f32 %v2826, %v2970
  %v2972 = vpop.f32.mrf.mxu0
  %v2973 = vpop.f32.mrf.mxu0
  %v2974 = vadd.f32 %v2829, %v2973
  %v2975 = vpop.f32.mrf.mxu0
  %2976 = vmatprep.mubr.bf16.mxu0 0
  %2977 = vmatmul.mubr.bf16.gmra.mxu0 %v2891
  %v2978 = vpop.f32.mrf.mxu0
  %v2979 = vadd.f32 %v2834, %v2978
  %v2980 = vpop.f32.mrf.mxu0
  %v2981 = vpop.f32.mrf.mxu0
  %v2982 = vadd.f32 %v2837, %v2981
  %v2983 = vpop.f32.mrf.mxu0
  %2984 = vmatprep.mubr.bf16.mxu0 0
  %2985 = vmatmul.mubr.bf16.gmra.mxu0 %v2894
  %v2986 = vpop.f32.mrf.mxu0
  %v2987 = vadd.f32 %v2842, %v2986
  %v2988 = vpop.f32.mrf.mxu0
  %v2989 = vpop.f32.mrf.mxu0
  %v2990 = vadd.f32 %v2845, %v2989
  %v2991 = vpop.f32.mrf.mxu0
  %2992 = vdwg.mxu0
  %v2993 = vld [vmem:[#allocation2 + $0x8] sm:$0xff]
  %v2994 = vld [vmem:[#allocation2 + $0x10] sm:$0xff]
  %v2995 = vld [vmem:[#allocation2 + $0x18] sm:$0xff]
  %v2996 = vld [vmem:[#allocation2 + $0x20] sm:$0xff]
  %v2997 = vld [vmem:[#allocation2 + $0x28] sm:$0xff]
  %v2998 = vld [vmem:[#allocation2 + $0x30] sm:$0xff]
  %v2999 = vld [vmem:[#allocation2 + $0x38] sm:$0xff]
  %v3000 = vld [vmem:[#allocation2 + $0x40] sm:$0xff]
  %v3001 = vld [vmem:[#allocation2 + $0x48] sm:$0xff]
  %v3002 = vld [vmem:[#allocation2 + $0x50] sm:$0xff]
  %v3003 = vld [vmem:[#allocation2 + $0x58] sm:$0xff]
  %v3004 = vld [vmem:[#allocation2 + $0x60] sm:$0xff]
  %v3005 = vld [vmem:[#allocation2 + $0x68] sm:$0xff]
  %v3006 = vld [vmem:[#allocation2 + $0x70] sm:$0xff]
  %v3007 = vld [vmem:[#allocation2 + $0x78] sm:$0xff]
  %v3008 = vld [vmem:[#allocation2 + $0x80] sm:$0xff]
  %v3009 = vld [vmem:[%s793] sm:$0xff]
  %v3010 = vld [vmem:[%s793 + $0x8] sm:$0xff]
  %v3011 = vld [vmem:[%s793 + $0x10] sm:$0xff]
  %v3012 = vld [vmem:[%s793 + $0x18] sm:$0xff]
  %v3013 = vld [vmem:[%s793 + $0x20] sm:$0xff]
  %v3014 = vld [vmem:[%s793 + $0x28] sm:$0xff]
  %v3015 = vld [vmem:[%s793 + $0x30] sm:$0xff]
  %v3016 = vld [vmem:[%s793 + $0x38] sm:$0xff]
  %v3017 = vld [vmem:[%s793 + $0x40] sm:$0xff]
  %v3018 = vld [vmem:[%s793 + $0x48] sm:$0xff]
  %v3019 = vld [vmem:[%s793 + $0x50] sm:$0xff]
  %v3020 = vld [vmem:[%s793 + $0x58] sm:$0xff]
  %v3021 = vld [vmem:[%s793 + $0x60] sm:$0xff]
  %v3022 = vld [vmem:[%s793 + $0x68] sm:$0xff]
  %v3023 = vld [vmem:[%s793 + $0x70] sm:$0xff]
  %v3024 = vld [vmem:[%s793 + $0x78] sm:$0xff]
  %vm3025 = vcmp.gt.f32.partialorder %v3009, 0.0
  %vm3026 = vcmp.gt.f32.partialorder %v3010, 0.0
  %vm3027 = vcmp.gt.f32.partialorder %v3011, 0.0
  %vm3028 = vcmp.gt.f32.partialorder %v3012, 0.0
  %vm3029 = vcmp.gt.f32.partialorder %v3013, 0.0
  %vm3030 = vcmp.gt.f32.partialorder %v3014, 0.0
  %vm3031 = vcmp.gt.f32.partialorder %v3015, 0.0
  %vm3032 = vcmp.gt.f32.partialorder %v3016, 0.0
  %vm3033 = vcmp.gt.f32.partialorder %v3017, 0.0
  %vm3034 = vcmp.gt.f32.partialorder %v3018, 0.0
  %vm3035 = vcmp.gt.f32.partialorder %v3019, 0.0
  %vm3036 = vcmp.gt.f32.partialorder %v3020, 0.0
  %vm3037 = vcmp.gt.f32.partialorder %v3021, 0.0
  %vm3038 = vcmp.gt.f32.partialorder %v3022, 0.0
  %vm3039 = vcmp.gt.f32.partialorder %v3023, 0.0
  %vm3040 = vcmp.gt.f32.partialorder %v3024, 0.0
  %v3041 = vsel %vm3025, %v2993, 0.0
  %v3042 = vsel %vm3026, %v2994, 0.0
  %v3043 = vsel %vm3027, %v2995, 0.0
  %v3044 = vsel %vm3028, %v2996, 0.0
  %v3045 = vsel %vm3029, %v2997, 0.0
  %v3046 = vsel %vm3030, %v2998, 0.0
  %v3047 = vsel %vm3031, %v2999, 0.0
  %v3048 = vsel %vm3032, %v3000, 0.0
  %v3049 = vsel %vm3033, %v3001, 0.0
  %v3050 = vsel %vm3034, %v3002, 0.0
  %v3051 = vsel %vm3035, %v3003, 0.0
  %v3052 = vsel %vm3036, %v3004, 0.0
  %v3053 = vsel %vm3037, %v3005, 0.0
  %v3054 = vsel %vm3038, %v3006, 0.0
  %v3055 = vsel %vm3039, %v3007, 0.0
  %v3056 = vsel %vm3040, %v3008, 0.0
  %v3057 = vpack.c.bf16 %v3042, %v3041
  %v3058 = vpack.c.bf16 %v3044, %v3043
  %v3059 = vpack.c.bf16 %v3046, %v3045
  %v3060 = vpack.c.bf16 %v3048, %v3047
  %v3061 = vpack.c.bf16 %v3050, %v3049
  %v3062 = vpack.c.bf16 %v3052, %v3051
  %v3063 = vpack.c.bf16 %v3054, %v3053
  %v3064 = vpack.c.bf16 %v3056, %v3055
  %v3065 = vld [vmem:[%s2614 + $0x40] sm:$0xf]
  %v3066 = vld [vmem:[%s2614 + $0x44] sm:$0xf]
  %v3067 = vld [vmem:[%s2614 + $0x48] sm:$0xf]
  %v3068 = vld [vmem:[%s2614 + $0x4c] sm:$0xf]
  %v3069 = vld [vmem:[%s2614 + $0x50] sm:$0xf]
  %v3070 = vld [vmem:[%s2614 + $0x54] sm:$0xf]
  %v3071 = vld [vmem:[%s2614 + $0x58] sm:$0xf]
  %v3072 = vld [vmem:[%s2614 + $0x5c] sm:$0xf]
  %v3081 = vunpack.c.l.b16 %v3065
  %v3082 = vunpack.c.l.b16 %v3066
  %v3083 = vunpack.c.l.b16 %v3067
  %v3084 = vunpack.c.l.b16 %v3068
  %v3085 = vunpack.c.l.b16 %v3069
  %v3086 = vunpack.c.l.b16 %v3070
  %v3087 = vunpack.c.l.b16 %v3071
  %v3088 = vunpack.c.l.b16 %v3072
  %v3089 = vpack.c.b16 %v3082, %v3081
  %v3090 = vpack.c.b16 %v3084, %v3083
  %v3091 = vpack.c.b16 %v3086, %v3085
  %v3092 = vpack.c.b16 %v3088, %v3087
  %v3098 = vsel %vm31, %v3057, 0
  %v3101 = vsel %vm31, %v3058, 0
  %v3104 = vsel %vm31, %v3059, 0
  %v3107 = vsel %vm31, %v3060, 0
  %v3110 = vsel %vm31, %v3061, 0
  %v3113 = vsel %vm31, %v3062, 0
  %v3116 = vsel %vm31, %v3063, 0
  %v3119 = vsel %vm31, %v3064, 0
  %3121 = vmatprep.subr.bf16.mxu0 0
  %3122 = vmatpush1.bf16.msra.mxu0 0
  %3123 = vmatprep.subr.bf16.mxu0 0
  %3124 = vmatpush1.bf16.msra.mxu0 0
  %3125 = vmatprep.subr.bf16.mxu0 0
  %3126 = vmatpush1.bf16.msra.mxu0 0
  %3127 = vmatprep.subr.bf16.mxu0 0
  %3128 = vmatpush1.bf16.msra.mxu0 0
  %3129 = vmatprep.subr.bf16.mxu0 0
  %3130 = vmatpush1.bf16.msra.mxu0 %v3092
  %3131 = vmatprep.subr.bf16.mxu0 0
  %3132 = vmatpush1.bf16.msra.mxu0 %v3091
  %3133 = vmatprep.subr.bf16.mxu0 0
  %3134 = vmatpush1.bf16.msra.mxu0 %v3090
  %3135 = vmatprep.subr.bf16.mxu0 0
  %3136 = vmatpush1.bf16.msra.mxu0 %v3089
  %3137 = vmatprep.subr.bf16.mxu0 0
  %3138 = vmatpush2.bf16.msra.mxu0 0
  %3139 = vmatprep.subr.bf16.mxu0 0
  %3140 = vmatpush2.bf16.msra.mxu0 0
  %3141 = vmatprep.subr.bf16.mxu0 0
  %3142 = vmatpush2.bf16.msra.mxu0 0
  %3143 = vmatprep.subr.bf16.mxu0 0
  %3144 = vmatpush2.bf16.msra.mxu0 0
  %3145 = vmatprep.subr.bf16.mxu0 0
  %3146 = vmatpush2.bf16.msra.mxu0 0
  %3147 = vmatprep.subr.bf16.mxu0 0
  %3148 = vmatpush2.bf16.msra.mxu0 0
  %3149 = vmatprep.subr.bf16.mxu0 0
  %3150 = vmatpush2.bf16.msra.mxu0 0
  %3151 = vmatprep.subr.bf16.mxu0 0
  %3152 = vmatpush2.bf16.msra.mxu0 0
  %3153 = vmatprep.mubr.bf16.mxu0 0
  %3154 = vmatmul.mubr.bf16.gmra.mxu0 %v3098
  %v3155 = vpop.f32.mrf.mxu0
  %v3156 = vadd.f32 0.0, %v3155
  %v3157 = vpop.f32.mrf.mxu0
  %v3158 = vpop.f32.mrf.mxu0
  %v3159 = vadd.f32 0.0, %v3158
  %v3160 = vpop.f32.mrf.mxu0
  %3161 = vmatprep.mubr.bf16.mxu0 0
  %3162 = vmatmul.mubr.bf16.gmra.mxu0 %v3101
  %v3163 = vpop.f32.mrf.mxu0
  %v3164 = vadd.f32 0.0, %v3163
  %v3165 = vpop.f32.mrf.mxu0
  %v3166 = vpop.f32.mrf.mxu0
  %v3167 = vadd.f32 0.0, %v3166
  %v3168 = vpop.f32.mrf.mxu0
  %3169 = vmatprep.mubr.bf16.mxu0 0
  %3170 = vmatmul.mubr.bf16.gmra.mxu0 %v3104
  %v3171 = vpop.f32.mrf.mxu0
  %v3172 = vadd.f32 0.0, %v3171
  %v3173 = vpop.f32.mrf.mxu0
  %v3174 = vpop.f32.mrf.mxu0
  %v3175 = vadd.f32 0.0, %v3174
  %v3176 = vpop.f32.mrf.mxu0
  %3177 = vmatprep.mubr.bf16.mxu0 0
  %3178 = vmatmul.mubr.bf16.gmra.mxu0 %v3107
  %v3179 = vpop.f32.mrf.mxu0
  %v3180 = vadd.f32 0.0, %v3179
  %v3181 = vpop.f32.mrf.mxu0
  %v3182 = vpop.f32.mrf.mxu0
  %v3183 = vadd.f32 0.0, %v3182
  %v3184 = vpop.f32.mrf.mxu0
  %3185 = vmatprep.mubr.bf16.mxu0 0
  %3186 = vmatmul.mubr.bf16.gmra.mxu0 %v3110
  %v3187 = vpop.f32.mrf.mxu0
  %v3188 = vadd.f32 0.0, %v3187
  %v3189 = vpop.f32.mrf.mxu0
  %v3190 = vpop.f32.mrf.mxu0
  %v3191 = vadd.f32 0.0, %v3190
  %v3192 = vpop.f32.mrf.mxu0
  %3193 = vmatprep.mubr.bf16.mxu0 0
  %3194 = vmatmul.mubr.bf16.gmra.mxu0 %v3113
  %v3195 = vpop.f32.mrf.mxu0
  %v3196 = vadd.f32 0.0, %v3195
  %v3197 = vpop.f32.mrf.mxu0
  %v3198 = vpop.f32.mrf.mxu0
  %v3199 = vadd.f32 0.0, %v3198
  %v3200 = vpop.f32.mrf.mxu0
  %3201 = vmatprep.mubr.bf16.mxu0 0
  %3202 = vmatmul.mubr.bf16.gmra.mxu0 %v3116
  %v3203 = vpop.f32.mrf.mxu0
  %v3204 = vadd.f32 0.0, %v3203
  %v3205 = vpop.f32.mrf.mxu0
  %v3206 = vpop.f32.mrf.mxu0
  %v3207 = vadd.f32 0.0, %v3206
  %v3208 = vpop.f32.mrf.mxu0
  %3209 = vmatprep.mubr.bf16.mxu0 0
  %3210 = vmatmul.mubr.bf16.gmra.mxu0 %v3119
  %v3211 = vpop.f32.mrf.mxu0
  %v3212 = vadd.f32 0.0, %v3211
  %v3213 = vpop.f32.mrf.mxu0
  %v3214 = vpop.f32.mrf.mxu0
  %v3215 = vadd.f32 0.0, %v3214
  %v3216 = vpop.f32.mrf.mxu0
  %3217 = vdwg.mxu0
  %v3218 = vadd.f32 %v2931, %v3156
  %v3219 = vadd.f32 %v2934, %v3159
  %v3220 = vadd.f32 %v2939, %v3164
  %v3221 = vadd.f32 %v2942, %v3167
  %v3222 = vadd.f32 %v2947, %v3172
  %v3223 = vadd.f32 %v2950, %v3175
  %v3224 = vadd.f32 %v2955, %v3180
  %v3225 = vadd.f32 %v2958, %v3183
  %v3226 = vadd.f32 %v2963, %v3188
  %v3227 = vadd.f32 %v2966, %v3191
  %v3228 = vadd.f32 %v2971, %v3196
  %v3229 = vadd.f32 %v2974, %v3199
  %v3230 = vadd.f32 %v2979, %v3204
  %v3231 = vadd.f32 %v2982, %v3207
  %v3232 = vadd.f32 %v2987, %v3212
  %v3233 = vadd.f32 %v2990, %v3215
  %v3234 = vld [vmem:[#allocation2 + $0xf] sm:$0xff]
  %v3235 = vld [vmem:[#allocation2 + $0x17] sm:$0xff]
  %v3236 = vld [vmem:[#allocation2 + $0x1f] sm:$0xff]
  %v3237 = vld [vmem:[#allocation2 + $0x27] sm:$0xff]
  %v3238 = vld [vmem:[#allocation2 + $0x2f] sm:$0xff]
  %v3239 = vld [vmem:[#allocation2 + $0x37] sm:$0xff]
  %v3240 = vld [vmem:[#allocation2 + $0x3f] sm:$0xff]
  %v3241 = vld [vmem:[#allocation2 + $0x47] sm:$0xff]
  %v3242 = vld [vmem:[#allocation2 + $0x4f] sm:$0xff]
  %v3243 = vld [vmem:[#allocation2 + $0x57] sm:$0xff]
  %v3244 = vld [vmem:[#allocation2 + $0x5f] sm:$0xff]
  %v3245 = vld [vmem:[#allocation2 + $0x67] sm:$0xff]
  %v3246 = vld [vmem:[#allocation2 + $0x6f] sm:$0xff]
  %v3247 = vld [vmem:[#allocation2 + $0x77] sm:$0xff]
  %v3248 = vld [vmem:[#allocation2 + $0x7f] sm:$0xff]
  %v3249 = vld [vmem:[#allocation2 + $0x87] sm:$0xff]
  %v3250 = vld [vmem:[%s1035] sm:$0xff]
  %v3251 = vld [vmem:[%s1035 + $0x8] sm:$0xff]
  %v3252 = vld [vmem:[%s1035 + $0x10] sm:$0xff]
  %v3253 = vld [vmem:[%s1035 + $0x18] sm:$0xff]
  %v3254 = vld [vmem:[%s1035 + $0x20] sm:$0xff]
  %v3255 = vld [vmem:[%s1035 + $0x28] sm:$0xff]
  %v3256 = vld [vmem:[%s1035 + $0x30] sm:$0xff]
  %v3257 = vld [vmem:[%s1035 + $0x38] sm:$0xff]
  %v3258 = vld [vmem:[%s1035 + $0x40] sm:$0xff]
  %v3259 = vld [vmem:[%s1035 + $0x48] sm:$0xff]
  %v3260 = vld [vmem:[%s1035 + $0x50] sm:$0xff]
  %v3261 = vld [vmem:[%s1035 + $0x58] sm:$0xff]
  %v3262 = vld [vmem:[%s1035 + $0x60] sm:$0xff]
  %v3263 = vld [vmem:[%s1035 + $0x68] sm:$0xff]
  %v3264 = vld [vmem:[%s1035 + $0x70] sm:$0xff]
  %v3265 = vld [vmem:[%s1035 + $0x78] sm:$0xff]
  %vm3266 = vcmp.gt.f32.partialorder %v3250, 0.0
  %vm3267 = vcmp.gt.f32.partialorder %v3251, 0.0
  %vm3268 = vcmp.gt.f32.partialorder %v3252, 0.0
  %vm3269 = vcmp.gt.f32.partialorder %v3253, 0.0
  %vm3270 = vcmp.gt.f32.partialorder %v3254, 0.0
  %vm3271 = vcmp.gt.f32.partialorder %v3255, 0.0
  %vm3272 = vcmp.gt.f32.partialorder %v3256, 0.0
  %vm3273 = vcmp.gt.f32.partialorder %v3257, 0.0
  %vm3274 = vcmp.gt.f32.partialorder %v3258, 0.0
  %vm3275 = vcmp.gt.f32.partialorder %v3259, 0.0
  %vm3276 = vcmp.gt.f32.partialorder %v3260, 0.0
  %vm3277 = vcmp.gt.f32.partialorder %v3261, 0.0
  %vm3278 = vcmp.gt.f32.partialorder %v3262, 0.0
  %vm3279 = vcmp.gt.f32.partialorder %v3263, 0.0
  %vm3280 = vcmp.gt.f32.partialorder %v3264, 0.0
  %vm3281 = vcmp.gt.f32.partialorder %v3265, 0.0
  %v3282 = vsel %vm3266, %v3234, 0.0
  %v3283 = vsel %vm3267, %v3235, 0.0
  %v3284 = vsel %vm3268, %v3236, 0.0
  %v3285 = vsel %vm3269, %v3237, 0.0
  %v3286 = vsel %vm3270, %v3238, 0.0
  %v3287 = vsel %vm3271, %v3239, 0.0
  %v3288 = vsel %vm3272, %v3240, 0.0
  %v3289 = vsel %vm3273, %v3241, 0.0
  %v3290 = vsel %vm3274, %v3242, 0.0
  %v3291 = vsel %vm3275, %v3243, 0.0
  %v3292 = vsel %vm3276, %v3244, 0.0
  %v3293 = vsel %vm3277, %v3245, 0.0
  %v3294 = vsel %vm3278, %v3246, 0.0
  %v3295 = vsel %vm3279, %v3247, 0.0
  %v3296 = vsel %vm3280, %v3248, 0.0
  %v3297 = vsel %vm3281, %v3249, 0.0
  %v3298 = vpack.c.bf16 %v3283, %v3282
  %v3299 = vpack.c.bf16 %v3285, %v3284
  %v3300 = vpack.c.bf16 %v3287, %v3286
  %v3301 = vpack.c.bf16 %v3289, %v3288
  %v3302 = vpack.c.bf16 %v3291, %v3290
  %v3303 = vpack.c.bf16 %v3293, %v3292
  %v3304 = vpack.c.bf16 %v3295, %v3294
  %v3305 = vpack.c.bf16 %v3297, %v3296
  %v3306 = vld [vmem:[%s2614 + $0x60] sm:$0xf]
  %v3307 = vld [vmem:[%s2614 + $0x64] sm:$0xf]
  %v3308 = vld [vmem:[%s2614 + $0x68] sm:$0xf]
  %v3309 = vld [vmem:[%s2614 + $0x6c] sm:$0xf]
  %v3310 = vld [vmem:[%s2614 + $0x70] sm:$0xf]
  %v3311 = vld [vmem:[%s2614 + $0x74] sm:$0xf]
  %v3312 = vld [vmem:[%s2614 + $0x78] sm:$0xf]
  %v3313 = vld [vmem:[%s2614 + $0x7c] sm:$0xf]
  %v3322 = vunpack.c.l.b16 %v3306
  %v3323 = vunpack.c.l.b16 %v3307
  %v3324 = vunpack.c.l.b16 %v3308
  %v3325 = vunpack.c.l.b16 %v3309
  %v3326 = vunpack.c.l.b16 %v3310
  %v3327 = vunpack.c.l.b16 %v3311
  %v3328 = vunpack.c.l.b16 %v3312
  %v3329 = vunpack.c.l.b16 %v3313
  %v3330 = vpack.c.b16 %v3323, %v3322
  %v3331 = vpack.c.b16 %v3325, %v3324
  %v3332 = vpack.c.b16 %v3327, %v3326
  %v3333 = vpack.c.b16 %v3329, %v3328
  %v3339 = vsel %vm31, %v3298, 0
  %v3342 = vsel %vm31, %v3299, 0
  %v3345 = vsel %vm31, %v3300, 0
  %v3348 = vsel %vm31, %v3301, 0
  %v3351 = vsel %vm31, %v3302, 0
  %v3354 = vsel %vm31, %v3303, 0
  %v3357 = vsel %vm31, %v3304, 0
  %v3360 = vsel %vm31, %v3305, 0
  %3362 = vmatprep.subr.bf16.mxu0 0
  %3363 = vmatpush1.bf16.msra.mxu0 0
  %3364 = vmatprep.subr.bf16.mxu0 0
  %3365 = vmatpush1.bf16.msra.mxu0 0
  %3366 = vmatprep.subr.bf16.mxu0 0
  %3367 = vmatpush1.bf16.msra.mxu0 0
  %3368 = vmatprep.subr.bf16.mxu0 0
  %3369 = vmatpush1.bf16.msra.mxu0 0
  %3370 = vmatprep.subr.bf16.mxu0 0
  %3371 = vmatpush1.bf16.msra.mxu0 %v3333
  %3372 = vmatprep.subr.bf16.mxu0 0
  %3373 = vmatpush1.bf16.msra.mxu0 %v3332
  %3374 = vmatprep.subr.bf16.mxu0 0
  %3375 = vmatpush1.bf16.msra.mxu0 %v3331
  %3376 = vmatprep.subr.bf16.mxu0 0
  %3377 = vmatpush1.bf16.msra.mxu0 %v3330
  %3378 = vmatprep.subr.bf16.mxu0 0
  %3379 = vmatpush2.bf16.msra.mxu0 0
  %3380 = vmatprep.subr.bf16.mxu0 0
  %3381 = vmatpush2.bf16.msra.mxu0 0
  %3382 = vmatprep.subr.bf16.mxu0 0
  %3383 = vmatpush2.bf16.msra.mxu0 0
  %3384 = vmatprep.subr.bf16.mxu0 0
  %3385 = vmatpush2.bf16.msra.mxu0 0
  %3386 = vmatprep.subr.bf16.mxu0 0
  %3387 = vmatpush2.bf16.msra.mxu0 0
  %3388 = vmatprep.subr.bf16.mxu0 0
  %3389 = vmatpush2.bf16.msra.mxu0 0
  %3390 = vmatprep.subr.bf16.mxu0 0
  %3391 = vmatpush2.bf16.msra.mxu0 0
  %3392 = vmatprep.subr.bf16.mxu0 0
  %3393 = vmatpush2.bf16.msra.mxu0 0
  %3394 = vmatprep.mubr.bf16.mxu0 0
  %3395 = vmatmul.mubr.bf16.gmra.mxu0 %v3339
  %v3396 = vpop.f32.mrf.mxu0
  %v3397 = vadd.f32 0.0, %v3396
  %v3398 = vpop.f32.mrf.mxu0
  %v3399 = vpop.f32.mrf.mxu0
  %v3400 = vadd.f32 0.0, %v3399
  %v3401 = vpop.f32.mrf.mxu0
  %3402 = vmatprep.mubr.bf16.mxu0 0
  %3403 = vmatmul.mubr.bf16.gmra.mxu0 %v3342
  %v3404 = vpop.f32.mrf.mxu0
  %v3405 = vadd.f32 0.0, %v3404
  %v3406 = vpop.f32.mrf.mxu0
  %v3407 = vpop.f32.mrf.mxu0
  %v3408 = vadd.f32 0.0, %v3407
  %v3409 = vpop.f32.mrf.mxu0
  %3410 = vmatprep.mubr.bf16.mxu0 0
  %3411 = vmatmul.mubr.bf16.gmra.mxu0 %v3345
  %v3412 = vpop.f32.mrf.mxu0
  %v3413 = vadd.f32 0.0, %v3412
  %v3414 = vpop.f32.mrf.mxu0
  %v3415 = vpop.f32.mrf.mxu0
  %v3416 = vadd.f32 0.0, %v3415
  %v3417 = vpop.f32.mrf.mxu0
  %3418 = vmatprep.mubr.bf16.mxu0 0
  %3419 = vmatmul.mubr.bf16.gmra.mxu0 %v3348
  %v3420 = vpop.f32.mrf.mxu0
  %v3421 = vadd.f32 0.0, %v3420
  %v3422 = vpop.f32.mrf.mxu0
  %v3423 = vpop.f32.mrf.mxu0
  %v3424 = vadd.f32 0.0, %v3423
  %v3425 = vpop.f32.mrf.mxu0
  %3426 = vmatprep.mubr.bf16.mxu0 0
  %3427 = vmatmul.mubr.bf16.gmra.mxu0 %v3351
  %v3428 = vpop.f32.mrf.mxu0
  %v3429 = vadd.f32 0.0, %v3428
  %v3430 = vpop.f32.mrf.mxu0
  %v3431 = vpop.f32.mrf.mxu0
  %v3432 = vadd.f32 0.0, %v3431
  %v3433 = vpop.f32.mrf.mxu0
  %3434 = vmatprep.mubr.bf16.mxu0 0
  %3435 = vmatmul.mubr.bf16.gmra.mxu0 %v3354
  %v3436 = vpop.f32.mrf.mxu0
  %v3437 = vadd.f32 0.0, %v3436
  %v3438 = vpop.f32.mrf.mxu0
  %v3439 = vpop.f32.mrf.mxu0
  %v3440 = vadd.f32 0.0, %v3439
  %v3441 = vpop.f32.mrf.mxu0
  %3442 = vmatprep.mubr.bf16.mxu0 0
  %3443 = vmatmul.mubr.bf16.gmra.mxu0 %v3357
  %v3444 = vpop.f32.mrf.mxu0
  %v3445 = vadd.f32 0.0, %v3444
  %v3446 = vpop.f32.mrf.mxu0
  %v3447 = vpop.f32.mrf.mxu0
  %v3448 = vadd.f32 0.0, %v3447
  %v3449 = vpop.f32.mrf.mxu0
  %3450 = vmatprep.mubr.bf16.mxu0 0
  %3451 = vmatmul.mubr.bf16.gmra.mxu0 %v3360
  %v3452 = vpop.f32.mrf.mxu0
  %v3453 = vadd.f32 0.0, %v3452
  %v3454 = vpop.f32.mrf.mxu0
  %v3455 = vpop.f32.mrf.mxu0
  %v3456 = vadd.f32 0.0, %v3455
  %v3457 = vpop.f32.mrf.mxu0
  %3458 = vdwg.mxu0
  %v3459 = vadd.f32 %v3218, %v3397
  %v3460 = vadd.f32 %v3219, %v3400
  %v3461 = vadd.f32 %v3220, %v3405
  %v3462 = vadd.f32 %v3221, %v3408
  %v3463 = vadd.f32 %v3222, %v3413
  %v3464 = vadd.f32 %v3223, %v3416
  %v3465 = vadd.f32 %v3224, %v3421
  %v3466 = vadd.f32 %v3225, %v3424
  %v3467 = vadd.f32 %v3226, %v3429
  %v3468 = vadd.f32 %v3227, %v3432
  %v3469 = vadd.f32 %v3228, %v3437
  %v3470 = vadd.f32 %v3229, %v3440
  %v3471 = vadd.f32 %v3230, %v3445
  %v3472 = vadd.f32 %v3231, %v3448
  %v3473 = vadd.f32 %v3232, %v3453
  %v3474 = vadd.f32 %v3233, %v3456
  %v3475 = vld [vmem:[#allocation2 + $0x10] sm:$0xff]
  %v3476 = vld [vmem:[#allocation2 + $0x18] sm:$0xff]
  %v3477 = vld [vmem:[#allocation2 + $0x20] sm:$0xff]
  %v3478 = vld [vmem:[#allocation2 + $0x28] sm:$0xff]
  %v3479 = vld [vmem:[#allocation2 + $0x30] sm:$0xff]
  %v3480 = vld [vmem:[#allocation2 + $0x38] sm:$0xff]
  %v3481 = vld [vmem:[#allocation2 + $0x40] sm:$0xff]
  %v3482 = vld [vmem:[#allocation2 + $0x48] sm:$0xff]
  %v3483 = vld [vmem:[#allocation2 + $0x50] sm:$0xff]
  %v3484 = vld [vmem:[#allocation2 + $0x58] sm:$0xff]
  %v3485 = vld [vmem:[#allocation2 + $0x60] sm:$0xff]
  %v3486 = vld [vmem:[#allocation2 + $0x68] sm:$0xff]
  %v3487 = vld [vmem:[#allocation2 + $0x70] sm:$0xff]
  %v3488 = vld [vmem:[#allocation2 + $0x78] sm:$0xff]
  %v3489 = vld [vmem:[#allocation2 + $0x80] sm:$0xff]
  %v3490 = vld [vmem:[#allocation2 + $0x88] sm:$0xff]
  %v3491 = vld [vmem:[%s1277] sm:$0xff]
  %v3492 = vld [vmem:[%s1277 + $0x8] sm:$0xff]
  %v3493 = vld [vmem:[%s1277 + $0x10] sm:$0xff]
  %v3494 = vld [vmem:[%s1277 + $0x18] sm:$0xff]
  %v3495 = vld [vmem:[%s1277 + $0x20] sm:$0xff]
  %v3496 = vld [vmem:[%s1277 + $0x28] sm:$0xff]
  %v3497 = vld [vmem:[%s1277 + $0x30] sm:$0xff]
  %v3498 = vld [vmem:[%s1277 + $0x38] sm:$0xff]
  %v3499 = vld [vmem:[%s1277 + $0x40] sm:$0xff]
  %v3500 = vld [vmem:[%s1277 + $0x48] sm:$0xff]
  %v3501 = vld [vmem:[%s1277 + $0x50] sm:$0xff]
  %v3502 = vld [vmem:[%s1277 + $0x58] sm:$0xff]
  %v3503 = vld [vmem:[%s1277 + $0x60] sm:$0xff]
  %v3504 = vld [vmem:[%s1277 + $0x68] sm:$0xff]
  %v3505 = vld [vmem:[%s1277 + $0x70] sm:$0xff]
  %v3506 = vld [vmem:[%s1277 + $0x78] sm:$0xff]
  %vm3507 = vcmp.gt.f32.partialorder %v3491, 0.0
  %vm3508 = vcmp.gt.f32.partialorder %v3492, 0.0
  %vm3509 = vcmp.gt.f32.partialorder %v3493, 0.0
  %vm3510 = vcmp.gt.f32.partialorder %v3494, 0.0
  %vm3511 = vcmp.gt.f32.partialorder %v3495, 0.0
  %vm3512 = vcmp.gt.f32.partialorder %v3496, 0.0
  %vm3513 = vcmp.gt.f32.partialorder %v3497, 0.0
  %vm3514 = vcmp.gt.f32.partialorder %v3498, 0.0
  %vm3515 = vcmp.gt.f32.partialorder %v3499, 0.0
  %vm3516 = vcmp.gt.f32.partialorder %v3500, 0.0
  %vm3517 = vcmp.gt.f32.partialorder %v3501, 0.0
  %vm3518 = vcmp.gt.f32.partialorder %v3502, 0.0
  %vm3519 = vcmp.gt.f32.partialorder %v3503, 0.0
  %vm3520 = vcmp.gt.f32.partialorder %v3504, 0.0
  %vm3521 = vcmp.gt.f32.partialorder %v3505, 0.0
  %vm3522 = vcmp.gt.f32.partialorder %v3506, 0.0
  %v3523 = vsel %vm3507, %v3475, 0.0
  %v3524 = vsel %vm3508, %v3476, 0.0
  %v3525 = vsel %vm3509, %v3477, 0.0
  %v3526 = vsel %vm3510, %v3478, 0.0
  %v3527 = vsel %vm3511, %v3479, 0.0
  %v3528 = vsel %vm3512, %v3480, 0.0
  %v3529 = vsel %vm3513, %v3481, 0.0
  %v3530 = vsel %vm3514, %v3482, 0.0
  %v3531 = vsel %vm3515, %v3483, 0.0
  %v3532 = vsel %vm3516, %v3484, 0.0
  %v3533 = vsel %vm3517, %v3485, 0.0
  %v3534 = vsel %vm3518, %v3486, 0.0
  %v3535 = vsel %vm3519, %v3487, 0.0
  %v3536 = vsel %vm3520, %v3488, 0.0
  %v3537 = vsel %vm3521, %v3489, 0.0
  %v3538 = vsel %vm3522, %v3490, 0.0
  %v3539 = vpack.c.bf16 %v3524, %v3523
  %v3540 = vpack.c.bf16 %v3526, %v3525
  %v3541 = vpack.c.bf16 %v3528, %v3527
  %v3542 = vpack.c.bf16 %v3530, %v3529
  %v3543 = vpack.c.bf16 %v3532, %v3531
  %v3544 = vpack.c.bf16 %v3534, %v3533
  %v3545 = vpack.c.bf16 %v3536, %v3535
  %v3546 = vpack.c.bf16 %v3538, %v3537
  %v3547 = vld [vmem:[%s2614 + $0x80] sm:$0xf]
  %v3548 = vld [vmem:[%s2614 + $0x84] sm:$0xf]
  %v3549 = vld [vmem:[%s2614 + $0x88] sm:$0xf]
  %v3550 = vld [vmem:[%s2614 + $0x8c] sm:$0xf]
  %v3551 = vld [vmem:[%s2614 + $0x90] sm:$0xf]
  %v3552 = vld [vmem:[%s2614 + $0x94] sm:$0xf]
  %v3553 = vld [vmem:[%s2614 + $0x98] sm:$0xf]
  %v3554 = vld [vmem:[%s2614 + $0x9c] sm:$0xf]
  %v3563 = vunpack.c.l.b16 %v3547
  %v3564 = vunpack.c.l.b16 %v3548
  %v3565 = vunpack.c.l.b16 %v3549
  %v3566 = vunpack.c.l.b16 %v3550
  %v3567 = vunpack.c.l.b16 %v3551
  %v3568 = vunpack.c.l.b16 %v3552
  %v3569 = vunpack.c.l.b16 %v3553
  %v3570 = vunpack.c.l.b16 %v3554
  %v3571 = vpack.c.b16 %v3564, %v3563
  %v3572 = vpack.c.b16 %v3566, %v3565
  %v3573 = vpack.c.b16 %v3568, %v3567
  %v3574 = vpack.c.b16 %v3570, %v3569
  %v3580 = vsel %vm31, %v3539, 0
  %v3583 = vsel %vm31, %v3540, 0
  %v3586 = vsel %vm31, %v3541, 0
  %v3589 = vsel %vm31, %v3542, 0
  %v3592 = vsel %vm31, %v3543, 0
  %v3595 = vsel %vm31, %v3544, 0
  %v3598 = vsel %vm31, %v3545, 0
  %v3601 = vsel %vm31, %v3546, 0
  %3603 = vmatprep.subr.bf16.mxu0 0
  %3604 = vmatpush1.bf16.msra.mxu0 0
  %3605 = vmatprep.subr.bf16.mxu0 0
  %3606 = vmatpush1.bf16.msra.mxu0 0
  %3607 = vmatprep.subr.bf16.mxu0 0
  %3608 = vmatpush1.bf16.msra.mxu0 0
  %3609 = vmatprep.subr.bf16.mxu0 0
  %3610 = vmatpush1.bf16.msra.mxu0 0
  %3611 = vmatprep.subr.bf16.mxu0 0
  %3612 = vmatpush1.bf16.msra.mxu0 %v3574
  %3613 = vmatprep.subr.bf16.mxu0 0
  %3614 = vmatpush1.bf16.msra.mxu0 %v3573
  %3615 = vmatprep.subr.bf16.mxu0 0
  %3616 = vmatpush1.bf16.msra.mxu0 %v3572
  %3617 = vmatprep.subr.bf16.mxu0 0
  %3618 = vmatpush1.bf16.msra.mxu0 %v3571
  %3619 = vmatprep.subr.bf16.mxu0 0
  %3620 = vmatpush2.bf16.msra.mxu0 0
  %3621 = vmatprep.subr.bf16.mxu0 0
  %3622 = vmatpush2.bf16.msra.mxu0 0
  %3623 = vmatprep.subr.bf16.mxu0 0
  %3624 = vmatpush2.bf16.msra.mxu0 0
  %3625 = vmatprep.subr.bf16.mxu0 0
  %3626 = vmatpush2.bf16.msra.mxu0 0
  %3627 = vmatprep.subr.bf16.mxu0 0
  %3628 = vmatpush2.bf16.msra.mxu0 0
  %3629 = vmatprep.subr.bf16.mxu0 0
  %3630 = vmatpush2.bf16.msra.mxu0 0
  %3631 = vmatprep.subr.bf16.mxu0 0
  %3632 = vmatpush2.bf16.msra.mxu0 0
  %3633 = vmatprep.subr.bf16.mxu0 0
  %3634 = vmatpush2.bf16.msra.mxu0 0
  %3635 = vmatprep.mubr.bf16.mxu0 0
  %3636 = vmatmul.mubr.bf16.gmra.mxu0 %v3580
  %v3637 = vpop.f32.mrf.mxu0
  %v3638 = vadd.f32 0.0, %v3637
  %v3639 = vpop.f32.mrf.mxu0
  %v3640 = vpop.f32.mrf.mxu0
  %v3641 = vadd.f32 0.0, %v3640
  %v3642 = vpop.f32.mrf.mxu0
  %3643 = vmatprep.mubr.bf16.mxu0 0
  %3644 = vmatmul.mubr.bf16.gmra.mxu0 %v3583
  %v3645 = vpop.f32.mrf.mxu0
  %v3646 = vadd.f32 0.0, %v3645
  %v3647 = vpop.f32.mrf.mxu0
  %v3648 = vpop.f32.mrf.mxu0
  %v3649 = vadd.f32 0.0, %v3648
  %v3650 = vpop.f32.mrf.mxu0
  %3651 = vmatprep.mubr.bf16.mxu0 0
  %3652 = vmatmul.mubr.bf16.gmra.mxu0 %v3586
  %v3653 = vpop.f32.mrf.mxu0
  %v3654 = vadd.f32 0.0, %v3653
  %v3655 = vpop.f32.mrf.mxu0
  %v3656 = vpop.f32.mrf.mxu0
  %v3657 = vadd.f32 0.0, %v3656
  %v3658 = vpop.f32.mrf.mxu0
  %3659 = vmatprep.mubr.bf16.mxu0 0
  %3660 = vmatmul.mubr.bf16.gmra.mxu0 %v3589
  %v3661 = vpop.f32.mrf.mxu0
  %v3662 = vadd.f32 0.0, %v3661
  %v3663 = vpop.f32.mrf.mxu0
  %v3664 = vpop.f32.mrf.mxu0
  %v3665 = vadd.f32 0.0, %v3664
  %v3666 = vpop.f32.mrf.mxu0
  %3667 = vmatprep.mubr.bf16.mxu0 0
  %3668 = vmatmul.mubr.bf16.gmra.mxu0 %v3592
  %v3669 = vpop.f32.mrf.mxu0
  %v3670 = vadd.f32 0.0, %v3669
  %v3671 = vpop.f32.mrf.mxu0
  %v3672 = vpop.f32.mrf.mxu0
  %v3673 = vadd.f32 0.0, %v3672
  %v3674 = vpop.f32.mrf.mxu0
  %3675 = vmatprep.mubr.bf16.mxu0 0
  %3676 = vmatmul.mubr.bf16.gmra.mxu0 %v3595
  %v3677 = vpop.f32.mrf.mxu0
  %v3678 = vadd.f32 0.0, %v3677
  %v3679 = vpop.f32.mrf.mxu0
  %v3680 = vpop.f32.mrf.mxu0
  %v3681 = vadd.f32 0.0, %v3680
  %v3682 = vpop.f32.mrf.mxu0
  %3683 = vmatprep.mubr.bf16.mxu0 0
  %3684 = vmatmul.mubr.bf16.gmra.mxu0 %v3598
  %v3685 = vpop.f32.mrf.mxu0
  %v3686 = vadd.f32 0.0, %v3685
  %v3687 = vpop.f32.mrf.mxu0
  %v3688 = vpop.f32.mrf.mxu0
  %v3689 = vadd.f32 0.0, %v3688
  %v3690 = vpop.f32.mrf.mxu0
  %3691 = vmatprep.mubr.bf16.mxu0 0
  %3692 = vmatmul.mubr.bf16.gmra.mxu0 %v3601
  %v3693 = vpop.f32.mrf.mxu0
  %v3694 = vadd.f32 0.0, %v3693
  %v3695 = vpop.f32.mrf.mxu0
  %v3696 = vpop.f32.mrf.mxu0
  %v3697 = vadd.f32 0.0, %v3696
  %v3698 = vpop.f32.mrf.mxu0
  %3699 = vdwg.mxu0
  %v3700 = vadd.f32 %v3459, %v3638
  %v3701 = vadd.f32 %v3460, %v3641
  %v3702 = vadd.f32 %v3461, %v3646
  %v3703 = vadd.f32 %v3462, %v3649
  %v3704 = vadd.f32 %v3463, %v3654
  %v3705 = vadd.f32 %v3464, %v3657
  %v3706 = vadd.f32 %v3465, %v3662
  %v3707 = vadd.f32 %v3466, %v3665
  %v3708 = vadd.f32 %v3467, %v3670
  %v3709 = vadd.f32 %v3468, %v3673
  %v3710 = vadd.f32 %v3469, %v3678
  %v3711 = vadd.f32 %v3470, %v3681
  %v3712 = vadd.f32 %v3471, %v3686
  %v3713 = vadd.f32 %v3472, %v3689
  %v3714 = vadd.f32 %v3473, %v3694
  %v3715 = vadd.f32 %v3474, %v3697
  %v3716 = vld [vmem:[#allocation2 + $0x11] sm:$0xff]
  %v3717 = vld [vmem:[#allocation2 + $0x19] sm:$0xff]
  %v3718 = vld [vmem:[#allocation2 + $0x21] sm:$0xff]
  %v3719 = vld [vmem:[#allocation2 + $0x29] sm:$0xff]
  %v3720 = vld [vmem:[#allocation2 + $0x31] sm:$0xff]
  %v3721 = vld [vmem:[#allocation2 + $0x39] sm:$0xff]
  %v3722 = vld [vmem:[#allocation2 + $0x41] sm:$0xff]
  %v3723 = vld [vmem:[#allocation2 + $0x49] sm:$0xff]
  %v3724 = vld [vmem:[#allocation2 + $0x51] sm:$0xff]
  %v3725 = vld [vmem:[#allocation2 + $0x59] sm:$0xff]
  %v3726 = vld [vmem:[#allocation2 + $0x61] sm:$0xff]
  %v3727 = vld [vmem:[#allocation2 + $0x69] sm:$0xff]
  %v3728 = vld [vmem:[#allocation2 + $0x71] sm:$0xff]
  %v3729 = vld [vmem:[#allocation2 + $0x79] sm:$0xff]
  %v3730 = vld [vmem:[#allocation2 + $0x81] sm:$0xff]
  %v3731 = vld [vmem:[#allocation2 + $0x89] sm:$0xff]
  %v3732 = vld [vmem:[%s1519] sm:$0xff]
  %v3733 = vld [vmem:[%s1519 + $0x8] sm:$0xff]
  %v3734 = vld [vmem:[%s1519 + $0x10] sm:$0xff]
  %v3735 = vld [vmem:[%s1519 + $0x18] sm:$0xff]
  %v3736 = vld [vmem:[%s1519 + $0x20] sm:$0xff]
  %v3737 = vld [vmem:[%s1519 + $0x28] sm:$0xff]
  %v3738 = vld [vmem:[%s1519 + $0x30] sm:$0xff]
  %v3739 = vld [vmem:[%s1519 + $0x38] sm:$0xff]
  %v3740 = vld [vmem:[%s1519 + $0x40] sm:$0xff]
  %v3741 = vld [vmem:[%s1519 + $0x48] sm:$0xff]
  %v3742 = vld [vmem:[%s1519 + $0x50] sm:$0xff]
  %v3743 = vld [vmem:[%s1519 + $0x58] sm:$0xff]
  %v3744 = vld [vmem:[%s1519 + $0x60] sm:$0xff]
  %v3745 = vld [vmem:[%s1519 + $0x68] sm:$0xff]
  %v3746 = vld [vmem:[%s1519 + $0x70] sm:$0xff]
  %v3747 = vld [vmem:[%s1519 + $0x78] sm:$0xff]
  %vm3748 = vcmp.gt.f32.partialorder %v3732, 0.0
  %vm3749 = vcmp.gt.f32.partialorder %v3733, 0.0
  %vm3750 = vcmp.gt.f32.partialorder %v3734, 0.0
  %vm3751 = vcmp.gt.f32.partialorder %v3735, 0.0
  %vm3752 = vcmp.gt.f32.partialorder %v3736, 0.0
  %vm3753 = vcmp.gt.f32.partialorder %v3737, 0.0
  %vm3754 = vcmp.gt.f32.partialorder %v3738, 0.0
  %vm3755 = vcmp.gt.f32.partialorder %v3739, 0.0
  %vm3756 = vcmp.gt.f32.partialorder %v3740, 0.0
  %vm3757 = vcmp.gt.f32.partialorder %v3741, 0.0
  %vm3758 = vcmp.gt.f32.partialorder %v3742, 0.0
  %vm3759 = vcmp.gt.f32.partialorder %v3743, 0.0
  %vm3760 = vcmp.gt.f32.partialorder %v3744, 0.0
  %vm3761 = vcmp.gt.f32.partialorder %v3745, 0.0
  %vm3762 = vcmp.gt.f32.partialorder %v3746, 0.0
  %vm3763 = vcmp.gt.f32.partialorder %v3747, 0.0
  %v3764 = vsel %vm3748, %v3716, 0.0
  %v3765 = vsel %vm3749, %v3717, 0.0
  %v3766 = vsel %vm3750, %v3718, 0.0
  %v3767 = vsel %vm3751, %v3719, 0.0
  %v3768 = vsel %vm3752, %v3720, 0.0
  %v3769 = vsel %vm3753, %v3721, 0.0
  %v3770 = vsel %vm3754, %v3722, 0.0
  %v3771 = vsel %vm3755, %v3723, 0.0
  %v3772 = vsel %vm3756, %v3724, 0.0
  %v3773 = vsel %vm3757, %v3725, 0.0
  %v3774 = vsel %vm3758, %v3726, 0.0
  %v3775 = vsel %vm3759, %v3727, 0.0
  %v3776 = vsel %vm3760, %v3728, 0.0
  %v3777 = vsel %vm3761, %v3729, 0.0
  %v3778 = vsel %vm3762, %v3730, 0.0
  %v3779 = vsel %vm3763, %v3731, 0.0
  %v3780 = vpack.c.bf16 %v3765, %v3764
  %v3781 = vpack.c.bf16 %v3767, %v3766
  %v3782 = vpack.c.bf16 %v3769, %v3768
  %v3783 = vpack.c.bf16 %v3771, %v3770
  %v3784 = vpack.c.bf16 %v3773, %v3772
  %v3785 = vpack.c.bf16 %v3775, %v3774
  %v3786 = vpack.c.bf16 %v3777, %v3776
  %v3787 = vpack.c.bf16 %v3779, %v3778
  %v3788 = vld [vmem:[%s2614 + $0xa0] sm:$0xf]
  %v3789 = vld [vmem:[%s2614 + $0xa4] sm:$0xf]
  %v3790 = vld [vmem:[%s2614 + $0xa8] sm:$0xf]
  %v3791 = vld [vmem:[%s2614 + $0xac] sm:$0xf]
  %v3792 = vld [vmem:[%s2614 + $0xb0] sm:$0xf]
  %v3793 = vld [vmem:[%s2614 + $0xb4] sm:$0xf]
  %v3794 = vld [vmem:[%s2614 + $0xb8] sm:$0xf]
  %v3795 = vld [vmem:[%s2614 + $0xbc] sm:$0xf]
  %v3804 = vunpack.c.l.b16 %v3788
  %v3805 = vunpack.c.l.b16 %v3789
  %v3806 = vunpack.c.l.b16 %v3790
  %v3807 = vunpack.c.l.b16 %v3791
  %v3808 = vunpack.c.l.b16 %v3792
  %v3809 = vunpack.c.l.b16 %v3793
  %v3810 = vunpack.c.l.b16 %v3794
  %v3811 = vunpack.c.l.b16 %v3795
  %v3812 = vpack.c.b16 %v3805, %v3804
  %v3813 = vpack.c.b16 %v3807, %v3806
  %v3814 = vpack.c.b16 %v3809, %v3808
  %v3815 = vpack.c.b16 %v3811, %v3810
  %v3821 = vsel %vm31, %v3780, 0
  %v3824 = vsel %vm31, %v3781, 0
  %v3827 = vsel %vm31, %v3782, 0
  %v3830 = vsel %vm31, %v3783, 0
  %v3833 = vsel %vm31, %v3784, 0
  %v3836 = vsel %vm31, %v3785, 0
  %v3839 = vsel %vm31, %v3786, 0
  %v3842 = vsel %vm31, %v3787, 0
  %3844 = vmatprep.subr.bf16.mxu0 0
  %3845 = vmatpush1.bf16.msra.mxu0 0
  %3846 = vmatprep.subr.bf16.mxu0 0
  %3847 = vmatpush1.bf16.msra.mxu0 0
  %3848 = vmatprep.subr.bf16.mxu0 0
  %3849 = vmatpush1.bf16.msra.mxu0 0
  %3850 = vmatprep.subr.bf16.mxu0 0
  %3851 = vmatpush1.bf16.msra.mxu0 0
  %3852 = vmatprep.subr.bf16.mxu0 0
  %3853 = vmatpush1.bf16.msra.mxu0 %v3815
  %3854 = vmatprep.subr.bf16.mxu0 0
  %3855 = vmatpush1.bf16.msra.mxu0 %v3814
  %3856 = vmatprep.subr.bf16.mxu0 0
  %3857 = vmatpush1.bf16.msra.mxu0 %v3813
  %3858 = vmatprep.subr.bf16.mxu0 0
  %3859 = vmatpush1.bf16.msra.mxu0 %v3812
  %3860 = vmatprep.subr.bf16.mxu0 0
  %3861 = vmatpush2.bf16.msra.mxu0 0
  %3862 = vmatprep.subr.bf16.mxu0 0
  %3863 = vmatpush2.bf16.msra.mxu0 0
  %3864 = vmatprep.subr.bf16.mxu0 0
  %3865 = vmatpush2.bf16.msra.mxu0 0
  %3866 = vmatprep.subr.bf16.mxu0 0
  %3867 = vmatpush2.bf16.msra.mxu0 0
  %3868 = vmatprep.subr.bf16.mxu0 0
  %3869 = vmatpush2.bf16.msra.mxu0 0
  %3870 = vmatprep.subr.bf16.mxu0 0
  %3871 = vmatpush2.bf16.msra.mxu0 0
  %3872 = vmatprep.subr.bf16.mxu0 0
  %3873 = vmatpush2.bf16.msra.mxu0 0
  %3874 = vmatprep.subr.bf16.mxu0 0
  %3875 = vmatpush2.bf16.msra.mxu0 0
  %3876 = vmatprep.mubr.bf16.mxu0 0
  %3877 = vmatmul.mubr.bf16.gmra.mxu0 %v3821
  %v3878 = vpop.f32.mrf.mxu0
  %v3879 = vadd.f32 0.0, %v3878
  %v3880 = vpop.f32.mrf.mxu0
  %v3881 = vpop.f32.mrf.mxu0
  %v3882 = vadd.f32 0.0, %v3881
  %v3883 = vpop.f32.mrf.mxu0
  %3884 = vmatprep.mubr.bf16.mxu0 0
  %3885 = vmatmul.mubr.bf16.gmra.mxu0 %v3824
  %v3886 = vpop.f32.mrf.mxu0
  %v3887 = vadd.f32 0.0, %v3886
  %v3888 = vpop.f32.mrf.mxu0
  %v3889 = vpop.f32.mrf.mxu0
  %v3890 = vadd.f32 0.0, %v3889
  %v3891 = vpop.f32.mrf.mxu0
  %3892 = vmatprep.mubr.bf16.mxu0 0
  %3893 = vmatmul.mubr.bf16.gmra.mxu0 %v3827
  %v3894 = vpop.f32.mrf.mxu0
  %v3895 = vadd.f32 0.0, %v3894
  %v3896 = vpop.f32.mrf.mxu0
  %v3897 = vpop.f32.mrf.mxu0
  %v3898 = vadd.f32 0.0, %v3897
  %v3899 = vpop.f32.mrf.mxu0
  %3900 = vmatprep.mubr.bf16.mxu0 0
  %3901 = vmatmul.mubr.bf16.gmra.mxu0 %v3830
  %v3902 = vpop.f32.mrf.mxu0
  %v3903 = vadd.f32 0.0, %v3902
  %v3904 = vpop.f32.mrf.mxu0
  %v3905 = vpop.f32.mrf.mxu0
  %v3906 = vadd.f32 0.0, %v3905
  %v3907 = vpop.f32.mrf.mxu0
  %3908 = vmatprep.mubr.bf16.mxu0 0
  %3909 = vmatmul.mubr.bf16.gmra.mxu0 %v3833
  %v3910 = vpop.f32.mrf.mxu0
  %v3911 = vadd.f32 0.0, %v3910
  %v3912 = vpop.f32.mrf.mxu0
  %v3913 = vpop.f32.mrf.mxu0
  %v3914 = vadd.f32 0.0, %v3913
  %v3915 = vpop.f32.mrf.mxu0
  %3916 = vmatprep.mubr.bf16.mxu0 0
  %3917 = vmatmul.mubr.bf16.gmra.mxu0 %v3836
  %v3918 = vpop.f32.mrf.mxu0
  %v3919 = vadd.f32 0.0, %v3918
  %v3920 = vpop.f32.mrf.mxu0
  %v3921 = vpop.f32.mrf.mxu0
  %v3922 = vadd.f32 0.0, %v3921
  %v3923 = vpop.f32.mrf.mxu0
  %3924 = vmatprep.mubr.bf16.mxu0 0
  %3925 = vmatmul.mubr.bf16.gmra.mxu0 %v3839
  %v3926 = vpop.f32.mrf.mxu0
  %v3927 = vadd.f32 0.0, %v3926
  %v3928 = vpop.f32.mrf.mxu0
  %v3929 = vpop.f32.mrf.mxu0
  %v3930 = vadd.f32 0.0, %v3929
  %v3931 = vpop.f32.mrf.mxu0
  %3932 = vmatprep.mubr.bf16.mxu0 0
  %3933 = vmatmul.mubr.bf16.gmra.mxu0 %v3842
  %v3934 = vpop.f32.mrf.mxu0
  %v3935 = vadd.f32 0.0, %v3934
  %v3936 = vpop.f32.mrf.mxu0
  %v3937 = vpop.f32.mrf.mxu0
  %v3938 = vadd.f32 0.0, %v3937
  %v3939 = vpop.f32.mrf.mxu0
  %3940 = vdwg.mxu0
  %v3941 = vadd.f32 %v3700, %v3879
  %v3942 = vadd.f32 %v3701, %v3882
  %v3943 = vadd.f32 %v3702, %v3887
  %v3944 = vadd.f32 %v3703, %v3890
  %v3945 = vadd.f32 %v3704, %v3895
  %v3946 = vadd.f32 %v3705, %v3898
  %v3947 = vadd.f32 %v3706, %v3903
  %v3948 = vadd.f32 %v3707, %v3906
  %v3949 = vadd.f32 %v3708, %v3911
  %v3950 = vadd.f32 %v3709, %v3914
  %v3951 = vadd.f32 %v3710, %v3919
  %v3952 = vadd.f32 %v3711, %v3922
  %v3953 = vadd.f32 %v3712, %v3927
  %v3954 = vadd.f32 %v3713, %v3930
  %v3955 = vadd.f32 %v3714, %v3935
  %v3956 = vadd.f32 %v3715, %v3938
  %v3957 = vld [vmem:[#allocation2 + $0x18] sm:$0xff]
  %v3958 = vld [vmem:[#allocation2 + $0x20] sm:$0xff]
  %v3959 = vld [vmem:[#allocation2 + $0x28] sm:$0xff]
  %v3960 = vld [vmem:[#allocation2 + $0x30] sm:$0xff]
  %v3961 = vld [vmem:[#allocation2 + $0x38] sm:$0xff]
  %v3962 = vld [vmem:[#allocation2 + $0x40] sm:$0xff]
  %v3963 = vld [vmem:[#allocation2 + $0x48] sm:$0xff]
  %v3964 = vld [vmem:[#allocation2 + $0x50] sm:$0xff]
  %v3965 = vld [vmem:[#allocation2 + $0x58] sm:$0xff]
  %v3966 = vld [vmem:[#allocation2 + $0x60] sm:$0xff]
  %v3967 = vld [vmem:[#allocation2 + $0x68] sm:$0xff]
  %v3968 = vld [vmem:[#allocation2 + $0x70] sm:$0xff]
  %v3969 = vld [vmem:[#allocation2 + $0x78] sm:$0xff]
  %v3970 = vld [vmem:[#allocation2 + $0x80] sm:$0xff]
  %v3971 = vld [vmem:[#allocation2 + $0x88] sm:$0xff]
  %v3972 = vld [vmem:[#allocation2 + $0x90] sm:$0xff]
  %v3973 = vld [vmem:[%s1761] sm:$0xff]
  %v3974 = vld [vmem:[%s1761 + $0x8] sm:$0xff]
  %v3975 = vld [vmem:[%s1761 + $0x10] sm:$0xff]
  %v3976 = vld [vmem:[%s1761 + $0x18] sm:$0xff]
  %v3977 = vld [vmem:[%s1761 + $0x20] sm:$0xff]
  %v3978 = vld [vmem:[%s1761 + $0x28] sm:$0xff]
  %v3979 = vld [vmem:[%s1761 + $0x30] sm:$0xff]
  %v3980 = vld [vmem:[%s1761 + $0x38] sm:$0xff]
  %v3981 = vld [vmem:[%s1761 + $0x40] sm:$0xff]
  %v3982 = vld [vmem:[%s1761 + $0x48] sm:$0xff]
  %v3983 = vld [vmem:[%s1761 + $0x50] sm:$0xff]
  %v3984 = vld [vmem:[%s1761 + $0x58] sm:$0xff]
  %v3985 = vld [vmem:[%s1761 + $0x60] sm:$0xff]
  %v3986 = vld [vmem:[%s1761 + $0x68] sm:$0xff]
  %v3987 = vld [vmem:[%s1761 + $0x70] sm:$0xff]
  %v3988 = vld [vmem:[%s1761 + $0x78] sm:$0xff]
  %vm3989 = vcmp.gt.f32.partialorder %v3973, 0.0
  %vm3990 = vcmp.gt.f32.partialorder %v3974, 0.0
  %vm3991 = vcmp.gt.f32.partialorder %v3975, 0.0
  %vm3992 = vcmp.gt.f32.partialorder %v3976, 0.0
  %vm3993 = vcmp.gt.f32.partialorder %v3977, 0.0
  %vm3994 = vcmp.gt.f32.partialorder %v3978, 0.0
  %vm3995 = vcmp.gt.f32.partialorder %v3979, 0.0
  %vm3996 = vcmp.gt.f32.partialorder %v3980, 0.0
  %vm3997 = vcmp.gt.f32.partialorder %v3981, 0.0
  %vm3998 = vcmp.gt.f32.partialorder %v3982, 0.0
  %vm3999 = vcmp.gt.f32.partialorder %v3983, 0.0
  %vm4000 = vcmp.gt.f32.partialorder %v3984, 0.0
  %vm4001 = vcmp.gt.f32.partialorder %v3985, 0.0
  %vm4002 = vcmp.gt.f32.partialorder %v3986, 0.0
  %vm4003 = vcmp.gt.f32.partialorder %v3987, 0.0
  %vm4004 = vcmp.gt.f32.partialorder %v3988, 0.0
  %v4005 = vsel %vm3989, %v3957, 0.0
  %v4006 = vsel %vm3990, %v3958, 0.0
  %v4007 = vsel %vm3991, %v3959, 0.0
  %v4008 = vsel %vm3992, %v3960, 0.0
  %v4009 = vsel %vm3993, %v3961, 0.0
  %v4010 = vsel %vm3994, %v3962, 0.0
  %v4011 = vsel %vm3995, %v3963, 0.0
  %v4012 = vsel %vm3996, %v3964, 0.0
  %v4013 = vsel %vm3997, %v3965, 0.0
  %v4014 = vsel %vm3998, %v3966, 0.0
  %v4015 = vsel %vm3999, %v3967, 0.0
  %v4016 = vsel %vm4000, %v3968, 0.0
  %v4017 = vsel %vm4001, %v3969, 0.0
  %v4018 = vsel %vm4002, %v3970, 0.0
  %v4019 = vsel %vm4003, %v3971, 0.0
  %v4020 = vsel %vm4004, %v3972, 0.0
  %v4021 = vpack.c.bf16 %v4006, %v4005
  %v4022 = vpack.c.bf16 %v4008, %v4007
  %v4023 = vpack.c.bf16 %v4010, %v4009
  %v4024 = vpack.c.bf16 %v4012, %v4011
  %v4025 = vpack.c.bf16 %v4014, %v4013
  %v4026 = vpack.c.bf16 %v4016, %v4015
  %v4027 = vpack.c.bf16 %v4018, %v4017
  %v4028 = vpack.c.bf16 %v4020, %v4019
  %v4029 = vld [vmem:[%s2614 + $0xc0] sm:$0xf]
  %v4030 = vld [vmem:[%s2614 + $0xc4] sm:$0xf]
  %v4031 = vld [vmem:[%s2614 + $0xc8] sm:$0xf]
  %v4032 = vld [vmem:[%s2614 + $0xcc] sm:$0xf]
  %v4033 = vld [vmem:[%s2614 + $0xd0] sm:$0xf]
  %v4034 = vld [vmem:[%s2614 + $0xd4] sm:$0xf]
  %v4035 = vld [vmem:[%s2614 + $0xd8] sm:$0xf]
  %v4036 = vld [vmem:[%s2614 + $0xdc] sm:$0xf]
  %v4045 = vunpack.c.l.b16 %v4029
  %v4046 = vunpack.c.l.b16 %v4030
  %v4047 = vunpack.c.l.b16 %v4031
  %v4048 = vunpack.c.l.b16 %v4032
  %v4049 = vunpack.c.l.b16 %v4033
  %v4050 = vunpack.c.l.b16 %v4034
  %v4051 = vunpack.c.l.b16 %v4035
  %v4052 = vunpack.c.l.b16 %v4036
  %v4053 = vpack.c.b16 %v4046, %v4045
  %v4054 = vpack.c.b16 %v4048, %v4047
  %v4055 = vpack.c.b16 %v4050, %v4049
  %v4056 = vpack.c.b16 %v4052, %v4051
  %v4062 = vsel %vm31, %v4021, 0
  %v4065 = vsel %vm31, %v4022, 0
  %v4068 = vsel %vm31, %v4023, 0
  %v4071 = vsel %vm31, %v4024, 0
  %v4074 = vsel %vm31, %v4025, 0
  %v4077 = vsel %vm31, %v4026, 0
  %v4080 = vsel %vm31, %v4027, 0
  %v4083 = vsel %vm31, %v4028, 0
  %4085 = vmatprep.subr.bf16.mxu0 0
  %4086 = vmatpush1.bf16.msra.mxu0 0
  %4087 = vmatprep.subr.bf16.mxu0 0
  %4088 = vmatpush1.bf16.msra.mxu0 0
  %4089 = vmatprep.subr.bf16.mxu0 0
  %4090 = vmatpush1.bf16.msra.mxu0 0
  %4091 = vmatprep.subr.bf16.mxu0 0
  %4092 = vmatpush1.bf16.msra.mxu0 0
  %4093 = vmatprep.subr.bf16.mxu0 0
  %4094 = vmatpush1.bf16.msra.mxu0 %v4056
  %4095 = vmatprep.subr.bf16.mxu0 0
  %4096 = vmatpush1.bf16.msra.mxu0 %v4055
  %4097 = vmatprep.subr.bf16.mxu0 0
  %4098 = vmatpush1.bf16.msra.mxu0 %v4054
  %4099 = vmatprep.subr.bf16.mxu0 0
  %4100 = vmatpush1.bf16.msra.mxu0 %v4053
  %4101 = vmatprep.subr.bf16.mxu0 0
  %4102 = vmatpush2.bf16.msra.mxu0 0
  %4103 = vmatprep.subr.bf16.mxu0 0
  %4104 = vmatpush2.bf16.msra.mxu0 0
  %4105 = vmatprep.subr.bf16.mxu0 0
  %4106 = vmatpush2.bf16.msra.mxu0 0
  %4107 = vmatprep.subr.bf16.mxu0 0
  %4108 = vmatpush2.bf16.msra.mxu0 0
  %4109 = vmatprep.subr.bf16.mxu0 0
  %4110 = vmatpush2.bf16.msra.mxu0 0
  %4111 = vmatprep.subr.bf16.mxu0 0
  %4112 = vmatpush2.bf16.msra.mxu0 0
  %4113 = vmatprep.subr.bf16.mxu0 0
  %4114 = vmatpush2.bf16.msra.mxu0 0
  %4115 = vmatprep.subr.bf16.mxu0 0
  %4116 = vmatpush2.bf16.msra.mxu0 0
  %4117 = vmatprep.mubr.bf16.mxu0 0
  %4118 = vmatmul.mubr.bf16.gmra.mxu0 %v4062
  %v4119 = vpop.f32.mrf.mxu0
  %v4120 = vadd.f32 0.0, %v4119
  %v4121 = vpop.f32.mrf.mxu0
  %v4122 = vpop.f32.mrf.mxu0
  %v4123 = vadd.f32 0.0, %v4122
  %v4124 = vpop.f32.mrf.mxu0
  %4125 = vmatprep.mubr.bf16.mxu0 0
  %4126 = vmatmul.mubr.bf16.gmra.mxu0 %v4065
  %v4127 = vpop.f32.mrf.mxu0
  %v4128 = vadd.f32 0.0, %v4127
  %v4129 = vpop.f32.mrf.mxu0
  %v4130 = vpop.f32.mrf.mxu0
  %v4131 = vadd.f32 0.0, %v4130
  %v4132 = vpop.f32.mrf.mxu0
  %4133 = vmatprep.mubr.bf16.mxu0 0
  %4134 = vmatmul.mubr.bf16.gmra.mxu0 %v4068
  %v4135 = vpop.f32.mrf.mxu0
  %v4136 = vadd.f32 0.0, %v4135
  %v4137 = vpop.f32.mrf.mxu0
  %v4138 = vpop.f32.mrf.mxu0
  %v4139 = vadd.f32 0.0, %v4138
  %v4140 = vpop.f32.mrf.mxu0
  %4141 = vmatprep.mubr.bf16.mxu0 0
  %4142 = vmatmul.mubr.bf16.gmra.mxu0 %v4071
  %v4143 = vpop.f32.mrf.mxu0
  %v4144 = vadd.f32 0.0, %v4143
  %v4145 = vpop.f32.mrf.mxu0
  %v4146 = vpop.f32.mrf.mxu0
  %v4147 = vadd.f32 0.0, %v4146
  %v4148 = vpop.f32.mrf.mxu0
  %4149 = vmatprep.mubr.bf16.mxu0 0
  %4150 = vmatmul.mubr.bf16.gmra.mxu0 %v4074
  %v4151 = vpop.f32.mrf.mxu0
  %v4152 = vadd.f32 0.0, %v4151
  %v4153 = vpop.f32.mrf.mxu0
  %v4154 = vpop.f32.mrf.mxu0
  %v4155 = vadd.f32 0.0, %v4154
  %v4156 = vpop.f32.mrf.mxu0
  %4157 = vmatprep.mubr.bf16.mxu0 0
  %4158 = vmatmul.mubr.bf16.gmra.mxu0 %v4077
  %v4159 = vpop.f32.mrf.mxu0
  %v4160 = vadd.f32 0.0, %v4159
  %v4161 = vpop.f32.mrf.mxu0
  %v4162 = vpop.f32.mrf.mxu0
  %v4163 = vadd.f32 0.0, %v4162
  %v4164 = vpop.f32.mrf.mxu0
  %4165 = vmatprep.mubr.bf16.mxu0 0
  %4166 = vmatmul.mubr.bf16.gmra.mxu0 %v4080
  %v4167 = vpop.f32.mrf.mxu0
  %v4168 = vadd.f32 0.0, %v4167
  %v4169 = vpop.f32.mrf.mxu0
  %v4170 = vpop.f32.mrf.mxu0
  %v4171 = vadd.f32 0.0, %v4170
  %v4172 = vpop.f32.mrf.mxu0
  %4173 = vmatprep.mubr.bf16.mxu0 0
  %4174 = vmatmul.mubr.bf16.gmra.mxu0 %v4083
  %v4175 = vpop.f32.mrf.mxu0
  %v4176 = vadd.f32 0.0, %v4175
  %v4177 = vpop.f32.mrf.mxu0
  %v4178 = vpop.f32.mrf.mxu0
  %v4179 = vadd.f32 0.0, %v4178
  %v4180 = vpop.f32.mrf.mxu0
  %4181 = vdwg.mxu0
  %v4182 = vadd.f32 %v3941, %v4120
  %v4183 = vadd.f32 %v3942, %v4123
  %v4184 = vadd.f32 %v3943, %v4128
  %v4185 = vadd.f32 %v3944, %v4131
  %v4186 = vadd.f32 %v3945, %v4136
  %v4187 = vadd.f32 %v3946, %v4139
  %v4188 = vadd.f32 %v3947, %v4144
  %v4189 = vadd.f32 %v3948, %v4147
  %v4190 = vadd.f32 %v3949, %v4152
  %v4191 = vadd.f32 %v3950, %v4155
  %v4192 = vadd.f32 %v3951, %v4160
  %v4193 = vadd.f32 %v3952, %v4163
  %v4194 = vadd.f32 %v3953, %v4168
  %v4195 = vadd.f32 %v3954, %v4171
  %v4196 = vadd.f32 %v3955, %v4176
  %v4197 = vadd.f32 %v3956, %v4179
  %v4198 = vld [vmem:[#allocation2 + $0x19] sm:$0xff]
  %v4199 = vld [vmem:[#allocation2 + $0x21] sm:$0xff]
  %v4200 = vld [vmem:[#allocation2 + $0x29] sm:$0xff]
  %v4201 = vld [vmem:[#allocation2 + $0x31] sm:$0xff]
  %v4202 = vld [vmem:[#allocation2 + $0x39] sm:$0xff]
  %v4203 = vld [vmem:[#allocation2 + $0x41] sm:$0xff]
  %v4204 = vld [vmem:[#allocation2 + $0x49] sm:$0xff]
  %v4205 = vld [vmem:[#allocation2 + $0x51] sm:$0xff]
  %v4206 = vld [vmem:[#allocation2 + $0x59] sm:$0xff]
  %v4207 = vld [vmem:[#allocation2 + $0x61] sm:$0xff]
  %v4208 = vld [vmem:[#allocation2 + $0x69] sm:$0xff]
  %v4209 = vld [vmem:[#allocation2 + $0x71] sm:$0xff]
  %v4210 = vld [vmem:[#allocation2 + $0x79] sm:$0xff]
  %v4211 = vld [vmem:[#allocation2 + $0x81] sm:$0xff]
  %v4212 = vld [vmem:[#allocation2 + $0x89] sm:$0xff]
  %v4213 = vld [vmem:[#allocation2 + $0x91] sm:$0xff]
  %v4214 = vld [vmem:[%s2003] sm:$0xff]
  %v4215 = vld [vmem:[%s2003 + $0x8] sm:$0xff]
  %v4216 = vld [vmem:[%s2003 + $0x10] sm:$0xff]
  %v4217 = vld [vmem:[%s2003 + $0x18] sm:$0xff]
  %v4218 = vld [vmem:[%s2003 + $0x20] sm:$0xff]
  %v4219 = vld [vmem:[%s2003 + $0x28] sm:$0xff]
  %v4220 = vld [vmem:[%s2003 + $0x30] sm:$0xff]
  %v4221 = vld [vmem:[%s2003 + $0x38] sm:$0xff]
  %v4222 = vld [vmem:[%s2003 + $0x40] sm:$0xff]
  %v4223 = vld [vmem:[%s2003 + $0x48] sm:$0xff]
  %v4224 = vld [vmem:[%s2003 + $0x50] sm:$0xff]
  %v4225 = vld [vmem:[%s2003 + $0x58] sm:$0xff]
  %v4226 = vld [vmem:[%s2003 + $0x60] sm:$0xff]
  %v4227 = vld [vmem:[%s2003 + $0x68] sm:$0xff]
  %v4228 = vld [vmem:[%s2003 + $0x70] sm:$0xff]
  %v4229 = vld [vmem:[%s2003 + $0x78] sm:$0xff]
  %vm4230 = vcmp.gt.f32.partialorder %v4214, 0.0
  %vm4231 = vcmp.gt.f32.partialorder %v4215, 0.0
  %vm4232 = vcmp.gt.f32.partialorder %v4216, 0.0
  %vm4233 = vcmp.gt.f32.partialorder %v4217, 0.0
  %vm4234 = vcmp.gt.f32.partialorder %v4218, 0.0
  %vm4235 = vcmp.gt.f32.partialorder %v4219, 0.0
  %vm4236 = vcmp.gt.f32.partialorder %v4220, 0.0
  %vm4237 = vcmp.gt.f32.partialorder %v4221, 0.0
  %vm4238 = vcmp.gt.f32.partialorder %v4222, 0.0
  %vm4239 = vcmp.gt.f32.partialorder %v4223, 0.0
  %vm4240 = vcmp.gt.f32.partialorder %v4224, 0.0
  %vm4241 = vcmp.gt.f32.partialorder %v4225, 0.0
  %vm4242 = vcmp.gt.f32.partialorder %v4226, 0.0
  %vm4243 = vcmp.gt.f32.partialorder %v4227, 0.0
  %vm4244 = vcmp.gt.f32.partialorder %v4228, 0.0
  %vm4245 = vcmp.gt.f32.partialorder %v4229, 0.0
  %v4246 = vsel %vm4230, %v4198, 0.0
  %v4247 = vsel %vm4231, %v4199, 0.0
  %v4248 = vsel %vm4232, %v4200, 0.0
  %v4249 = vsel %vm4233, %v4201, 0.0
  %v4250 = vsel %vm4234, %v4202, 0.0
  %v4251 = vsel %vm4235, %v4203, 0.0
  %v4252 = vsel %vm4236, %v4204, 0.0
  %v4253 = vsel %vm4237, %v4205, 0.0
  %v4254 = vsel %vm4238, %v4206, 0.0
  %v4255 = vsel %vm4239, %v4207, 0.0
  %v4256 = vsel %vm4240, %v4208, 0.0
  %v4257 = vsel %vm4241, %v4209, 0.0
  %v4258 = vsel %vm4242, %v4210, 0.0
  %v4259 = vsel %vm4243, %v4211, 0.0
  %v4260 = vsel %vm4244, %v4212, 0.0
  %v4261 = vsel %vm4245, %v4213, 0.0
  %v4262 = vpack.c.bf16 %v4247, %v4246
  %v4263 = vpack.c.bf16 %v4249, %v4248
  %v4264 = vpack.c.bf16 %v4251, %v4250
  %v4265 = vpack.c.bf16 %v4253, %v4252
  %v4266 = vpack.c.bf16 %v4255, %v4254
  %v4267 = vpack.c.bf16 %v4257, %v4256
  %v4268 = vpack.c.bf16 %v4259, %v4258
  %v4269 = vpack.c.bf16 %v4261, %v4260
  %v4270 = vld [vmem:[%s2614 + $0xe0] sm:$0xf]
  %v4271 = vld [vmem:[%s2614 + $0xe4] sm:$0xf]
  %v4272 = vld [vmem:[%s2614 + $0xe8] sm:$0xf]
  %v4273 = vld [vmem:[%s2614 + $0xec] sm:$0xf]
  %v4274 = vld [vmem:[%s2614 + $0xf0] sm:$0xf]
  %v4275 = vld [vmem:[%s2614 + $0xf4] sm:$0xf]
  %v4276 = vld [vmem:[%s2614 + $0xf8] sm:$0xf]
  %v4277 = vld [vmem:[%s2614 + $0xfc] sm:$0xf]
  %v4286 = vunpack.c.l.b16 %v4270
  %v4287 = vunpack.c.l.b16 %v4271
  %v4288 = vunpack.c.l.b16 %v4272
  %v4289 = vunpack.c.l.b16 %v4273
  %v4290 = vunpack.c.l.b16 %v4274
  %v4291 = vunpack.c.l.b16 %v4275
  %v4292 = vunpack.c.l.b16 %v4276
  %v4293 = vunpack.c.l.b16 %v4277
  %v4294 = vpack.c.b16 %v4287, %v4286
  %v4295 = vpack.c.b16 %v4289, %v4288
  %v4296 = vpack.c.b16 %v4291, %v4290
  %v4297 = vpack.c.b16 %v4293, %v4292
  %v4303 = vsel %vm31, %v4262, 0
  %v4306 = vsel %vm31, %v4263, 0
  %v4309 = vsel %vm31, %v4264, 0
  %v4312 = vsel %vm31, %v4265, 0
  %v4315 = vsel %vm31, %v4266, 0
  %v4318 = vsel %vm31, %v4267, 0
  %v4321 = vsel %vm31, %v4268, 0
  %v4324 = vsel %vm31, %v4269, 0
  %4326 = vmatprep.subr.bf16.mxu0 0
  %4327 = vmatpush1.bf16.msra.mxu0 0
  %4328 = vmatprep.subr.bf16.mxu0 0
  %4329 = vmatpush1.bf16.msra.mxu0 0
  %4330 = vmatprep.subr.bf16.mxu0 0
  %4331 = vmatpush1.bf16.msra.mxu0 0
  %4332 = vmatprep.subr.bf16.mxu0 0
  %4333 = vmatpush1.bf16.msra.mxu0 0
  %4334 = vmatprep.subr.bf16.mxu0 0
  %4335 = vmatpush1.bf16.msra.mxu0 %v4297
  %4336 = vmatprep.subr.bf16.mxu0 0
  %4337 = vmatpush1.bf16.msra.mxu0 %v4296
  %4338 = vmatprep.subr.bf16.mxu0 0
  %4339 = vmatpush1.bf16.msra.mxu0 %v4295
  %4340 = vmatprep.subr.bf16.mxu0 0
  %4341 = vmatpush1.bf16.msra.mxu0 %v4294
  %4342 = vmatprep.subr.bf16.mxu0 0
  %4343 = vmatpush2.bf16.msra.mxu0 0
  %4344 = vmatprep.subr.bf16.mxu0 0
  %4345 = vmatpush2.bf16.msra.mxu0 0
  %4346 = vmatprep.subr.bf16.mxu0 0
  %4347 = vmatpush2.bf16.msra.mxu0 0
  %4348 = vmatprep.subr.bf16.mxu0 0
  %4349 = vmatpush2.bf16.msra.mxu0 0
  %4350 = vmatprep.subr.bf16.mxu0 0
  %4351 = vmatpush2.bf16.msra.mxu0 0
  %4352 = vmatprep.subr.bf16.mxu0 0
  %4353 = vmatpush2.bf16.msra.mxu0 0
  %4354 = vmatprep.subr.bf16.mxu0 0
  %4355 = vmatpush2.bf16.msra.mxu0 0
  %4356 = vmatprep.subr.bf16.mxu0 0
  %4357 = vmatpush2.bf16.msra.mxu0 0
  %4358 = vmatprep.mubr.bf16.mxu0 0
  %4359 = vmatmul.mubr.bf16.gmra.mxu0 %v4303
  %v4360 = vpop.f32.mrf.mxu0
  %v4361 = vadd.f32 0.0, %v4360
  %v4362 = vpop.f32.mrf.mxu0
  %v4363 = vpop.f32.mrf.mxu0
  %v4364 = vadd.f32 0.0, %v4363
  %v4365 = vpop.f32.mrf.mxu0
  %4366 = vmatprep.mubr.bf16.mxu0 0
  %4367 = vmatmul.mubr.bf16.gmra.mxu0 %v4306
  %v4368 = vpop.f32.mrf.mxu0
  %v4369 = vadd.f32 0.0, %v4368
  %v4370 = vpop.f32.mrf.mxu0
  %v4371 = vpop.f32.mrf.mxu0
  %v4372 = vadd.f32 0.0, %v4371
  %v4373 = vpop.f32.mrf.mxu0
  %4374 = vmatprep.mubr.bf16.mxu0 0
  %4375 = vmatmul.mubr.bf16.gmra.mxu0 %v4309
  %v4376 = vpop.f32.mrf.mxu0
  %v4377 = vadd.f32 0.0, %v4376
  %v4378 = vpop.f32.mrf.mxu0
  %v4379 = vpop.f32.mrf.mxu0
  %v4380 = vadd.f32 0.0, %v4379
  %v4381 = vpop.f32.mrf.mxu0
  %4382 = vmatprep.mubr.bf16.mxu0 0
  %4383 = vmatmul.mubr.bf16.gmra.mxu0 %v4312
  %v4384 = vpop.f32.mrf.mxu0
  %v4385 = vadd.f32 0.0, %v4384
  %v4386 = vpop.f32.mrf.mxu0
  %v4387 = vpop.f32.mrf.mxu0
  %v4388 = vadd.f32 0.0, %v4387
  %v4389 = vpop.f32.mrf.mxu0
  %4390 = vmatprep.mubr.bf16.mxu0 0
  %4391 = vmatmul.mubr.bf16.gmra.mxu0 %v4315
  %v4392 = vpop.f32.mrf.mxu0
  %v4393 = vadd.f32 0.0, %v4392
  %v4394 = vpop.f32.mrf.mxu0
  %v4395 = vpop.f32.mrf.mxu0
  %v4396 = vadd.f32 0.0, %v4395
  %v4397 = vpop.f32.mrf.mxu0
  %4398 = vmatprep.mubr.bf16.mxu0 0
  %4399 = vmatmul.mubr.bf16.gmra.mxu0 %v4318
  %v4400 = vpop.f32.mrf.mxu0
  %v4401 = vadd.f32 0.0, %v4400
  %v4402 = vpop.f32.mrf.mxu0
  %v4403 = vpop.f32.mrf.mxu0
  %v4404 = vadd.f32 0.0, %v4403
  %v4405 = vpop.f32.mrf.mxu0
  %4406 = vmatprep.mubr.bf16.mxu0 0
  %4407 = vmatmul.mubr.bf16.gmra.mxu0 %v4321
  %v4408 = vpop.f32.mrf.mxu0
  %v4409 = vadd.f32 0.0, %v4408
  %v4410 = vpop.f32.mrf.mxu0
  %v4411 = vpop.f32.mrf.mxu0
  %v4412 = vadd.f32 0.0, %v4411
  %v4413 = vpop.f32.mrf.mxu0
  %4414 = vmatprep.mubr.bf16.mxu0 0
  %4415 = vmatmul.mubr.bf16.gmra.mxu0 %v4324
  %v4416 = vpop.f32.mrf.mxu0
  %v4417 = vadd.f32 0.0, %v4416
  %v4418 = vpop.f32.mrf.mxu0
  %v4419 = vpop.f32.mrf.mxu0
  %v4420 = vadd.f32 0.0, %v4419
  %v4421 = vpop.f32.mrf.mxu0
  %4422 = vdwg.mxu0
  %v4423 = vadd.f32 %v4182, %v4361
  %v4424 = vadd.f32 %v4183, %v4364
  %v4425 = vadd.f32 %v4184, %v4369
  %v4426 = vadd.f32 %v4185, %v4372
  %v4427 = vadd.f32 %v4186, %v4377
  %v4428 = vadd.f32 %v4187, %v4380
  %v4429 = vadd.f32 %v4188, %v4385
  %v4430 = vadd.f32 %v4189, %v4388
  %v4431 = vadd.f32 %v4190, %v4393
  %v4432 = vadd.f32 %v4191, %v4396
  %v4433 = vadd.f32 %v4192, %v4401
  %v4434 = vadd.f32 %v4193, %v4404
  %v4435 = vadd.f32 %v4194, %v4409
  %v4436 = vadd.f32 %v4195, %v4412
  %v4437 = vadd.f32 %v4196, %v4417
  %v4438 = vadd.f32 %v4197, %v4420
  %v4439 = vld [vmem:[#allocation2 + $0x1a] sm:$0xff]
  %v4440 = vld [vmem:[#allocation2 + $0x22] sm:$0xff]
  %v4441 = vld [vmem:[#allocation2 + $0x2a] sm:$0xff]
  %v4442 = vld [vmem:[#allocation2 + $0x32] sm:$0xff]
  %v4443 = vld [vmem:[#allocation2 + $0x3a] sm:$0xff]
  %v4444 = vld [vmem:[#allocation2 + $0x42] sm:$0xff]
  %v4445 = vld [vmem:[#allocation2 + $0x4a] sm:$0xff]
  %v4446 = vld [vmem:[#allocation2 + $0x52] sm:$0xff]
  %v4447 = vld [vmem:[#allocation2 + $0x5a] sm:$0xff]
  %v4448 = vld [vmem:[#allocation2 + $0x62] sm:$0xff]
  %v4449 = vld [vmem:[#allocation2 + $0x6a] sm:$0xff]
  %v4450 = vld [vmem:[#allocation2 + $0x72] sm:$0xff]
  %v4451 = vld [vmem:[#allocation2 + $0x7a] sm:$0xff]
  %v4452 = vld [vmem:[#allocation2 + $0x82] sm:$0xff]
  %v4453 = vld [vmem:[#allocation2 + $0x8a] sm:$0xff]
  %v4454 = vld [vmem:[#allocation2 + $0x92] sm:$0xff]
  %v4455 = vld [vmem:[%s2245] sm:$0xff]
  %v4456 = vld [vmem:[%s2245 + $0x8] sm:$0xff]
  %v4457 = vld [vmem:[%s2245 + $0x10] sm:$0xff]
  %v4458 = vld [vmem:[%s2245 + $0x18] sm:$0xff]
  %v4459 = vld [vmem:[%s2245 + $0x20] sm:$0xff]
  %v4460 = vld [vmem:[%s2245 + $0x28] sm:$0xff]
  %v4461 = vld [vmem:[%s2245 + $0x30] sm:$0xff]
  %v4462 = vld [vmem:[%s2245 + $0x38] sm:$0xff]
  %v4463 = vld [vmem:[%s2245 + $0x40] sm:$0xff]
  %v4464 = vld [vmem:[%s2245 + $0x48] sm:$0xff]
  %v4465 = vld [vmem:[%s2245 + $0x50] sm:$0xff]
  %v4466 = vld [vmem:[%s2245 + $0x58] sm:$0xff]
  %v4467 = vld [vmem:[%s2245 + $0x60] sm:$0xff]
  %v4468 = vld [vmem:[%s2245 + $0x68] sm:$0xff]
  %v4469 = vld [vmem:[%s2245 + $0x70] sm:$0xff]
  %v4470 = vld [vmem:[%s2245 + $0x78] sm:$0xff]
  %vm4471 = vcmp.gt.f32.partialorder %v4455, 0.0
  %vm4472 = vcmp.gt.f32.partialorder %v4456, 0.0
  %vm4473 = vcmp.gt.f32.partialorder %v4457, 0.0
  %vm4474 = vcmp.gt.f32.partialorder %v4458, 0.0
  %vm4475 = vcmp.gt.f32.partialorder %v4459, 0.0
  %vm4476 = vcmp.gt.f32.partialorder %v4460, 0.0
  %vm4477 = vcmp.gt.f32.partialorder %v4461, 0.0
  %vm4478 = vcmp.gt.f32.partialorder %v4462, 0.0
  %vm4479 = vcmp.gt.f32.partialorder %v4463, 0.0
  %vm4480 = vcmp.gt.f32.partialorder %v4464, 0.0
  %vm4481 = vcmp.gt.f32.partialorder %v4465, 0.0
  %vm4482 = vcmp.gt.f32.partialorder %v4466, 0.0
  %vm4483 = vcmp.gt.f32.partialorder %v4467, 0.0
  %vm4484 = vcmp.gt.f32.partialorder %v4468, 0.0
  %vm4485 = vcmp.gt.f32.partialorder %v4469, 0.0
  %vm4486 = vcmp.gt.f32.partialorder %v4470, 0.0
  %v4487 = vsel %vm4471, %v4439, 0.0
  %v4488 = vsel %vm4472, %v4440, 0.0
  %v4489 = vsel %vm4473, %v4441, 0.0
  %v4490 = vsel %vm4474, %v4442, 0.0
  %v4491 = vsel %vm4475, %v4443, 0.0
  %v4492 = vsel %vm4476, %v4444, 0.0
  %v4493 = vsel %vm4477, %v4445, 0.0
  %v4494 = vsel %vm4478, %v4446, 0.0
  %v4495 = vsel %vm4479, %v4447, 0.0
  %v4496 = vsel %vm4480, %v4448, 0.0
  %v4497 = vsel %vm4481, %v4449, 0.0
  %v4498 = vsel %vm4482, %v4450, 0.0
  %v4499 = vsel %vm4483, %v4451, 0.0
  %v4500 = vsel %vm4484, %v4452, 0.0
  %v4501 = vsel %vm4485, %v4453, 0.0
  %v4502 = vsel %vm4486, %v4454, 0.0
  %v4503 = vpack.c.bf16 %v4488, %v4487
  %v4504 = vpack.c.bf16 %v4490, %v4489
  %v4505 = vpack.c.bf16 %v4492, %v4491
  %v4506 = vpack.c.bf16 %v4494, %v4493
  %v4507 = vpack.c.bf16 %v4496, %v4495
  %v4508 = vpack.c.bf16 %v4498, %v4497
  %v4509 = vpack.c.bf16 %v4500, %v4499
  %v4510 = vpack.c.bf16 %v4502, %v4501
  %v4511 = vld [vmem:[%s2614 + $0x100] sm:$0xf]
  %v4512 = vld [vmem:[%s2614 + $0x104] sm:$0xf]
  %v4513 = vld [vmem:[%s2614 + $0x108] sm:$0xf]
  %v4514 = vld [vmem:[%s2614 + $0x10c] sm:$0xf]
  %v4515 = vld [vmem:[%s2614 + $0x110] sm:$0xf]
  %v4516 = vld [vmem:[%s2614 + $0x114] sm:$0xf]
  %v4517 = vld [vmem:[%s2614 + $0x118] sm:$0xf]
  %v4518 = vld [vmem:[%s2614 + $0x11c] sm:$0xf]
  %v4527 = vunpack.c.l.b16 %v4511
  %v4528 = vunpack.c.l.b16 %v4512
  %v4529 = vunpack.c.l.b16 %v4513
  %v4530 = vunpack.c.l.b16 %v4514
  %v4531 = vunpack.c.l.b16 %v4515
  %v4532 = vunpack.c.l.b16 %v4516
  %v4533 = vunpack.c.l.b16 %v4517
  %v4534 = vunpack.c.l.b16 %v4518
  %v4535 = vpack.c.b16 %v4528, %v4527
  %v4536 = vpack.c.b16 %v4530, %v4529
  %v4537 = vpack.c.b16 %v4532, %v4531
  %v4538 = vpack.c.b16 %v4534, %v4533
  %v4544 = vsel %vm31, %v4503, 0
  %v4547 = vsel %vm31, %v4504, 0
  %v4550 = vsel %vm31, %v4505, 0
  %v4553 = vsel %vm31, %v4506, 0
  %v4556 = vsel %vm31, %v4507, 0
  %v4559 = vsel %vm31, %v4508, 0
  %v4562 = vsel %vm31, %v4509, 0
  %v4565 = vsel %vm31, %v4510, 0
  %4567 = vmatprep.subr.bf16.mxu0 0
  %4568 = vmatpush1.bf16.msra.mxu0 0
  %4569 = vmatprep.subr.bf16.mxu0 0
  %4570 = vmatpush1.bf16.msra.mxu0 0
  %4571 = vmatprep.subr.bf16.mxu0 0
  %4572 = vmatpush1.bf16.msra.mxu0 0
  %4573 = vmatprep.subr.bf16.mxu0 0
  %4574 = vmatpush1.bf16.msra.mxu0 0
  %4575 = vmatprep.subr.bf16.mxu0 0
  %4576 = vmatpush1.bf16.msra.mxu0 %v4538
  %4577 = vmatprep.subr.bf16.mxu0 0
  %4578 = vmatpush1.bf16.msra.mxu0 %v4537
  %4579 = vmatprep.subr.bf16.mxu0 0
  %4580 = vmatpush1.bf16.msra.mxu0 %v4536
  %4581 = vmatprep.subr.bf16.mxu0 0
  %4582 = vmatpush1.bf16.msra.mxu0 %v4535
  %4583 = vmatprep.subr.bf16.mxu0 0
  %4584 = vmatpush2.bf16.msra.mxu0 0
  %4585 = vmatprep.subr.bf16.mxu0 0
  %4586 = vmatpush2.bf16.msra.mxu0 0
  %4587 = vmatprep.subr.bf16.mxu0 0
  %4588 = vmatpush2.bf16.msra.mxu0 0
  %4589 = vmatprep.subr.bf16.mxu0 0
  %4590 = vmatpush2.bf16.msra.mxu0 0
  %4591 = vmatprep.subr.bf16.mxu0 0
  %4592 = vmatpush2.bf16.msra.mxu0 0
  %4593 = vmatprep.subr.bf16.mxu0 0
  %4594 = vmatpush2.bf16.msra.mxu0 0
  %4595 = vmatprep.subr.bf16.mxu0 0
  %4596 = vmatpush2.bf16.msra.mxu0 0
  %4597 = vmatprep.subr.bf16.mxu0 0
  %4598 = vmatpush2.bf16.msra.mxu0 0
  %4599 = vmatprep.mubr.bf16.mxu0 0
  %4600 = vmatmul.mubr.bf16.gmra.mxu0 %v4544
  %v4601 = vpop.f32.mrf.mxu0
  %v4602 = vadd.f32 0.0, %v4601
  %v4603 = vpop.f32.mrf.mxu0
  %v4604 = vpop.f32.mrf.mxu0
  %v4605 = vadd.f32 0.0, %v4604
  %v4606 = vpop.f32.mrf.mxu0
  %4607 = vmatprep.mubr.bf16.mxu0 0
  %4608 = vmatmul.mubr.bf16.gmra.mxu0 %v4547
  %v4609 = vpop.f32.mrf.mxu0
  %v4610 = vadd.f32 0.0, %v4609
  %v4611 = vpop.f32.mrf.mxu0
  %v4612 = vpop.f32.mrf.mxu0
  %v4613 = vadd.f32 0.0, %v4612
  %v4614 = vpop.f32.mrf.mxu0
  %4615 = vmatprep.mubr.bf16.mxu0 0
  %4616 = vmatmul.mubr.bf16.gmra.mxu0 %v4550
  %v4617 = vpop.f32.mrf.mxu0
  %v4618 = vadd.f32 0.0, %v4617
  %v4619 = vpop.f32.mrf.mxu0
  %v4620 = vpop.f32.mrf.mxu0
  %v4621 = vadd.f32 0.0, %v4620
  %v4622 = vpop.f32.mrf.mxu0
  %4623 = vmatprep.mubr.bf16.mxu0 0
  %4624 = vmatmul.mubr.bf16.gmra.mxu0 %v4553
  %v4625 = vpop.f32.mrf.mxu0
  %v4626 = vadd.f32 0.0, %v4625
  %v4627 = vpop.f32.mrf.mxu0
  %v4628 = vpop.f32.mrf.mxu0
  %v4629 = vadd.f32 0.0, %v4628
  %v4630 = vpop.f32.mrf.mxu0
  %4631 = vmatprep.mubr.bf16.mxu0 0
  %4632 = vmatmul.mubr.bf16.gmra.mxu0 %v4556
  %v4633 = vpop.f32.mrf.mxu0
  %v4634 = vadd.f32 0.0, %v4633
  %v4635 = vpop.f32.mrf.mxu0
  %v4636 = vpop.f32.mrf.mxu0
  %v4637 = vadd.f32 0.0, %v4636
  %v4638 = vpop.f32.mrf.mxu0
  %4639 = vmatprep.mubr.bf16.mxu0 0
  %4640 = vmatmul.mubr.bf16.gmra.mxu0 %v4559
  %v4641 = vpop.f32.mrf.mxu0
  %v4642 = vadd.f32 0.0, %v4641
  %v4643 = vpop.f32.mrf.mxu0
  %v4644 = vpop.f32.mrf.mxu0
  %v4645 = vadd.f32 0.0, %v4644
  %v4646 = vpop.f32.mrf.mxu0
  %4647 = vmatprep.mubr.bf16.mxu0 0
  %4648 = vmatmul.mubr.bf16.gmra.mxu0 %v4562
  %v4649 = vpop.f32.mrf.mxu0
  %v4650 = vadd.f32 0.0, %v4649
  %v4651 = vpop.f32.mrf.mxu0
  %v4652 = vpop.f32.mrf.mxu0
  %v4653 = vadd.f32 0.0, %v4652
  %v4654 = vpop.f32.mrf.mxu0
  %4655 = vmatprep.mubr.bf16.mxu0 0
  %4656 = vmatmul.mubr.bf16.gmra.mxu0 %v4565
  %v4657 = vpop.f32.mrf.mxu0
  %v4658 = vadd.f32 0.0, %v4657
  %v4659 = vpop.f32.mrf.mxu0
  %v4660 = vpop.f32.mrf.mxu0
  %v4661 = vadd.f32 0.0, %v4660
  %v4662 = vpop.f32.mrf.mxu0
  %4663 = vdwg.mxu0
  %v4664 = vadd.f32 %v4423, %v4602
  %v4665 = vadd.f32 %v4424, %v4605
  %v4666 = vadd.f32 %v4425, %v4610
  %v4667 = vadd.f32 %v4426, %v4613
  %v4668 = vadd.f32 %v4427, %v4618
  %v4669 = vadd.f32 %v4428, %v4621
  %v4670 = vadd.f32 %v4429, %v4626
  %v4671 = vadd.f32 %v4430, %v4629
  %v4672 = vadd.f32 %v4431, %v4634
  %v4673 = vadd.f32 %v4432, %v4637
  %v4674 = vadd.f32 %v4433, %v4642
  %v4675 = vadd.f32 %v4434, %v4645
  %v4676 = vadd.f32 %v4435, %v4650
  %v4677 = vadd.f32 %v4436, %v4653
  %v4678 = vadd.f32 %v4437, %v4658
  %v4679 = vadd.f32 %v4438, %v4661
  %s4680 = scalar_lea.vmem %s5, 1
  %v4681 = vld [vmem:[%s4680] sm:$0x1]
  %v4683 = vlaneseq
  %v4684 = vshrl.u32 %v4683, 7
  %v4685 = vsub.s32 0, %v4684
  %v4686 = vrot.slane %v4681, %v4685
  %v4688 = vadd.f32 %v4664, %v4686
  %v4689 = vadd.f32 %v4665, %v4686
  %v4690 = vadd.f32 %v4666, %v4686
  %v4691 = vadd.f32 %v4667, %v4686
  %v4692 = vadd.f32 %v4668, %v4686
  %v4693 = vadd.f32 %v4669, %v4686
  %v4694 = vadd.f32 %v4670, %v4686
  %v4695 = vadd.f32 %v4671, %v4686
  %v4696 = vadd.f32 %v4672, %v4686
  %v4697 = vadd.f32 %v4673, %v4686
  %v4698 = vadd.f32 %v4674, %v4686
  %v4699 = vadd.f32 %v4675, %v4686
  %v4700 = vadd.f32 %v4676, %v4686
  %v4701 = vadd.f32 %v4677, %v4686
  %v4702 = vadd.f32 %v4678, %v4686
  %v4703 = vadd.f32 %v4679, %v4686
  %v4704 = vadd.f32 %v4688, %v294
  %v4705 = vadd.f32 %v4689, %v295
  %v4706 = vadd.f32 %v4690, %v296
  %v4707 = vadd.f32 %v4691, %v297
  %v4708 = vadd.f32 %v4692, %v298
  %v4709 = vadd.f32 %v4693, %v299
  %v4710 = vadd.f32 %v4694, %v300
  %v4711 = vadd.f32 %v4695, %v301
  %v4712 = vadd.f32 %v4696, %v302
  %v4713 = vadd.f32 %v4697, %v303
  %v4714 = vadd.f32 %v4698, %v304
  %v4715 = vadd.f32 %v4699, %v305
  %v4716 = vadd.f32 %v4700, %v306
  %v4717 = vadd.f32 %v4701, %v307
  %v4718 = vadd.f32 %v4702, %v308
  %v4719 = vadd.f32 %v4703, %v309
  %v4720 = vmax.f32 %v4704, 0.0
  %v4721 = vmax.f32 %v4705, 0.0
  %v4722 = vmax.f32 %v4706, 0.0
  %v4723 = vmax.f32 %v4707, 0.0
  %v4724 = vmax.f32 %v4708, 0.0
  %v4725 = vmax.f32 %v4709, 0.0
  %v4726 = vmax.f32 %v4710, 0.0
  %v4727 = vmax.f32 %v4711, 0.0
  %v4728 = vmax.f32 %v4712, 0.0
  %v4729 = vmax.f32 %v4713, 0.0
  %v4730 = vmax.f32 %v4714, 0.0
  %v4731 = vmax.f32 %v4715, 0.0
  %v4732 = vmax.f32 %v4716, 0.0
  %v4733 = vmax.f32 %v4717, 0.0
  %v4734 = vmax.f32 %v4718, 0.0
  %v4735 = vmax.f32 %v4719, 0.0
  %v4736 = vsel %vm69, %v4720, 0.0
  %v4737 = vsel %vm70, %v4721, 0.0
  %v4738 = vsel %vm71, %v4722, 0.0
  %v4739 = vsel %vm72, %v4723, 0.0
  %v4740 = vsel %vm73, %v4724, 0.0
  %v4741 = vsel %vm74, %v4725, 0.0
  %v4742 = vsel %vm75, %v4726, 0.0
  %v4743 = vsel %vm76, %v4727, 0.0
  %v4744 = vsel %vm77, %v4728, 0.0
  %v4745 = vsel %vm78, %v4729, 0.0
  %v4746 = vsel %vm79, %v4730, 0.0
  %v4747 = vsel %vm80, %v4731, 0.0
  %v4748 = vsel %vm81, %v4732, 0.0
  %v4749 = vsel %vm82, %v4733, 0.0
  %v4750 = vsel %vm83, %v4734, 0.0
  %v4751 = vsel %vm84, %v4735, 0.0
  %4752 = vst.msk [vmem:[#allocation2 + $0x10] sm:$0xff] %vm31, %v4736
  %4753 = vst.msk [vmem:[#allocation2 + $0x18] sm:$0xff] %vm31, %v4737
  %4754 = vst.msk [vmem:[#allocation2 + $0x20] sm:$0xff] %vm31, %v4738
  %4755 = vst.msk [vmem:[#allocation2 + $0x28] sm:$0xff] %vm31, %v4739
  %4756 = vst.msk [vmem:[#allocation2 + $0x30] sm:$0xff] %vm31, %v4740
  %4757 = vst.msk [vmem:[#allocation2 + $0x38] sm:$0xff] %vm31, %v4741
  %4758 = vst.msk [vmem:[#allocation2 + $0x40] sm:$0xff] %vm31, %v4742
  %4759 = vst.msk [vmem:[#allocation2 + $0x48] sm:$0xff] %vm31, %v4743
  %4760 = vst.msk [vmem:[#allocation2 + $0x50] sm:$0xff] %vm31, %v4744
  %4761 = vst.msk [vmem:[#allocation2 + $0x58] sm:$0xff] %vm31, %v4745
  %4762 = vst.msk [vmem:[#allocation2 + $0x60] sm:$0xff] %vm31, %v4746
  %4763 = vst.msk [vmem:[#allocation2 + $0x68] sm:$0xff] %vm31, %v4747
  %4764 = vst.msk [vmem:[#allocation2 + $0x70] sm:$0xff] %vm31, %v4748
  %4765 = vst.msk [vmem:[#allocation2 + $0x78] sm:$0xff] %vm31, %v4749
  %4766 = vst.msk [vmem:[#allocation2 + $0x80] sm:$0xff] %vm31, %v4750
  %4767 = vst.msk [vmem:[#allocation2 + $0x88] sm:$0xff] %vm31, %v4751
  %v4768 = vld [vmem:[#allocation2 + $0x6] sm:$0xff]
  %v4769 = vld [vmem:[#allocation2 + $0xe] sm:$0xff]
  %v4770 = vld [vmem:[#allocation2 + $0x16] sm:$0xff]
  %v4771 = vld [vmem:[#allocation2 + $0x1e] sm:$0xff]
  %v4772 = vld [vmem:[#allocation2 + $0x26] sm:$0xff]
  %v4773 = vld [vmem:[#allocation2 + $0x2e] sm:$0xff]
  %v4774 = vld [vmem:[#allocation2 + $0x36] sm:$0xff]
  %v4775 = vld [vmem:[#allocation2 + $0x3e] sm:$0xff]
  %v4776 = vld [vmem:[#allocation2 + $0x46] sm:$0xff]
  %v4777 = vld [vmem:[#allocation2 + $0x4e] sm:$0xff]
  %v4778 = vld [vmem:[#allocation2 + $0x56] sm:$0xff]
  %v4779 = vld [vmem:[#allocation2 + $0x5e] sm:$0xff]
  %v4780 = vld [vmem:[#allocation2 + $0x66] sm:$0xff]
  %v4781 = vld [vmem:[#allocation2 + $0x6e] sm:$0xff]
  %v4782 = vld [vmem:[#allocation2 + $0x76] sm:$0xff]
  %v4783 = vld [vmem:[#allocation2 + $0x7e] sm:$0xff]
  %v4784 = vld [vmem:[%s1] sm:$0xff]
  %v4785 = vld [vmem:[%s1 + $0x8] sm:$0xff]
  %v4786 = vld [vmem:[%s1 + $0x10] sm:$0xff]
  %v4787 = vld [vmem:[%s1 + $0x18] sm:$0xff]
  %v4788 = vld [vmem:[%s1 + $0x20] sm:$0xff]
  %v4789 = vld [vmem:[%s1 + $0x28] sm:$0xff]
  %v4790 = vld [vmem:[%s1 + $0x30] sm:$0xff]
  %v4791 = vld [vmem:[%s1 + $0x38] sm:$0xff]
  %v4792 = vld [vmem:[%s1 + $0x40] sm:$0xff]
  %v4793 = vld [vmem:[%s1 + $0x48] sm:$0xff]
  %v4794 = vld [vmem:[%s1 + $0x50] sm:$0xff]
  %v4795 = vld [vmem:[%s1 + $0x58] sm:$0xff]
  %v4796 = vld [vmem:[%s1 + $0x60] sm:$0xff]
  %v4797 = vld [vmem:[%s1 + $0x68] sm:$0xff]
  %v4798 = vld [vmem:[%s1 + $0x70] sm:$0xff]
  %v4799 = vld [vmem:[%s1 + $0x78] sm:$0xff]
  %vm4800 = vcmp.gt.f32.partialorder %v4784, 0.0
  %vm4801 = vcmp.gt.f32.partialorder %v4785, 0.0
  %vm4802 = vcmp.gt.f32.partialorder %v4786, 0.0
  %vm4803 = vcmp.gt.f32.partialorder %v4787, 0.0
  %vm4804 = vcmp.gt.f32.partialorder %v4788, 0.0
  %vm4805 = vcmp.gt.f32.partialorder %v4789, 0.0
  %vm4806 = vcmp.gt.f32.partialorder %v4790, 0.0
  %vm4807 = vcmp.gt.f32.partialorder %v4791, 0.0
  %vm4808 = vcmp.gt.f32.partialorder %v4792, 0.0
  %vm4809 = vcmp.gt.f32.partialorder %v4793, 0.0
  %vm4810 = vcmp.gt.f32.partialorder %v4794, 0.0
  %vm4811 = vcmp.gt.f32.partialorder %v4795, 0.0
  %vm4812 = vcmp.gt.f32.partialorder %v4796, 0.0
  %vm4813 = vcmp.gt.f32.partialorder %v4797, 0.0
  %vm4814 = vcmp.gt.f32.partialorder %v4798, 0.0
  %vm4815 = vcmp.gt.f32.partialorder %v4799, 0.0
  %v4816 = vsel %vm4800, %v4768, 0.0
  %v4817 = vsel %vm4801, %v4769, 0.0
  %v4818 = vsel %vm4802, %v4770, 0.0
  %v4819 = vsel %vm4803, %v4771, 0.0
  %v4820 = vsel %vm4804, %v4772, 0.0
  %v4821 = vsel %vm4805, %v4773, 0.0
  %v4822 = vsel %vm4806, %v4774, 0.0
  %v4823 = vsel %vm4807, %v4775, 0.0
  %v4824 = vsel %vm4808, %v4776, 0.0
  %v4825 = vsel %vm4809, %v4777, 0.0
  %v4826 = vsel %vm4810, %v4778, 0.0
  %v4827 = vsel %vm4811, %v4779, 0.0
  %v4828 = vsel %vm4812, %v4780, 0.0
  %v4829 = vsel %vm4813, %v4781, 0.0
  %v4830 = vsel %vm4814, %v4782, 0.0
  %v4831 = vsel %vm4815, %v4783, 0.0
  %v4832 = vpack.c.bf16 %v4817, %v4816
  %v4833 = vpack.c.bf16 %v4819, %v4818
  %v4834 = vpack.c.bf16 %v4821, %v4820
  %v4835 = vpack.c.bf16 %v4823, %v4822
  %v4836 = vpack.c.bf16 %v4825, %v4824
  %v4837 = vpack.c.bf16 %v4827, %v4826
  %v4838 = vpack.c.bf16 %v4829, %v4828
  %v4839 = vpack.c.bf16 %v4831, %v4830
  %s4840 = scalar_lea.vmem %s4, 576
  %v4841 = vld [vmem:[%s4840] sm:$0xf]
  %v4842 = vld [vmem:[%s4840 + $0x4] sm:$0xf]
  %v4843 = vld [vmem:[%s4840 + $0x8] sm:$0xf]
  %v4844 = vld [vmem:[%s4840 + $0xc] sm:$0xf]
  %v4845 = vld [vmem:[%s4840 + $0x10] sm:$0xf]
  %v4846 = vld [vmem:[%s4840 + $0x14] sm:$0xf]
  %v4847 = vld [vmem:[%s4840 + $0x18] sm:$0xf]
  %v4848 = vld [vmem:[%s4840 + $0x1c] sm:$0xf]
  %v4849 = vld [vmem:[#allocation2 + $0x7] sm:$0xff]
  %v4850 = vld [vmem:[#allocation2 + $0xf] sm:$0xff]
  %v4851 = vld [vmem:[#allocation2 + $0x17] sm:$0xff]
  %v4852 = vld [vmem:[#allocation2 + $0x1f] sm:$0xff]
  %v4853 = vld [vmem:[#allocation2 + $0x27] sm:$0xff]
  %v4854 = vld [vmem:[#allocation2 + $0x2f] sm:$0xff]
  %v4855 = vld [vmem:[#allocation2 + $0x37] sm:$0xff]
  %v4856 = vld [vmem:[#allocation2 + $0x3f] sm:$0xff]
  %v4857 = vld [vmem:[#allocation2 + $0x47] sm:$0xff]
  %v4858 = vld [vmem:[#allocation2 + $0x4f] sm:$0xff]
  %v4859 = vld [vmem:[#allocation2 + $0x57] sm:$0xff]
  %v4860 = vld [vmem:[#allocation2 + $0x5f] sm:$0xff]
  %v4861 = vld [vmem:[#allocation2 + $0x67] sm:$0xff]
  %v4862 = vld [vmem:[#allocation2 + $0x6f] sm:$0xff]
  %v4863 = vld [vmem:[#allocation2 + $0x77] sm:$0xff]
  %v4864 = vld [vmem:[#allocation2 + $0x7f] sm:$0xff]
  %v4865 = vld [vmem:[%s422] sm:$0xff]
  %v4866 = vld [vmem:[%s422 + $0x8] sm:$0xff]
  %v4867 = vld [vmem:[%s422 + $0x10] sm:$0xff]
  %v4868 = vld [vmem:[%s422 + $0x18] sm:$0xff]
  %v4869 = vld [vmem:[%s422 + $0x20] sm:$0xff]
  %v4870 = vld [vmem:[%s422 + $0x28] sm:$0xff]
  %v4871 = vld [vmem:[%s422 + $0x30] sm:$0xff]
  %v4872 = vld [vmem:[%s422 + $0x38] sm:$0xff]
  %v4873 = vld [vmem:[%s422 + $0x40] sm:$0xff]
  %v4874 = vld [vmem:[%s422 + $0x48] sm:$0xff]
  %v4875 = vld [vmem:[%s422 + $0x50] sm:$0xff]
  %v4876 = vld [vmem:[%s422 + $0x58] sm:$0xff]
  %v4877 = vld [vmem:[%s422 + $0x60] sm:$0xff]
  %v4878 = vld [vmem:[%s422 + $0x68] sm:$0xff]
  %v4879 = vld [vmem:[%s422 + $0x70] sm:$0xff]
  %v4880 = vld [vmem:[%s422 + $0x78] sm:$0xff]
  %vm4881 = vcmp.gt.f32.partialorder %v4865, 0.0
  %vm4882 = vcmp.gt.f32.partialorder %v4866, 0.0
  %vm4883 = vcmp.gt.f32.partialorder %v4867, 0.0
  %vm4884 = vcmp.gt.f32.partialorder %v4868, 0.0
  %vm4885 = vcmp.gt.f32.partialorder %v4869, 0.0
  %vm4886 = vcmp.gt.f32.partialorder %v4870, 0.0
  %vm4887 = vcmp.gt.f32.partialorder %v4871, 0.0
  %vm4888 = vcmp.gt.f32.partialorder %v4872, 0.0
  %vm4889 = vcmp.gt.f32.partialorder %v4873, 0.0
  %vm4890 = vcmp.gt.f32.partialorder %v4874, 0.0
  %vm4891 = vcmp.gt.f32.partialorder %v4875, 0.0
  %vm4892 = vcmp.gt.f32.partialorder %v4876, 0.0
  %vm4893 = vcmp.gt.f32.partialorder %v4877, 0.0
  %vm4894 = vcmp.gt.f32.partialorder %v4878, 0.0
  %vm4895 = vcmp.gt.f32.partialorder %v4879, 0.0
  %vm4896 = vcmp.gt.f32.partialorder %v4880, 0.0
  %v4897 = vsel %vm4881, %v4849, 0.0
  %v4898 = vsel %vm4882, %v4850, 0.0
  %v4899 = vsel %vm4883, %v4851, 0.0
  %v4900 = vsel %vm4884, %v4852, 0.0
  %v4901 = vsel %vm4885, %v4853, 0.0
  %v4902 = vsel %vm4886, %v4854, 0.0
  %v4903 = vsel %vm4887, %v4855, 0.0
  %v4904 = vsel %vm4888, %v4856, 0.0
  %v4905 = vsel %vm4889, %v4857, 0.0
  %v4906 = vsel %vm4890, %v4858, 0.0
  %v4907 = vsel %vm4891, %v4859, 0.0
  %v4908 = vsel %vm4892, %v4860, 0.0
  %v4909 = vsel %vm4893, %v4861, 0.0
  %v4910 = vsel %vm4894, %v4862, 0.0
  %v4911 = vsel %vm4895, %v4863, 0.0
  %v4912 = vsel %vm4896, %v4864, 0.0
  %v4913 = vpack.c.bf16 %v4898, %v4897
  %v4914 = vpack.c.bf16 %v4900, %v4899
  %v4915 = vpack.c.bf16 %v4902, %v4901
  %v4916 = vpack.c.bf16 %v4904, %v4903
  %v4917 = vpack.c.bf16 %v4906, %v4905
  %v4918 = vpack.c.bf16 %v4908, %v4907
  %v4919 = vpack.c.bf16 %v4910, %v4909
  %v4920 = vpack.c.bf16 %v4912, %v4911
  %v4921 = vld [vmem:[%s4840 + $0x20] sm:$0xf]
  %v4922 = vld [vmem:[%s4840 + $0x24] sm:$0xf]
  %v4923 = vld [vmem:[%s4840 + $0x28] sm:$0xf]
  %v4924 = vld [vmem:[%s4840 + $0x2c] sm:$0xf]
  %v4925 = vld [vmem:[%s4840 + $0x30] sm:$0xf]
  %v4926 = vld [vmem:[%s4840 + $0x34] sm:$0xf]
  %v4927 = vld [vmem:[%s4840 + $0x38] sm:$0xf]
  %v4928 = vld [vmem:[%s4840 + $0x3c] sm:$0xf]
  %v4937 = vunpack.c.l.b16 %v4921
  %v4938 = vunpack.c.l.b16 %v4922
  %v4939 = vunpack.c.l.b16 %v4923
  %v4940 = vunpack.c.l.b16 %v4924
  %v4941 = vunpack.c.l.b16 %v4925
  %v4942 = vunpack.c.l.b16 %v4926
  %v4943 = vunpack.c.l.b16 %v4927
  %v4944 = vunpack.c.l.b16 %v4928
  %v4945 = vpack.c.b16 %v4938, %v4937
  %v4946 = vpack.c.b16 %v4940, %v4939
  %v4947 = vpack.c.b16 %v4942, %v4941
  %v4948 = vpack.c.b16 %v4944, %v4943
  %v4954 = vsel %vm31, %v4913, 0
  %v4957 = vsel %vm31, %v4914, 0
  %v4960 = vsel %vm31, %v4915, 0
  %v4963 = vsel %vm31, %v4916, 0
  %v4966 = vsel %vm31, %v4917, 0
  %v4969 = vsel %vm31, %v4918, 0
  %v4972 = vsel %vm31, %v4919, 0
  %v4975 = vsel %vm31, %v4920, 0
  %4977 = vmatprep.subr.bf16.mxu0 0
  %4978 = vmatpush1.bf16.msra.mxu0 0
  %4979 = vmatprep.subr.bf16.mxu0 0
  %4980 = vmatpush1.bf16.msra.mxu0 0
  %4981 = vmatprep.subr.bf16.mxu0 0
  %4982 = vmatpush1.bf16.msra.mxu0 0
  %4983 = vmatprep.subr.bf16.mxu0 0
  %4984 = vmatpush1.bf16.msra.mxu0 0
  %4985 = vmatprep.subr.bf16.mxu0 0
  %4986 = vmatpush1.bf16.msra.mxu0 %v4948
  %4987 = vmatprep.subr.bf16.mxu0 0
  %4988 = vmatpush1.bf16.msra.mxu0 %v4947
  %4989 = vmatprep.subr.bf16.mxu0 0
  %4990 = vmatpush1.bf16.msra.mxu0 %v4946
  %4991 = vmatprep.subr.bf16.mxu0 0
  %4992 = vmatpush1.bf16.msra.mxu0 %v4945
  %4993 = vmatprep.subr.bf16.mxu0 0
  %4994 = vmatpush2.bf16.msra.mxu0 0
  %4995 = vmatprep.subr.bf16.mxu0 0
  %4996 = vmatpush2.bf16.msra.mxu0 0
  %4997 = vmatprep.subr.bf16.mxu0 0
  %4998 = vmatpush2.bf16.msra.mxu0 0
  %4999 = vmatprep.subr.bf16.mxu0 0
  %5000 = vmatpush2.bf16.msra.mxu0 0
  %5001 = vmatprep.subr.bf16.mxu0 0
  %5002 = vmatpush2.bf16.msra.mxu0 0
  %5003 = vmatprep.subr.bf16.mxu0 0
  %5004 = vmatpush2.bf16.msra.mxu0 0
  %5005 = vmatprep.subr.bf16.mxu0 0
  %5006 = vmatpush2.bf16.msra.mxu0 0
  %5007 = vmatprep.subr.bf16.mxu0 0
  %5008 = vmatpush2.bf16.msra.mxu0 0
  %5009 = vmatprep.mubr.bf16.mxu0 0
  %5010 = vmatmul.mubr.bf16.gmra.mxu0 %v4954
  %v5011 = vpop.f32.mrf.mxu0
  %v5012 = vadd.f32 0.0, %v5011
  %v5013 = vpop.f32.mrf.mxu0
  %v5014 = vpop.f32.mrf.mxu0
  %v5015 = vadd.f32 0.0, %v5014
  %v5016 = vpop.f32.mrf.mxu0
  %5017 = vmatprep.mubr.bf16.mxu0 0
  %5018 = vmatmul.mubr.bf16.gmra.mxu0 %v4957
  %v5019 = vpop.f32.mrf.mxu0
  %v5020 = vadd.f32 0.0, %v5019
  %v5021 = vpop.f32.mrf.mxu0
  %v5022 = vpop.f32.mrf.mxu0
  %v5023 = vadd.f32 0.0, %v5022
  %v5024 = vpop.f32.mrf.mxu0
  %5025 = vmatprep.mubr.bf16.mxu0 0
  %5026 = vmatmul.mubr.bf16.gmra.mxu0 %v4960
  %v5027 = vpop.f32.mrf.mxu0
  %v5028 = vadd.f32 0.0, %v5027
  %v5029 = vpop.f32.mrf.mxu0
  %v5030 = vpop.f32.mrf.mxu0
  %v5031 = vadd.f32 0.0, %v5030
  %v5032 = vpop.f32.mrf.mxu0
  %5033 = vmatprep.mubr.bf16.mxu0 0
  %5034 = vmatmul.mubr.bf16.gmra.mxu0 %v4963
  %v5035 = vpop.f32.mrf.mxu0
  %v5036 = vadd.f32 0.0, %v5035
  %v5037 = vpop.f32.mrf.mxu0
  %v5038 = vpop.f32.mrf.mxu0
  %v5039 = vadd.f32 0.0, %v5038
  %v5040 = vpop.f32.mrf.mxu0
  %5041 = vmatprep.mubr.bf16.mxu0 0
  %5042 = vmatmul.mubr.bf16.gmra.mxu0 %v4966
  %v5043 = vpop.f32.mrf.mxu0
  %v5044 = vadd.f32 0.0, %v5043
  %v5045 = vpop.f32.mrf.mxu0
  %v5046 = vpop.f32.mrf.mxu0
  %v5047 = vadd.f32 0.0, %v5046
  %v5048 = vpop.f32.mrf.mxu0
  %5049 = vmatprep.mubr.bf16.mxu0 0
  %5050 = vmatmul.mubr.bf16.gmra.mxu0 %v4969
  %v5051 = vpop.f32.mrf.mxu0
  %v5052 = vadd.f32 0.0, %v5051
  %v5053 = vpop.f32.mrf.mxu0
  %v5054 = vpop.f32.mrf.mxu0
  %v5055 = vadd.f32 0.0, %v5054
  %v5056 = vpop.f32.mrf.mxu0
  %5057 = vmatprep.mubr.bf16.mxu0 0
  %5058 = vmatmul.mubr.bf16.gmra.mxu0 %v4972
  %v5059 = vpop.f32.mrf.mxu0
  %v5060 = vadd.f32 0.0, %v5059
  %v5061 = vpop.f32.mrf.mxu0
  %v5062 = vpop.f32.mrf.mxu0
  %v5063 = vadd.f32 0.0, %v5062
  %v5064 = vpop.f32.mrf.mxu0
  %5065 = vmatprep.mubr.bf16.mxu0 0
  %5066 = vmatmul.mubr.bf16.gmra.mxu0 %v4975
  %v5067 = vpop.f32.mrf.mxu0
  %v5068 = vadd.f32 0.0, %v5067
  %v5069 = vpop.f32.mrf.mxu0
  %v5070 = vpop.f32.mrf.mxu0
  %v5071 = vadd.f32 0.0, %v5070
  %v5072 = vpop.f32.mrf.mxu0
  %5073 = vdwg.mxu0
  %v5082 = vunpack.c.l.b16 %v4841
  %v5083 = vunpack.c.l.b16 %v4842
  %v5084 = vunpack.c.l.b16 %v4843
  %v5085 = vunpack.c.l.b16 %v4844
  %v5086 = vunpack.c.l.b16 %v4845
  %v5087 = vunpack.c.l.b16 %v4846
  %v5088 = vunpack.c.l.b16 %v4847
  %v5089 = vunpack.c.l.b16 %v4848
  %v5090 = vpack.c.b16 %v5083, %v5082
  %v5091 = vpack.c.b16 %v5085, %v5084
  %v5092 = vpack.c.b16 %v5087, %v5086
  %v5093 = vpack.c.b16 %v5089, %v5088
  %v5099 = vsel %vm31, %v4832, 0
  %v5102 = vsel %vm31, %v4833, 0
  %v5105 = vsel %vm31, %v4834, 0
  %v5108 = vsel %vm31, %v4835, 0
  %v5111 = vsel %vm31, %v4836, 0
  %v5114 = vsel %vm31, %v4837, 0
  %v5117 = vsel %vm31, %v4838, 0
  %v5120 = vsel %vm31, %v4839, 0
  %5122 = vmatprep.subr.bf16.mxu0 0
  %5123 = vmatpush1.bf16.msra.mxu0 0
  %5124 = vmatprep.subr.bf16.mxu0 0
  %5125 = vmatpush1.bf16.msra.mxu0 0
  %5126 = vmatprep.subr.bf16.mxu0 0
  %5127 = vmatpush1.bf16.msra.mxu0 0
  %5128 = vmatprep.subr.bf16.mxu0 0
  %5129 = vmatpush1.bf16.msra.mxu0 0
  %5130 = vmatprep.subr.bf16.mxu0 0
  %5131 = vmatpush1.bf16.msra.mxu0 %v5093
  %5132 = vmatprep.subr.bf16.mxu0 0
  %5133 = vmatpush1.bf16.msra.mxu0 %v5092
  %5134 = vmatprep.subr.bf16.mxu0 0
  %5135 = vmatpush1.bf16.msra.mxu0 %v5091
  %5136 = vmatprep.subr.bf16.mxu0 0
  %5137 = vmatpush1.bf16.msra.mxu0 %v5090
  %5138 = vmatprep.subr.bf16.mxu0 0
  %5139 = vmatpush2.bf16.msra.mxu0 0
  %5140 = vmatprep.subr.bf16.mxu0 0
  %5141 = vmatpush2.bf16.msra.mxu0 0
  %5142 = vmatprep.subr.bf16.mxu0 0
  %5143 = vmatpush2.bf16.msra.mxu0 0
  %5144 = vmatprep.subr.bf16.mxu0 0
  %5145 = vmatpush2.bf16.msra.mxu0 0
  %5146 = vmatprep.subr.bf16.mxu0 0
  %5147 = vmatpush2.bf16.msra.mxu0 0
  %5148 = vmatprep.subr.bf16.mxu0 0
  %5149 = vmatpush2.bf16.msra.mxu0 0
  %5150 = vmatprep.subr.bf16.mxu0 0
  %5151 = vmatpush2.bf16.msra.mxu0 0
  %5152 = vmatprep.subr.bf16.mxu0 0
  %5153 = vmatpush2.bf16.msra.mxu0 0
  %5154 = vmatprep.mubr.bf16.mxu0 0
  %5155 = vmatmul.mubr.bf16.gmra.mxu0 %v5099
  %v5156 = vpop.f32.mrf.mxu0
  %v5157 = vadd.f32 %v5012, %v5156
  %v5158 = vpop.f32.mrf.mxu0
  %v5159 = vpop.f32.mrf.mxu0
  %v5160 = vadd.f32 %v5015, %v5159
  %v5161 = vpop.f32.mrf.mxu0
  %5162 = vmatprep.mubr.bf16.mxu0 0
  %5163 = vmatmul.mubr.bf16.gmra.mxu0 %v5102
  %v5164 = vpop.f32.mrf.mxu0
  %v5165 = vadd.f32 %v5020, %v5164
  %v5166 = vpop.f32.mrf.mxu0
  %v5167 = vpop.f32.mrf.mxu0
  %v5168 = vadd.f32 %v5023, %v5167
  %v5169 = vpop.f32.mrf.mxu0
  %5170 = vmatprep.mubr.bf16.mxu0 0
  %5171 = vmatmul.mubr.bf16.gmra.mxu0 %v5105
  %v5172 = vpop.f32.mrf.mxu0
  %v5173 = vadd.f32 %v5028, %v5172
  %v5174 = vpop.f32.mrf.mxu0
  %v5175 = vpop.f32.mrf.mxu0
  %v5176 = vadd.f32 %v5031, %v5175
  %v5177 = vpop.f32.mrf.mxu0
  %5178 = vmatprep.mubr.bf16.mxu0 0
  %5179 = vmatmul.mubr.bf16.gmra.mxu0 %v5108
  %v5180 = vpop.f32.mrf.mxu0
  %v5181 = vadd.f32 %v5036, %v5180
  %v5182 = vpop.f32.mrf.mxu0
  %v5183 = vpop.f32.mrf.mxu0
  %v5184 = vadd.f32 %v5039, %v5183
  %v5185 = vpop.f32.mrf.mxu0
  %5186 = vmatprep.mubr.bf16.mxu0 0
  %5187 = vmatmul.mubr.bf16.gmra.mxu0 %v5111
  %v5188 = vpop.f32.mrf.mxu0
  %v5189 = vadd.f32 %v5044, %v5188
  %v5190 = vpop.f32.mrf.mxu0
  %v5191 = vpop.f32.mrf.mxu0
  %v5192 = vadd.f32 %v5047, %v5191
  %v5193 = vpop.f32.mrf.mxu0
  %5194 = vmatprep.mubr.bf16.mxu0 0
  %5195 = vmatmul.mubr.bf16.gmra.mxu0 %v5114
  %v5196 = vpop.f32.mrf.mxu0
  %v5197 = vadd.f32 %v5052, %v5196
  %v5198 = vpop.f32.mrf.mxu0
  %v5199 = vpop.f32.mrf.mxu0
  %v5200 = vadd.f32 %v5055, %v5199
  %v5201 = vpop.f32.mrf.mxu0
  %5202 = vmatprep.mubr.bf16.mxu0 0
  %5203 = vmatmul.mubr.bf16.gmra.mxu0 %v5117
  %v5204 = vpop.f32.mrf.mxu0
  %v5205 = vadd.f32 %v5060, %v5204
  %v5206 = vpop.f32.mrf.mxu0
  %v5207 = vpop.f32.mrf.mxu0
  %v5208 = vadd.f32 %v5063, %v5207
  %v5209 = vpop.f32.mrf.mxu0
  %5210 = vmatprep.mubr.bf16.mxu0 0
  %5211 = vmatmul.mubr.bf16.gmra.mxu0 %v5120
  %v5212 = vpop.f32.mrf.mxu0
  %v5213 = vadd.f32 %v5068, %v5212
  %v5214 = vpop.f32.mrf.mxu0
  %v5215 = vpop.f32.mrf.mxu0
  %v5216 = vadd.f32 %v5071, %v5215
  %v5217 = vpop.f32.mrf.mxu0
  %5218 = vdwg.mxu0
  %v5219 = vld [vmem:[#allocation2 + $0x8] sm:$0xff]
  %v5220 = vld [vmem:[#allocation2 + $0x10] sm:$0xff]
  %v5221 = vld [vmem:[#allocation2 + $0x18] sm:$0xff]
  %v5222 = vld [vmem:[#allocation2 + $0x20] sm:$0xff]
  %v5223 = vld [vmem:[#allocation2 + $0x28] sm:$0xff]
  %v5224 = vld [vmem:[#allocation2 + $0x30] sm:$0xff]
  %v5225 = vld [vmem:[#allocation2 + $0x38] sm:$0xff]
  %v5226 = vld [vmem:[#allocation2 + $0x40] sm:$0xff]
  %v5227 = vld [vmem:[#allocation2 + $0x48] sm:$0xff]
  %v5228 = vld [vmem:[#allocation2 + $0x50] sm:$0xff]
  %v5229 = vld [vmem:[#allocation2 + $0x58] sm:$0xff]
  %v5230 = vld [vmem:[#allocation2 + $0x60] sm:$0xff]
  %v5231 = vld [vmem:[#allocation2 + $0x68] sm:$0xff]
  %v5232 = vld [vmem:[#allocation2 + $0x70] sm:$0xff]
  %v5233 = vld [vmem:[#allocation2 + $0x78] sm:$0xff]
  %v5234 = vld [vmem:[#allocation2 + $0x80] sm:$0xff]
  %v5235 = vld [vmem:[%s793] sm:$0xff]
  %v5236 = vld [vmem:[%s793 + $0x8] sm:$0xff]
  %v5237 = vld [vmem:[%s793 + $0x10] sm:$0xff]
  %v5238 = vld [vmem:[%s793 + $0x18] sm:$0xff]
  %v5239 = vld [vmem:[%s793 + $0x20] sm:$0xff]
  %v5240 = vld [vmem:[%s793 + $0x28] sm:$0xff]
  %v5241 = vld [vmem:[%s793 + $0x30] sm:$0xff]
  %v5242 = vld [vmem:[%s793 + $0x38] sm:$0xff]
  %v5243 = vld [vmem:[%s793 + $0x40] sm:$0xff]
  %v5244 = vld [vmem:[%s793 + $0x48] sm:$0xff]
  %v5245 = vld [vmem:[%s793 + $0x50] sm:$0xff]
  %v5246 = vld [vmem:[%s793 + $0x58] sm:$0xff]
  %v5247 = vld [vmem:[%s793 + $0x60] sm:$0xff]
  %v5248 = vld [vmem:[%s793 + $0x68] sm:$0xff]
  %v5249 = vld [vmem:[%s793 + $0x70] sm:$0xff]
  %v5250 = vld [vmem:[%s793 + $0x78] sm:$0xff]
  %vm5251 = vcmp.gt.f32.partialorder %v5235, 0.0
  %vm5252 = vcmp.gt.f32.partialorder %v5236, 0.0
  %vm5253 = vcmp.gt.f32.partialorder %v5237, 0.0
  %vm5254 = vcmp.gt.f32.partialorder %v5238, 0.0
  %vm5255 = vcmp.gt.f32.partialorder %v5239, 0.0
  %vm5256 = vcmp.gt.f32.partialorder %v5240, 0.0
  %vm5257 = vcmp.gt.f32.partialorder %v5241, 0.0
  %vm5258 = vcmp.gt.f32.partialorder %v5242, 0.0
  %vm5259 = vcmp.gt.f32.partialorder %v5243, 0.0
  %vm5260 = vcmp.gt.f32.partialorder %v5244, 0.0
  %vm5261 = vcmp.gt.f32.partialorder %v5245, 0.0
  %vm5262 = vcmp.gt.f32.partialorder %v5246, 0.0
  %vm5263 = vcmp.gt.f32.partialorder %v5247, 0.0
  %vm5264 = vcmp.gt.f32.partialorder %v5248, 0.0
  %vm5265 = vcmp.gt.f32.partialorder %v5249, 0.0
  %vm5266 = vcmp.gt.f32.partialorder %v5250, 0.0
  %v5267 = vsel %vm5251, %v5219, 0.0
  %v5268 = vsel %vm5252, %v5220, 0.0
  %v5269 = vsel %vm5253, %v5221, 0.0
  %v5270 = vsel %vm5254, %v5222, 0.0
  %v5271 = vsel %vm5255, %v5223, 0.0
  %v5272 = vsel %vm5256, %v5224, 0.0
  %v5273 = vsel %vm5257, %v5225, 0.0
  %v5274 = vsel %vm5258, %v5226, 0.0
  %v5275 = vsel %vm5259, %v5227, 0.0
  %v5276 = vsel %vm5260, %v5228, 0.0
  %v5277 = vsel %vm5261, %v5229, 0.0
  %v5278 = vsel %vm5262, %v5230, 0.0
  %v5279 = vsel %vm5263, %v5231, 0.0
  %v5280 = vsel %vm5264, %v5232, 0.0
  %v5281 = vsel %vm5265, %v5233, 0.0
  %v5282 = vsel %vm5266, %v5234, 0.0
  %v5283 = vpack.c.bf16 %v5268, %v5267
  %v5284 = vpack.c.bf16 %v5270, %v5269
  %v5285 = vpack.c.bf16 %v5272, %v5271
  %v5286 = vpack.c.bf16 %v5274, %v5273
  %v5287 = vpack.c.bf16 %v5276, %v5275
  %v5288 = vpack.c.bf16 %v5278, %v5277
  %v5289 = vpack.c.bf16 %v5280, %v5279
  %v5290 = vpack.c.bf16 %v5282, %v5281
  %v5291 = vld [vmem:[%s4840 + $0x40] sm:$0xf]
  %v5292 = vld [vmem:[%s4840 + $0x44] sm:$0xf]
  %v5293 = vld [vmem:[%s4840 + $0x48] sm:$0xf]
  %v5294 = vld [vmem:[%s4840 + $0x4c] sm:$0xf]
  %v5295 = vld [vmem:[%s4840 + $0x50] sm:$0xf]
  %v5296 = vld [vmem:[%s4840 + $0x54] sm:$0xf]
  %v5297 = vld [vmem:[%s4840 + $0x58] sm:$0xf]
  %v5298 = vld [vmem:[%s4840 + $0x5c] sm:$0xf]
  %v5307 = vunpack.c.l.b16 %v5291
  %v5308 = vunpack.c.l.b16 %v5292
  %v5309 = vunpack.c.l.b16 %v5293
  %v5310 = vunpack.c.l.b16 %v5294
  %v5311 = vunpack.c.l.b16 %v5295
  %v5312 = vunpack.c.l.b16 %v5296
  %v5313 = vunpack.c.l.b16 %v5297
  %v5314 = vunpack.c.l.b16 %v5298
  %v5315 = vpack.c.b16 %v5308, %v5307
  %v5316 = vpack.c.b16 %v5310, %v5309
  %v5317 = vpack.c.b16 %v5312, %v5311
  %v5318 = vpack.c.b16 %v5314, %v5313
  %v5324 = vsel %vm31, %v5283, 0
  %v5327 = vsel %vm31, %v5284, 0
  %v5330 = vsel %vm31, %v5285, 0
  %v5333 = vsel %vm31, %v5286, 0
  %v5336 = vsel %vm31, %v5287, 0
  %v5339 = vsel %vm31, %v5288, 0
  %v5342 = vsel %vm31, %v5289, 0
  %v5345 = vsel %vm31, %v5290, 0
  %5347 = vmatprep.subr.bf16.mxu0 0
  %5348 = vmatpush1.bf16.msra.mxu0 0
  %5349 = vmatprep.subr.bf16.mxu0 0
  %5350 = vmatpush1.bf16.msra.mxu0 0
  %5351 = vmatprep.subr.bf16.mxu0 0
  %5352 = vmatpush1.bf16.msra.mxu0 0
  %5353 = vmatprep.subr.bf16.mxu0 0
  %5354 = vmatpush1.bf16.msra.mxu0 0
  %5355 = vmatprep.subr.bf16.mxu0 0
  %5356 = vmatpush1.bf16.msra.mxu0 %v5318
  %5357 = vmatprep.subr.bf16.mxu0 0
  %5358 = vmatpush1.bf16.msra.mxu0 %v5317
  %5359 = vmatprep.subr.bf16.mxu0 0
  %5360 = vmatpush1.bf16.msra.mxu0 %v5316
  %5361 = vmatprep.subr.bf16.mxu0 0
  %5362 = vmatpush1.bf16.msra.mxu0 %v5315
  %5363 = vmatprep.subr.bf16.mxu0 0
  %5364 = vmatpush2.bf16.msra.mxu0 0
  %5365 = vmatprep.subr.bf16.mxu0 0
  %5366 = vmatpush2.bf16.msra.mxu0 0
  %5367 = vmatprep.subr.bf16.mxu0 0
  %5368 = vmatpush2.bf16.msra.mxu0 0
  %5369 = vmatprep.subr.bf16.mxu0 0
  %5370 = vmatpush2.bf16.msra.mxu0 0
  %5371 = vmatprep.subr.bf16.mxu0 0
  %5372 = vmatpush2.bf16.msra.mxu0 0
  %5373 = vmatprep.subr.bf16.mxu0 0
  %5374 = vmatpush2.bf16.msra.mxu0 0
  %5375 = vmatprep.subr.bf16.mxu0 0
  %5376 = vmatpush2.bf16.msra.mxu0 0
  %5377 = vmatprep.subr.bf16.mxu0 0
  %5378 = vmatpush2.bf16.msra.mxu0 0
  %5379 = vmatprep.mubr.bf16.mxu0 0
  %5380 = vmatmul.mubr.bf16.gmra.mxu0 %v5324
  %v5381 = vpop.f32.mrf.mxu0
  %v5382 = vadd.f32 0.0, %v5381
  %v5383 = vpop.f32.mrf.mxu0
  %v5384 = vpop.f32.mrf.mxu0
  %v5385 = vadd.f32 0.0, %v5384
  %v5386 = vpop.f32.mrf.mxu0
  %5387 = vmatprep.mubr.bf16.mxu0 0
  %5388 = vmatmul.mubr.bf16.gmra.mxu0 %v5327
  %v5389 = vpop.f32.mrf.mxu0
  %v5390 = vadd.f32 0.0, %v5389
  %v5391 = vpop.f32.mrf.mxu0
  %v5392 = vpop.f32.mrf.mxu0
  %v5393 = vadd.f32 0.0, %v5392
  %v5394 = vpop.f32.mrf.mxu0
  %5395 = vmatprep.mubr.bf16.mxu0 0
  %5396 = vmatmul.mubr.bf16.gmra.mxu0 %v5330
  %v5397 = vpop.f32.mrf.mxu0
  %v5398 = vadd.f32 0.0, %v5397
  %v5399 = vpop.f32.mrf.mxu0
  %v5400 = vpop.f32.mrf.mxu0
  %v5401 = vadd.f32 0.0, %v5400
  %v5402 = vpop.f32.mrf.mxu0
  %5403 = vmatprep.mubr.bf16.mxu0 0
  %5404 = vmatmul.mubr.bf16.gmra.mxu0 %v5333
  %v5405 = vpop.f32.mrf.mxu0
  %v5406 = vadd.f32 0.0, %v5405
  %v5407 = vpop.f32.mrf.mxu0
  %v5408 = vpop.f32.mrf.mxu0
  %v5409 = vadd.f32 0.0, %v5408
  %v5410 = vpop.f32.mrf.mxu0
  %5411 = vmatprep.mubr.bf16.mxu0 0
  %5412 = vmatmul.mubr.bf16.gmra.mxu0 %v5336
  %v5413 = vpop.f32.mrf.mxu0
  %v5414 = vadd.f32 0.0, %v5413
  %v5415 = vpop.f32.mrf.mxu0
  %v5416 = vpop.f32.mrf.mxu0
  %v5417 = vadd.f32 0.0, %v5416
  %v5418 = vpop.f32.mrf.mxu0
  %5419 = vmatprep.mubr.bf16.mxu0 0
  %5420 = vmatmul.mubr.bf16.gmra.mxu0 %v5339
  %v5421 = vpop.f32.mrf.mxu0
  %v5422 = vadd.f32 0.0, %v5421
  %v5423 = vpop.f32.mrf.mxu0
  %v5424 = vpop.f32.mrf.mxu0
  %v5425 = vadd.f32 0.0, %v5424
  %v5426 = vpop.f32.mrf.mxu0
  %5427 = vmatprep.mubr.bf16.mxu0 0
  %5428 = vmatmul.mubr.bf16.gmra.mxu0 %v5342
  %v5429 = vpop.f32.mrf.mxu0
  %v5430 = vadd.f32 0.0, %v5429
  %v5431 = vpop.f32.mrf.mxu0
  %v5432 = vpop.f32.mrf.mxu0
  %v5433 = vadd.f32 0.0, %v5432
  %v5434 = vpop.f32.mrf.mxu0
  %5435 = vmatprep.mubr.bf16.mxu0 0
  %5436 = vmatmul.mubr.bf16.gmra.mxu0 %v5345
  %v5437 = vpop.f32.mrf.mxu0
  %v5438 = vadd.f32 0.0, %v5437
  %v5439 = vpop.f32.mrf.mxu0
  %v5440 = vpop.f32.mrf.mxu0
  %v5441 = vadd.f32 0.0, %v5440
  %v5442 = vpop.f32.mrf.mxu0
  %5443 = vdwg.mxu0
  %v5444 = vadd.f32 %v5157, %v5382
  %v5445 = vadd.f32 %v5160, %v5385
  %v5446 = vadd.f32 %v5165, %v5390
  %v5447 = vadd.f32 %v5168, %v5393
  %v5448 = vadd.f32 %v5173, %v5398
  %v5449 = vadd.f32 %v5176, %v5401
  %v5450 = vadd.f32 %v5181, %v5406
  %v5451 = vadd.f32 %v5184, %v5409
  %v5452 = vadd.f32 %v5189, %v5414
  %v5453 = vadd.f32 %v5192, %v5417
  %v5454 = vadd.f32 %v5197, %v5422
  %v5455 = vadd.f32 %v5200, %v5425
  %v5456 = vadd.f32 %v5205, %v5430
  %v5457 = vadd.f32 %v5208, %v5433
  %v5458 = vadd.f32 %v5213, %v5438
  %v5459 = vadd.f32 %v5216, %v5441
  %v5460 = vld [vmem:[#allocation2 + $0xf] sm:$0xff]
  %v5461 = vld [vmem:[#allocation2 + $0x17] sm:$0xff]
  %v5462 = vld [vmem:[#allocation2 + $0x1f] sm:$0xff]
  %v5463 = vld [vmem:[#allocation2 + $0x27] sm:$0xff]
  %v5464 = vld [vmem:[#allocation2 + $0x2f] sm:$0xff]
  %v5465 = vld [vmem:[#allocation2 + $0x37] sm:$0xff]
  %v5466 = vld [vmem:[#allocation2 + $0x3f] sm:$0xff]
  %v5467 = vld [vmem:[#allocation2 + $0x47] sm:$0xff]
  %v5468 = vld [vmem:[#allocation2 + $0x4f] sm:$0xff]
  %v5469 = vld [vmem:[#allocation2 + $0x57] sm:$0xff]
  %v5470 = vld [vmem:[#allocation2 + $0x5f] sm:$0xff]
  %v5471 = vld [vmem:[#allocation2 + $0x67] sm:$0xff]
  %v5472 = vld [vmem:[#allocation2 + $0x6f] sm:$0xff]
  %v5473 = vld [vmem:[#allocation2 + $0x77] sm:$0xff]
  %v5474 = vld [vmem:[#allocation2 + $0x7f] sm:$0xff]
  %v5475 = vld [vmem:[#allocation2 + $0x87] sm:$0xff]
  %v5476 = vld [vmem:[%s1035] sm:$0xff]
  %v5477 = vld [vmem:[%s1035 + $0x8] sm:$0xff]
  %v5478 = vld [vmem:[%s1035 + $0x10] sm:$0xff]
  %v5479 = vld [vmem:[%s1035 + $0x18] sm:$0xff]
  %v5480 = vld [vmem:[%s1035 + $0x20] sm:$0xff]
  %v5481 = vld [vmem:[%s1035 + $0x28] sm:$0xff]
  %v5482 = vld [vmem:[%s1035 + $0x30] sm:$0xff]
  %v5483 = vld [vmem:[%s1035 + $0x38] sm:$0xff]
  %v5484 = vld [vmem:[%s1035 + $0x40] sm:$0xff]
  %v5485 = vld [vmem:[%s1035 + $0x48] sm:$0xff]
  %v5486 = vld [vmem:[%s1035 + $0x50] sm:$0xff]
  %v5487 = vld [vmem:[%s1035 + $0x58] sm:$0xff]
  %v5488 = vld [vmem:[%s1035 + $0x60] sm:$0xff]
  %v5489 = vld [vmem:[%s1035 + $0x68] sm:$0xff]
  %v5490 = vld [vmem:[%s1035 + $0x70] sm:$0xff]
  %v5491 = vld [vmem:[%s1035 + $0x78] sm:$0xff]
  %vm5492 = vcmp.gt.f32.partialorder %v5476, 0.0
  %vm5493 = vcmp.gt.f32.partialorder %v5477, 0.0
  %vm5494 = vcmp.gt.f32.partialorder %v5478, 0.0
  %vm5495 = vcmp.gt.f32.partialorder %v5479, 0.0
  %vm5496 = vcmp.gt.f32.partialorder %v5480, 0.0
  %vm5497 = vcmp.gt.f32.partialorder %v5481, 0.0
  %vm5498 = vcmp.gt.f32.partialorder %v5482, 0.0
  %vm5499 = vcmp.gt.f32.partialorder %v5483, 0.0
  %vm5500 = vcmp.gt.f32.partialorder %v5484, 0.0
  %vm5501 = vcmp.gt.f32.partialorder %v5485, 0.0
  %vm5502 = vcmp.gt.f32.partialorder %v5486, 0.0
  %vm5503 = vcmp.gt.f32.partialorder %v5487, 0.0
  %vm5504 = vcmp.gt.f32.partialorder %v5488, 0.0
  %vm5505 = vcmp.gt.f32.partialorder %v5489, 0.0
  %vm5506 = vcmp.gt.f32.partialorder %v5490, 0.0
  %vm5507 = vcmp.gt.f32.partialorder %v5491, 0.0
  %v5508 = vsel %vm5492, %v5460, 0.0
  %v5509 = vsel %vm5493, %v5461, 0.0
  %v5510 = vsel %vm5494, %v5462, 0.0
  %v5511 = vsel %vm5495, %v5463, 0.0
  %v5512 = vsel %vm5496, %v5464, 0.0
  %v5513 = vsel %vm5497, %v5465, 0.0
  %v5514 = vsel %vm5498, %v5466, 0.0
  %v5515 = vsel %vm5499, %v5467, 0.0
  %v5516 = vsel %vm5500, %v5468, 0.0
  %v5517 = vsel %vm5501, %v5469, 0.0
  %v5518 = vsel %vm5502, %v5470, 0.0
  %v5519 = vsel %vm5503, %v5471, 0.0
  %v5520 = vsel %vm5504, %v5472, 0.0
  %v5521 = vsel %vm5505, %v5473, 0.0
  %v5522 = vsel %vm5506, %v5474, 0.0
  %v5523 = vsel %vm5507, %v5475, 0.0
  %v5524 = vpack.c.bf16 %v5509, %v5508
  %v5525 = vpack.c.bf16 %v5511, %v5510
  %v5526 = vpack.c.bf16 %v5513, %v5512
  %v5527 = vpack.c.bf16 %v5515, %v5514
  %v5528 = vpack.c.bf16 %v5517, %v5516
  %v5529 = vpack.c.bf16 %v5519, %v5518
  %v5530 = vpack.c.bf16 %v5521, %v5520
  %v5531 = vpack.c.bf16 %v5523, %v5522
  %v5532 = vld [vmem:[%s4840 + $0x60] sm:$0xf]
  %v5533 = vld [vmem:[%s4840 + $0x64] sm:$0xf]
  %v5534 = vld [vmem:[%s4840 + $0x68] sm:$0xf]
  %v5535 = vld [vmem:[%s4840 + $0x6c] sm:$0xf]
  %v5536 = vld [vmem:[%s4840 + $0x70] sm:$0xf]
  %v5537 = vld [vmem:[%s4840 + $0x74] sm:$0xf]
  %v5538 = vld [vmem:[%s4840 + $0x78] sm:$0xf]
  %v5539 = vld [vmem:[%s4840 + $0x7c] sm:$0xf]
  %v5548 = vunpack.c.l.b16 %v5532
  %v5549 = vunpack.c.l.b16 %v5533
  %v5550 = vunpack.c.l.b16 %v5534
  %v5551 = vunpack.c.l.b16 %v5535
  %v5552 = vunpack.c.l.b16 %v5536
  %v5553 = vunpack.c.l.b16 %v5537
  %v5554 = vunpack.c.l.b16 %v5538
  %v5555 = vunpack.c.l.b16 %v5539
  %v5556 = vpack.c.b16 %v5549, %v5548
  %v5557 = vpack.c.b16 %v5551, %v5550
  %v5558 = vpack.c.b16 %v5553, %v5552
  %v5559 = vpack.c.b16 %v5555, %v5554
  %v5565 = vsel %vm31, %v5524, 0
  %v5568 = vsel %vm31, %v5525, 0
  %v5571 = vsel %vm31, %v5526, 0
  %v5574 = vsel %vm31, %v5527, 0
  %v5577 = vsel %vm31, %v5528, 0
  %v5580 = vsel %vm31, %v5529, 0
  %v5583 = vsel %vm31, %v5530, 0
  %v5586 = vsel %vm31, %v5531, 0
  %5588 = vmatprep.subr.bf16.mxu0 0
  %5589 = vmatpush1.bf16.msra.mxu0 0
  %5590 = vmatprep.subr.bf16.mxu0 0
  %5591 = vmatpush1.bf16.msra.mxu0 0
  %5592 = vmatprep.subr.bf16.mxu0 0
  %5593 = vmatpush1.bf16.msra.mxu0 0
  %5594 = vmatprep.subr.bf16.mxu0 0
  %5595 = vmatpush1.bf16.msra.mxu0 0
  %5596 = vmatprep.subr.bf16.mxu0 0
  %5597 = vmatpush1.bf16.msra.mxu0 %v5559
  %5598 = vmatprep.subr.bf16.mxu0 0
  %5599 = vmatpush1.bf16.msra.mxu0 %v5558
  %5600 = vmatprep.subr.bf16.mxu0 0
  %5601 = vmatpush1.bf16.msra.mxu0 %v5557
  %5602 = vmatprep.subr.bf16.mxu0 0
  %5603 = vmatpush1.bf16.msra.mxu0 %v5556
  %5604 = vmatprep.subr.bf16.mxu0 0
  %5605 = vmatpush2.bf16.msra.mxu0 0
  %5606 = vmatprep.subr.bf16.mxu0 0
  %5607 = vmatpush2.bf16.msra.mxu0 0
  %5608 = vmatprep.subr.bf16.mxu0 0
  %5609 = vmatpush2.bf16.msra.mxu0 0
  %5610 = vmatprep.subr.bf16.mxu0 0
  %5611 = vmatpush2.bf16.msra.mxu0 0
  %5612 = vmatprep.subr.bf16.mxu0 0
  %5613 = vmatpush2.bf16.msra.mxu0 0
  %5614 = vmatprep.subr.bf16.mxu0 0
  %5615 = vmatpush2.bf16.msra.mxu0 0
  %5616 = vmatprep.subr.bf16.mxu0 0
  %5617 = vmatpush2.bf16.msra.mxu0 0
  %5618 = vmatprep.subr.bf16.mxu0 0
  %5619 = vmatpush2.bf16.msra.mxu0 0
  %5620 = vmatprep.mubr.bf16.mxu0 0
  %5621 = vmatmul.mubr.bf16.gmra.mxu0 %v5565
  %v5622 = vpop.f32.mrf.mxu0
  %v5623 = vadd.f32 0.0, %v5622
  %v5624 = vpop.f32.mrf.mxu0
  %v5625 = vpop.f32.mrf.mxu0
  %v5626 = vadd.f32 0.0, %v5625
  %v5627 = vpop.f32.mrf.mxu0
  %5628 = vmatprep.mubr.bf16.mxu0 0
  %5629 = vmatmul.mubr.bf16.gmra.mxu0 %v5568
  %v5630 = vpop.f32.mrf.mxu0
  %v5631 = vadd.f32 0.0, %v5630
  %v5632 = vpop.f32.mrf.mxu0
  %v5633 = vpop.f32.mrf.mxu0
  %v5634 = vadd.f32 0.0, %v5633
  %v5635 = vpop.f32.mrf.mxu0
  %5636 = vmatprep.mubr.bf16.mxu0 0
  %5637 = vmatmul.mubr.bf16.gmra.mxu0 %v5571
  %v5638 = vpop.f32.mrf.mxu0
  %v5639 = vadd.f32 0.0, %v5638
  %v5640 = vpop.f32.mrf.mxu0
  %v5641 = vpop.f32.mrf.mxu0
  %v5642 = vadd.f32 0.0, %v5641
  %v5643 = vpop.f32.mrf.mxu0
  %5644 = vmatprep.mubr.bf16.mxu0 0
  %5645 = vmatmul.mubr.bf16.gmra.mxu0 %v5574
  %v5646 = vpop.f32.mrf.mxu0
  %v5647 = vadd.f32 0.0, %v5646
  %v5648 = vpop.f32.mrf.mxu0
  %v5649 = vpop.f32.mrf.mxu0
  %v5650 = vadd.f32 0.0, %v5649
  %v5651 = vpop.f32.mrf.mxu0
  %5652 = vmatprep.mubr.bf16.mxu0 0
  %5653 = vmatmul.mubr.bf16.gmra.mxu0 %v5577
  %v5654 = vpop.f32.mrf.mxu0
  %v5655 = vadd.f32 0.0, %v5654
  %v5656 = vpop.f32.mrf.mxu0
  %v5657 = vpop.f32.mrf.mxu0
  %v5658 = vadd.f32 0.0, %v5657
  %v5659 = vpop.f32.mrf.mxu0
  %5660 = vmatprep.mubr.bf16.mxu0 0
  %5661 = vmatmul.mubr.bf16.gmra.mxu0 %v5580
  %v5662 = vpop.f32.mrf.mxu0
  %v5663 = vadd.f32 0.0, %v5662
  %v5664 = vpop.f32.mrf.mxu0
  %v5665 = vpop.f32.mrf.mxu0
  %v5666 = vadd.f32 0.0, %v5665
  %v5667 = vpop.f32.mrf.mxu0
  %5668 = vmatprep.mubr.bf16.mxu0 0
  %5669 = vmatmul.mubr.bf16.gmra.mxu0 %v5583
  %v5670 = vpop.f32.mrf.mxu0
  %v5671 = vadd.f32 0.0, %v5670
  %v5672 = vpop.f32.mrf.mxu0
  %v5673 = vpop.f32.mrf.mxu0
  %v5674 = vadd.f32 0.0, %v5673
  %v5675 = vpop.f32.mrf.mxu0
  %5676 = vmatprep.mubr.bf16.mxu0 0
  %5677 = vmatmul.mubr.bf16.gmra.mxu0 %v5586
  %v5678 = vpop.f32.mrf.mxu0
  %v5679 = vadd.f32 0.0, %v5678
  %v5680 = vpop.f32.mrf.mxu0
  %v5681 = vpop.f32.mrf.mxu0
  %v5682 = vadd.f32 0.0, %v5681
  %v5683 = vpop.f32.mrf.mxu0
  %5684 = vdwg.mxu0
  %v5685 = vadd.f32 %v5444, %v5623
  %v5686 = vadd.f32 %v5445, %v5626
  %v5687 = vadd.f32 %v5446, %v5631
  %v5688 = vadd.f32 %v5447, %v5634
  %v5689 = vadd.f32 %v5448, %v5639
  %v5690 = vadd.f32 %v5449, %v5642
  %v5691 = vadd.f32 %v5450, %v5647
  %v5692 = vadd.f32 %v5451, %v5650
  %v5693 = vadd.f32 %v5452, %v5655
  %v5694 = vadd.f32 %v5453, %v5658
  %v5695 = vadd.f32 %v5454, %v5663
  %v5696 = vadd.f32 %v5455, %v5666
  %v5697 = vadd.f32 %v5456, %v5671
  %v5698 = vadd.f32 %v5457, %v5674
  %v5699 = vadd.f32 %v5458, %v5679
  %v5700 = vadd.f32 %v5459, %v5682
  %v5701 = vld [vmem:[#allocation2 + $0x10] sm:$0xff]
  %v5702 = vld [vmem:[#allocation2 + $0x18] sm:$0xff]
  %v5703 = vld [vmem:[#allocation2 + $0x20] sm:$0xff]
  %v5704 = vld [vmem:[#allocation2 + $0x28] sm:$0xff]
  %v5705 = vld [vmem:[#allocation2 + $0x30] sm:$0xff]
  %v5706 = vld [vmem:[#allocation2 + $0x38] sm:$0xff]
  %v5707 = vld [vmem:[#allocation2 + $0x40] sm:$0xff]
  %v5708 = vld [vmem:[#allocation2 + $0x48] sm:$0xff]
  %v5709 = vld [vmem:[#allocation2 + $0x50] sm:$0xff]
  %v5710 = vld [vmem:[#allocation2 + $0x58] sm:$0xff]
  %v5711 = vld [vmem:[#allocation2 + $0x60] sm:$0xff]
  %v5712 = vld [vmem:[#allocation2 + $0x68] sm:$0xff]
  %v5713 = vld [vmem:[#allocation2 + $0x70] sm:$0xff]
  %v5714 = vld [vmem:[#allocation2 + $0x78] sm:$0xff]
  %v5715 = vld [vmem:[#allocation2 + $0x80] sm:$0xff]
  %v5716 = vld [vmem:[#allocation2 + $0x88] sm:$0xff]
  %v5717 = vld [vmem:[%s1277] sm:$0xff]
  %v5718 = vld [vmem:[%s1277 + $0x8] sm:$0xff]
  %v5719 = vld [vmem:[%s1277 + $0x10] sm:$0xff]
  %v5720 = vld [vmem:[%s1277 + $0x18] sm:$0xff]
  %v5721 = vld [vmem:[%s1277 + $0x20] sm:$0xff]
  %v5722 = vld [vmem:[%s1277 + $0x28] sm:$0xff]
  %v5723 = vld [vmem:[%s1277 + $0x30] sm:$0xff]
  %v5724 = vld [vmem:[%s1277 + $0x38] sm:$0xff]
  %v5725 = vld [vmem:[%s1277 + $0x40] sm:$0xff]
  %v5726 = vld [vmem:[%s1277 + $0x48] sm:$0xff]
  %v5727 = vld [vmem:[%s1277 + $0x50] sm:$0xff]
  %v5728 = vld [vmem:[%s1277 + $0x58] sm:$0xff]
  %v5729 = vld [vmem:[%s1277 + $0x60] sm:$0xff]
  %v5730 = vld [vmem:[%s1277 + $0x68] sm:$0xff]
  %v5731 = vld [vmem:[%s1277 + $0x70] sm:$0xff]
  %v5732 = vld [vmem:[%s1277 + $0x78] sm:$0xff]
  %vm5733 = vcmp.gt.f32.partialorder %v5717, 0.0
  %vm5734 = vcmp.gt.f32.partialorder %v5718, 0.0
  %vm5735 = vcmp.gt.f32.partialorder %v5719, 0.0
  %vm5736 = vcmp.gt.f32.partialorder %v5720, 0.0
  %vm5737 = vcmp.gt.f32.partialorder %v5721, 0.0
  %vm5738 = vcmp.gt.f32.partialorder %v5722, 0.0
  %vm5739 = vcmp.gt.f32.partialorder %v5723, 0.0
  %vm5740 = vcmp.gt.f32.partialorder %v5724, 0.0
  %vm5741 = vcmp.gt.f32.partialorder %v5725, 0.0
  %vm5742 = vcmp.gt.f32.partialorder %v5726, 0.0
  %vm5743 = vcmp.gt.f32.partialorder %v5727, 0.0
  %vm5744 = vcmp.gt.f32.partialorder %v5728, 0.0
  %vm5745 = vcmp.gt.f32.partialorder %v5729, 0.0
  %vm5746 = vcmp.gt.f32.partialorder %v5730, 0.0
  %vm5747 = vcmp.gt.f32.partialorder %v5731, 0.0
  %vm5748 = vcmp.gt.f32.partialorder %v5732, 0.0
  %v5749 = vsel %vm5733, %v5701, 0.0
  %v5750 = vsel %vm5734, %v5702, 0.0
  %v5751 = vsel %vm5735, %v5703, 0.0
  %v5752 = vsel %vm5736, %v5704, 0.0
  %v5753 = vsel %vm5737, %v5705, 0.0
  %v5754 = vsel %vm5738, %v5706, 0.0
  %v5755 = vsel %vm5739, %v5707, 0.0
  %v5756 = vsel %vm5740, %v5708, 0.0
  %v5757 = vsel %vm5741, %v5709, 0.0
  %v5758 = vsel %vm5742, %v5710, 0.0
  %v5759 = vsel %vm5743, %v5711, 0.0
  %v5760 = vsel %vm5744, %v5712, 0.0
  %v5761 = vsel %vm5745, %v5713, 0.0
  %v5762 = vsel %vm5746, %v5714, 0.0
  %v5763 = vsel %vm5747, %v5715, 0.0
  %v5764 = vsel %vm5748, %v5716, 0.0
  %v5765 = vpack.c.bf16 %v5750, %v5749
  %v5766 = vpack.c.bf16 %v5752, %v5751
  %v5767 = vpack.c.bf16 %v5754, %v5753
  %v5768 = vpack.c.bf16 %v5756, %v5755
  %v5769 = vpack.c.bf16 %v5758, %v5757
  %v5770 = vpack.c.bf16 %v5760, %v5759
  %v5771 = vpack.c.bf16 %v5762, %v5761
  %v5772 = vpack.c.bf16 %v5764, %v5763
  %v5773 = vld [vmem:[%s4840 + $0x80] sm:$0xf]
  %v5774 = vld [vmem:[%s4840 + $0x84] sm:$0xf]
  %v5775 = vld [vmem:[%s4840 + $0x88] sm:$0xf]
  %v5776 = vld [vmem:[%s4840 + $0x8c] sm:$0xf]
  %v5777 = vld [vmem:[%s4840 + $0x90] sm:$0xf]
  %v5778 = vld [vmem:[%s4840 + $0x94] sm:$0xf]
  %v5779 = vld [vmem:[%s4840 + $0x98] sm:$0xf]
  %v5780 = vld [vmem:[%s4840 + $0x9c] sm:$0xf]
  %v5789 = vunpack.c.l.b16 %v5773
  %v5790 = vunpack.c.l.b16 %v5774
  %v5791 = vunpack.c.l.b16 %v5775
  %v5792 = vunpack.c.l.b16 %v5776
  %v5793 = vunpack.c.l.b16 %v5777
  %v5794 = vunpack.c.l.b16 %v5778
  %v5795 = vunpack.c.l.b16 %v5779
  %v5796 = vunpack.c.l.b16 %v5780
  %v5797 = vpack.c.b16 %v5790, %v5789
  %v5798 = vpack.c.b16 %v5792, %v5791
  %v5799 = vpack.c.b16 %v5794, %v5793
  %v5800 = vpack.c.b16 %v5796, %v5795
  %v5806 = vsel %vm31, %v5765, 0
  %v5809 = vsel %vm31, %v5766, 0
  %v5812 = vsel %vm31, %v5767, 0
  %v5815 = vsel %vm31, %v5768, 0
  %v5818 = vsel %vm31, %v5769, 0
  %v5821 = vsel %vm31, %v5770, 0
  %v5824 = vsel %vm31, %v5771, 0
  %v5827 = vsel %vm31, %v5772, 0
  %5829 = vmatprep.subr.bf16.mxu0 0
  %5830 = vmatpush1.bf16.msra.mxu0 0
  %5831 = vmatprep.subr.bf16.mxu0 0
  %5832 = vmatpush1.bf16.msra.mxu0 0
  %5833 = vmatprep.subr.bf16.mxu0 0
  %5834 = vmatpush1.bf16.msra.mxu0 0
  %5835 = vmatprep.subr.bf16.mxu0 0
  %5836 = vmatpush1.bf16.msra.mxu0 0
  %5837 = vmatprep.subr.bf16.mxu0 0
  %5838 = vmatpush1.bf16.msra.mxu0 %v5800
  %5839 = vmatprep.subr.bf16.mxu0 0
  %5840 = vmatpush1.bf16.msra.mxu0 %v5799
  %5841 = vmatprep.subr.bf16.mxu0 0
  %5842 = vmatpush1.bf16.msra.mxu0 %v5798
  %5843 = vmatprep.subr.bf16.mxu0 0
  %5844 = vmatpush1.bf16.msra.mxu0 %v5797
  %5845 = vmatprep.subr.bf16.mxu0 0
  %5846 = vmatpush2.bf16.msra.mxu0 0
  %5847 = vmatprep.subr.bf16.mxu0 0
  %5848 = vmatpush2.bf16.msra.mxu0 0
  %5849 = vmatprep.subr.bf16.mxu0 0
  %5850 = vmatpush2.bf16.msra.mxu0 0
  %5851 = vmatprep.subr.bf16.mxu0 0
  %5852 = vmatpush2.bf16.msra.mxu0 0
  %5853 = vmatprep.subr.bf16.mxu0 0
  %5854 = vmatpush2.bf16.msra.mxu0 0
  %5855 = vmatprep.subr.bf16.mxu0 0
  %5856 = vmatpush2.bf16.msra.mxu0 0
  %5857 = vmatprep.subr.bf16.mxu0 0
  %5858 = vmatpush2.bf16.msra.mxu0 0
  %5859 = vmatprep.subr.bf16.mxu0 0
  %5860 = vmatpush2.bf16.msra.mxu0 0
  %5861 = vmatprep.mubr.bf16.mxu0 0
  %5862 = vmatmul.mubr.bf16.gmra.mxu0 %v5806
  %v5863 = vpop.f32.mrf.mxu0
  %v5864 = vadd.f32 0.0, %v5863
  %v5865 = vpop.f32.mrf.mxu0
  %v5866 = vpop.f32.mrf.mxu0
  %v5867 = vadd.f32 0.0, %v5866
  %v5868 = vpop.f32.mrf.mxu0
  %5869 = vmatprep.mubr.bf16.mxu0 0
  %5870 = vmatmul.mubr.bf16.gmra.mxu0 %v5809
  %v5871 = vpop.f32.mrf.mxu0
  %v5872 = vadd.f32 0.0, %v5871
  %v5873 = vpop.f32.mrf.mxu0
  %v5874 = vpop.f32.mrf.mxu0
  %v5875 = vadd.f32 0.0, %v5874
  %v5876 = vpop.f32.mrf.mxu0
  %5877 = vmatprep.mubr.bf16.mxu0 0
  %5878 = vmatmul.mubr.bf16.gmra.mxu0 %v5812
  %v5879 = vpop.f32.mrf.mxu0
  %v5880 = vadd.f32 0.0, %v5879
  %v5881 = vpop.f32.mrf.mxu0
  %v5882 = vpop.f32.mrf.mxu0
  %v5883 = vadd.f32 0.0, %v5882
  %v5884 = vpop.f32.mrf.mxu0
  %5885 = vmatprep.mubr.bf16.mxu0 0
  %5886 = vmatmul.mubr.bf16.gmra.mxu0 %v5815
  %v5887 = vpop.f32.mrf.mxu0
  %v5888 = vadd.f32 0.0, %v5887
  %v5889 = vpop.f32.mrf.mxu0
  %v5890 = vpop.f32.mrf.mxu0
  %v5891 = vadd.f32 0.0, %v5890
  %v5892 = vpop.f32.mrf.mxu0
  %5893 = vmatprep.mubr.bf16.mxu0 0
  %5894 = vmatmul.mubr.bf16.gmra.mxu0 %v5818
  %v5895 = vpop.f32.mrf.mxu0
  %v5896 = vadd.f32 0.0, %v5895
  %v5897 = vpop.f32.mrf.mxu0
  %v5898 = vpop.f32.mrf.mxu0
  %v5899 = vadd.f32 0.0, %v5898
  %v5900 = vpop.f32.mrf.mxu0
  %5901 = vmatprep.mubr.bf16.mxu0 0
  %5902 = vmatmul.mubr.bf16.gmra.mxu0 %v5821
  %v5903 = vpop.f32.mrf.mxu0
  %v5904 = vadd.f32 0.0, %v5903
  %v5905 = vpop.f32.mrf.mxu0
  %v5906 = vpop.f32.mrf.mxu0
  %v5907 = vadd.f32 0.0, %v5906
  %v5908 = vpop.f32.mrf.mxu0
  %5909 = vmatprep.mubr.bf16.mxu0 0
  %5910 = vmatmul.mubr.bf16.gmra.mxu0 %v5824
  %v5911 = vpop.f32.mrf.mxu0
  %v5912 = vadd.f32 0.0, %v5911
  %v5913 = vpop.f32.mrf.mxu0
  %v5914 = vpop.f32.mrf.mxu0
  %v5915 = vadd.f32 0.0, %v5914
  %v5916 = vpop.f32.mrf.mxu0
  %5917 = vmatprep.mubr.bf16.mxu0 0
  %5918 = vmatmul.mubr.bf16.gmra.mxu0 %v5827
  %v5919 = vpop.f32.mrf.mxu0
  %v5920 = vadd.f32 0.0, %v5919
  %v5921 = vpop.f32.mrf.mxu0
  %v5922 = vpop.f32.mrf.mxu0
  %v5923 = vadd.f32 0.0, %v5922
  %v5924 = vpop.f32.mrf.mxu0
  %5925 = vdwg.mxu0
  %v5926 = vadd.f32 %v5685, %v5864
  %v5927 = vadd.f32 %v5686, %v5867
  %v5928 = vadd.f32 %v5687, %v5872
  %v5929 = vadd.f32 %v5688, %v5875
  %v5930 = vadd.f32 %v5689, %v5880
  %v5931 = vadd.f32 %v5690, %v5883
  %v5932 = vadd.f32 %v5691, %v5888
  %v5933 = vadd.f32 %v5692, %v5891
  %v5934 = vadd.f32 %v5693, %v5896
  %v5935 = vadd.f32 %v5694, %v5899
  %v5936 = vadd.f32 %v5695, %v5904
  %v5937 = vadd.f32 %v5696, %v5907
  %v5938 = vadd.f32 %v5697, %v5912
  %v5939 = vadd.f32 %v5698, %v5915
  %v5940 = vadd.f32 %v5699, %v5920
  %v5941 = vadd.f32 %v5700, %v5923
  %v5942 = vld [vmem:[#allocation2 + $0x11] sm:$0xff]
  %v5943 = vld [vmem:[#allocation2 + $0x19] sm:$0xff]
  %v5944 = vld [vmem:[#allocation2 + $0x21] sm:$0xff]
  %v5945 = vld [vmem:[#allocation2 + $0x29] sm:$0xff]
  %v5946 = vld [vmem:[#allocation2 + $0x31] sm:$0xff]
  %v5947 = vld [vmem:[#allocation2 + $0x39] sm:$0xff]
  %v5948 = vld [vmem:[#allocation2 + $0x41] sm:$0xff]
  %v5949 = vld [vmem:[#allocation2 + $0x49] sm:$0xff]
  %v5950 = vld [vmem:[#allocation2 + $0x51] sm:$0xff]
  %v5951 = vld [vmem:[#allocation2 + $0x59] sm:$0xff]
  %v5952 = vld [vmem:[#allocation2 + $0x61] sm:$0xff]
  %v5953 = vld [vmem:[#allocation2 + $0x69] sm:$0xff]
  %v5954 = vld [vmem:[#allocation2 + $0x71] sm:$0xff]
  %v5955 = vld [vmem:[#allocation2 + $0x79] sm:$0xff]
  %v5956 = vld [vmem:[#allocation2 + $0x81] sm:$0xff]
  %v5957 = vld [vmem:[#allocation2 + $0x89] sm:$0xff]
  %v5958 = vld [vmem:[%s1519] sm:$0xff]
  %v5959 = vld [vmem:[%s1519 + $0x8] sm:$0xff]
  %v5960 = vld [vmem:[%s1519 + $0x10] sm:$0xff]
  %v5961 = vld [vmem:[%s1519 + $0x18] sm:$0xff]
  %v5962 = vld [vmem:[%s1519 + $0x20] sm:$0xff]
  %v5963 = vld [vmem:[%s1519 + $0x28] sm:$0xff]
  %v5964 = vld [vmem:[%s1519 + $0x30] sm:$0xff]
  %v5965 = vld [vmem:[%s1519 + $0x38] sm:$0xff]
  %v5966 = vld [vmem:[%s1519 + $0x40] sm:$0xff]
  %v5967 = vld [vmem:[%s1519 + $0x48] sm:$0xff]
  %v5968 = vld [vmem:[%s1519 + $0x50] sm:$0xff]
  %v5969 = vld [vmem:[%s1519 + $0x58] sm:$0xff]
  %v5970 = vld [vmem:[%s1519 + $0x60] sm:$0xff]
  %v5971 = vld [vmem:[%s1519 + $0x68] sm:$0xff]
  %v5972 = vld [vmem:[%s1519 + $0x70] sm:$0xff]
  %v5973 = vld [vmem:[%s1519 + $0x78] sm:$0xff]
  %vm5974 = vcmp.gt.f32.partialorder %v5958, 0.0
  %vm5975 = vcmp.gt.f32.partialorder %v5959, 0.0
  %vm5976 = vcmp.gt.f32.partialorder %v5960, 0.0
  %vm5977 = vcmp.gt.f32.partialorder %v5961, 0.0
  %vm5978 = vcmp.gt.f32.partialorder %v5962, 0.0
  %vm5979 = vcmp.gt.f32.partialorder %v5963, 0.0
  %vm5980 = vcmp.gt.f32.partialorder %v5964, 0.0
  %vm5981 = vcmp.gt.f32.partialorder %v5965, 0.0
  %vm5982 = vcmp.gt.f32.partialorder %v5966, 0.0
  %vm5983 = vcmp.gt.f32.partialorder %v5967, 0.0
  %vm5984 = vcmp.gt.f32.partialorder %v5968, 0.0
  %vm5985 = vcmp.gt.f32.partialorder %v5969, 0.0
  %vm5986 = vcmp.gt.f32.partialorder %v5970, 0.0
  %vm5987 = vcmp.gt.f32.partialorder %v5971, 0.0
  %vm5988 = vcmp.gt.f32.partialorder %v5972, 0.0
  %vm5989 = vcmp.gt.f32.partialorder %v5973, 0.0
  %v5990 = vsel %vm5974, %v5942, 0.0
  %v5991 = vsel %vm5975, %v5943, 0.0
  %v5992 = vsel %vm5976, %v5944, 0.0
  %v5993 = vsel %vm5977, %v5945, 0.0
  %v5994 = vsel %vm5978, %v5946, 0.0
  %v5995 = vsel %vm5979, %v5947, 0.0
  %v5996 = vsel %vm5980, %v5948, 0.0
  %v5997 = vsel %vm5981, %v5949, 0.0
  %v5998 = vsel %vm5982, %v5950, 0.0
  %v5999 = vsel %vm5983, %v5951, 0.0
  %v6000 = vsel %vm5984, %v5952, 0.0
  %v6001 = vsel %vm5985, %v5953, 0.0
  %v6002 = vsel %vm5986, %v5954, 0.0
  %v6003 = vsel %vm5987, %v5955, 0.0
  %v6004 = vsel %vm5988, %v5956, 0.0
  %v6005 = vsel %vm5989, %v5957, 0.0
  %v6006 = vpack.c.bf16 %v5991, %v5990
  %v6007 = vpack.c.bf16 %v5993, %v5992
  %v6008 = vpack.c.bf16 %v5995, %v5994
  %v6009 = vpack.c.bf16 %v5997, %v5996
  %v6010 = vpack.c.bf16 %v5999, %v5998
  %v6011 = vpack.c.bf16 %v6001, %v6000
  %v6012 = vpack.c.bf16 %v6003, %v6002
  %v6013 = vpack.c.bf16 %v6005, %v6004
  %v6014 = vld [vmem:[%s4840 + $0xa0] sm:$0xf]
  %v6015 = vld [vmem:[%s4840 + $0xa4] sm:$0xf]
  %v6016 = vld [vmem:[%s4840 + $0xa8] sm:$0xf]
  %v6017 = vld [vmem:[%s4840 + $0xac] sm:$0xf]
  %v6018 = vld [vmem:[%s4840 + $0xb0] sm:$0xf]
  %v6019 = vld [vmem:[%s4840 + $0xb4] sm:$0xf]
  %v6020 = vld [vmem:[%s4840 + $0xb8] sm:$0xf]
  %v6021 = vld [vmem:[%s4840 + $0xbc] sm:$0xf]
  %v6030 = vunpack.c.l.b16 %v6014
  %v6031 = vunpack.c.l.b16 %v6015
  %v6032 = vunpack.c.l.b16 %v6016
  %v6033 = vunpack.c.l.b16 %v6017
  %v6034 = vunpack.c.l.b16 %v6018
  %v6035 = vunpack.c.l.b16 %v6019
  %v6036 = vunpack.c.l.b16 %v6020
  %v6037 = vunpack.c.l.b16 %v6021
  %v6038 = vpack.c.b16 %v6031, %v6030
  %v6039 = vpack.c.b16 %v6033, %v6032
  %v6040 = vpack.c.b16 %v6035, %v6034
  %v6041 = vpack.c.b16 %v6037, %v6036
  %v6047 = vsel %vm31, %v6006, 0
  %v6050 = vsel %vm31, %v6007, 0
  %v6053 = vsel %vm31, %v6008, 0
  %v6056 = vsel %vm31, %v6009, 0
  %v6059 = vsel %vm31, %v6010, 0
  %v6062 = vsel %vm31, %v6011, 0
  %v6065 = vsel %vm31, %v6012, 0
  %v6068 = vsel %vm31, %v6013, 0
  %6070 = vmatprep.subr.bf16.mxu0 0
  %6071 = vmatpush1.bf16.msra.mxu0 0
  %6072 = vmatprep.subr.bf16.mxu0 0
  %6073 = vmatpush1.bf16.msra.mxu0 0
  %6074 = vmatprep.subr.bf16.mxu0 0
  %6075 = vmatpush1.bf16.msra.mxu0 0
  %6076 = vmatprep.subr.bf16.mxu0 0
  %6077 = vmatpush1.bf16.msra.mxu0 0
  %6078 = vmatprep.subr.bf16.mxu0 0
  %6079 = vmatpush1.bf16.msra.mxu0 %v6041
  %6080 = vmatprep.subr.bf16.mxu0 0
  %6081 = vmatpush1.bf16.msra.mxu0 %v6040
  %6082 = vmatprep.subr.bf16.mxu0 0
  %6083 = vmatpush1.bf16.msra.mxu0 %v6039
  %6084 = vmatprep.subr.bf16.mxu0 0
  %6085 = vmatpush1.bf16.msra.mxu0 %v6038
  %6086 = vmatprep.subr.bf16.mxu0 0
  %6087 = vmatpush2.bf16.msra.mxu0 0
  %6088 = vmatprep.subr.bf16.mxu0 0
  %6089 = vmatpush2.bf16.msra.mxu0 0
  %6090 = vmatprep.subr.bf16.mxu0 0
  %6091 = vmatpush2.bf16.msra.mxu0 0
  %6092 = vmatprep.subr.bf16.mxu0 0
  %6093 = vmatpush2.bf16.msra.mxu0 0
  %6094 = vmatprep.subr.bf16.mxu0 0
  %6095 = vmatpush2.bf16.msra.mxu0 0
  %6096 = vmatprep.subr.bf16.mxu0 0
  %6097 = vmatpush2.bf16.msra.mxu0 0
  %6098 = vmatprep.subr.bf16.mxu0 0
  %6099 = vmatpush2.bf16.msra.mxu0 0
  %6100 = vmatprep.subr.bf16.mxu0 0
  %6101 = vmatpush2.bf16.msra.mxu0 0
  %6102 = vmatprep.mubr.bf16.mxu0 0
  %6103 = vmatmul.mubr.bf16.gmra.mxu0 %v6047
  %v6104 = vpop.f32.mrf.mxu0
  %v6105 = vadd.f32 0.0, %v6104
  %v6106 = vpop.f32.mrf.mxu0
  %v6107 = vpop.f32.mrf.mxu0
  %v6108 = vadd.f32 0.0, %v6107
  %v6109 = vpop.f32.mrf.mxu0
  %6110 = vmatprep.mubr.bf16.mxu0 0
  %6111 = vmatmul.mubr.bf16.gmra.mxu0 %v6050
  %v6112 = vpop.f32.mrf.mxu0
  %v6113 = vadd.f32 0.0, %v6112
  %v6114 = vpop.f32.mrf.mxu0
  %v6115 = vpop.f32.mrf.mxu0
  %v6116 = vadd.f32 0.0, %v6115
  %v6117 = vpop.f32.mrf.mxu0
  %6118 = vmatprep.mubr.bf16.mxu0 0
  %6119 = vmatmul.mubr.bf16.gmra.mxu0 %v6053
  %v6120 = vpop.f32.mrf.mxu0
  %v6121 = vadd.f32 0.0, %v6120
  %v6122 = vpop.f32.mrf.mxu0
  %v6123 = vpop.f32.mrf.mxu0
  %v6124 = vadd.f32 0.0, %v6123
  %v6125 = vpop.f32.mrf.mxu0
  %6126 = vmatprep.mubr.bf16.mxu0 0
  %6127 = vmatmul.mubr.bf16.gmra.mxu0 %v6056
  %v6128 = vpop.f32.mrf.mxu0
  %v6129 = vadd.f32 0.0, %v6128
  %v6130 = vpop.f32.mrf.mxu0
  %v6131 = vpop.f32.mrf.mxu0
  %v6132 = vadd.f32 0.0, %v6131
  %v6133 = vpop.f32.mrf.mxu0
  %6134 = vmatprep.mubr.bf16.mxu0 0
  %6135 = vmatmul.mubr.bf16.gmra.mxu0 %v6059
  %v6136 = vpop.f32.mrf.mxu0
  %v6137 = vadd.f32 0.0, %v6136
  %v6138 = vpop.f32.mrf.mxu0
  %v6139 = vpop.f32.mrf.mxu0
  %v6140 = vadd.f32 0.0, %v6139
  %v6141 = vpop.f32.mrf.mxu0
  %6142 = vmatprep.mubr.bf16.mxu0 0
  %6143 = vmatmul.mubr.bf16.gmra.mxu0 %v6062
  %v6144 = vpop.f32.mrf.mxu0
  %v6145 = vadd.f32 0.0, %v6144
  %v6146 = vpop.f32.mrf.mxu0
  %v6147 = vpop.f32.mrf.mxu0
  %v6148 = vadd.f32 0.0, %v6147
  %v6149 = vpop.f32.mrf.mxu0
  %6150 = vmatprep.mubr.bf16.mxu0 0
  %6151 = vmatmul.mubr.bf16.gmra.mxu0 %v6065
  %v6152 = vpop.f32.mrf.mxu0
  %v6153 = vadd.f32 0.0, %v6152
  %v6154 = vpop.f32.mrf.mxu0
  %v6155 = vpop.f32.mrf.mxu0
  %v6156 = vadd.f32 0.0, %v6155
  %v6157 = vpop.f32.mrf.mxu0
  %6158 = vmatprep.mubr.bf16.mxu0 0
  %6159 = vmatmul.mubr.bf16.gmra.mxu0 %v6068
  %v6160 = vpop.f32.mrf.mxu0
  %v6161 = vadd.f32 0.0, %v6160
  %v6162 = vpop.f32.mrf.mxu0
  %v6163 = vpop.f32.mrf.mxu0
  %v6164 = vadd.f32 0.0, %v6163
  %v6165 = vpop.f32.mrf.mxu0
  %6166 = vdwg.mxu0
  %v6167 = vadd.f32 %v5926, %v6105
  %v6168 = vadd.f32 %v5927, %v6108
  %v6169 = vadd.f32 %v5928, %v6113
  %v6170 = vadd.f32 %v5929, %v6116
  %v6171 = vadd.f32 %v5930, %v6121
  %v6172 = vadd.f32 %v5931, %v6124
  %v6173 = vadd.f32 %v5932, %v6129
  %v6174 = vadd.f32 %v5933, %v6132
  %v6175 = vadd.f32 %v5934, %v6137
  %v6176 = vadd.f32 %v5935, %v6140
  %v6177 = vadd.f32 %v5936, %v6145
  %v6178 = vadd.f32 %v5937, %v6148
  %v6179 = vadd.f32 %v5938, %v6153
  %v6180 = vadd.f32 %v5939, %v6156
  %v6181 = vadd.f32 %v5940, %v6161
  %v6182 = vadd.f32 %v5941, %v6164
  %v6183 = vld [vmem:[#allocation2 + $0x18] sm:$0xff]
  %v6184 = vld [vmem:[#allocation2 + $0x20] sm:$0xff]
  %v6185 = vld [vmem:[#allocation2 + $0x28] sm:$0xff]
  %v6186 = vld [vmem:[#allocation2 + $0x30] sm:$0xff]
  %v6187 = vld [vmem:[#allocation2 + $0x38] sm:$0xff]
  %v6188 = vld [vmem:[#allocation2 + $0x40] sm:$0xff]
  %v6189 = vld [vmem:[#allocation2 + $0x48] sm:$0xff]
  %v6190 = vld [vmem:[#allocation2 + $0x50] sm:$0xff]
  %v6191 = vld [vmem:[#allocation2 + $0x58] sm:$0xff]
  %v6192 = vld [vmem:[#allocation2 + $0x60] sm:$0xff]
  %v6193 = vld [vmem:[#allocation2 + $0x68] sm:$0xff]
  %v6194 = vld [vmem:[#allocation2 + $0x70] sm:$0xff]
  %v6195 = vld [vmem:[#allocation2 + $0x78] sm:$0xff]
  %v6196 = vld [vmem:[#allocation2 + $0x80] sm:$0xff]
  %v6197 = vld [vmem:[#allocation2 + $0x88] sm:$0xff]
  %v6198 = vld [vmem:[#allocation2 + $0x90] sm:$0xff]
  %v6199 = vld [vmem:[%s1761] sm:$0xff]
  %v6200 = vld [vmem:[%s1761 + $0x8] sm:$0xff]
  %v6201 = vld [vmem:[%s1761 + $0x10] sm:$0xff]
  %v6202 = vld [vmem:[%s1761 + $0x18] sm:$0xff]
  %v6203 = vld [vmem:[%s1761 + $0x20] sm:$0xff]
  %v6204 = vld [vmem:[%s1761 + $0x28] sm:$0xff]
  %v6205 = vld [vmem:[%s1761 + $0x30] sm:$0xff]
  %v6206 = vld [vmem:[%s1761 + $0x38] sm:$0xff]
  %v6207 = vld [vmem:[%s1761 + $0x40] sm:$0xff]
  %v6208 = vld [vmem:[%s1761 + $0x48] sm:$0xff]
  %v6209 = vld [vmem:[%s1761 + $0x50] sm:$0xff]
  %v6210 = vld [vmem:[%s1761 + $0x58] sm:$0xff]
  %v6211 = vld [vmem:[%s1761 + $0x60] sm:$0xff]
  %v6212 = vld [vmem:[%s1761 + $0x68] sm:$0xff]
  %v6213 = vld [vmem:[%s1761 + $0x70] sm:$0xff]
  %v6214 = vld [vmem:[%s1761 + $0x78] sm:$0xff]
  %vm6215 = vcmp.gt.f32.partialorder %v6199, 0.0
  %vm6216 = vcmp.gt.f32.partialorder %v6200, 0.0
  %vm6217 = vcmp.gt.f32.partialorder %v6201, 0.0
  %vm6218 = vcmp.gt.f32.partialorder %v6202, 0.0
  %vm6219 = vcmp.gt.f32.partialorder %v6203, 0.0
  %vm6220 = vcmp.gt.f32.partialorder %v6204, 0.0
  %vm6221 = vcmp.gt.f32.partialorder %v6205, 0.0
  %vm6222 = vcmp.gt.f32.partialorder %v6206, 0.0
  %vm6223 = vcmp.gt.f32.partialorder %v6207, 0.0
  %vm6224 = vcmp.gt.f32.partialorder %v6208, 0.0
  %vm6225 = vcmp.gt.f32.partialorder %v6209, 0.0
  %vm6226 = vcmp.gt.f32.partialorder %v6210, 0.0
  %vm6227 = vcmp.gt.f32.partialorder %v6211, 0.0
  %vm6228 = vcmp.gt.f32.partialorder %v6212, 0.0
  %vm6229 = vcmp.gt.f32.partialorder %v6213, 0.0
  %vm6230 = vcmp.gt.f32.partialorder %v6214, 0.0
  %v6231 = vsel %vm6215, %v6183, 0.0
  %v6232 = vsel %vm6216, %v6184, 0.0
  %v6233 = vsel %vm6217, %v6185, 0.0
  %v6234 = vsel %vm6218, %v6186, 0.0
  %v6235 = vsel %vm6219, %v6187, 0.0
  %v6236 = vsel %vm6220, %v6188, 0.0
  %v6237 = vsel %vm6221, %v6189, 0.0
  %v6238 = vsel %vm6222, %v6190, 0.0
  %v6239 = vsel %vm6223, %v6191, 0.0
  %v6240 = vsel %vm6224, %v6192, 0.0
  %v6241 = vsel %vm6225, %v6193, 0.0
  %v6242 = vsel %vm6226, %v6194, 0.0
  %v6243 = vsel %vm6227, %v6195, 0.0
  %v6244 = vsel %vm6228, %v6196, 0.0
  %v6245 = vsel %vm6229, %v6197, 0.0
  %v6246 = vsel %vm6230, %v6198, 0.0
  %v6247 = vpack.c.bf16 %v6232, %v6231
  %v6248 = vpack.c.bf16 %v6234, %v6233
  %v6249 = vpack.c.bf16 %v6236, %v6235
  %v6250 = vpack.c.bf16 %v6238, %v6237
  %v6251 = vpack.c.bf16 %v6240, %v6239
  %v6252 = vpack.c.bf16 %v6242, %v6241
  %v6253 = vpack.c.bf16 %v6244, %v6243
  %v6254 = vpack.c.bf16 %v6246, %v6245
  %v6255 = vld [vmem:[%s4840 + $0xc0] sm:$0xf]
  %v6256 = vld [vmem:[%s4840 + $0xc4] sm:$0xf]
  %v6257 = vld [vmem:[%s4840 + $0xc8] sm:$0xf]
  %v6258 = vld [vmem:[%s4840 + $0xcc] sm:$0xf]
  %v6259 = vld [vmem:[%s4840 + $0xd0] sm:$0xf]
  %v6260 = vld [vmem:[%s4840 + $0xd4] sm:$0xf]
  %v6261 = vld [vmem:[%s4840 + $0xd8] sm:$0xf]
  %v6262 = vld [vmem:[%s4840 + $0xdc] sm:$0xf]
  %v6271 = vunpack.c.l.b16 %v6255
  %v6272 = vunpack.c.l.b16 %v6256
  %v6273 = vunpack.c.l.b16 %v6257
  %v6274 = vunpack.c.l.b16 %v6258
  %v6275 = vunpack.c.l.b16 %v6259
  %v6276 = vunpack.c.l.b16 %v6260
  %v6277 = vunpack.c.l.b16 %v6261
  %v6278 = vunpack.c.l.b16 %v6262
  %v6279 = vpack.c.b16 %v6272, %v6271
  %v6280 = vpack.c.b16 %v6274, %v6273
  %v6281 = vpack.c.b16 %v6276, %v6275
  %v6282 = vpack.c.b16 %v6278, %v6277
  %v6288 = vsel %vm31, %v6247, 0
  %v6291 = vsel %vm31, %v6248, 0
  %v6294 = vsel %vm31, %v6249, 0
  %v6297 = vsel %vm31, %v6250, 0
  %v6300 = vsel %vm31, %v6251, 0
  %v6303 = vsel %vm31, %v6252, 0
  %v6306 = vsel %vm31, %v6253, 0
  %v6309 = vsel %vm31, %v6254, 0
  %6311 = vmatprep.subr.bf16.mxu0 0
  %6312 = vmatpush1.bf16.msra.mxu0 0
  %6313 = vmatprep.subr.bf16.mxu0 0
  %6314 = vmatpush1.bf16.msra.mxu0 0
  %6315 = vmatprep.subr.bf16.mxu0 0
  %6316 = vmatpush1.bf16.msra.mxu0 0
  %6317 = vmatprep.subr.bf16.mxu0 0
  %6318 = vmatpush1.bf16.msra.mxu0 0
  %6319 = vmatprep.subr.bf16.mxu0 0
  %6320 = vmatpush1.bf16.msra.mxu0 %v6282
  %6321 = vmatprep.subr.bf16.mxu0 0
  %6322 = vmatpush1.bf16.msra.mxu0 %v6281
  %6323 = vmatprep.subr.bf16.mxu0 0
  %6324 = vmatpush1.bf16.msra.mxu0 %v6280
  %6325 = vmatprep.subr.bf16.mxu0 0
  %6326 = vmatpush1.bf16.msra.mxu0 %v6279
  %6327 = vmatprep.subr.bf16.mxu0 0
  %6328 = vmatpush2.bf16.msra.mxu0 0
  %6329 = vmatprep.subr.bf16.mxu0 0
  %6330 = vmatpush2.bf16.msra.mxu0 0
  %6331 = vmatprep.subr.bf16.mxu0 0
  %6332 = vmatpush2.bf16.msra.mxu0 0
  %6333 = vmatprep.subr.bf16.mxu0 0
  %6334 = vmatpush2.bf16.msra.mxu0 0
  %6335 = vmatprep.subr.bf16.mxu0 0
  %6336 = vmatpush2.bf16.msra.mxu0 0
  %6337 = vmatprep.subr.bf16.mxu0 0
  %6338 = vmatpush2.bf16.msra.mxu0 0
  %6339 = vmatprep.subr.bf16.mxu0 0
  %6340 = vmatpush2.bf16.msra.mxu0 0
  %6341 = vmatprep.subr.bf16.mxu0 0
  %6342 = vmatpush2.bf16.msra.mxu0 0
  %6343 = vmatprep.mubr.bf16.mxu0 0
  %6344 = vmatmul.mubr.bf16.gmra.mxu0 %v6288
  %v6345 = vpop.f32.mrf.mxu0
  %v6346 = vadd.f32 0.0, %v6345
  %v6347 = vpop.f32.mrf.mxu0
  %v6348 = vpop.f32.mrf.mxu0
  %v6349 = vadd.f32 0.0, %v6348
  %v6350 = vpop.f32.mrf.mxu0
  %6351 = vmatprep.mubr.bf16.mxu0 0
  %6352 = vmatmul.mubr.bf16.gmra.mxu0 %v6291
  %v6353 = vpop.f32.mrf.mxu0
  %v6354 = vadd.f32 0.0, %v6353
  %v6355 = vpop.f32.mrf.mxu0
  %v6356 = vpop.f32.mrf.mxu0
  %v6357 = vadd.f32 0.0, %v6356
  %v6358 = vpop.f32.mrf.mxu0
  %6359 = vmatprep.mubr.bf16.mxu0 0
  %6360 = vmatmul.mubr.bf16.gmra.mxu0 %v6294
  %v6361 = vpop.f32.mrf.mxu0
  %v6362 = vadd.f32 0.0, %v6361
  %v6363 = vpop.f32.mrf.mxu0
  %v6364 = vpop.f32.mrf.mxu0
  %v6365 = vadd.f32 0.0, %v6364
  %v6366 = vpop.f32.mrf.mxu0
  %6367 = vmatprep.mubr.bf16.mxu0 0
  %6368 = vmatmul.mubr.bf16.gmra.mxu0 %v6297
  %v6369 = vpop.f32.mrf.mxu0
  %v6370 = vadd.f32 0.0, %v6369
  %v6371 = vpop.f32.mrf.mxu0
  %v6372 = vpop.f32.mrf.mxu0
  %v6373 = vadd.f32 0.0, %v6372
  %v6374 = vpop.f32.mrf.mxu0
  %6375 = vmatprep.mubr.bf16.mxu0 0
  %6376 = vmatmul.mubr.bf16.gmra.mxu0 %v6300
  %v6377 = vpop.f32.mrf.mxu0
  %v6378 = vadd.f32 0.0, %v6377
  %v6379 = vpop.f32.mrf.mxu0
  %v6380 = vpop.f32.mrf.mxu0
  %v6381 = vadd.f32 0.0, %v6380
  %v6382 = vpop.f32.mrf.mxu0
  %6383 = vmatprep.mubr.bf16.mxu0 0
  %6384 = vmatmul.mubr.bf16.gmra.mxu0 %v6303
  %v6385 = vpop.f32.mrf.mxu0
  %v6386 = vadd.f32 0.0, %v6385
  %v6387 = vpop.f32.mrf.mxu0
  %v6388 = vpop.f32.mrf.mxu0
  %v6389 = vadd.f32 0.0, %v6388
  %v6390 = vpop.f32.mrf.mxu0
  %6391 = vmatprep.mubr.bf16.mxu0 0
  %6392 = vmatmul.mubr.bf16.gmra.mxu0 %v6306
  %v6393 = vpop.f32.mrf.mxu0
  %v6394 = vadd.f32 0.0, %v6393
  %v6395 = vpop.f32.mrf.mxu0
  %v6396 = vpop.f32.mrf.mxu0
  %v6397 = vadd.f32 0.0, %v6396
  %v6398 = vpop.f32.mrf.mxu0
  %6399 = vmatprep.mubr.bf16.mxu0 0
  %6400 = vmatmul.mubr.bf16.gmra.mxu0 %v6309
  %v6401 = vpop.f32.mrf.mxu0
  %v6402 = vadd.f32 0.0, %v6401
  %v6403 = vpop.f32.mrf.mxu0
  %v6404 = vpop.f32.mrf.mxu0
  %v6405 = vadd.f32 0.0, %v6404
  %v6406 = vpop.f32.mrf.mxu0
  %6407 = vdwg.mxu0
  %v6408 = vadd.f32 %v6167, %v6346
  %v6409 = vadd.f32 %v6168, %v6349
  %v6410 = vadd.f32 %v6169, %v6354
  %v6411 = vadd.f32 %v6170, %v6357
  %v6412 = vadd.f32 %v6171, %v6362
  %v6413 = vadd.f32 %v6172, %v6365
  %v6414 = vadd.f32 %v6173, %v6370
  %v6415 = vadd.f32 %v6174, %v6373
  %v6416 = vadd.f32 %v6175, %v6378
  %v6417 = vadd.f32 %v6176, %v6381
  %v6418 = vadd.f32 %v6177, %v6386
  %v6419 = vadd.f32 %v6178, %v6389
  %v6420 = vadd.f32 %v6179, %v6394
  %v6421 = vadd.f32 %v6180, %v6397
  %v6422 = vadd.f32 %v6181, %v6402
  %v6423 = vadd.f32 %v6182, %v6405
  %v6424 = vld [vmem:[#allocation2 + $0x19] sm:$0xff]
  %v6425 = vld [vmem:[#allocation2 + $0x21] sm:$0xff]
  %v6426 = vld [vmem:[#allocation2 + $0x29] sm:$0xff]
  %v6427 = vld [vmem:[#allocation2 + $0x31] sm:$0xff]
  %v6428 = vld [vmem:[#allocation2 + $0x39] sm:$0xff]
  %v6429 = vld [vmem:[#allocation2 + $0x41] sm:$0xff]
  %v6430 = vld [vmem:[#allocation2 + $0x49] sm:$0xff]
  %v6431 = vld [vmem:[#allocation2 + $0x51] sm:$0xff]
  %v6432 = vld [vmem:[#allocation2 + $0x59] sm:$0xff]
  %v6433 = vld [vmem:[#allocation2 + $0x61] sm:$0xff]
  %v6434 = vld [vmem:[#allocation2 + $0x69] sm:$0xff]
  %v6435 = vld [vmem:[#allocation2 + $0x71] sm:$0xff]
  %v6436 = vld [vmem:[#allocation2 + $0x79] sm:$0xff]
  %v6437 = vld [vmem:[#allocation2 + $0x81] sm:$0xff]
  %v6438 = vld [vmem:[#allocation2 + $0x89] sm:$0xff]
  %v6439 = vld [vmem:[#allocation2 + $0x91] sm:$0xff]
  %v6440 = vld [vmem:[%s2003] sm:$0xff]
  %v6441 = vld [vmem:[%s2003 + $0x8] sm:$0xff]
  %v6442 = vld [vmem:[%s2003 + $0x10] sm:$0xff]
  %v6443 = vld [vmem:[%s2003 + $0x18] sm:$0xff]
  %v6444 = vld [vmem:[%s2003 + $0x20] sm:$0xff]
  %v6445 = vld [vmem:[%s2003 + $0x28] sm:$0xff]
  %v6446 = vld [vmem:[%s2003 + $0x30] sm:$0xff]
  %v6447 = vld [vmem:[%s2003 + $0x38] sm:$0xff]
  %v6448 = vld [vmem:[%s2003 + $0x40] sm:$0xff]
  %v6449 = vld [vmem:[%s2003 + $0x48] sm:$0xff]
  %v6450 = vld [vmem:[%s2003 + $0x50] sm:$0xff]
  %v6451 = vld [vmem:[%s2003 + $0x58] sm:$0xff]
  %v6452 = vld [vmem:[%s2003 + $0x60] sm:$0xff]
  %v6453 = vld [vmem:[%s2003 + $0x68] sm:$0xff]
  %v6454 = vld [vmem:[%s2003 + $0x70] sm:$0xff]
  %v6455 = vld [vmem:[%s2003 + $0x78] sm:$0xff]
  %vm6456 = vcmp.gt.f32.partialorder %v6440, 0.0
  %vm6457 = vcmp.gt.f32.partialorder %v6441, 0.0
  %vm6458 = vcmp.gt.f32.partialorder %v6442, 0.0
  %vm6459 = vcmp.gt.f32.partialorder %v6443, 0.0
  %vm6460 = vcmp.gt.f32.partialorder %v6444, 0.0
  %vm6461 = vcmp.gt.f32.partialorder %v6445, 0.0
  %vm6462 = vcmp.gt.f32.partialorder %v6446, 0.0
  %vm6463 = vcmp.gt.f32.partialorder %v6447, 0.0
  %vm6464 = vcmp.gt.f32.partialorder %v6448, 0.0
  %vm6465 = vcmp.gt.f32.partialorder %v6449, 0.0
  %vm6466 = vcmp.gt.f32.partialorder %v6450, 0.0
  %vm6467 = vcmp.gt.f32.partialorder %v6451, 0.0
  %vm6468 = vcmp.gt.f32.partialorder %v6452, 0.0
  %vm6469 = vcmp.gt.f32.partialorder %v6453, 0.0
  %vm6470 = vcmp.gt.f32.partialorder %v6454, 0.0
  %vm6471 = vcmp.gt.f32.partialorder %v6455, 0.0
  %v6472 = vsel %vm6456, %v6424, 0.0
  %v6473 = vsel %vm6457, %v6425, 0.0
  %v6474 = vsel %vm6458, %v6426, 0.0
  %v6475 = vsel %vm6459, %v6427, 0.0
  %v6476 = vsel %vm6460, %v6428, 0.0
  %v6477 = vsel %vm6461, %v6429, 0.0
  %v6478 = vsel %vm6462, %v6430, 0.0
  %v6479 = vsel %vm6463, %v6431, 0.0
  %v6480 = vsel %vm6464, %v6432, 0.0
  %v6481 = vsel %vm6465, %v6433, 0.0
  %v6482 = vsel %vm6466, %v6434, 0.0
  %v6483 = vsel %vm6467, %v6435, 0.0
  %v6484 = vsel %vm6468, %v6436, 0.0
  %v6485 = vsel %vm6469, %v6437, 0.0
  %v6486 = vsel %vm6470, %v6438, 0.0
  %v6487 = vsel %vm6471, %v6439, 0.0
  %v6488 = vpack.c.bf16 %v6473, %v6472
  %v6489 = vpack.c.bf16 %v6475, %v6474
  %v6490 = vpack.c.bf16 %v6477, %v6476
  %v6491 = vpack.c.bf16 %v6479, %v6478
  %v6492 = vpack.c.bf16 %v6481, %v6480
  %v6493 = vpack.c.bf16 %v6483, %v6482
  %v6494 = vpack.c.bf16 %v6485, %v6484
  %v6495 = vpack.c.bf16 %v6487, %v6486
  %v6496 = vld [vmem:[%s4840 + $0xe0] sm:$0xf]
  %v6497 = vld [vmem:[%s4840 + $0xe4] sm:$0xf]
  %v6498 = vld [vmem:[%s4840 + $0xe8] sm:$0xf]
  %v6499 = vld [vmem:[%s4840 + $0xec] sm:$0xf]
  %v6500 = vld [vmem:[%s4840 + $0xf0] sm:$0xf]
  %v6501 = vld [vmem:[%s4840 + $0xf4] sm:$0xf]
  %v6502 = vld [vmem:[%s4840 + $0xf8] sm:$0xf]
  %v6503 = vld [vmem:[%s4840 + $0xfc] sm:$0xf]
  %v6512 = vunpack.c.l.b16 %v6496
  %v6513 = vunpack.c.l.b16 %v6497
  %v6514 = vunpack.c.l.b16 %v6498
  %v6515 = vunpack.c.l.b16 %v6499
  %v6516 = vunpack.c.l.b16 %v6500
  %v6517 = vunpack.c.l.b16 %v6501
  %v6518 = vunpack.c.l.b16 %v6502
  %v6519 = vunpack.c.l.b16 %v6503
  %v6520 = vpack.c.b16 %v6513, %v6512
  %v6521 = vpack.c.b16 %v6515, %v6514
  %v6522 = vpack.c.b16 %v6517, %v6516
  %v6523 = vpack.c.b16 %v6519, %v6518
  %v6529 = vsel %vm31, %v6488, 0
  %v6532 = vsel %vm31, %v6489, 0
  %v6535 = vsel %vm31, %v6490, 0
  %v6538 = vsel %vm31, %v6491, 0
  %v6541 = vsel %vm31, %v6492, 0
  %v6544 = vsel %vm31, %v6493, 0
  %v6547 = vsel %vm31, %v6494, 0
  %v6550 = vsel %vm31, %v6495, 0
  %6552 = vmatprep.subr.bf16.mxu0 0
  %6553 = vmatpush1.bf16.msra.mxu0 0
  %6554 = vmatprep.subr.bf16.mxu0 0
  %6555 = vmatpush1.bf16.msra.mxu0 0
  %6556 = vmatprep.subr.bf16.mxu0 0
  %6557 = vmatpush1.bf16.msra.mxu0 0
  %6558 = vmatprep.subr.bf16.mxu0 0
  %6559 = vmatpush1.bf16.msra.mxu0 0
  %6560 = vmatprep.subr.bf16.mxu0 0
  %6561 = vmatpush1.bf16.msra.mxu0 %v6523
  %6562 = vmatprep.subr.bf16.mxu0 0
  %6563 = vmatpush1.bf16.msra.mxu0 %v6522
  %6564 = vmatprep.subr.bf16.mxu0 0
  %6565 = vmatpush1.bf16.msra.mxu0 %v6521
  %6566 = vmatprep.subr.bf16.mxu0 0
  %6567 = vmatpush1.bf16.msra.mxu0 %v6520
  %6568 = vmatprep.subr.bf16.mxu0 0
  %6569 = vmatpush2.bf16.msra.mxu0 0
  %6570 = vmatprep.subr.bf16.mxu0 0
  %6571 = vmatpush2.bf16.msra.mxu0 0
  %6572 = vmatprep.subr.bf16.mxu0 0
  %6573 = vmatpush2.bf16.msra.mxu0 0
  %6574 = vmatprep.subr.bf16.mxu0 0
  %6575 = vmatpush2.bf16.msra.mxu0 0
  %6576 = vmatprep.subr.bf16.mxu0 0
  %6577 = vmatpush2.bf16.msra.mxu0 0
  %6578 = vmatprep.subr.bf16.mxu0 0
  %6579 = vmatpush2.bf16.msra.mxu0 0
  %6580 = vmatprep.subr.bf16.mxu0 0
  %6581 = vmatpush2.bf16.msra.mxu0 0
  %6582 = vmatprep.subr.bf16.mxu0 0
  %6583 = vmatpush2.bf16.msra.mxu0 0
  %6584 = vmatprep.mubr.bf16.mxu0 0
  %6585 = vmatmul.mubr.bf16.gmra.mxu0 %v6529
  %v6586 = vpop.f32.mrf.mxu0
  %v6587 = vadd.f32 0.0, %v6586
  %v6588 = vpop.f32.mrf.mxu0
  %v6589 = vpop.f32.mrf.mxu0
  %v6590 = vadd.f32 0.0, %v6589
  %v6591 = vpop.f32.mrf.mxu0
  %6592 = vmatprep.mubr.bf16.mxu0 0
  %6593 = vmatmul.mubr.bf16.gmra.mxu0 %v6532
  %v6594 = vpop.f32.mrf.mxu0
  %v6595 = vadd.f32 0.0, %v6594
  %v6596 = vpop.f32.mrf.mxu0
  %v6597 = vpop.f32.mrf.mxu0
  %v6598 = vadd.f32 0.0, %v6597
  %v6599 = vpop.f32.mrf.mxu0
  %6600 = vmatprep.mubr.bf16.mxu0 0
  %6601 = vmatmul.mubr.bf16.gmra.mxu0 %v6535
  %v6602 = vpop.f32.mrf.mxu0
  %v6603 = vadd.f32 0.0, %v6602
  %v6604 = vpop.f32.mrf.mxu0
  %v6605 = vpop.f32.mrf.mxu0
  %v6606 = vadd.f32 0.0, %v6605
  %v6607 = vpop.f32.mrf.mxu0
  %6608 = vmatprep.mubr.bf16.mxu0 0
  %6609 = vmatmul.mubr.bf16.gmra.mxu0 %v6538
  %v6610 = vpop.f32.mrf.mxu0
  %v6611 = vadd.f32 0.0, %v6610
  %v6612 = vpop.f32.mrf.mxu0
  %v6613 = vpop.f32.mrf.mxu0
  %v6614 = vadd.f32 0.0, %v6613
  %v6615 = vpop.f32.mrf.mxu0
  %6616 = vmatprep.mubr.bf16.mxu0 0
  %6617 = vmatmul.mubr.bf16.gmra.mxu0 %v6541
  %v6618 = vpop.f32.mrf.mxu0
  %v6619 = vadd.f32 0.0, %v6618
  %v6620 = vpop.f32.mrf.mxu0
  %v6621 = vpop.f32.mrf.mxu0
  %v6622 = vadd.f32 0.0, %v6621
  %v6623 = vpop.f32.mrf.mxu0
  %6624 = vmatprep.mubr.bf16.mxu0 0
  %6625 = vmatmul.mubr.bf16.gmra.mxu0 %v6544
  %v6626 = vpop.f32.mrf.mxu0
  %v6627 = vadd.f32 0.0, %v6626
  %v6628 = vpop.f32.mrf.mxu0
  %v6629 = vpop.f32.mrf.mxu0
  %v6630 = vadd.f32 0.0, %v6629
  %v6631 = vpop.f32.mrf.mxu0
  %6632 = vmatprep.mubr.bf16.mxu0 0
  %6633 = vmatmul.mubr.bf16.gmra.mxu0 %v6547
  %v6634 = vpop.f32.mrf.mxu0
  %v6635 = vadd.f32 0.0, %v6634
  %v6636 = vpop.f32.mrf.mxu0
  %v6637 = vpop.f32.mrf.mxu0
  %v6638 = vadd.f32 0.0, %v6637
  %v6639 = vpop.f32.mrf.mxu0
  %6640 = vmatprep.mubr.bf16.mxu0 0
  %6641 = vmatmul.mubr.bf16.gmra.mxu0 %v6550
  %v6642 = vpop.f32.mrf.mxu0
  %v6643 = vadd.f32 0.0, %v6642
  %v6644 = vpop.f32.mrf.mxu0
  %v6645 = vpop.f32.mrf.mxu0
  %v6646 = vadd.f32 0.0, %v6645
  %v6647 = vpop.f32.mrf.mxu0
  %6648 = vdwg.mxu0
  %v6649 = vadd.f32 %v6408, %v6587
  %v6650 = vadd.f32 %v6409, %v6590
  %v6651 = vadd.f32 %v6410, %v6595
  %v6652 = vadd.f32 %v6411, %v6598
  %v6653 = vadd.f32 %v6412, %v6603
  %v6654 = vadd.f32 %v6413, %v6606
  %v6655 = vadd.f32 %v6414, %v6611
  %v6656 = vadd.f32 %v6415, %v6614
  %v6657 = vadd.f32 %v6416, %v6619
  %v6658 = vadd.f32 %v6417, %v6622
  %v6659 = vadd.f32 %v6418, %v6627
  %v6660 = vadd.f32 %v6419, %v6630
  %v6661 = vadd.f32 %v6420, %v6635
  %v6662 = vadd.f32 %v6421, %v6638
  %v6663 = vadd.f32 %v6422, %v6643
  %v6664 = vadd.f32 %v6423, %v6646
  %v6665 = vld [vmem:[#allocation2 + $0x1a] sm:$0xff]
  %v6666 = vld [vmem:[#allocation2 + $0x22] sm:$0xff]
  %v6667 = vld [vmem:[#allocation2 + $0x2a] sm:$0xff]
  %v6668 = vld [vmem:[#allocation2 + $0x32] sm:$0xff]
  %v6669 = vld [vmem:[#allocation2 + $0x3a] sm:$0xff]
  %v6670 = vld [vmem:[#allocation2 + $0x42] sm:$0xff]
  %v6671 = vld [vmem:[#allocation2 + $0x4a] sm:$0xff]
  %v6672 = vld [vmem:[#allocation2 + $0x52] sm:$0xff]
  %v6673 = vld [vmem:[#allocation2 + $0x5a] sm:$0xff]
  %v6674 = vld [vmem:[#allocation2 + $0x62] sm:$0xff]
  %v6675 = vld [vmem:[#allocation2 + $0x6a] sm:$0xff]
  %v6676 = vld [vmem:[#allocation2 + $0x72] sm:$0xff]
  %v6677 = vld [vmem:[#allocation2 + $0x7a] sm:$0xff]
  %v6678 = vld [vmem:[#allocation2 + $0x82] sm:$0xff]
  %v6679 = vld [vmem:[#allocation2 + $0x8a] sm:$0xff]
  %v6680 = vld [vmem:[#allocation2 + $0x92] sm:$0xff]
  %v6681 = vld [vmem:[%s2245] sm:$0xff]
  %v6682 = vld [vmem:[%s2245 + $0x8] sm:$0xff]
  %v6683 = vld [vmem:[%s2245 + $0x10] sm:$0xff]
  %v6684 = vld [vmem:[%s2245 + $0x18] sm:$0xff]
  %v6685 = vld [vmem:[%s2245 + $0x20] sm:$0xff]
  %v6686 = vld [vmem:[%s2245 + $0x28] sm:$0xff]
  %v6687 = vld [vmem:[%s2245 + $0x30] sm:$0xff]
  %v6688 = vld [vmem:[%s2245 + $0x38] sm:$0xff]
  %v6689 = vld [vmem:[%s2245 + $0x40] sm:$0xff]
  %v6690 = vld [vmem:[%s2245 + $0x48] sm:$0xff]
  %v6691 = vld [vmem:[%s2245 + $0x50] sm:$0xff]
  %v6692 = vld [vmem:[%s2245 + $0x58] sm:$0xff]
  %v6693 = vld [vmem:[%s2245 + $0x60] sm:$0xff]
  %v6694 = vld [vmem:[%s2245 + $0x68] sm:$0xff]
  %v6695 = vld [vmem:[%s2245 + $0x70] sm:$0xff]
  %v6696 = vld [vmem:[%s2245 + $0x78] sm:$0xff]
  %vm6697 = vcmp.gt.f32.partialorder %v6681, 0.0
  %vm6698 = vcmp.gt.f32.partialorder %v6682, 0.0
  %vm6699 = vcmp.gt.f32.partialorder %v6683, 0.0
  %vm6700 = vcmp.gt.f32.partialorder %v6684, 0.0
  %vm6701 = vcmp.gt.f32.partialorder %v6685, 0.0
  %vm6702 = vcmp.gt.f32.partialorder %v6686, 0.0
  %vm6703 = vcmp.gt.f32.partialorder %v6687, 0.0
  %vm6704 = vcmp.gt.f32.partialorder %v6688, 0.0
  %vm6705 = vcmp.gt.f32.partialorder %v6689, 0.0
  %vm6706 = vcmp.gt.f32.partialorder %v6690, 0.0
  %vm6707 = vcmp.gt.f32.partialorder %v6691, 0.0
  %vm6708 = vcmp.gt.f32.partialorder %v6692, 0.0
  %vm6709 = vcmp.gt.f32.partialorder %v6693, 0.0
  %vm6710 = vcmp.gt.f32.partialorder %v6694, 0.0
  %vm6711 = vcmp.gt.f32.partialorder %v6695, 0.0
  %vm6712 = vcmp.gt.f32.partialorder %v6696, 0.0
  %v6713 = vsel %vm6697, %v6665, 0.0
  %v6714 = vsel %vm6698, %v6666, 0.0
  %v6715 = vsel %vm6699, %v6667, 0.0
  %v6716 = vsel %vm6700, %v6668, 0.0
  %v6717 = vsel %vm6701, %v6669, 0.0
  %v6718 = vsel %vm6702, %v6670, 0.0
  %v6719 = vsel %vm6703, %v6671, 0.0
  %v6720 = vsel %vm6704, %v6672, 0.0
  %v6721 = vsel %vm6705, %v6673, 0.0
  %v6722 = vsel %vm6706, %v6674, 0.0
  %v6723 = vsel %vm6707, %v6675, 0.0
  %v6724 = vsel %vm6708, %v6676, 0.0
  %v6725 = vsel %vm6709, %v6677, 0.0
  %v6726 = vsel %vm6710, %v6678, 0.0
  %v6727 = vsel %vm6711, %v6679, 0.0
  %v6728 = vsel %vm6712, %v6680, 0.0
  %v6729 = vpack.c.bf16 %v6714, %v6713
  %v6730 = vpack.c.bf16 %v6716, %v6715
  %v6731 = vpack.c.bf16 %v6718, %v6717
  %v6732 = vpack.c.bf16 %v6720, %v6719
  %v6733 = vpack.c.bf16 %v6722, %v6721
  %v6734 = vpack.c.bf16 %v6724, %v6723
  %v6735 = vpack.c.bf16 %v6726, %v6725
  %v6736 = vpack.c.bf16 %v6728, %v6727
  %v6737 = vld [vmem:[%s4840 + $0x100] sm:$0xf]
  %v6738 = vld [vmem:[%s4840 + $0x104] sm:$0xf]
  %v6739 = vld [vmem:[%s4840 + $0x108] sm:$0xf]
  %v6740 = vld [vmem:[%s4840 + $0x10c] sm:$0xf]
  %v6741 = vld [vmem:[%s4840 + $0x110] sm:$0xf]
  %v6742 = vld [vmem:[%s4840 + $0x114] sm:$0xf]
  %v6743 = vld [vmem:[%s4840 + $0x118] sm:$0xf]
  %v6744 = vld [vmem:[%s4840 + $0x11c] sm:$0xf]
  %v6753 = vunpack.c.l.b16 %v6737
  %v6754 = vunpack.c.l.b16 %v6738
  %v6755 = vunpack.c.l.b16 %v6739
  %v6756 = vunpack.c.l.b16 %v6740
  %v6757 = vunpack.c.l.b16 %v6741
  %v6758 = vunpack.c.l.b16 %v6742
  %v6759 = vunpack.c.l.b16 %v6743
  %v6760 = vunpack.c.l.b16 %v6744
  %v6761 = vpack.c.b16 %v6754, %v6753
  %v6762 = vpack.c.b16 %v6756, %v6755
  %v6763 = vpack.c.b16 %v6758, %v6757
  %v6764 = vpack.c.b16 %v6760, %v6759
  %v6770 = vsel %vm31, %v6729, 0
  %v6773 = vsel %vm31, %v6730, 0
  %v6776 = vsel %vm31, %v6731, 0
  %v6779 = vsel %vm31, %v6732, 0
  %v6782 = vsel %vm31, %v6733, 0
  %v6785 = vsel %vm31, %v6734, 0
  %v6788 = vsel %vm31, %v6735, 0
  %v6791 = vsel %vm31, %v6736, 0
  %6793 = vmatprep.subr.bf16.mxu0 0
  %6794 = vmatpush1.bf16.msra.mxu0 0
  %6795 = vmatprep.subr.bf16.mxu0 0
  %6796 = vmatpush1.bf16.msra.mxu0 0
  %6797 = vmatprep.subr.bf16.mxu0 0
  %6798 = vmatpush1.bf16.msra.mxu0 0
  %6799 = vmatprep.subr.bf16.mxu0 0
  %6800 = vmatpush1.bf16.msra.mxu0 0
  %6801 = vmatprep.subr.bf16.mxu0 0
  %6802 = vmatpush1.bf16.msra.mxu0 %v6764
  %6803 = vmatprep.subr.bf16.mxu0 0
  %6804 = vmatpush1.bf16.msra.mxu0 %v6763
  %6805 = vmatprep.subr.bf16.mxu0 0
  %6806 = vmatpush1.bf16.msra.mxu0 %v6762
  %6807 = vmatprep.subr.bf16.mxu0 0
  %6808 = vmatpush1.bf16.msra.mxu0 %v6761
  %6809 = vmatprep.subr.bf16.mxu0 0
  %6810 = vmatpush2.bf16.msra.mxu0 0
  %6811 = vmatprep.subr.bf16.mxu0 0
  %6812 = vmatpush2.bf16.msra.mxu0 0
  %6813 = vmatprep.subr.bf16.mxu0 0
  %6814 = vmatpush2.bf16.msra.mxu0 0
  %6815 = vmatprep.subr.bf16.mxu0 0
  %6816 = vmatpush2.bf16.msra.mxu0 0
  %6817 = vmatprep.subr.bf16.mxu0 0
  %6818 = vmatpush2.bf16.msra.mxu0 0
  %6819 = vmatprep.subr.bf16.mxu0 0
  %6820 = vmatpush2.bf16.msra.mxu0 0
  %6821 = vmatprep.subr.bf16.mxu0 0
  %6822 = vmatpush2.bf16.msra.mxu0 0
  %6823 = vmatprep.subr.bf16.mxu0 0
  %6824 = vmatpush2.bf16.msra.mxu0 0
  %6825 = vmatprep.mubr.bf16.mxu0 0
  %6826 = vmatmul.mubr.bf16.gmra.mxu0 %v6770
  %v6827 = vpop.f32.mrf.mxu0
  %v6828 = vadd.f32 0.0, %v6827
  %v6829 = vpop.f32.mrf.mxu0
  %v6830 = vpop.f32.mrf.mxu0
  %v6831 = vadd.f32 0.0, %v6830
  %v6832 = vpop.f32.mrf.mxu0
  %6833 = vmatprep.mubr.bf16.mxu0 0
  %6834 = vmatmul.mubr.bf16.gmra.mxu0 %v6773
  %v6835 = vpop.f32.mrf.mxu0
  %v6836 = vadd.f32 0.0, %v6835
  %v6837 = vpop.f32.mrf.mxu0
  %v6838 = vpop.f32.mrf.mxu0
  %v6839 = vadd.f32 0.0, %v6838
  %v6840 = vpop.f32.mrf.mxu0
  %6841 = vmatprep.mubr.bf16.mxu0 0
  %6842 = vmatmul.mubr.bf16.gmra.mxu0 %v6776
  %v6843 = vpop.f32.mrf.mxu0
  %v6844 = vadd.f32 0.0, %v6843
  %v6845 = vpop.f32.mrf.mxu0
  %v6846 = vpop.f32.mrf.mxu0
  %v6847 = vadd.f32 0.0, %v6846
  %v6848 = vpop.f32.mrf.mxu0
  %6849 = vmatprep.mubr.bf16.mxu0 0
  %6850 = vmatmul.mubr.bf16.gmra.mxu0 %v6779
  %v6851 = vpop.f32.mrf.mxu0
  %v6852 = vadd.f32 0.0, %v6851
  %v6853 = vpop.f32.mrf.mxu0
  %v6854 = vpop.f32.mrf.mxu0
  %v6855 = vadd.f32 0.0, %v6854
  %v6856 = vpop.f32.mrf.mxu0
  %6857 = vmatprep.mubr.bf16.mxu0 0
  %6858 = vmatmul.mubr.bf16.gmra.mxu0 %v6782
  %v6859 = vpop.f32.mrf.mxu0
  %v6860 = vadd.f32 0.0, %v6859
  %v6861 = vpop.f32.mrf.mxu0
  %v6862 = vpop.f32.mrf.mxu0
  %v6863 = vadd.f32 0.0, %v6862
  %v6864 = vpop.f32.mrf.mxu0
  %6865 = vmatprep.mubr.bf16.mxu0 0
  %6866 = vmatmul.mubr.bf16.gmra.mxu0 %v6785
  %v6867 = vpop.f32.mrf.mxu0
  %v6868 = vadd.f32 0.0, %v6867
  %v6869 = vpop.f32.mrf.mxu0
  %v6870 = vpop.f32.mrf.mxu0
  %v6871 = vadd.f32 0.0, %v6870
  %v6872 = vpop.f32.mrf.mxu0
  %6873 = vmatprep.mubr.bf16.mxu0 0
  %6874 = vmatmul.mubr.bf16.gmra.mxu0 %v6788
  %v6875 = vpop.f32.mrf.mxu0
  %v6876 = vadd.f32 0.0, %v6875
  %v6877 = vpop.f32.mrf.mxu0
  %v6878 = vpop.f32.mrf.mxu0
  %v6879 = vadd.f32 0.0, %v6878
  %v6880 = vpop.f32.mrf.mxu0
  %6881 = vmatprep.mubr.bf16.mxu0 0
  %6882 = vmatmul.mubr.bf16.gmra.mxu0 %v6791
  %v6883 = vpop.f32.mrf.mxu0
  %v6884 = vadd.f32 0.0, %v6883
  %v6885 = vpop.f32.mrf.mxu0
  %v6886 = vpop.f32.mrf.mxu0
  %v6887 = vadd.f32 0.0, %v6886
  %v6888 = vpop.f32.mrf.mxu0
  %6889 = vdwg.mxu0
  %v6890 = vadd.f32 %v6649, %v6828
  %v6891 = vadd.f32 %v6650, %v6831
  %v6892 = vadd.f32 %v6651, %v6836
  %v6893 = vadd.f32 %v6652, %v6839
  %v6894 = vadd.f32 %v6653, %v6844
  %v6895 = vadd.f32 %v6654, %v6847
  %v6896 = vadd.f32 %v6655, %v6852
  %v6897 = vadd.f32 %v6656, %v6855
  %v6898 = vadd.f32 %v6657, %v6860
  %v6899 = vadd.f32 %v6658, %v6863
  %v6900 = vadd.f32 %v6659, %v6868
  %v6901 = vadd.f32 %v6660, %v6871
  %v6902 = vadd.f32 %v6661, %v6876
  %v6903 = vadd.f32 %v6662, %v6879
  %v6904 = vadd.f32 %v6663, %v6884
  %v6905 = vadd.f32 %v6664, %v6887
  %s6906 = scalar_lea.vmem %s5, 2
  %v6907 = vld [vmem:[%s6906] sm:$0x1]
  %v6909 = vlaneseq
  %v6910 = vshrl.u32 %v6909, 7
  %v6911 = vsub.s32 0, %v6910
  %v6912 = vrot.slane %v6907, %v6911
  %v6914 = vadd.f32 %v6890, %v6912
  %v6915 = vadd.f32 %v6891, %v6912
  %v6916 = vadd.f32 %v6892, %v6912
  %v6917 = vadd.f32 %v6893, %v6912
  %v6918 = vadd.f32 %v6894, %v6912
  %v6919 = vadd.f32 %v6895, %v6912
  %v6920 = vadd.f32 %v6896, %v6912
  %v6921 = vadd.f32 %v6897, %v6912
  %v6922 = vadd.f32 %v6898, %v6912
  %v6923 = vadd.f32 %v6899, %v6912
  %v6924 = vadd.f32 %v6900, %v6912
  %v6925 = vadd.f32 %v6901, %v6912
  %v6926 = vadd.f32 %v6902, %v6912
  %v6927 = vadd.f32 %v6903, %v6912
  %v6928 = vadd.f32 %v6904, %v6912
  %v6929 = vadd.f32 %v6905, %v6912
  %v6930 = vmax.f32 %v6914, 0.0
  %v6931 = vmax.f32 %v6915, 0.0
  %v6932 = vmax.f32 %v6916, 0.0
  %v6933 = vmax.f32 %v6917, 0.0
  %v6934 = vmax.f32 %v6918, 0.0
  %v6935 = vmax.f32 %v6919, 0.0
  %v6936 = vmax.f32 %v6920, 0.0
  %v6937 = vmax.f32 %v6921, 0.0
  %v6938 = vmax.f32 %v6922, 0.0
  %v6939 = vmax.f32 %v6923, 0.0
  %v6940 = vmax.f32 %v6924, 0.0
  %v6941 = vmax.f32 %v6925, 0.0
  %v6942 = vmax.f32 %v6926, 0.0
  %v6943 = vmax.f32 %v6927, 0.0
  %v6944 = vmax.f32 %v6928, 0.0
  %v6945 = vmax.f32 %v6929, 0.0
  %v6946 = vsel %vm69, %v6930, 0.0
  %v6947 = vsel %vm70, %v6931, 0.0
  %v6948 = vsel %vm71, %v6932, 0.0
  %v6949 = vsel %vm72, %v6933, 0.0
  %v6950 = vsel %vm73, %v6934, 0.0
  %v6951 = vsel %vm74, %v6935, 0.0
  %v6952 = vsel %vm75, %v6936, 0.0
  %v6953 = vsel %vm76, %v6937, 0.0
  %v6954 = vsel %vm77, %v6938, 0.0
  %v6955 = vsel %vm78, %v6939, 0.0
  %v6956 = vsel %vm79, %v6940, 0.0
  %v6957 = vsel %vm80, %v6941, 0.0
  %v6958 = vsel %vm81, %v6942, 0.0
  %v6959 = vsel %vm82, %v6943, 0.0
  %v6960 = vsel %vm83, %v6944, 0.0
  %v6961 = vsel %vm84, %v6945, 0.0
  %6962 = vst.msk [vmem:[#allocation2 + $0x10] sm:$0xff] %vm31, %v6946
  %6963 = vst.msk [vmem:[#allocation2 + $0x18] sm:$0xff] %vm31, %v6947
  %6964 = vst.msk [vmem:[#allocation2 + $0x20] sm:$0xff] %vm31, %v6948
  %6965 = vst.msk [vmem:[#allocation2 + $0x28] sm:$0xff] %vm31, %v6949
  %6966 = vst.msk [vmem:[#allocation2 + $0x30] sm:$0xff] %vm31, %v6950
  %6967 = vst.msk [vmem:[#allocation2 + $0x38] sm:$0xff] %vm31, %v6951
  %6968 = vst.msk [vmem:[#allocation2 + $0x40] sm:$0xff] %vm31, %v6952
  %6969 = vst.msk [vmem:[#allocation2 + $0x48] sm:$0xff] %vm31, %v6953
  %6970 = vst.msk [vmem:[#allocation2 + $0x50] sm:$0xff] %vm31, %v6954
  %6971 = vst.msk [vmem:[#allocation2 + $0x58] sm:$0xff] %vm31, %v6955
  %6972 = vst.msk [vmem:[#allocation2 + $0x60] sm:$0xff] %vm31, %v6956
  %6973 = vst.msk [vmem:[#allocation2 + $0x68] sm:$0xff] %vm31, %v6957
  %6974 = vst.msk [vmem:[#allocation2 + $0x70] sm:$0xff] %vm31, %v6958
  %6975 = vst.msk [vmem:[#allocation2 + $0x78] sm:$0xff] %vm31, %v6959
  %6976 = vst.msk [vmem:[#allocation2 + $0x80] sm:$0xff] %vm31, %v6960
  %6977 = vst.msk [vmem:[#allocation2 + $0x88] sm:$0xff] %vm31, %v6961
  %v6978 = vld [vmem:[#allocation2 + $0x6] sm:$0xff]
  %v6979 = vld [vmem:[#allocation2 + $0xe] sm:$0xff]
  %v6980 = vld [vmem:[#allocation2 + $0x16] sm:$0xff]
  %v6981 = vld [vmem:[#allocation2 + $0x1e] sm:$0xff]
  %v6982 = vld [vmem:[#allocation2 + $0x26] sm:$0xff]
  %v6983 = vld [vmem:[#allocation2 + $0x2e] sm:$0xff]
  %v6984 = vld [vmem:[#allocation2 + $0x36] sm:$0xff]
  %v6985 = vld [vmem:[#allocation2 + $0x3e] sm:$0xff]
  %v6986 = vld [vmem:[#allocation2 + $0x46] sm:$0xff]
  %v6987 = vld [vmem:[#allocation2 + $0x4e] sm:$0xff]
  %v6988 = vld [vmem:[#allocation2 + $0x56] sm:$0xff]
  %v6989 = vld [vmem:[#allocation2 + $0x5e] sm:$0xff]
  %v6990 = vld [vmem:[#allocation2 + $0x66] sm:$0xff]
  %v6991 = vld [vmem:[#allocation2 + $0x6e] sm:$0xff]
  %v6992 = vld [vmem:[#allocation2 + $0x76] sm:$0xff]
  %v6993 = vld [vmem:[#allocation2 + $0x7e] sm:$0xff]
  %v6994 = vld [vmem:[%s1] sm:$0xff]
  %v6995 = vld [vmem:[%s1 + $0x8] sm:$0xff]
  %v6996 = vld [vmem:[%s1 + $0x10] sm:$0xff]
  %v6997 = vld [vmem:[%s1 + $0x18] sm:$0xff]
  %v6998 = vld [vmem:[%s1 + $0x20] sm:$0xff]
  %v6999 = vld [vmem:[%s1 + $0x28] sm:$0xff]
  %v7000 = vld [vmem:[%s1 + $0x30] sm:$0xff]
  %v7001 = vld [vmem:[%s1 + $0x38] sm:$0xff]
  %v7002 = vld [vmem:[%s1 + $0x40] sm:$0xff]
  %v7003 = vld [vmem:[%s1 + $0x48] sm:$0xff]
  %v7004 = vld [vmem:[%s1 + $0x50] sm:$0xff]
  %v7005 = vld [vmem:[%s1 + $0x58] sm:$0xff]
  %v7006 = vld [vmem:[%s1 + $0x60] sm:$0xff]
  %v7007 = vld [vmem:[%s1 + $0x68] sm:$0xff]
  %v7008 = vld [vmem:[%s1 + $0x70] sm:$0xff]
  %v7009 = vld [vmem:[%s1 + $0x78] sm:$0xff]
  %vm7010 = vcmp.gt.f32.partialorder %v6994, 0.0
  %vm7011 = vcmp.gt.f32.partialorder %v6995, 0.0
  %vm7012 = vcmp.gt.f32.partialorder %v6996, 0.0
  %vm7013 = vcmp.gt.f32.partialorder %v6997, 0.0
  %vm7014 = vcmp.gt.f32.partialorder %v6998, 0.0
  %vm7015 = vcmp.gt.f32.partialorder %v6999, 0.0
  %vm7016 = vcmp.gt.f32.partialorder %v7000, 0.0
  %vm7017 = vcmp.gt.f32.partialorder %v7001, 0.0
  %vm7018 = vcmp.gt.f32.partialorder %v7002, 0.0
  %vm7019 = vcmp.gt.f32.partialorder %v7003, 0.0
  %vm7020 = vcmp.gt.f32.partialorder %v7004, 0.0
  %vm7021 = vcmp.gt.f32.partialorder %v7005, 0.0
  %vm7022 = vcmp.gt.f32.partialorder %v7006, 0.0
  %vm7023 = vcmp.gt.f32.partialorder %v7007, 0.0
  %vm7024 = vcmp.gt.f32.partialorder %v7008, 0.0
  %vm7025 = vcmp.gt.f32.partialorder %v7009, 0.0
  %v7026 = vsel %vm7010, %v6978, 0.0
  %v7027 = vsel %vm7011, %v6979, 0.0
  %v7028 = vsel %vm7012, %v6980, 0.0
  %v7029 = vsel %vm7013, %v6981, 0.0
  %v7030 = vsel %vm7014, %v6982, 0.0
  %v7031 = vsel %vm7015, %v6983, 0.0
  %v7032 = vsel %vm7016, %v6984, 0.0
  %v7033 = vsel %vm7017, %v6985, 0.0
  %v7034 = vsel %vm7018, %v6986, 0.0
  %v7035 = vsel %vm7019, %v6987, 0.0
  %v7036 = vsel %vm7020, %v6988, 0.0
  %v7037 = vsel %vm7021, %v6989, 0.0
  %v7038 = vsel %vm7022, %v6990, 0.0
  %v7039 = vsel %vm7023, %v6991, 0.0
  %v7040 = vsel %vm7024, %v6992, 0.0
  %v7041 = vsel %vm7025, %v6993, 0.0
  %v7042 = vpack.c.bf16 %v7027, %v7026
  %v7043 = vpack.c.bf16 %v7029, %v7028
  %v7044 = vpack.c.bf16 %v7031, %v7030
  %v7045 = vpack.c.bf16 %v7033, %v7032
  %v7046 = vpack.c.bf16 %v7035, %v7034
  %v7047 = vpack.c.bf16 %v7037, %v7036
  %v7048 = vpack.c.bf16 %v7039, %v7038
  %v7049 = vpack.c.bf16 %v7041, %v7040
  %s7050 = scalar_lea.vmem %s4, 864
  %v7051 = vld [vmem:[%s7050] sm:$0xf]
  %v7052 = vld [vmem:[%s7050 + $0x4] sm:$0xf]
  %v7053 = vld [vmem:[%s7050 + $0x8] sm:$0xf]
  %v7054 = vld [vmem:[%s7050 + $0xc] sm:$0xf]
  %v7055 = vld [vmem:[%s7050 + $0x10] sm:$0xf]
  %v7056 = vld [vmem:[%s7050 + $0x14] sm:$0xf]
  %v7057 = vld [vmem:[%s7050 + $0x18] sm:$0xf]
  %v7058 = vld [vmem:[%s7050 + $0x1c] sm:$0xf]
  %v7059 = vld [vmem:[#allocation2 + $0x7] sm:$0xff]
  %v7060 = vld [vmem:[#allocation2 + $0xf] sm:$0xff]
  %v7061 = vld [vmem:[#allocation2 + $0x17] sm:$0xff]
  %v7062 = vld [vmem:[#allocation2 + $0x1f] sm:$0xff]
  %v7063 = vld [vmem:[#allocation2 + $0x27] sm:$0xff]
  %v7064 = vld [vmem:[#allocation2 + $0x2f] sm:$0xff]
  %v7065 = vld [vmem:[#allocation2 + $0x37] sm:$0xff]
  %v7066 = vld [vmem:[#allocation2 + $0x3f] sm:$0xff]
  %v7067 = vld [vmem:[#allocation2 + $0x47] sm:$0xff]
  %v7068 = vld [vmem:[#allocation2 + $0x4f] sm:$0xff]
  %v7069 = vld [vmem:[#allocation2 + $0x57] sm:$0xff]
  %v7070 = vld [vmem:[#allocation2 + $0x5f] sm:$0xff]
  %v7071 = vld [vmem:[#allocation2 + $0x67] sm:$0xff]
  %v7072 = vld [vmem:[#allocation2 + $0x6f] sm:$0xff]
  %v7073 = vld [vmem:[#allocation2 + $0x77] sm:$0xff]
  %v7074 = vld [vmem:[#allocation2 + $0x7f] sm:$0xff]
  %v7075 = vld [vmem:[%s422] sm:$0xff]
  %v7076 = vld [vmem:[%s422 + $0x8] sm:$0xff]
  %v7077 = vld [vmem:[%s422 + $0x10] sm:$0xff]
  %v7078 = vld [vmem:[%s422 + $0x18] sm:$0xff]
  %v7079 = vld [vmem:[%s422 + $0x20] sm:$0xff]
  %v7080 = vld [vmem:[%s422 + $0x28] sm:$0xff]
  %v7081 = vld [vmem:[%s422 + $0x30] sm:$0xff]
  %v7082 = vld [vmem:[%s422 + $0x38] sm:$0xff]
  %v7083 = vld [vmem:[%s422 + $0x40] sm:$0xff]
  %v7084 = vld [vmem:[%s422 + $0x48] sm:$0xff]
  %v7085 = vld [vmem:[%s422 + $0x50] sm:$0xff]
  %v7086 = vld [vmem:[%s422 + $0x58] sm:$0xff]
  %v7087 = vld [vmem:[%s422 + $0x60] sm:$0xff]
  %v7088 = vld [vmem:[%s422 + $0x68] sm:$0xff]
  %v7089 = vld [vmem:[%s422 + $0x70] sm:$0xff]
  %v7090 = vld [vmem:[%s422 + $0x78] sm:$0xff]
  %vm7091 = vcmp.gt.f32.partialorder %v7075, 0.0
  %vm7092 = vcmp.gt.f32.partialorder %v7076, 0.0
  %vm7093 = vcmp.gt.f32.partialorder %v7077, 0.0
  %vm7094 = vcmp.gt.f32.partialorder %v7078, 0.0
  %vm7095 = vcmp.gt.f32.partialorder %v7079, 0.0
  %vm7096 = vcmp.gt.f32.partialorder %v7080, 0.0
  %vm7097 = vcmp.gt.f32.partialorder %v7081, 0.0
  %vm7098 = vcmp.gt.f32.partialorder %v7082, 0.0
  %vm7099 = vcmp.gt.f32.partialorder %v7083, 0.0
  %vm7100 = vcmp.gt.f32.partialorder %v7084, 0.0
  %vm7101 = vcmp.gt.f32.partialorder %v7085, 0.0
  %vm7102 = vcmp.gt.f32.partialorder %v7086, 0.0
  %vm7103 = vcmp.gt.f32.partialorder %v7087, 0.0
  %vm7104 = vcmp.gt.f32.partialorder %v7088, 0.0
  %vm7105 = vcmp.gt.f32.partialorder %v7089, 0.0
  %vm7106 = vcmp.gt.f32.partialorder %v7090, 0.0
  %v7107 = vsel %vm7091, %v7059, 0.0
  %v7108 = vsel %vm7092, %v7060, 0.0
  %v7109 = vsel %vm7093, %v7061, 0.0
  %v7110 = vsel %vm7094, %v7062, 0.0
  %v7111 = vsel %vm7095, %v7063, 0.0
  %v7112 = vsel %vm7096, %v7064, 0.0
  %v7113 = vsel %vm7097, %v7065, 0.0
  %v7114 = vsel %vm7098, %v7066, 0.0
  %v7115 = vsel %vm7099, %v7067, 0.0
  %v7116 = vsel %vm7100, %v7068, 0.0
  %v7117 = vsel %vm7101, %v7069, 0.0
  %v7118 = vsel %vm7102, %v7070, 0.0
  %v7119 = vsel %vm7103, %v7071, 0.0
  %v7120 = vsel %vm7104, %v7072, 0.0
  %v7121 = vsel %vm7105, %v7073, 0.0
  %v7122 = vsel %vm7106, %v7074, 0.0
  %v7123 = vpack.c.bf16 %v7108, %v7107
  %v7124 = vpack.c.bf16 %v7110, %v7109
  %v7125 = vpack.c.bf16 %v7112, %v7111
  %v7126 = vpack.c.bf16 %v7114, %v7113
  %v7127 = vpack.c.bf16 %v7116, %v7115
  %v7128 = vpack.c.bf16 %v7118, %v7117
  %v7129 = vpack.c.bf16 %v7120, %v7119
  %v7130 = vpack.c.bf16 %v7122, %v7121
  %v7131 = vld [vmem:[%s7050 + $0x20] sm:$0xf]
  %v7132 = vld [vmem:[%s7050 + $0x24] sm:$0xf]
  %v7133 = vld [vmem:[%s7050 + $0x28] sm:$0xf]
  %v7134 = vld [vmem:[%s7050 + $0x2c] sm:$0xf]
  %v7135 = vld [vmem:[%s7050 + $0x30] sm:$0xf]
  %v7136 = vld [vmem:[%s7050 + $0x34] sm:$0xf]
  %v7137 = vld [vmem:[%s7050 + $0x38] sm:$0xf]
  %v7138 = vld [vmem:[%s7050 + $0x3c] sm:$0xf]
  %v7147 = vunpack.c.l.b16 %v7131
  %v7148 = vunpack.c.l.b16 %v7132
  %v7149 = vunpack.c.l.b16 %v7133
  %v7150 = vunpack.c.l.b16 %v7134
  %v7151 = vunpack.c.l.b16 %v7135
  %v7152 = vunpack.c.l.b16 %v7136
  %v7153 = vunpack.c.l.b16 %v7137
  %v7154 = vunpack.c.l.b16 %v7138
  %v7155 = vpack.c.b16 %v7148, %v7147
  %v7156 = vpack.c.b16 %v7150, %v7149
  %v7157 = vpack.c.b16 %v7152, %v7151
  %v7158 = vpack.c.b16 %v7154, %v7153
  %v7164 = vsel %vm31, %v7123, 0
  %v7167 = vsel %vm31, %v7124, 0
  %v7170 = vsel %vm31, %v7125, 0
  %v7173 = vsel %vm31, %v7126, 0
  %v7176 = vsel %vm31, %v7127, 0
  %v7179 = vsel %vm31, %v7128, 0
  %v7182 = vsel %vm31, %v7129, 0
  %v7185 = vsel %vm31, %v7130, 0
  %7187 = vmatprep.subr.bf16.mxu0 0
  %7188 = vmatpush1.bf16.msra.mxu0 0
  %7189 = vmatprep.subr.bf16.mxu0 0
  %7190 = vmatpush1.bf16.msra.mxu0 0
  %7191 = vmatprep.subr.bf16.mxu0 0
  %7192 = vmatpush1.bf16.msra.mxu0 0
  %7193 = vmatprep.subr.bf16.mxu0 0
  %7194 = vmatpush1.bf16.msra.mxu0 0
  %7195 = vmatprep.subr.bf16.mxu0 0
  %7196 = vmatpush1.bf16.msra.mxu0 %v7158
  %7197 = vmatprep.subr.bf16.mxu0 0
  %7198 = vmatpush1.bf16.msra.mxu0 %v7157
  %7199 = vmatprep.subr.bf16.mxu0 0
  %7200 = vmatpush1.bf16.msra.mxu0 %v7156
  %7201 = vmatprep.subr.bf16.mxu0 0
  %7202 = vmatpush1.bf16.msra.mxu0 %v7155
  %7203 = vmatprep.subr.bf16.mxu0 0
  %7204 = vmatpush2.bf16.msra.mxu0 0
  %7205 = vmatprep.subr.bf16.mxu0 0
  %7206 = vmatpush2.bf16.msra.mxu0 0
  %7207 = vmatprep.subr.bf16.mxu0 0
  %7208 = vmatpush2.bf16.msra.mxu0 0
  %7209 = vmatprep.subr.bf16.mxu0 0
  %7210 = vmatpush2.bf16.msra.mxu0 0
  %7211 = vmatprep.subr.bf16.mxu0 0
  %7212 = vmatpush2.bf16.msra.mxu0 0
  %7213 = vmatprep.subr.bf16.mxu0 0
  %7214 = vmatpush2.bf16.msra.mxu0 0
  %7215 = vmatprep.subr.bf16.mxu0 0
  %7216 = vmatpush2.bf16.msra.mxu0 0
  %7217 = vmatprep.subr.bf16.mxu0 0
  %7218 = vmatpush2.bf16.msra.mxu0 0
  %7219 = vmatprep.mubr.bf16.mxu0 0
  %7220 = vmatmul.mubr.bf16.gmra.mxu0 %v7164
  %v7221 = vpop.f32.mrf.mxu0
  %v7222 = vadd.f32 0.0, %v7221
  %v7223 = vpop.f32.mrf.mxu0
  %v7224 = vpop.f32.mrf.mxu0
  %v7225 = vadd.f32 0.0, %v7224
  %v7226 = vpop.f32.mrf.mxu0
  %7227 = vmatprep.mubr.bf16.mxu0 0
  %7228 = vmatmul.mubr.bf16.gmra.mxu0 %v7167
  %v7229 = vpop.f32.mrf.mxu0
  %v7230 = vadd.f32 0.0, %v7229
  %v7231 = vpop.f32.mrf.mxu0
  %v7232 = vpop.f32.mrf.mxu0
  %v7233 = vadd.f32 0.0, %v7232
  %v7234 = vpop.f32.mrf.mxu0
  %7235 = vmatprep.mubr.bf16.mxu0 0
  %7236 = vmatmul.mubr.bf16.gmra.mxu0 %v7170
  %v7237 = vpop.f32.mrf.mxu0
  %v7238 = vadd.f32 0.0, %v7237
  %v7239 = vpop.f32.mrf.mxu0
  %v7240 = vpop.f32.mrf.mxu0
  %v7241 = vadd.f32 0.0, %v7240
  %v7242 = vpop.f32.mrf.mxu0
  %7243 = vmatprep.mubr.bf16.mxu0 0
  %7244 = vmatmul.mubr.bf16.gmra.mxu0 %v7173
  %v7245 = vpop.f32.mrf.mxu0
  %v7246 = vadd.f32 0.0, %v7245
  %v7247 = vpop.f32.mrf.mxu0
  %v7248 = vpop.f32.mrf.mxu0
  %v7249 = vadd.f32 0.0, %v7248
  %v7250 = vpop.f32.mrf.mxu0
  %7251 = vmatprep.mubr.bf16.mxu0 0
  %7252 = vmatmul.mubr.bf16.gmra.mxu0 %v7176
  %v7253 = vpop.f32.mrf.mxu0
  %v7254 = vadd.f32 0.0, %v7253
  %v7255 = vpop.f32.mrf.mxu0
  %v7256 = vpop.f32.mrf.mxu0
  %v7257 = vadd.f32 0.0, %v7256
  %v7258 = vpop.f32.mrf.mxu0
  %7259 = vmatprep.mubr.bf16.mxu0 0
  %7260 = vmatmul.mubr.bf16.gmra.mxu0 %v7179
  %v7261 = vpop.f32.mrf.mxu0
  %v7262 = vadd.f32 0.0, %v7261
  %v7263 = vpop.f32.mrf.mxu0
  %v7264 = vpop.f32.mrf.mxu0
  %v7265 = vadd.f32 0.0, %v7264
  %v7266 = vpop.f32.mrf.mxu0
  %7267 = vmatprep.mubr.bf16.mxu0 0
  %7268 = vmatmul.mubr.bf16.gmra.mxu0 %v7182
  %v7269 = vpop.f32.mrf.mxu0
  %v7270 = vadd.f32 0.0, %v7269
  %v7271 = vpop.f32.mrf.mxu0
  %v7272 = vpop.f32.mrf.mxu0
  %v7273 = vadd.f32 0.0, %v7272
  %v7274 = vpop.f32.mrf.mxu0
  %7275 = vmatprep.mubr.bf16.mxu0 0
  %7276 = vmatmul.mubr.bf16.gmra.mxu0 %v7185
  %v7277 = vpop.f32.mrf.mxu0
  %v7278 = vadd.f32 0.0, %v7277
  %v7279 = vpop.f32.mrf.mxu0
  %v7280 = vpop.f32.mrf.mxu0
  %v7281 = vadd.f32 0.0, %v7280
  %v7282 = vpop.f32.mrf.mxu0
  %7283 = vdwg.mxu0
  %v7292 = vunpack.c.l.b16 %v7051
  %v7293 = vunpack.c.l.b16 %v7052
  %v7294 = vunpack.c.l.b16 %v7053
  %v7295 = vunpack.c.l.b16 %v7054
  %v7296 = vunpack.c.l.b16 %v7055
  %v7297 = vunpack.c.l.b16 %v7056
  %v7298 = vunpack.c.l.b16 %v7057
  %v7299 = vunpack.c.l.b16 %v7058
  %v7300 = vpack.c.b16 %v7293, %v7292
  %v7301 = vpack.c.b16 %v7295, %v7294
  %v7302 = vpack.c.b16 %v7297, %v7296
  %v7303 = vpack.c.b16 %v7299, %v7298
  %v7309 = vsel %vm31, %v7042, 0
  %v7312 = vsel %vm31, %v7043, 0
  %v7315 = vsel %vm31, %v7044, 0
  %v7318 = vsel %vm31, %v7045, 0
  %v7321 = vsel %vm31, %v7046, 0
  %v7324 = vsel %vm31, %v7047, 0
  %v7327 = vsel %vm31, %v7048, 0
  %v7330 = vsel %vm31, %v7049, 0
  %7332 = vmatprep.subr.bf16.mxu0 0
  %7333 = vmatpush1.bf16.msra.mxu0 0
  %7334 = vmatprep.subr.bf16.mxu0 0
  %7335 = vmatpush1.bf16.msra.mxu0 0
  %7336 = vmatprep.subr.bf16.mxu0 0
  %7337 = vmatpush1.bf16.msra.mxu0 0
  %7338 = vmatprep.subr.bf16.mxu0 0
  %7339 = vmatpush1.bf16.msra.mxu0 0
  %7340 = vmatprep.subr.bf16.mxu0 0
  %7341 = vmatpush1.bf16.msra.mxu0 %v7303
  %7342 = vmatprep.subr.bf16.mxu0 0
  %7343 = vmatpush1.bf16.msra.mxu0 %v7302
  %7344 = vmatprep.subr.bf16.mxu0 0
  %7345 = vmatpush1.bf16.msra.mxu0 %v7301
  %7346 = vmatprep.subr.bf16.mxu0 0
  %7347 = vmatpush1.bf16.msra.mxu0 %v7300
  %7348 = vmatprep.subr.bf16.mxu0 0
  %7349 = vmatpush2.bf16.msra.mxu0 0
  %7350 = vmatprep.subr.bf16.mxu0 0
  %7351 = vmatpush2.bf16.msra.mxu0 0
  %7352 = vmatprep.subr.bf16.mxu0 0
  %7353 = vmatpush2.bf16.msra.mxu0 0
  %7354 = vmatprep.subr.bf16.mxu0 0
  %7355 = vmatpush2.bf16.msra.mxu0 0
  %7356 = vmatprep.subr.bf16.mxu0 0
  %7357 = vmatpush2.bf16.msra.mxu0 0
  %7358 = vmatprep.subr.bf16.mxu0 0
  %7359 = vmatpush2.bf16.msra.mxu0 0
  %7360 = vmatprep.subr.bf16.mxu0 0
  %7361 = vmatpush2.bf16.msra.mxu0 0
  %7362 = vmatprep.subr.bf16.mxu0 0
  %7363 = vmatpush2.bf16.msra.mxu0 0
  %7364 = vmatprep.mubr.bf16.mxu0 0
  %7365 = vmatmul.mubr.bf16.gmra.mxu0 %v7309
  %v7366 = vpop.f32.mrf.mxu0
  %v7367 = vadd.f32 %v7222, %v7366
  %v7368 = vpop.f32.mrf.mxu0
  %v7369 = vpop.f32.mrf.mxu0
  %v7370 = vadd.f32 %v7225, %v7369
  %v7371 = vpop.f32.mrf.mxu0
  %7372 = vmatprep.mubr.bf16.mxu0 0
  %7373 = vmatmul.mubr.bf16.gmra.mxu0 %v7312
  %v7374 = vpop.f32.mrf.mxu0
  %v7375 = vadd.f32 %v7230, %v7374
  %v7376 = vpop.f32.mrf.mxu0
  %v7377 = vpop.f32.mrf.mxu0
  %v7378 = vadd.f32 %v7233, %v7377
  %v7379 = vpop.f32.mrf.mxu0
  %7380 = vmatprep.mubr.bf16.mxu0 0
  %7381 = vmatmul.mubr.bf16.gmra.mxu0 %v7315
  %v7382 = vpop.f32.mrf.mxu0
  %v7383 = vadd.f32 %v7238, %v7382
  %v7384 = vpop.f32.mrf.mxu0
  %v7385 = vpop.f32.mrf.mxu0
  %v7386 = vadd.f32 %v7241, %v7385
  %v7387 = vpop.f32.mrf.mxu0
  %7388 = vmatprep.mubr.bf16.mxu0 0
  %7389 = vmatmul.mubr.bf16.gmra.mxu0 %v7318
  %v7390 = vpop.f32.mrf.mxu0
  %v7391 = vadd.f32 %v7246, %v7390
  %v7392 = vpop.f32.mrf.mxu0
  %v7393 = vpop.f32.mrf.mxu0
  %v7394 = vadd.f32 %v7249, %v7393
  %v7395 = vpop.f32.mrf.mxu0
  %7396 = vmatprep.mubr.bf16.mxu0 0
  %7397 = vmatmul.mubr.bf16.gmra.mxu0 %v7321
  %v7398 = vpop.f32.mrf.mxu0
  %v7399 = vadd.f32 %v7254, %v7398
  %v7400 = vpop.f32.mrf.mxu0
  %v7401 = vpop.f32.mrf.mxu0
  %v7402 = vadd.f32 %v7257, %v7401
  %v7403 = vpop.f32.mrf.mxu0
  %7404 = vmatprep.mubr.bf16.mxu0 0
  %7405 = vmatmul.mubr.bf16.gmra.mxu0 %v7324
  %v7406 = vpop.f32.mrf.mxu0
  %v7407 = vadd.f32 %v7262, %v7406
  %v7408 = vpop.f32.mrf.mxu0
  %v7409 = vpop.f32.mrf.mxu0
  %v7410 = vadd.f32 %v7265, %v7409
  %v7411 = vpop.f32.mrf.mxu0
  %7412 = vmatprep.mubr.bf16.mxu0 0
  %7413 = vmatmul.mubr.bf16.gmra.mxu0 %v7327
  %v7414 = vpop.f32.mrf.mxu0
  %v7415 = vadd.f32 %v7270, %v7414
  %v7416 = vpop.f32.mrf.mxu0
  %v7417 = vpop.f32.mrf.mxu0
  %v7418 = vadd.f32 %v7273, %v7417
  %v7419 = vpop.f32.mrf.mxu0
  %7420 = vmatprep.mubr.bf16.mxu0 0
  %7421 = vmatmul.mubr.bf16.gmra.mxu0 %v7330
  %v7422 = vpop.f32.mrf.mxu0
  %v7423 = vadd.f32 %v7278, %v7422
  %v7424 = vpop.f32.mrf.mxu0
  %v7425 = vpop.f32.mrf.mxu0
  %v7426 = vadd.f32 %v7281, %v7425
  %v7427 = vpop.f32.mrf.mxu0
  %7428 = vdwg.mxu0
  %v7429 = vld [vmem:[#allocation2 + $0x8] sm:$0xff]
  %v7430 = vld [vmem:[#allocation2 + $0x10] sm:$0xff]
  %v7431 = vld [vmem:[#allocation2 + $0x18] sm:$0xff]
  %v7432 = vld [vmem:[#allocation2 + $0x20] sm:$0xff]
  %v7433 = vld [vmem:[#allocation2 + $0x28] sm:$0xff]
  %v7434 = vld [vmem:[#allocation2 + $0x30] sm:$0xff]
  %v7435 = vld [vmem:[#allocation2 + $0x38] sm:$0xff]
  %v7436 = vld [vmem:[#allocation2 + $0x40] sm:$0xff]
  %v7437 = vld [vmem:[#allocation2 + $0x48] sm:$0xff]
  %v7438 = vld [vmem:[#allocation2 + $0x50] sm:$0xff]
  %v7439 = vld [vmem:[#allocation2 + $0x58] sm:$0xff]
  %v7440 = vld [vmem:[#allocation2 + $0x60] sm:$0xff]
  %v7441 = vld [vmem:[#allocation2 + $0x68] sm:$0xff]
  %v7442 = vld [vmem:[#allocation2 + $0x70] sm:$0xff]
  %v7443 = vld [vmem:[#allocation2 + $0x78] sm:$0xff]
  %v7444 = vld [vmem:[#allocation2 + $0x80] sm:$0xff]
  %v7445 = vld [vmem:[%s793] sm:$0xff]
  %v7446 = vld [vmem:[%s793 + $0x8] sm:$0xff]
  %v7447 = vld [vmem:[%s793 + $0x10] sm:$0xff]
  %v7448 = vld [vmem:[%s793 + $0x18] sm:$0xff]
  %v7449 = vld [vmem:[%s793 + $0x20] sm:$0xff]
  %v7450 = vld [vmem:[%s793 + $0x28] sm:$0xff]
  %v7451 = vld [vmem:[%s793 + $0x30] sm:$0xff]
  %v7452 = vld [vmem:[%s793 + $0x38] sm:$0xff]
  %v7453 = vld [vmem:[%s793 + $0x40] sm:$0xff]
  %v7454 = vld [vmem:[%s793 + $0x48] sm:$0xff]
  %v7455 = vld [vmem:[%s793 + $0x50] sm:$0xff]
  %v7456 = vld [vmem:[%s793 + $0x58] sm:$0xff]
  %v7457 = vld [vmem:[%s793 + $0x60] sm:$0xff]
  %v7458 = vld [vmem:[%s793 + $0x68] sm:$0xff]
  %v7459 = vld [vmem:[%s793 + $0x70] sm:$0xff]
  %v7460 = vld [vmem:[%s793 + $0x78] sm:$0xff]
  %vm7461 = vcmp.gt.f32.partialorder %v7445, 0.0
  %vm7462 = vcmp.gt.f32.partialorder %v7446, 0.0
  %vm7463 = vcmp.gt.f32.partialorder %v7447, 0.0
  %vm7464 = vcmp.gt.f32.partialorder %v7448, 0.0
  %vm7465 = vcmp.gt.f32.partialorder %v7449, 0.0
  %vm7466 = vcmp.gt.f32.partialorder %v7450, 0.0
  %vm7467 = vcmp.gt.f32.partialorder %v7451, 0.0
  %vm7468 = vcmp.gt.f32.partialorder %v7452, 0.0
  %vm7469 = vcmp.gt.f32.partialorder %v7453, 0.0
  %vm7470 = vcmp.gt.f32.partialorder %v7454, 0.0
  %vm7471 = vcmp.gt.f32.partialorder %v7455, 0.0
  %vm7472 = vcmp.gt.f32.partialorder %v7456, 0.0
  %vm7473 = vcmp.gt.f32.partialorder %v7457, 0.0
  %vm7474 = vcmp.gt.f32.partialorder %v7458, 0.0
  %vm7475 = vcmp.gt.f32.partialorder %v7459, 0.0
  %vm7476 = vcmp.gt.f32.partialorder %v7460, 0.0
  %v7477 = vsel %vm7461, %v7429, 0.0
  %v7478 = vsel %vm7462, %v7430, 0.0
  %v7479 = vsel %vm7463, %v7431, 0.0
  %v7480 = vsel %vm7464, %v7432, 0.0
  %v7481 = vsel %vm7465, %v7433, 0.0
  %v7482 = vsel %vm7466, %v7434, 0.0
  %v7483 = vsel %vm7467, %v7435, 0.0
  %v7484 = vsel %vm7468, %v7436, 0.0
  %v7485 = vsel %vm7469, %v7437, 0.0
  %v7486 = vsel %vm7470, %v7438, 0.0
  %v7487 = vsel %vm7471, %v7439, 0.0
  %v7488 = vsel %vm7472, %v7440, 0.0
  %v7489 = vsel %vm7473, %v7441, 0.0
  %v7490 = vsel %vm7474, %v7442, 0.0
  %v7491 = vsel %vm7475, %v7443, 0.0
  %v7492 = vsel %vm7476, %v7444, 0.0
  %v7493 = vpack.c.bf16 %v7478, %v7477
  %v7494 = vpack.c.bf16 %v7480, %v7479
  %v7495 = vpack.c.bf16 %v7482, %v7481
  %v7496 = vpack.c.bf16 %v7484, %v7483
  %v7497 = vpack.c.bf16 %v7486, %v7485
  %v7498 = vpack.c.bf16 %v7488, %v7487
  %v7499 = vpack.c.bf16 %v7490, %v7489
  %v7500 = vpack.c.bf16 %v7492, %v7491
  %v7501 = vld [vmem:[%s7050 + $0x40] sm:$0xf]
  %v7502 = vld [vmem:[%s7050 + $0x44] sm:$0xf]
  %v7503 = vld [vmem:[%s7050 + $0x48] sm:$0xf]
  %v7504 = vld [vmem:[%s7050 + $0x4c] sm:$0xf]
  %v7505 = vld [vmem:[%s7050 + $0x50] sm:$0xf]
  %v7506 = vld [vmem:[%s7050 + $0x54] sm:$0xf]
  %v7507 = vld [vmem:[%s7050 + $0x58] sm:$0xf]
  %v7508 = vld [vmem:[%s7050 + $0x5c] sm:$0xf]
  %v7517 = vunpack.c.l.b16 %v7501
  %v7518 = vunpack.c.l.b16 %v7502
  %v7519 = vunpack.c.l.b16 %v7503
  %v7520 = vunpack.c.l.b16 %v7504
  %v7521 = vunpack.c.l.b16 %v7505
  %v7522 = vunpack.c.l.b16 %v7506
  %v7523 = vunpack.c.l.b16 %v7507
  %v7524 = vunpack.c.l.b16 %v7508
  %v7525 = vpack.c.b16 %v7518, %v7517
  %v7526 = vpack.c.b16 %v7520, %v7519
  %v7527 = vpack.c.b16 %v7522, %v7521
  %v7528 = vpack.c.b16 %v7524, %v7523
  %v7534 = vsel %vm31, %v7493, 0
  %v7537 = vsel %vm31, %v7494, 0
  %v7540 = vsel %vm31, %v7495, 0
  %v7543 = vsel %vm31, %v7496, 0
  %v7546 = vsel %vm31, %v7497, 0
  %v7549 = vsel %vm31, %v7498, 0
  %v7552 = vsel %vm31, %v7499, 0
  %v7555 = vsel %vm31, %v7500, 0
  %7557 = vmatprep.subr.bf16.mxu0 0
  %7558 = vmatpush1.bf16.msra.mxu0 0
  %7559 = vmatprep.subr.bf16.mxu0 0
  %7560 = vmatpush1.bf16.msra.mxu0 0
  %7561 = vmatprep.subr.bf16.mxu0 0
  %7562 = vmatpush1.bf16.msra.mxu0 0
  %7563 = vmatprep.subr.bf16.mxu0 0
  %7564 = vmatpush1.bf16.msra.mxu0 0
  %7565 = vmatprep.subr.bf16.mxu0 0
  %7566 = vmatpush1.bf16.msra.mxu0 %v7528
  %7567 = vmatprep.subr.bf16.mxu0 0
  %7568 = vmatpush1.bf16.msra.mxu0 %v7527
  %7569 = vmatprep.subr.bf16.mxu0 0
  %7570 = vmatpush1.bf16.msra.mxu0 %v7526
  %7571 = vmatprep.subr.bf16.mxu0 0
  %7572 = vmatpush1.bf16.msra.mxu0 %v7525
  %7573 = vmatprep.subr.bf16.mxu0 0
  %7574 = vmatpush2.bf16.msra.mxu0 0
  %7575 = vmatprep.subr.bf16.mxu0 0
  %7576 = vmatpush2.bf16.msra.mxu0 0
  %7577 = vmatprep.subr.bf16.mxu0 0
  %7578 = vmatpush2.bf16.msra.mxu0 0
  %7579 = vmatprep.subr.bf16.mxu0 0
  %7580 = vmatpush2.bf16.msra.mxu0 0
  %7581 = vmatprep.subr.bf16.mxu0 0
  %7582 = vmatpush2.bf16.msra.mxu0 0
  %7583 = vmatprep.subr.bf16.mxu0 0
  %7584 = vmatpush2.bf16.msra.mxu0 0
  %7585 = vmatprep.subr.bf16.mxu0 0
  %7586 = vmatpush2.bf16.msra.mxu0 0
  %7587 = vmatprep.subr.bf16.mxu0 0
  %7588 = vmatpush2.bf16.msra.mxu0 0
  %7589 = vmatprep.mubr.bf16.mxu0 0
  %7590 = vmatmul.mubr.bf16.gmra.mxu0 %v7534
  %v7591 = vpop.f32.mrf.mxu0
  %v7592 = vadd.f32 0.0, %v7591
  %v7593 = vpop.f32.mrf.mxu0
  %v7594 = vpop.f32.mrf.mxu0
  %v7595 = vadd.f32 0.0, %v7594
  %v7596 = vpop.f32.mrf.mxu0
  %7597 = vmatprep.mubr.bf16.mxu0 0
  %7598 = vmatmul.mubr.bf16.gmra.mxu0 %v7537
  %v7599 = vpop.f32.mrf.mxu0
  %v7600 = vadd.f32 0.0, %v7599
  %v7601 = vpop.f32.mrf.mxu0
  %v7602 = vpop.f32.mrf.mxu0
  %v7603 = vadd.f32 0.0, %v7602
  %v7604 = vpop.f32.mrf.mxu0
  %7605 = vmatprep.mubr.bf16.mxu0 0
  %7606 = vmatmul.mubr.bf16.gmra.mxu0 %v7540
  %v7607 = vpop.f32.mrf.mxu0
  %v7608 = vadd.f32 0.0, %v7607
  %v7609 = vpop.f32.mrf.mxu0
  %v7610 = vpop.f32.mrf.mxu0
  %v7611 = vadd.f32 0.0, %v7610
  %v7612 = vpop.f32.mrf.mxu0
  %7613 = vmatprep.mubr.bf16.mxu0 0
  %7614 = vmatmul.mubr.bf16.gmra.mxu0 %v7543
  %v7615 = vpop.f32.mrf.mxu0
  %v7616 = vadd.f32 0.0, %v7615
  %v7617 = vpop.f32.mrf.mxu0
  %v7618 = vpop.f32.mrf.mxu0
  %v7619 = vadd.f32 0.0, %v7618
  %v7620 = vpop.f32.mrf.mxu0
  %7621 = vmatprep.mubr.bf16.mxu0 0
  %7622 = vmatmul.mubr.bf16.gmra.mxu0 %v7546
  %v7623 = vpop.f32.mrf.mxu0
  %v7624 = vadd.f32 0.0, %v7623
  %v7625 = vpop.f32.mrf.mxu0
  %v7626 = vpop.f32.mrf.mxu0
  %v7627 = vadd.f32 0.0, %v7626
  %v7628 = vpop.f32.mrf.mxu0
  %7629 = vmatprep.mubr.bf16.mxu0 0
  %7630 = vmatmul.mubr.bf16.gmra.mxu0 %v7549
  %v7631 = vpop.f32.mrf.mxu0
  %v7632 = vadd.f32 0.0, %v7631
  %v7633 = vpop.f32.mrf.mxu0
  %v7634 = vpop.f32.mrf.mxu0
  %v7635 = vadd.f32 0.0, %v7634
  %v7636 = vpop.f32.mrf.mxu0
  %7637 = vmatprep.mubr.bf16.mxu0 0
  %7638 = vmatmul.mubr.bf16.gmra.mxu0 %v7552
  %v7639 = vpop.f32.mrf.mxu0
  %v7640 = vadd.f32 0.0, %v7639
  %v7641 = vpop.f32.mrf.mxu0
  %v7642 = vpop.f32.mrf.mxu0
  %v7643 = vadd.f32 0.0, %v7642
  %v7644 = vpop.f32.mrf.mxu0
  %7645 = vmatprep.mubr.bf16.mxu0 0
  %7646 = vmatmul.mubr.bf16.gmra.mxu0 %v7555
  %v7647 = vpop.f32.mrf.mxu0
  %v7648 = vadd.f32 0.0, %v7647
  %v7649 = vpop.f32.mrf.mxu0
  %v7650 = vpop.f32.mrf.mxu0
  %v7651 = vadd.f32 0.0, %v7650
  %v7652 = vpop.f32.mrf.mxu0
  %7653 = vdwg.mxu0
  %v7654 = vadd.f32 %v7367, %v7592
  %v7655 = vadd.f32 %v7370, %v7595
  %v7656 = vadd.f32 %v7375, %v7600
  %v7657 = vadd.f32 %v7378, %v7603
  %v7658 = vadd.f32 %v7383, %v7608
  %v7659 = vadd.f32 %v7386, %v7611
  %v7660 = vadd.f32 %v7391, %v7616
  %v7661 = vadd.f32 %v7394, %v7619
  %v7662 = vadd.f32 %v7399, %v7624
  %v7663 = vadd.f32 %v7402, %v7627
  %v7664 = vadd.f32 %v7407, %v7632
  %v7665 = vadd.f32 %v7410, %v7635
  %v7666 = vadd.f32 %v7415, %v7640
  %v7667 = vadd.f32 %v7418, %v7643
  %v7668 = vadd.f32 %v7423, %v7648
  %v7669 = vadd.f32 %v7426, %v7651
  %v7670 = vld [vmem:[#allocation2 + $0xf] sm:$0xff]
  %v7671 = vld [vmem:[#allocation2 + $0x17] sm:$0xff]
  %v7672 = vld [vmem:[#allocation2 + $0x1f] sm:$0xff]
  %v7673 = vld [vmem:[#allocation2 + $0x27] sm:$0xff]
  %v7674 = vld [vmem:[#allocation2 + $0x2f] sm:$0xff]
  %v7675 = vld [vmem:[#allocation2 + $0x37] sm:$0xff]
  %v7676 = vld [vmem:[#allocation2 + $0x3f] sm:$0xff]
  %v7677 = vld [vmem:[#allocation2 + $0x47] sm:$0xff]
  %v7678 = vld [vmem:[#allocation2 + $0x4f] sm:$0xff]
  %v7679 = vld [vmem:[#allocation2 + $0x57] sm:$0xff]
  %v7680 = vld [vmem:[#allocation2 + $0x5f] sm:$0xff]
  %v7681 = vld [vmem:[#allocation2 + $0x67] sm:$0xff]
  %v7682 = vld [vmem:[#allocation2 + $0x6f] sm:$0xff]
  %v7683 = vld [vmem:[#allocation2 + $0x77] sm:$0xff]
  %v7684 = vld [vmem:[#allocation2 + $0x7f] sm:$0xff]
  %v7685 = vld [vmem:[#allocation2 + $0x87] sm:$0xff]
  %v7686 = vld [vmem:[%s1035] sm:$0xff]
  %v7687 = vld [vmem:[%s1035 + $0x8] sm:$0xff]
  %v7688 = vld [vmem:[%s1035 + $0x10] sm:$0xff]
  %v7689 = vld [vmem:[%s1035 + $0x18] sm:$0xff]
  %v7690 = vld [vmem:[%s1035 + $0x20] sm:$0xff]
  %v7691 = vld [vmem:[%s1035 + $0x28] sm:$0xff]
  %v7692 = vld [vmem:[%s1035 + $0x30] sm:$0xff]
  %v7693 = vld [vmem:[%s1035 + $0x38] sm:$0xff]
  %v7694 = vld [vmem:[%s1035 + $0x40] sm:$0xff]
  %v7695 = vld [vmem:[%s1035 + $0x48] sm:$0xff]
  %v7696 = vld [vmem:[%s1035 + $0x50] sm:$0xff]
  %v7697 = vld [vmem:[%s1035 + $0x58] sm:$0xff]
  %v7698 = vld [vmem:[%s1035 + $0x60] sm:$0xff]
  %v7699 = vld [vmem:[%s1035 + $0x68] sm:$0xff]
  %v7700 = vld [vmem:[%s1035 + $0x70] sm:$0xff]
  %v7701 = vld [vmem:[%s1035 + $0x78] sm:$0xff]
  %vm7702 = vcmp.gt.f32.partialorder %v7686, 0.0
  %vm7703 = vcmp.gt.f32.partialorder %v7687, 0.0
  %vm7704 = vcmp.gt.f32.partialorder %v7688, 0.0
  %vm7705 = vcmp.gt.f32.partialorder %v7689, 0.0
  %vm7706 = vcmp.gt.f32.partialorder %v7690, 0.0
  %vm7707 = vcmp.gt.f32.partialorder %v7691, 0.0
  %vm7708 = vcmp.gt.f32.partialorder %v7692, 0.0
  %vm7709 = vcmp.gt.f32.partialorder %v7693, 0.0
  %vm7710 = vcmp.gt.f32.partialorder %v7694, 0.0
  %vm7711 = vcmp.gt.f32.partialorder %v7695, 0.0
  %vm7712 = vcmp.gt.f32.partialorder %v7696, 0.0
  %vm7713 = vcmp.gt.f32.partialorder %v7697, 0.0
  %vm7714 = vcmp.gt.f32.partialorder %v7698, 0.0
  %vm7715 = vcmp.gt.f32.partialorder %v7699, 0.0
  %vm7716 = vcmp.gt.f32.partialorder %v7700, 0.0
  %vm7717 = vcmp.gt.f32.partialorder %v7701, 0.0
  %v7718 = vsel %vm7702, %v7670, 0.0
  %v7719 = vsel %vm7703, %v7671, 0.0
  %v7720 = vsel %vm7704, %v7672, 0.0
  %v7721 = vsel %vm7705, %v7673, 0.0
  %v7722 = vsel %vm7706, %v7674, 0.0
  %v7723 = vsel %vm7707, %v7675, 0.0
  %v7724 = vsel %vm7708, %v7676, 0.0
  %v7725 = vsel %vm7709, %v7677, 0.0
  %v7726 = vsel %vm7710, %v7678, 0.0
  %v7727 = vsel %vm7711, %v7679, 0.0
  %v7728 = vsel %vm7712, %v7680, 0.0
  %v7729 = vsel %vm7713, %v7681, 0.0
  %v7730 = vsel %vm7714, %v7682, 0.0
  %v7731 = vsel %vm7715, %v7683, 0.0
  %v7732 = vsel %vm7716, %v7684, 0.0
  %v7733 = vsel %vm7717, %v7685, 0.0
  %v7734 = vpack.c.bf16 %v7719, %v7718
  %v7735 = vpack.c.bf16 %v7721, %v7720
  %v7736 = vpack.c.bf16 %v7723, %v7722
  %v7737 = vpack.c.bf16 %v7725, %v7724
  %v7738 = vpack.c.bf16 %v7727, %v7726
  %v7739 = vpack.c.bf16 %v7729, %v7728
  %v7740 = vpack.c.bf16 %v7731, %v7730
  %v7741 = vpack.c.bf16 %v7733, %v7732
  %v7742 = vld [vmem:[%s7050 + $0x60] sm:$0xf]
  %v7743 = vld [vmem:[%s7050 + $0x64] sm:$0xf]
  %v7744 = vld [vmem:[%s7050 + $0x68] sm:$0xf]
  %v7745 = vld [vmem:[%s7050 + $0x6c] sm:$0xf]
  %v7746 = vld [vmem:[%s7050 + $0x70] sm:$0xf]
  %v7747 = vld [vmem:[%s7050 + $0x74] sm:$0xf]
  %v7748 = vld [vmem:[%s7050 + $0x78] sm:$0xf]
  %v7749 = vld [vmem:[%s7050 + $0x7c] sm:$0xf]
  %v7758 = vunpack.c.l.b16 %v7742
  %v7759 = vunpack.c.l.b16 %v7743
  %v7760 = vunpack.c.l.b16 %v7744
  %v7761 = vunpack.c.l.b16 %v7745
  %v7762 = vunpack.c.l.b16 %v7746
  %v7763 = vunpack.c.l.b16 %v7747
  %v7764 = vunpack.c.l.b16 %v7748
  %v7765 = vunpack.c.l.b16 %v7749
  %v7766 = vpack.c.b16 %v7759, %v7758
  %v7767 = vpack.c.b16 %v7761, %v7760
  %v7768 = vpack.c.b16 %v7763, %v7762
  %v7769 = vpack.c.b16 %v7765, %v7764
  %v7775 = vsel %vm31, %v7734, 0
  %v7778 = vsel %vm31, %v7735, 0
  %v7781 = vsel %vm31, %v7736, 0
  %v7784 = vsel %vm31, %v7737, 0
  %v7787 = vsel %vm31, %v7738, 0
  %v7790 = vsel %vm31, %v7739, 0
  %v7793 = vsel %vm31, %v7740, 0
  %v7796 = vsel %vm31, %v7741, 0
  %7798 = vmatprep.subr.bf16.mxu0 0
  %7799 = vmatpush1.bf16.msra.mxu0 0
  %7800 = vmatprep.subr.bf16.mxu0 0
  %7801 = vmatpush1.bf16.msra.mxu0 0
  %7802 = vmatprep.subr.bf16.mxu0 0
  %7803 = vmatpush1.bf16.msra.mxu0 0
  %7804 = vmatprep.subr.bf16.mxu0 0
  %7805 = vmatpush1.bf16.msra.mxu0 0
  %7806 = vmatprep.subr.bf16.mxu0 0
  %7807 = vmatpush1.bf16.msra.mxu0 %v7769
  %7808 = vmatprep.subr.bf16.mxu0 0
  %7809 = vmatpush1.bf16.msra.mxu0 %v7768
  %7810 = vmatprep.subr.bf16.mxu0 0
  %7811 = vmatpush1.bf16.msra.mxu0 %v7767
  %7812 = vmatprep.subr.bf16.mxu0 0
  %7813 = vmatpush1.bf16.msra.mxu0 %v7766
  %7814 = vmatprep.subr.bf16.mxu0 0
  %7815 = vmatpush2.bf16.msra.mxu0 0
  %7816 = vmatprep.subr.bf16.mxu0 0
  %7817 = vmatpush2.bf16.msra.mxu0 0
  %7818 = vmatprep.subr.bf16.mxu0 0
  %7819 = vmatpush2.bf16.msra.mxu0 0
  %7820 = vmatprep.subr.bf16.mxu0 0
  %7821 = vmatpush2.bf16.msra.mxu0 0
  %7822 = vmatprep.subr.bf16.mxu0 0
  %7823 = vmatpush2.bf16.msra.mxu0 0
  %7824 = vmatprep.subr.bf16.mxu0 0
  %7825 = vmatpush2.bf16.msra.mxu0 0
  %7826 = vmatprep.subr.bf16.mxu0 0
  %7827 = vmatpush2.bf16.msra.mxu0 0
  %7828 = vmatprep.subr.bf16.mxu0 0
  %7829 = vmatpush2.bf16.msra.mxu0 0
  %7830 = vmatprep.mubr.bf16.mxu0 0
  %7831 = vmatmul.mubr.bf16.gmra.mxu0 %v7775
  %v7832 = vpop.f32.mrf.mxu0
  %v7833 = vadd.f32 0.0, %v7832
  %v7834 = vpop.f32.mrf.mxu0
  %v7835 = vpop.f32.mrf.mxu0
  %v7836 = vadd.f32 0.0, %v7835
  %v7837 = vpop.f32.mrf.mxu0
  %7838 = vmatprep.mubr.bf16.mxu0 0
  %7839 = vmatmul.mubr.bf16.gmra.mxu0 %v7778
  %v7840 = vpop.f32.mrf.mxu0
  %v7841 = vadd.f32 0.0, %v7840
  %v7842 = vpop.f32.mrf.mxu0
  %v7843 = vpop.f32.mrf.mxu0
  %v7844 = vadd.f32 0.0, %v7843
  %v7845 = vpop.f32.mrf.mxu0
  %7846 = vmatprep.mubr.bf16.mxu0 0
  %7847 = vmatmul.mubr.bf16.gmra.mxu0 %v7781
  %v7848 = vpop.f32.mrf.mxu0
  %v7849 = vadd.f32 0.0, %v7848
  %v7850 = vpop.f32.mrf.mxu0
  %v7851 = vpop.f32.mrf.mxu0
  %v7852 = vadd.f32 0.0, %v7851
  %v7853 = vpop.f32.mrf.mxu0
  %7854 = vmatprep.mubr.bf16.mxu0 0
  %7855 = vmatmul.mubr.bf16.gmra.mxu0 %v7784
  %v7856 = vpop.f32.mrf.mxu0
  %v7857 = vadd.f32 0.0, %v7856
  %v7858 = vpop.f32.mrf.mxu0
  %v7859 = vpop.f32.mrf.mxu0
  %v7860 = vadd.f32 0.0, %v7859
  %v7861 = vpop.f32.mrf.mxu0
  %7862 = vmatprep.mubr.bf16.mxu0 0
  %7863 = vmatmul.mubr.bf16.gmra.mxu0 %v7787
  %v7864 = vpop.f32.mrf.mxu0
  %v7865 = vadd.f32 0.0, %v7864
  %v7866 = vpop.f32.mrf.mxu0
  %v7867 = vpop.f32.mrf.mxu0
  %v7868 = vadd.f32 0.0, %v7867
  %v7869 = vpop.f32.mrf.mxu0
  %7870 = vmatprep.mubr.bf16.mxu0 0
  %7871 = vmatmul.mubr.bf16.gmra.mxu0 %v7790
  %v7872 = vpop.f32.mrf.mxu0
  %v7873 = vadd.f32 0.0, %v7872
  %v7874 = vpop.f32.mrf.mxu0
  %v7875 = vpop.f32.mrf.mxu0
  %v7876 = vadd.f32 0.0, %v7875
  %v7877 = vpop.f32.mrf.mxu0
  %7878 = vmatprep.mubr.bf16.mxu0 0
  %7879 = vmatmul.mubr.bf16.gmra.mxu0 %v7793
  %v7880 = vpop.f32.mrf.mxu0
  %v7881 = vadd.f32 0.0, %v7880
  %v7882 = vpop.f32.mrf.mxu0
  %v7883 = vpop.f32.mrf.mxu0
  %v7884 = vadd.f32 0.0, %v7883
  %v7885 = vpop.f32.mrf.mxu0
  %7886 = vmatprep.mubr.bf16.mxu0 0
  %7887 = vmatmul.mubr.bf16.gmra.mxu0 %v7796
  %v7888 = vpop.f32.mrf.mxu0
  %v7889 = vadd.f32 0.0, %v7888
  %v7890 = vpop.f32.mrf.mxu0
  %v7891 = vpop.f32.mrf.mxu0
  %v7892 = vadd.f32 0.0, %v7891
  %v7893 = vpop.f32.mrf.mxu0
  %7894 = vdwg.mxu0
  %v7895 = vadd.f32 %v7654, %v7833
  %v7896 = vadd.f32 %v7655, %v7836
  %v7897 = vadd.f32 %v7656, %v7841
  %v7898 = vadd.f32 %v7657, %v7844
  %v7899 = vadd.f32 %v7658, %v7849
  %v7900 = vadd.f32 %v7659, %v7852
  %v7901 = vadd.f32 %v7660, %v7857
  %v7902 = vadd.f32 %v7661, %v7860
  %v7903 = vadd.f32 %v7662, %v7865
  %v7904 = vadd.f32 %v7663, %v7868
  %v7905 = vadd.f32 %v7664, %v7873
  %v7906 = vadd.f32 %v7665, %v7876
  %v7907 = vadd.f32 %v7666, %v7881
  %v7908 = vadd.f32 %v7667, %v7884
  %v7909 = vadd.f32 %v7668, %v7889
  %v7910 = vadd.f32 %v7669, %v7892
  %v7911 = vld [vmem:[#allocation2 + $0x10] sm:$0xff]
  %v7912 = vld [vmem:[#allocation2 + $0x18] sm:$0xff]
  %v7913 = vld [vmem:[#allocation2 + $0x20] sm:$0xff]
  %v7914 = vld [vmem:[#allocation2 + $0x28] sm:$0xff]
  %v7915 = vld [vmem:[#allocation2 + $0x30] sm:$0xff]
  %v7916 = vld [vmem:[#allocation2 + $0x38] sm:$0xff]
  %v7917 = vld [vmem:[#allocation2 + $0x40] sm:$0xff]
  %v7918 = vld [vmem:[#allocation2 + $0x48] sm:$0xff]
  %v7919 = vld [vmem:[#allocation2 + $0x50] sm:$0xff]
  %v7920 = vld [vmem:[#allocation2 + $0x58] sm:$0xff]
  %v7921 = vld [vmem:[#allocation2 + $0x60] sm:$0xff]
  %v7922 = vld [vmem:[#allocation2 + $0x68] sm:$0xff]
  %v7923 = vld [vmem:[#allocation2 + $0x70] sm:$0xff]
  %v7924 = vld [vmem:[#allocation2 + $0x78] sm:$0xff]
  %v7925 = vld [vmem:[#allocation2 + $0x80] sm:$0xff]
  %v7926 = vld [vmem:[#allocation2 + $0x88] sm:$0xff]
  %v7927 = vld [vmem:[%s1277] sm:$0xff]
  %v7928 = vld [vmem:[%s1277 + $0x8] sm:$0xff]
  %v7929 = vld [vmem:[%s1277 + $0x10] sm:$0xff]
  %v7930 = vld [vmem:[%s1277 + $0x18] sm:$0xff]
  %v7931 = vld [vmem:[%s1277 + $0x20] sm:$0xff]
  %v7932 = vld [vmem:[%s1277 + $0x28] sm:$0xff]
  %v7933 = vld [vmem:[%s1277 + $0x30] sm:$0xff]
  %v7934 = vld [vmem:[%s1277 + $0x38] sm:$0xff]
  %v7935 = vld [vmem:[%s1277 + $0x40] sm:$0xff]
  %v7936 = vld [vmem:[%s1277 + $0x48] sm:$0xff]
  %v7937 = vld [vmem:[%s1277 + $0x50] sm:$0xff]
  %v7938 = vld [vmem:[%s1277 + $0x58] sm:$0xff]
  %v7939 = vld [vmem:[%s1277 + $0x60] sm:$0xff]
  %v7940 = vld [vmem:[%s1277 + $0x68] sm:$0xff]
  %v7941 = vld [vmem:[%s1277 + $0x70] sm:$0xff]
  %v7942 = vld [vmem:[%s1277 + $0x78] sm:$0xff]
  %vm7943 = vcmp.gt.f32.partialorder %v7927, 0.0
  %vm7944 = vcmp.gt.f32.partialorder %v7928, 0.0
  %vm7945 = vcmp.gt.f32.partialorder %v7929, 0.0
  %vm7946 = vcmp.gt.f32.partialorder %v7930, 0.0
  %vm7947 = vcmp.gt.f32.partialorder %v7931, 0.0
  %vm7948 = vcmp.gt.f32.partialorder %v7932, 0.0
  %vm7949 = vcmp.gt.f32.partialorder %v7933, 0.0
  %vm7950 = vcmp.gt.f32.partialorder %v7934, 0.0
  %vm7951 = vcmp.gt.f32.partialorder %v7935, 0.0
  %vm7952 = vcmp.gt.f32.partialorder %v7936, 0.0
  %vm7953 = vcmp.gt.f32.partialorder %v7937, 0.0
  %vm7954 = vcmp.gt.f32.partialorder %v7938, 0.0
  %vm7955 = vcmp.gt.f32.partialorder %v7939, 0.0
  %vm7956 = vcmp.gt.f32.partialorder %v7940, 0.0
  %vm7957 = vcmp.gt.f32.partialorder %v7941, 0.0
  %vm7958 = vcmp.gt.f32.partialorder %v7942, 0.0
  %v7959 = vsel %vm7943, %v7911, 0.0
  %v7960 = vsel %vm7944, %v7912, 0.0
  %v7961 = vsel %vm7945, %v7913, 0.0
  %v7962 = vsel %vm7946, %v7914, 0.0
  %v7963 = vsel %vm7947, %v7915, 0.0
  %v7964 = vsel %vm7948, %v7916, 0.0
  %v7965 = vsel %vm7949, %v7917, 0.0
  %v7966 = vsel %vm7950, %v7918, 0.0
  %v7967 = vsel %vm7951, %v7919, 0.0
  %v7968 = vsel %vm7952, %v7920, 0.0
  %v7969 = vsel %vm7953, %v7921, 0.0
  %v7970 = vsel %vm7954, %v7922, 0.0
  %v7971 = vsel %vm7955, %v7923, 0.0
  %v7972 = vsel %vm7956, %v7924, 0.0
  %v7973 = vsel %vm7957, %v7925, 0.0
  %v7974 = vsel %vm7958, %v7926, 0.0
  %v7975 = vpack.c.bf16 %v7960, %v7959
  %v7976 = vpack.c.bf16 %v7962, %v7961
  %v7977 = vpack.c.bf16 %v7964, %v7963
  %v7978 = vpack.c.bf16 %v7966, %v7965
  %v7979 = vpack.c.bf16 %v7968, %v7967
  %v7980 = vpack.c.bf16 %v7970, %v7969
  %v7981 = vpack.c.bf16 %v7972, %v7971
  %v7982 = vpack.c.bf16 %v7974, %v7973
  %v7983 = vld [vmem:[%s7050 + $0x80] sm:$0xf]
  %v7984 = vld [vmem:[%s7050 + $0x84] sm:$0xf]
  %v7985 = vld [vmem:[%s7050 + $0x88] sm:$0xf]
  %v7986 = vld [vmem:[%s7050 + $0x8c] sm:$0xf]
  %v7987 = vld [vmem:[%s7050 + $0x90] sm:$0xf]
  %v7988 = vld [vmem:[%s7050 + $0x94] sm:$0xf]
  %v7989 = vld [vmem:[%s7050 + $0x98] sm:$0xf]
  %v7990 = vld [vmem:[%s7050 + $0x9c] sm:$0xf]
  %v7999 = vunpack.c.l.b16 %v7983
  %v8000 = vunpack.c.l.b16 %v7984
  %v8001 = vunpack.c.l.b16 %v7985
  %v8002 = vunpack.c.l.b16 %v7986
  %v8003 = vunpack.c.l.b16 %v7987
  %v8004 = vunpack.c.l.b16 %v7988
  %v8005 = vunpack.c.l.b16 %v7989
  %v8006 = vunpack.c.l.b16 %v7990
  %v8007 = vpack.c.b16 %v8000, %v7999
  %v8008 = vpack.c.b16 %v8002, %v8001
  %v8009 = vpack.c.b16 %v8004, %v8003
  %v8010 = vpack.c.b16 %v8006, %v8005
  %v8016 = vsel %vm31, %v7975, 0
  %v8019 = vsel %vm31, %v7976, 0
  %v8022 = vsel %vm31, %v7977, 0
  %v8025 = vsel %vm31, %v7978, 0
  %v8028 = vsel %vm31, %v7979, 0
  %v8031 = vsel %vm31, %v7980, 0
  %v8034 = vsel %vm31, %v7981, 0
  %v8037 = vsel %vm31, %v7982, 0
  %8039 = vmatprep.subr.bf16.mxu0 0
  %8040 = vmatpush1.bf16.msra.mxu0 0
  %8041 = vmatprep.subr.bf16.mxu0 0
  %8042 = vmatpush1.bf16.msra.mxu0 0
  %8043 = vmatprep.subr.bf16.mxu0 0
  %8044 = vmatpush1.bf16.msra.mxu0 0
  %8045 = vmatprep.subr.bf16.mxu0 0
  %8046 = vmatpush1.bf16.msra.mxu0 0
  %8047 = vmatprep.subr.bf16.mxu0 0
  %8048 = vmatpush1.bf16.msra.mxu0 %v8010
  %8049 = vmatprep.subr.bf16.mxu0 0
  %8050 = vmatpush1.bf16.msra.mxu0 %v8009
  %8051 = vmatprep.subr.bf16.mxu0 0
  %8052 = vmatpush1.bf16.msra.mxu0 %v8008
  %8053 = vmatprep.subr.bf16.mxu0 0
  %8054 = vmatpush1.bf16.msra.mxu0 %v8007
  %8055 = vmatprep.subr.bf16.mxu0 0
  %8056 = vmatpush2.bf16.msra.mxu0 0
  %8057 = vmatprep.subr.bf16.mxu0 0
  %8058 = vmatpush2.bf16.msra.mxu0 0
  %8059 = vmatprep.subr.bf16.mxu0 0
  %8060 = vmatpush2.bf16.msra.mxu0 0
  %8061 = vmatprep.subr.bf16.mxu0 0
  %8062 = vmatpush2.bf16.msra.mxu0 0
  %8063 = vmatprep.subr.bf16.mxu0 0
  %8064 = vmatpush2.bf16.msra.mxu0 0
  %8065 = vmatprep.subr.bf16.mxu0 0
  %8066 = vmatpush2.bf16.msra.mxu0 0
  %8067 = vmatprep.subr.bf16.mxu0 0
  %8068 = vmatpush2.bf16.msra.mxu0 0
  %8069 = vmatprep.subr.bf16.mxu0 0
  %8070 = vmatpush2.bf16.msra.mxu0 0
  %8071 = vmatprep.mubr.bf16.mxu0 0
  %8072 = vmatmul.mubr.bf16.gmra.mxu0 %v8016
  %v8073 = vpop.f32.mrf.mxu0
  %v8074 = vadd.f32 0.0, %v8073
  %v8075 = vpop.f32.mrf.mxu0
  %v8076 = vpop.f32.mrf.mxu0
  %v8077 = vadd.f32 0.0, %v8076
  %v8078 = vpop.f32.mrf.mxu0
  %8079 = vmatprep.mubr.bf16.mxu0 0
  %8080 = vmatmul.mubr.bf16.gmra.mxu0 %v8019
  %v8081 = vpop.f32.mrf.mxu0
  %v8082 = vadd.f32 0.0, %v8081
  %v8083 = vpop.f32.mrf.mxu0
  %v8084 = vpop.f32.mrf.mxu0
  %v8085 = vadd.f32 0.0, %v8084
  %v8086 = vpop.f32.mrf.mxu0
  %8087 = vmatprep.mubr.bf16.mxu0 0
  %8088 = vmatmul.mubr.bf16.gmra.mxu0 %v8022
  %v8089 = vpop.f32.mrf.mxu0
  %v8090 = vadd.f32 0.0, %v8089
  %v8091 = vpop.f32.mrf.mxu0
  %v8092 = vpop.f32.mrf.mxu0
  %v8093 = vadd.f32 0.0, %v8092
  %v8094 = vpop.f32.mrf.mxu0
  %8095 = vmatprep.mubr.bf16.mxu0 0
  %8096 = vmatmul.mubr.bf16.gmra.mxu0 %v8025
  %v8097 = vpop.f32.mrf.mxu0
  %v8098 = vadd.f32 0.0, %v8097
  %v8099 = vpop.f32.mrf.mxu0
  %v8100 = vpop.f32.mrf.mxu0
  %v8101 = vadd.f32 0.0, %v8100
  %v8102 = vpop.f32.mrf.mxu0
  %8103 = vmatprep.mubr.bf16.mxu0 0
  %8104 = vmatmul.mubr.bf16.gmra.mxu0 %v8028
  %v8105 = vpop.f32.mrf.mxu0
  %v8106 = vadd.f32 0.0, %v8105
  %v8107 = vpop.f32.mrf.mxu0
  %v8108 = vpop.f32.mrf.mxu0
  %v8109 = vadd.f32 0.0, %v8108
  %v8110 = vpop.f32.mrf.mxu0
  %8111 = vmatprep.mubr.bf16.mxu0 0
  %8112 = vmatmul.mubr.bf16.gmra.mxu0 %v8031
  %v8113 = vpop.f32.mrf.mxu0
  %v8114 = vadd.f32 0.0, %v8113
  %v8115 = vpop.f32.mrf.mxu0
  %v8116 = vpop.f32.mrf.mxu0
  %v8117 = vadd.f32 0.0, %v8116
  %v8118 = vpop.f32.mrf.mxu0
  %8119 = vmatprep.mubr.bf16.mxu0 0
  %8120 = vmatmul.mubr.bf16.gmra.mxu0 %v8034
  %v8121 = vpop.f32.mrf.mxu0
  %v8122 = vadd.f32 0.0, %v8121
  %v8123 = vpop.f32.mrf.mxu0
  %v8124 = vpop.f32.mrf.mxu0
  %v8125 = vadd.f32 0.0, %v8124
  %v8126 = vpop.f32.mrf.mxu0
  %8127 = vmatprep.mubr.bf16.mxu0 0
  %8128 = vmatmul.mubr.bf16.gmra.mxu0 %v8037
  %v8129 = vpop.f32.mrf.mxu0
  %v8130 = vadd.f32 0.0, %v8129
  %v8131 = vpop.f32.mrf.mxu0
  %v8132 = vpop.f32.mrf.mxu0
  %v8133 = vadd.f32 0.0, %v8132
  %v8134 = vpop.f32.mrf.mxu0
  %8135 = vdwg.mxu0
  %v8136 = vadd.f32 %v7895, %v8074
  %v8137 = vadd.f32 %v7896, %v8077
  %v8138 = vadd.f32 %v7897, %v8082
  %v8139 = vadd.f32 %v7898, %v8085
  %v8140 = vadd.f32 %v7899, %v8090
  %v8141 = vadd.f32 %v7900, %v8093
  %v8142 = vadd.f32 %v7901, %v8098
  %v8143 = vadd.f32 %v7902, %v8101
  %v8144 = vadd.f32 %v7903, %v8106
  %v8145 = vadd.f32 %v7904, %v8109
  %v8146 = vadd.f32 %v7905, %v8114
  %v8147 = vadd.f32 %v7906, %v8117
  %v8148 = vadd.f32 %v7907, %v8122
  %v8149 = vadd.f32 %v7908, %v8125
  %v8150 = vadd.f32 %v7909, %v8130
  %v8151 = vadd.f32 %v7910, %v8133
  %v8152 = vld [vmem:[#allocation2 + $0x11] sm:$0xff]
  %v8153 = vld [vmem:[#allocation2 + $0x19] sm:$0xff]
  %v8154 = vld [vmem:[#allocation2 + $0x21] sm:$0xff]
  %v8155 = vld [vmem:[#allocation2 + $0x29] sm:$0xff]
  %v8156 = vld [vmem:[#allocation2 + $0x31] sm:$0xff]
  %v8157 = vld [vmem:[#allocation2 + $0x39] sm:$0xff]
  %v8158 = vld [vmem:[#allocation2 + $0x41] sm:$0xff]
  %v8159 = vld [vmem:[#allocation2 + $0x49] sm:$0xff]
  %v8160 = vld [vmem:[#allocation2 + $0x51] sm:$0xff]
  %v8161 = vld [vmem:[#allocation2 + $0x59] sm:$0xff]
  %v8162 = vld [vmem:[#allocation2 + $0x61] sm:$0xff]
  %v8163 = vld [vmem:[#allocation2 + $0x69] sm:$0xff]
  %v8164 = vld [vmem:[#allocation2 + $0x71] sm:$0xff]
  %v8165 = vld [vmem:[#allocation2 + $0x79] sm:$0xff]
  %v8166 = vld [vmem:[#allocation2 + $0x81] sm:$0xff]
  %v8167 = vld [vmem:[#allocation2 + $0x89] sm:$0xff]
  %v8168 = vld [vmem:[%s1519] sm:$0xff]
  %v8169 = vld [vmem:[%s1519 + $0x8] sm:$0xff]
  %v8170 = vld [vmem:[%s1519 + $0x10] sm:$0xff]
  %v8171 = vld [vmem:[%s1519 + $0x18] sm:$0xff]
  %v8172 = vld [vmem:[%s1519 + $0x20] sm:$0xff]
  %v8173 = vld [vmem:[%s1519 + $0x28] sm:$0xff]
  %v8174 = vld [vmem:[%s1519 + $0x30] sm:$0xff]
  %v8175 = vld [vmem:[%s1519 + $0x38] sm:$0xff]
  %v8176 = vld [vmem:[%s1519 + $0x40] sm:$0xff]
  %v8177 = vld [vmem:[%s1519 + $0x48] sm:$0xff]
  %v8178 = vld [vmem:[%s1519 + $0x50] sm:$0xff]
  %v8179 = vld [vmem:[%s1519 + $0x58] sm:$0xff]
  %v8180 = vld [vmem:[%s1519 + $0x60] sm:$0xff]
  %v8181 = vld [vmem:[%s1519 + $0x68] sm:$0xff]
  %v8182 = vld [vmem:[%s1519 + $0x70] sm:$0xff]
  %v8183 = vld [vmem:[%s1519 + $0x78] sm:$0xff]
  %vm8184 = vcmp.gt.f32.partialorder %v8168, 0.0
  %vm8185 = vcmp.gt.f32.partialorder %v8169, 0.0
  %vm8186 = vcmp.gt.f32.partialorder %v8170, 0.0
  %vm8187 = vcmp.gt.f32.partialorder %v8171, 0.0
  %vm8188 = vcmp.gt.f32.partialorder %v8172, 0.0
  %vm8189 = vcmp.gt.f32.partialorder %v8173, 0.0
  %vm8190 = vcmp.gt.f32.partialorder %v8174, 0.0
  %vm8191 = vcmp.gt.f32.partialorder %v8175, 0.0
  %vm8192 = vcmp.gt.f32.partialorder %v8176, 0.0
  %vm8193 = vcmp.gt.f32.partialorder %v8177, 0.0
  %vm8194 = vcmp.gt.f32.partialorder %v8178, 0.0
  %vm8195 = vcmp.gt.f32.partialorder %v8179, 0.0
  %vm8196 = vcmp.gt.f32.partialorder %v8180, 0.0
  %vm8197 = vcmp.gt.f32.partialorder %v8181, 0.0
  %vm8198 = vcmp.gt.f32.partialorder %v8182, 0.0
  %vm8199 = vcmp.gt.f32.partialorder %v8183, 0.0
  %v8200 = vsel %vm8184, %v8152, 0.0
  %v8201 = vsel %vm8185, %v8153, 0.0
  %v8202 = vsel %vm8186, %v8154, 0.0
  %v8203 = vsel %vm8187, %v8155, 0.0
  %v8204 = vsel %vm8188, %v8156, 0.0
  %v8205 = vsel %vm8189, %v8157, 0.0
  %v8206 = vsel %vm8190, %v8158, 0.0
  %v8207 = vsel %vm8191, %v8159, 0.0
  %v8208 = vsel %vm8192, %v8160, 0.0
  %v8209 = vsel %vm8193, %v8161, 0.0
  %v8210 = vsel %vm8194, %v8162, 0.0
  %v8211 = vsel %vm8195, %v8163, 0.0
  %v8212 = vsel %vm8196, %v8164, 0.0
  %v8213 = vsel %vm8197, %v8165, 0.0
  %v8214 = vsel %vm8198, %v8166, 0.0
  %v8215 = vsel %vm8199, %v8167, 0.0
  %v8216 = vpack.c.bf16 %v8201, %v8200
  %v8217 = vpack.c.bf16 %v8203, %v8202
  %v8218 = vpack.c.bf16 %v8205, %v8204
  %v8219 = vpack.c.bf16 %v8207, %v8206
  %v8220 = vpack.c.bf16 %v8209, %v8208
  %v8221 = vpack.c.bf16 %v8211, %v8210
  %v8222 = vpack.c.bf16 %v8213, %v8212
  %v8223 = vpack.c.bf16 %v8215, %v8214
  %v8224 = vld [vmem:[%s7050 + $0xa0] sm:$0xf]
  %v8225 = vld [vmem:[%s7050 + $0xa4] sm:$0xf]
  %v8226 = vld [vmem:[%s7050 + $0xa8] sm:$0xf]
  %v8227 = vld [vmem:[%s7050 + $0xac] sm:$0xf]
  %v8228 = vld [vmem:[%s7050 + $0xb0] sm:$0xf]
  %v8229 = vld [vmem:[%s7050 + $0xb4] sm:$0xf]
  %v8230 = vld [vmem:[%s7050 + $0xb8] sm:$0xf]
  %v8231 = vld [vmem:[%s7050 + $0xbc] sm:$0xf]
  %v8240 = vunpack.c.l.b16 %v8224
  %v8241 = vunpack.c.l.b16 %v8225
  %v8242 = vunpack.c.l.b16 %v8226
  %v8243 = vunpack.c.l.b16 %v8227
  %v8244 = vunpack.c.l.b16 %v8228
  %v8245 = vunpack.c.l.b16 %v8229
  %v8246 = vunpack.c.l.b16 %v8230
  %v8247 = vunpack.c.l.b16 %v8231
  %v8248 = vpack.c.b16 %v8241, %v8240
  %v8249 = vpack.c.b16 %v8243, %v8242
  %v8250 = vpack.c.b16 %v8245, %v8244
  %v8251 = vpack.c.b16 %v8247, %v8246
  %v8257 = vsel %vm31, %v8216, 0
  %v8260 = vsel %vm31, %v8217, 0
  %v8263 = vsel %vm31, %v8218, 0
  %v8266 = vsel %vm31, %v8219, 0
  %v8269 = vsel %vm31, %v8220, 0
  %v8272 = vsel %vm31, %v8221, 0
  %v8275 = vsel %vm31, %v8222, 0
  %v8278 = vsel %vm31, %v8223, 0
  %8280 = vmatprep.subr.bf16.mxu0 0
  %8281 = vmatpush1.bf16.msra.mxu0 0
  %8282 = vmatprep.subr.bf16.mxu0 0
  %8283 = vmatpush1.bf16.msra.mxu0 0
  %8284 = vmatprep.subr.bf16.mxu0 0
  %8285 = vmatpush1.bf16.msra.mxu0 0
  %8286 = vmatprep.subr.bf16.mxu0 0
  %8287 = vmatpush1.bf16.msra.mxu0 0
  %8288 = vmatprep.subr.bf16.mxu0 0
  %8289 = vmatpush1.bf16.msra.mxu0 %v8251
  %8290 = vmatprep.subr.bf16.mxu0 0
  %8291 = vmatpush1.bf16.msra.mxu0 %v8250
  %8292 = vmatprep.subr.bf16.mxu0 0
  %8293 = vmatpush1.bf16.msra.mxu0 %v8249
  %8294 = vmatprep.subr.bf16.mxu0 0
  %8295 = vmatpush1.bf16.msra.mxu0 %v8248
  %8296 = vmatprep.subr.bf16.mxu0 0
  %8297 = vmatpush2.bf16.msra.mxu0 0
  %8298 = vmatprep.subr.bf16.mxu0 0
  %8299 = vmatpush2.bf16.msra.mxu0 0
  %8300 = vmatprep.subr.bf16.mxu0 0
  %8301 = vmatpush2.bf16.msra.mxu0 0
  %8302 = vmatprep.subr.bf16.mxu0 0
  %8303 = vmatpush2.bf16.msra.mxu0 0
  %8304 = vmatprep.subr.bf16.mxu0 0
  %8305 = vmatpush2.bf16.msra.mxu0 0
  %8306 = vmatprep.subr.bf16.mxu0 0
  %8307 = vmatpush2.bf16.msra.mxu0 0
  %8308 = vmatprep.subr.bf16.mxu0 0
  %8309 = vmatpush2.bf16.msra.mxu0 0
  %8310 = vmatprep.subr.bf16.mxu0 0
  %8311 = vmatpush2.bf16.msra.mxu0 0
  %8312 = vmatprep.mubr.bf16.mxu0 0
  %8313 = vmatmul.mubr.bf16.gmra.mxu0 %v8257
  %v8314 = vpop.f32.mrf.mxu0
  %v8315 = vadd.f32 0.0, %v8314
  %v8316 = vpop.f32.mrf.mxu0
  %v8317 = vpop.f32.mrf.mxu0
  %v8318 = vadd.f32 0.0, %v8317
  %v8319 = vpop.f32.mrf.mxu0
  %8320 = vmatprep.mubr.bf16.mxu0 0
  %8321 = vmatmul.mubr.bf16.gmra.mxu0 %v8260
  %v8322 = vpop.f32.mrf.mxu0
  %v8323 = vadd.f32 0.0, %v8322
  %v8324 = vpop.f32.mrf.mxu0
  %v8325 = vpop.f32.mrf.mxu0
  %v8326 = vadd.f32 0.0, %v8325
  %v8327 = vpop.f32.mrf.mxu0
  %8328 = vmatprep.mubr.bf16.mxu0 0
  %8329 = vmatmul.mubr.bf16.gmra.mxu0 %v8263
  %v8330 = vpop.f32.mrf.mxu0
  %v8331 = vadd.f32 0.0, %v8330
  %v8332 = vpop.f32.mrf.mxu0
  %v8333 = vpop.f32.mrf.mxu0
  %v8334 = vadd.f32 0.0, %v8333
  %v8335 = vpop.f32.mrf.mxu0
  %8336 = vmatprep.mubr.bf16.mxu0 0
  %8337 = vmatmul.mubr.bf16.gmra.mxu0 %v8266
  %v8338 = vpop.f32.mrf.mxu0
  %v8339 = vadd.f32 0.0, %v8338
  %v8340 = vpop.f32.mrf.mxu0
  %v8341 = vpop.f32.mrf.mxu0
  %v8342 = vadd.f32 0.0, %v8341
  %v8343 = vpop.f32.mrf.mxu0
  %8344 = vmatprep.mubr.bf16.mxu0 0
  %8345 = vmatmul.mubr.bf16.gmra.mxu0 %v8269
  %v8346 = vpop.f32.mrf.mxu0
  %v8347 = vadd.f32 0.0, %v8346
  %v8348 = vpop.f32.mrf.mxu0
  %v8349 = vpop.f32.mrf.mxu0
  %v8350 = vadd.f32 0.0, %v8349
  %v8351 = vpop.f32.mrf.mxu0
  %8352 = vmatprep.mubr.bf16.mxu0 0
  %8353 = vmatmul.mubr.bf16.gmra.mxu0 %v8272
  %v8354 = vpop.f32.mrf.mxu0
  %v8355 = vadd.f32 0.0, %v8354
  %v8356 = vpop.f32.mrf.mxu0
  %v8357 = vpop.f32.mrf.mxu0
  %v8358 = vadd.f32 0.0, %v8357
  %v8359 = vpop.f32.mrf.mxu0
  %8360 = vmatprep.mubr.bf16.mxu0 0
  %8361 = vmatmul.mubr.bf16.gmra.mxu0 %v8275
  %v8362 = vpop.f32.mrf.mxu0
  %v8363 = vadd.f32 0.0, %v8362
  %v8364 = vpop.f32.mrf.mxu0
  %v8365 = vpop.f32.mrf.mxu0
  %v8366 = vadd.f32 0.0, %v8365
  %v8367 = vpop.f32.mrf.mxu0
  %8368 = vmatprep.mubr.bf16.mxu0 0
  %8369 = vmatmul.mubr.bf16.gmra.mxu0 %v8278
  %v8370 = vpop.f32.mrf.mxu0
  %v8371 = vadd.f32 0.0, %v8370
  %v8372 = vpop.f32.mrf.mxu0
  %v8373 = vpop.f32.mrf.mxu0
  %v8374 = vadd.f32 0.0, %v8373
  %v8375 = vpop.f32.mrf.mxu0
  %8376 = vdwg.mxu0
  %v8377 = vadd.f32 %v8136, %v8315
  %v8378 = vadd.f32 %v8137, %v8318
  %v8379 = vadd.f32 %v8138, %v8323
  %v8380 = vadd.f32 %v8139, %v8326
  %v8381 = vadd.f32 %v8140, %v8331
  %v8382 = vadd.f32 %v8141, %v8334
  %v8383 = vadd.f32 %v8142, %v8339
  %v8384 = vadd.f32 %v8143, %v8342
  %v8385 = vadd.f32 %v8144, %v8347
  %v8386 = vadd.f32 %v8145, %v8350
  %v8387 = vadd.f32 %v8146, %v8355
  %v8388 = vadd.f32 %v8147, %v8358
  %v8389 = vadd.f32 %v8148, %v8363
  %v8390 = vadd.f32 %v8149, %v8366
  %v8391 = vadd.f32 %v8150, %v8371
  %v8392 = vadd.f32 %v8151, %v8374
  %v8393 = vld [vmem:[#allocation2 + $0x18] sm:$0xff]
  %v8394 = vld [vmem:[#allocation2 + $0x20] sm:$0xff]
  %v8395 = vld [vmem:[#allocation2 + $0x28] sm:$0xff]
  %v8396 = vld [vmem:[#allocation2 + $0x30] sm:$0xff]
  %v8397 = vld [vmem:[#allocation2 + $0x38] sm:$0xff]
  %v8398 = vld [vmem:[#allocation2 + $0x40] sm:$0xff]
  %v8399 = vld [vmem:[#allocation2 + $0x48] sm:$0xff]
  %v8400 = vld [vmem:[#allocation2 + $0x50] sm:$0xff]
  %v8401 = vld [vmem:[#allocation2 + $0x58] sm:$0xff]
  %v8402 = vld [vmem:[#allocation2 + $0x60] sm:$0xff]
  %v8403 = vld [vmem:[#allocation2 + $0x68] sm:$0xff]
  %v8404 = vld [vmem:[#allocation2 + $0x70] sm:$0xff]
  %v8405 = vld [vmem:[#allocation2 + $0x78] sm:$0xff]
  %v8406 = vld [vmem:[#allocation2 + $0x80] sm:$0xff]
  %v8407 = vld [vmem:[#allocation2 + $0x88] sm:$0xff]
  %v8408 = vld [vmem:[#allocation2 + $0x90] sm:$0xff]
  %v8409 = vld [vmem:[%s1761] sm:$0xff]
  %v8410 = vld [vmem:[%s1761 + $0x8] sm:$0xff]
  %v8411 = vld [vmem:[%s1761 + $0x10] sm:$0xff]
  %v8412 = vld [vmem:[%s1761 + $0x18] sm:$0xff]
  %v8413 = vld [vmem:[%s1761 + $0x20] sm:$0xff]
  %v8414 = vld [vmem:[%s1761 + $0x28] sm:$0xff]
  %v8415 = vld [vmem:[%s1761 + $0x30] sm:$0xff]
  %v8416 = vld [vmem:[%s1761 + $0x38] sm:$0xff]
  %v8417 = vld [vmem:[%s1761 + $0x40] sm:$0xff]
  %v8418 = vld [vmem:[%s1761 + $0x48] sm:$0xff]
  %v8419 = vld [vmem:[%s1761 + $0x50] sm:$0xff]
  %v8420 = vld [vmem:[%s1761 + $0x58] sm:$0xff]
  %v8421 = vld [vmem:[%s1761 + $0x60] sm:$0xff]
  %v8422 = vld [vmem:[%s1761 + $0x68] sm:$0xff]
  %v8423 = vld [vmem:[%s1761 + $0x70] sm:$0xff]
  %v8424 = vld [vmem:[%s1761 + $0x78] sm:$0xff]
  %vm8425 = vcmp.gt.f32.partialorder %v8409, 0.0
  %vm8426 = vcmp.gt.f32.partialorder %v8410, 0.0
  %vm8427 = vcmp.gt.f32.partialorder %v8411, 0.0
  %vm8428 = vcmp.gt.f32.partialorder %v8412, 0.0
  %vm8429 = vcmp.gt.f32.partialorder %v8413, 0.0
  %vm8430 = vcmp.gt.f32.partialorder %v8414, 0.0
  %vm8431 = vcmp.gt.f32.partialorder %v8415, 0.0
  %vm8432 = vcmp.gt.f32.partialorder %v8416, 0.0
  %vm8433 = vcmp.gt.f32.partialorder %v8417, 0.0
  %vm8434 = vcmp.gt.f32.partialorder %v8418, 0.0
  %vm8435 = vcmp.gt.f32.partialorder %v8419, 0.0
  %vm8436 = vcmp.gt.f32.partialorder %v8420, 0.0
  %vm8437 = vcmp.gt.f32.partialorder %v8421, 0.0
  %vm8438 = vcmp.gt.f32.partialorder %v8422, 0.0
  %vm8439 = vcmp.gt.f32.partialorder %v8423, 0.0
  %vm8440 = vcmp.gt.f32.partialorder %v8424, 0.0
  %v8441 = vsel %vm8425, %v8393, 0.0
  %v8442 = vsel %vm8426, %v8394, 0.0
  %v8443 = vsel %vm8427, %v8395, 0.0
  %v8444 = vsel %vm8428, %v8396, 0.0
  %v8445 = vsel %vm8429, %v8397, 0.0
  %v8446 = vsel %vm8430, %v8398, 0.0
  %v8447 = vsel %vm8431, %v8399, 0.0
  %v8448 = vsel %vm8432, %v8400, 0.0
  %v8449 = vsel %vm8433, %v8401, 0.0
  %v8450 = vsel %vm8434, %v8402, 0.0
  %v8451 = vsel %vm8435, %v8403, 0.0
  %v8452 = vsel %vm8436, %v8404, 0.0
  %v8453 = vsel %vm8437, %v8405, 0.0
  %v8454 = vsel %vm8438, %v8406, 0.0
  %v8455 = vsel %vm8439, %v8407, 0.0
  %v8456 = vsel %vm8440, %v8408, 0.0
  %v8457 = vpack.c.bf16 %v8442, %v8441
  %v8458 = vpack.c.bf16 %v8444, %v8443
  %v8459 = vpack.c.bf16 %v8446, %v8445
  %v8460 = vpack.c.bf16 %v8448, %v8447
  %v8461 = vpack.c.bf16 %v8450, %v8449
  %v8462 = vpack.c.bf16 %v8452, %v8451
  %v8463 = vpack.c.bf16 %v8454, %v8453
  %v8464 = vpack.c.bf16 %v8456, %v8455
  %v8465 = vld [vmem:[%s7050 + $0xc0] sm:$0xf]
  %v8466 = vld [vmem:[%s7050 + $0xc4] sm:$0xf]
  %v8467 = vld [vmem:[%s7050 + $0xc8] sm:$0xf]
  %v8468 = vld [vmem:[%s7050 + $0xcc] sm:$0xf]
  %v8469 = vld [vmem:[%s7050 + $0xd0] sm:$0xf]
  %v8470 = vld [vmem:[%s7050 + $0xd4] sm:$0xf]
  %v8471 = vld [vmem:[%s7050 + $0xd8] sm:$0xf]
  %v8472 = vld [vmem:[%s7050 + $0xdc] sm:$0xf]
  %v8481 = vunpack.c.l.b16 %v8465
  %v8482 = vunpack.c.l.b16 %v8466
  %v8483 = vunpack.c.l.b16 %v8467
  %v8484 = vunpack.c.l.b16 %v8468
  %v8485 = vunpack.c.l.b16 %v8469
  %v8486 = vunpack.c.l.b16 %v8470
  %v8487 = vunpack.c.l.b16 %v8471
  %v8488 = vunpack.c.l.b16 %v8472
  %v8489 = vpack.c.b16 %v8482, %v8481
  %v8490 = vpack.c.b16 %v8484, %v8483
  %v8491 = vpack.c.b16 %v8486, %v8485
  %v8492 = vpack.c.b16 %v8488, %v8487
  %v8498 = vsel %vm31, %v8457, 0
  %v8501 = vsel %vm31, %v8458, 0
  %v8504 = vsel %vm31, %v8459, 0
  %v8507 = vsel %vm31, %v8460, 0
  %v8510 = vsel %vm31, %v8461, 0
  %v8513 = vsel %vm31, %v8462, 0
  %v8516 = vsel %vm31, %v8463, 0
  %v8519 = vsel %vm31, %v8464, 0
  %8521 = vmatprep.subr.bf16.mxu0 0
  %8522 = vmatpush1.bf16.msra.mxu0 0
  %8523 = vmatprep.subr.bf16.mxu0 0
  %8524 = vmatpush1.bf16.msra.mxu0 0
  %8525 = vmatprep.subr.bf16.mxu0 0
  %8526 = vmatpush1.bf16.msra.mxu0 0
  %8527 = vmatprep.subr.bf16.mxu0 0
  %8528 = vmatpush1.bf16.msra.mxu0 0
  %8529 = vmatprep.subr.bf16.mxu0 0
  %8530 = vmatpush1.bf16.msra.mxu0 %v8492
  %8531 = vmatprep.subr.bf16.mxu0 0
  %8532 = vmatpush1.bf16.msra.mxu0 %v8491
  %8533 = vmatprep.subr.bf16.mxu0 0
  %8534 = vmatpush1.bf16.msra.mxu0 %v8490
  %8535 = vmatprep.subr.bf16.mxu0 0
  %8536 = vmatpush1.bf16.msra.mxu0 %v8489
  %8537 = vmatprep.subr.bf16.mxu0 0
  %8538 = vmatpush2.bf16.msra.mxu0 0
  %8539 = vmatprep.subr.bf16.mxu0 0
  %8540 = vmatpush2.bf16.msra.mxu0 0
  %8541 = vmatprep.subr.bf16.mxu0 0
  %8542 = vmatpush2.bf16.msra.mxu0 0
  %8543 = vmatprep.subr.bf16.mxu0 0
  %8544 = vmatpush2.bf16.msra.mxu0 0
  %8545 = vmatprep.subr.bf16.mxu0 0
  %8546 = vmatpush2.bf16.msra.mxu0 0
  %8547 = vmatprep.subr.bf16.mxu0 0
  %8548 = vmatpush2.bf16.msra.mxu0 0
  %8549 = vmatprep.subr.bf16.mxu0 0
  %8550 = vmatpush2.bf16.msra.mxu0 0
  %8551 = vmatprep.subr.bf16.mxu0 0
  %8552 = vmatpush2.bf16.msra.mxu0 0
  %8553 = vmatprep.mubr.bf16.mxu0 0
  %8554 = vmatmul.mubr.bf16.gmra.mxu0 %v8498
  %v8555 = vpop.f32.mrf.mxu0
  %v8556 = vadd.f32 0.0, %v8555
  %v8557 = vpop.f32.mrf.mxu0
  %v8558 = vpop.f32.mrf.mxu0
  %v8559 = vadd.f32 0.0, %v8558
  %v8560 = vpop.f32.mrf.mxu0
  %8561 = vmatprep.mubr.bf16.mxu0 0
  %8562 = vmatmul.mubr.bf16.gmra.mxu0 %v8501
  %v8563 = vpop.f32.mrf.mxu0
  %v8564 = vadd.f32 0.0, %v8563
  %v8565 = vpop.f32.mrf.mxu0
  %v8566 = vpop.f32.mrf.mxu0
  %v8567 = vadd.f32 0.0, %v8566
  %v8568 = vpop.f32.mrf.mxu0
  %8569 = vmatprep.mubr.bf16.mxu0 0
  %8570 = vmatmul.mubr.bf16.gmra.mxu0 %v8504
  %v8571 = vpop.f32.mrf.mxu0
  %v8572 = vadd.f32 0.0, %v8571
  %v8573 = vpop.f32.mrf.mxu0
  %v8574 = vpop.f32.mrf.mxu0
  %v8575 = vadd.f32 0.0, %v8574
  %v8576 = vpop.f32.mrf.mxu0
  %8577 = vmatprep.mubr.bf16.mxu0 0
  %8578 = vmatmul.mubr.bf16.gmra.mxu0 %v8507
  %v8579 = vpop.f32.mrf.mxu0
  %v8580 = vadd.f32 0.0, %v8579
  %v8581 = vpop.f32.mrf.mxu0
  %v8582 = vpop.f32.mrf.mxu0
  %v8583 = vadd.f32 0.0, %v8582
  %v8584 = vpop.f32.mrf.mxu0
  %8585 = vmatprep.mubr.bf16.mxu0 0
  %8586 = vmatmul.mubr.bf16.gmra.mxu0 %v8510
  %v8587 = vpop.f32.mrf.mxu0
  %v8588 = vadd.f32 0.0, %v8587
  %v8589 = vpop.f32.mrf.mxu0
  %v8590 = vpop.f32.mrf.mxu0
  %v8591 = vadd.f32 0.0, %v8590
  %v8592 = vpop.f32.mrf.mxu0
  %8593 = vmatprep.mubr.bf16.mxu0 0
  %8594 = vmatmul.mubr.bf16.gmra.mxu0 %v8513
  %v8595 = vpop.f32.mrf.mxu0
  %v8596 = vadd.f32 0.0, %v8595
  %v8597 = vpop.f32.mrf.mxu0
  %v8598 = vpop.f32.mrf.mxu0
  %v8599 = vadd.f32 0.0, %v8598
  %v8600 = vpop.f32.mrf.mxu0
  %8601 = vmatprep.mubr.bf16.mxu0 0
  %8602 = vmatmul.mubr.bf16.gmra.mxu0 %v8516
  %v8603 = vpop.f32.mrf.mxu0
  %v8604 = vadd.f32 0.0, %v8603
  %v8605 = vpop.f32.mrf.mxu0
  %v8606 = vpop.f32.mrf.mxu0
  %v8607 = vadd.f32 0.0, %v8606
  %v8608 = vpop.f32.mrf.mxu0
  %8609 = vmatprep.mubr.bf16.mxu0 0
  %8610 = vmatmul.mubr.bf16.gmra.mxu0 %v8519
  %v8611 = vpop.f32.mrf.mxu0
  %v8612 = vadd.f32 0.0, %v8611
  %v8613 = vpop.f32.mrf.mxu0
  %v8614 = vpop.f32.mrf.mxu0
  %v8615 = vadd.f32 0.0, %v8614
  %v8616 = vpop.f32.mrf.mxu0
  %8617 = vdwg.mxu0
  %v8618 = vadd.f32 %v8377, %v8556
  %v8619 = vadd.f32 %v8378, %v8559
  %v8620 = vadd.f32 %v8379, %v8564
  %v8621 = vadd.f32 %v8380, %v8567
  %v8622 = vadd.f32 %v8381, %v8572
  %v8623 = vadd.f32 %v8382, %v8575
  %v8624 = vadd.f32 %v8383, %v8580
  %v8625 = vadd.f32 %v8384, %v8583
  %v8626 = vadd.f32 %v8385, %v8588
  %v8627 = vadd.f32 %v8386, %v8591
  %v8628 = vadd.f32 %v8387, %v8596
  %v8629 = vadd.f32 %v8388, %v8599
  %v8630 = vadd.f32 %v8389, %v8604
  %v8631 = vadd.f32 %v8390, %v8607
  %v8632 = vadd.f32 %v8391, %v8612
  %v8633 = vadd.f32 %v8392, %v8615
  %v8634 = vld [vmem:[#allocation2 + $0x19] sm:$0xff]
  %v8635 = vld [vmem:[#allocation2 + $0x21] sm:$0xff]
  %v8636 = vld [vmem:[#allocation2 + $0x29] sm:$0xff]
  %v8637 = vld [vmem:[#allocation2 + $0x31] sm:$0xff]
  %v8638 = vld [vmem:[#allocation2 + $0x39] sm:$0xff]
  %v8639 = vld [vmem:[#allocation2 + $0x41] sm:$0xff]
  %v8640 = vld [vmem:[#allocation2 + $0x49] sm:$0xff]
  %v8641 = vld [vmem:[#allocation2 + $0x51] sm:$0xff]
  %v8642 = vld [vmem:[#allocation2 + $0x59] sm:$0xff]
  %v8643 = vld [vmem:[#allocation2 + $0x61] sm:$0xff]
  %v8644 = vld [vmem:[#allocation2 + $0x69] sm:$0xff]
  %v8645 = vld [vmem:[#allocation2 + $0x71] sm:$0xff]
  %v8646 = vld [vmem:[#allocation2 + $0x79] sm:$0xff]
  %v8647 = vld [vmem:[#allocation2 + $0x81] sm:$0xff]
  %v8648 = vld [vmem:[#allocation2 + $0x89] sm:$0xff]
  %v8649 = vld [vmem:[#allocation2 + $0x91] sm:$0xff]
  %v8650 = vld [vmem:[%s2003] sm:$0xff]
  %v8651 = vld [vmem:[%s2003 + $0x8] sm:$0xff]
  %v8652 = vld [vmem:[%s2003 + $0x10] sm:$0xff]
  %v8653 = vld [vmem:[%s2003 + $0x18] sm:$0xff]
  %v8654 = vld [vmem:[%s2003 + $0x20] sm:$0xff]
  %v8655 = vld [vmem:[%s2003 + $0x28] sm:$0xff]
  %v8656 = vld [vmem:[%s2003 + $0x30] sm:$0xff]
  %v8657 = vld [vmem:[%s2003 + $0x38] sm:$0xff]
  %v8658 = vld [vmem:[%s2003 + $0x40] sm:$0xff]
  %v8659 = vld [vmem:[%s2003 + $0x48] sm:$0xff]
  %v8660 = vld [vmem:[%s2003 + $0x50] sm:$0xff]
  %v8661 = vld [vmem:[%s2003 + $0x58] sm:$0xff]
  %v8662 = vld [vmem:[%s2003 + $0x60] sm:$0xff]
  %v8663 = vld [vmem:[%s2003 + $0x68] sm:$0xff]
  %v8664 = vld [vmem:[%s2003 + $0x70] sm:$0xff]
  %v8665 = vld [vmem:[%s2003 + $0x78] sm:$0xff]
  %vm8666 = vcmp.gt.f32.partialorder %v8650, 0.0
  %vm8667 = vcmp.gt.f32.partialorder %v8651, 0.0
  %vm8668 = vcmp.gt.f32.partialorder %v8652, 0.0
  %vm8669 = vcmp.gt.f32.partialorder %v8653, 0.0
  %vm8670 = vcmp.gt.f32.partialorder %v8654, 0.0
  %vm8671 = vcmp.gt.f32.partialorder %v8655, 0.0
  %vm8672 = vcmp.gt.f32.partialorder %v8656, 0.0
  %vm8673 = vcmp.gt.f32.partialorder %v8657, 0.0
  %vm8674 = vcmp.gt.f32.partialorder %v8658, 0.0
  %vm8675 = vcmp.gt.f32.partialorder %v8659, 0.0
  %vm8676 = vcmp.gt.f32.partialorder %v8660, 0.0
  %vm8677 = vcmp.gt.f32.partialorder %v8661, 0.0
  %vm8678 = vcmp.gt.f32.partialorder %v8662, 0.0
  %vm8679 = vcmp.gt.f32.partialorder %v8663, 0.0
  %vm8680 = vcmp.gt.f32.partialorder %v8664, 0.0
  %vm8681 = vcmp.gt.f32.partialorder %v8665, 0.0
  %v8682 = vsel %vm8666, %v8634, 0.0
  %v8683 = vsel %vm8667, %v8635, 0.0
  %v8684 = vsel %vm8668, %v8636, 0.0
  %v8685 = vsel %vm8669, %v8637, 0.0
  %v8686 = vsel %vm8670, %v8638, 0.0
  %v8687 = vsel %vm8671, %v8639, 0.0
  %v8688 = vsel %vm8672, %v8640, 0.0
  %v8689 = vsel %vm8673, %v8641, 0.0
  %v8690 = vsel %vm8674, %v8642, 0.0
  %v8691 = vsel %vm8675, %v8643, 0.0
  %v8692 = vsel %vm8676, %v8644, 0.0
  %v8693 = vsel %vm8677, %v8645, 0.0
  %v8694 = vsel %vm8678, %v8646, 0.0
  %v8695 = vsel %vm8679, %v8647, 0.0
  %v8696 = vsel %vm8680, %v8648, 0.0
  %v8697 = vsel %vm8681, %v8649, 0.0
  %v8698 = vpack.c.bf16 %v8683, %v8682
  %v8699 = vpack.c.bf16 %v8685, %v8684
  %v8700 = vpack.c.bf16 %v8687, %v8686
  %v8701 = vpack.c.bf16 %v8689, %v8688
  %v8702 = vpack.c.bf16 %v8691, %v8690
  %v8703 = vpack.c.bf16 %v8693, %v8692
  %v8704 = vpack.c.bf16 %v8695, %v8694
  %v8705 = vpack.c.bf16 %v8697, %v8696
  %v8706 = vld [vmem:[%s7050 + $0xe0] sm:$0xf]
  %v8707 = vld [vmem:[%s7050 + $0xe4] sm:$0xf]
  %v8708 = vld [vmem:[%s7050 + $0xe8] sm:$0xf]
  %v8709 = vld [vmem:[%s7050 + $0xec] sm:$0xf]
  %v8710 = vld [vmem:[%s7050 + $0xf0] sm:$0xf]
  %v8711 = vld [vmem:[%s7050 + $0xf4] sm:$0xf]
  %v8712 = vld [vmem:[%s7050 + $0xf8] sm:$0xf]
  %v8713 = vld [vmem:[%s7050 + $0xfc] sm:$0xf]
  %v8722 = vunpack.c.l.b16 %v8706
  %v8723 = vunpack.c.l.b16 %v8707
  %v8724 = vunpack.c.l.b16 %v8708
  %v8725 = vunpack.c.l.b16 %v8709
  %v8726 = vunpack.c.l.b16 %v8710
  %v8727 = vunpack.c.l.b16 %v8711
  %v8728 = vunpack.c.l.b16 %v8712
  %v8729 = vunpack.c.l.b16 %v8713
  %v8730 = vpack.c.b16 %v8723, %v8722
  %v8731 = vpack.c.b16 %v8725, %v8724
  %v8732 = vpack.c.b16 %v8727, %v8726
  %v8733 = vpack.c.b16 %v8729, %v8728
  %v8739 = vsel %vm31, %v8698, 0
  %v8742 = vsel %vm31, %v8699, 0
  %v8745 = vsel %vm31, %v8700, 0
  %v8748 = vsel %vm31, %v8701, 0
  %v8751 = vsel %vm31, %v8702, 0
  %v8754 = vsel %vm31, %v8703, 0
  %v8757 = vsel %vm31, %v8704, 0
  %v8760 = vsel %vm31, %v8705, 0
  %8762 = vmatprep.subr.bf16.mxu0 0
  %8763 = vmatpush1.bf16.msra.mxu0 0
  %8764 = vmatprep.subr.bf16.mxu0 0
  %8765 = vmatpush1.bf16.msra.mxu0 0
  %8766 = vmatprep.subr.bf16.mxu0 0
  %8767 = vmatpush1.bf16.msra.mxu0 0
  %8768 = vmatprep.subr.bf16.mxu0 0
  %8769 = vmatpush1.bf16.msra.mxu0 0
  %8770 = vmatprep.subr.bf16.mxu0 0
  %8771 = vmatpush1.bf16.msra.mxu0 %v8733
  %8772 = vmatprep.subr.bf16.mxu0 0
  %8773 = vmatpush1.bf16.msra.mxu0 %v8732
  %8774 = vmatprep.subr.bf16.mxu0 0
  %8775 = vmatpush1.bf16.msra.mxu0 %v8731
  %8776 = vmatprep.subr.bf16.mxu0 0
  %8777 = vmatpush1.bf16.msra.mxu0 %v8730
  %8778 = vmatprep.subr.bf16.mxu0 0
  %8779 = vmatpush2.bf16.msra.mxu0 0
  %8780 = vmatprep.subr.bf16.mxu0 0
  %8781 = vmatpush2.bf16.msra.mxu0 0
  %8782 = vmatprep.subr.bf16.mxu0 0
  %8783 = vmatpush2.bf16.msra.mxu0 0
  %8784 = vmatprep.subr.bf16.mxu0 0
  %8785 = vmatpush2.bf16.msra.mxu0 0
  %8786 = vmatprep.subr.bf16.mxu0 0
  %8787 = vmatpush2.bf16.msra.mxu0 0
  %8788 = vmatprep.subr.bf16.mxu0 0
  %8789 = vmatpush2.bf16.msra.mxu0 0
  %8790 = vmatprep.subr.bf16.mxu0 0
  %8791 = vmatpush2.bf16.msra.mxu0 0
  %8792 = vmatprep.subr.bf16.mxu0 0
  %8793 = vmatpush2.bf16.msra.mxu0 0
  %8794 = vmatprep.mubr.bf16.mxu0 0
  %8795 = vmatmul.mubr.bf16.gmra.mxu0 %v8739
  %v8796 = vpop.f32.mrf.mxu0
  %v8797 = vadd.f32 0.0, %v8796
  %v8798 = vpop.f32.mrf.mxu0
  %v8799 = vpop.f32.mrf.mxu0
  %v8800 = vadd.f32 0.0, %v8799
  %v8801 = vpop.f32.mrf.mxu0
  %8802 = vmatprep.mubr.bf16.mxu0 0
  %8803 = vmatmul.mubr.bf16.gmra.mxu0 %v8742
  %v8804 = vpop.f32.mrf.mxu0
  %v8805 = vadd.f32 0.0, %v8804
  %v8806 = vpop.f32.mrf.mxu0
  %v8807 = vpop.f32.mrf.mxu0
  %v8808 = vadd.f32 0.0, %v8807
  %v8809 = vpop.f32.mrf.mxu0
  %8810 = vmatprep.mubr.bf16.mxu0 0
  %8811 = vmatmul.mubr.bf16.gmra.mxu0 %v8745
  %v8812 = vpop.f32.mrf.mxu0
  %v8813 = vadd.f32 0.0, %v8812
  %v8814 = vpop.f32.mrf.mxu0
  %v8815 = vpop.f32.mrf.mxu0
  %v8816 = vadd.f32 0.0, %v8815
  %v8817 = vpop.f32.mrf.mxu0
  %8818 = vmatprep.mubr.bf16.mxu0 0
  %8819 = vmatmul.mubr.bf16.gmra.mxu0 %v8748
  %v8820 = vpop.f32.mrf.mxu0
  %v8821 = vadd.f32 0.0, %v8820
  %v8822 = vpop.f32.mrf.mxu0
  %v8823 = vpop.f32.mrf.mxu0
  %v8824 = vadd.f32 0.0, %v8823
  %v8825 = vpop.f32.mrf.mxu0
  %8826 = vmatprep.mubr.bf16.mxu0 0
  %8827 = vmatmul.mubr.bf16.gmra.mxu0 %v8751
  %v8828 = vpop.f32.mrf.mxu0
  %v8829 = vadd.f32 0.0, %v8828
  %v8830 = vpop.f32.mrf.mxu0
  %v8831 = vpop.f32.mrf.mxu0
  %v8832 = vadd.f32 0.0, %v8831
  %v8833 = vpop.f32.mrf.mxu0
  %8834 = vmatprep.mubr.bf16.mxu0 0
  %8835 = vmatmul.mubr.bf16.gmra.mxu0 %v8754
  %v8836 = vpop.f32.mrf.mxu0
  %v8837 = vadd.f32 0.0, %v8836
  %v8838 = vpop.f32.mrf.mxu0
  %v8839 = vpop.f32.mrf.mxu0
  %v8840 = vadd.f32 0.0, %v8839
  %v8841 = vpop.f32.mrf.mxu0
  %8842 = vmatprep.mubr.bf16.mxu0 0
  %8843 = vmatmul.mubr.bf16.gmra.mxu0 %v8757
  %v8844 = vpop.f32.mrf.mxu0
  %v8845 = vadd.f32 0.0, %v8844
  %v8846 = vpop.f32.mrf.mxu0
  %v8847 = vpop.f32.mrf.mxu0
  %v8848 = vadd.f32 0.0, %v8847
  %v8849 = vpop.f32.mrf.mxu0
  %8850 = vmatprep.mubr.bf16.mxu0 0
  %8851 = vmatmul.mubr.bf16.gmra.mxu0 %v8760
  %v8852 = vpop.f32.mrf.mxu0
  %v8853 = vadd.f32 0.0, %v8852
  %v8854 = vpop.f32.mrf.mxu0
  %v8855 = vpop.f32.mrf.mxu0
  %v8856 = vadd.f32 0.0, %v8855
  %v8857 = vpop.f32.mrf.mxu0
  %8858 = vdwg.mxu0
  %v8859 = vadd.f32 %v8618, %v8797
  %v8860 = vadd.f32 %v8619, %v8800
  %v8861 = vadd.f32 %v8620, %v8805
  %v8862 = vadd.f32 %v8621, %v8808
  %v8863 = vadd.f32 %v8622, %v8813
  %v8864 = vadd.f32 %v8623, %v8816
  %v8865 = vadd.f32 %v8624, %v8821
  %v8866 = vadd.f32 %v8625, %v8824
  %v8867 = vadd.f32 %v8626, %v8829
  %v8868 = vadd.f32 %v8627, %v8832
  %v8869 = vadd.f32 %v8628, %v8837
  %v8870 = vadd.f32 %v8629, %v8840
  %v8871 = vadd.f32 %v8630, %v8845
  %v8872 = vadd.f32 %v8631, %v8848
  %v8873 = vadd.f32 %v8632, %v8853
  %v8874 = vadd.f32 %v8633, %v8856
  %v8875 = vld [vmem:[#allocation2 + $0x1a] sm:$0xff]
  %v8876 = vld [vmem:[#allocation2 + $0x22] sm:$0xff]
  %v8877 = vld [vmem:[#allocation2 + $0x2a] sm:$0xff]
  %v8878 = vld [vmem:[#allocation2 + $0x32] sm:$0xff]
  %v8879 = vld [vmem:[#allocation2 + $0x3a] sm:$0xff]
  %v8880 = vld [vmem:[#allocation2 + $0x42] sm:$0xff]
  %v8881 = vld [vmem:[#allocation2 + $0x4a] sm:$0xff]
  %v8882 = vld [vmem:[#allocation2 + $0x52] sm:$0xff]
  %v8883 = vld [vmem:[#allocation2 + $0x5a] sm:$0xff]
  %v8884 = vld [vmem:[#allocation2 + $0x62] sm:$0xff]
  %v8885 = vld [vmem:[#allocation2 + $0x6a] sm:$0xff]
  %v8886 = vld [vmem:[#allocation2 + $0x72] sm:$0xff]
  %v8887 = vld [vmem:[#allocation2 + $0x7a] sm:$0xff]
  %v8888 = vld [vmem:[#allocation2 + $0x82] sm:$0xff]
  %v8889 = vld [vmem:[#allocation2 + $0x8a] sm:$0xff]
  %v8890 = vld [vmem:[#allocation2 + $0x92] sm:$0xff]
  %v8891 = vld [vmem:[%s2245] sm:$0xff]
  %v8892 = vld [vmem:[%s2245 + $0x8] sm:$0xff]
  %v8893 = vld [vmem:[%s2245 + $0x10] sm:$0xff]
  %v8894 = vld [vmem:[%s2245 + $0x18] sm:$0xff]
  %v8895 = vld [vmem:[%s2245 + $0x20] sm:$0xff]
  %v8896 = vld [vmem:[%s2245 + $0x28] sm:$0xff]
  %v8897 = vld [vmem:[%s2245 + $0x30] sm:$0xff]
  %v8898 = vld [vmem:[%s2245 + $0x38] sm:$0xff]
  %v8899 = vld [vmem:[%s2245 + $0x40] sm:$0xff]
  %v8900 = vld [vmem:[%s2245 + $0x48] sm:$0xff]
  %v8901 = vld [vmem:[%s2245 + $0x50] sm:$0xff]
  %v8902 = vld [vmem:[%s2245 + $0x58] sm:$0xff]
  %v8903 = vld [vmem:[%s2245 + $0x60] sm:$0xff]
  %v8904 = vld [vmem:[%s2245 + $0x68] sm:$0xff]
  %v8905 = vld [vmem:[%s2245 + $0x70] sm:$0xff]
  %v8906 = vld [vmem:[%s2245 + $0x78] sm:$0xff]
  %vm8907 = vcmp.gt.f32.partialorder %v8891, 0.0
  %vm8908 = vcmp.gt.f32.partialorder %v8892, 0.0
  %vm8909 = vcmp.gt.f32.partialorder %v8893, 0.0
  %vm8910 = vcmp.gt.f32.partialorder %v8894, 0.0
  %vm8911 = vcmp.gt.f32.partialorder %v8895, 0.0
  %vm8912 = vcmp.gt.f32.partialorder %v8896, 0.0
  %vm8913 = vcmp.gt.f32.partialorder %v8897, 0.0
  %vm8914 = vcmp.gt.f32.partialorder %v8898, 0.0
  %vm8915 = vcmp.gt.f32.partialorder %v8899, 0.0
  %vm8916 = vcmp.gt.f32.partialorder %v8900, 0.0
  %vm8917 = vcmp.gt.f32.partialorder %v8901, 0.0
  %vm8918 = vcmp.gt.f32.partialorder %v8902, 0.0
  %vm8919 = vcmp.gt.f32.partialorder %v8903, 0.0
  %vm8920 = vcmp.gt.f32.partialorder %v8904, 0.0
  %vm8921 = vcmp.gt.f32.partialorder %v8905, 0.0
  %vm8922 = vcmp.gt.f32.partialorder %v8906, 0.0
  %v8923 = vsel %vm8907, %v8875, 0.0
  %v8924 = vsel %vm8908, %v8876, 0.0
  %v8925 = vsel %vm8909, %v8877, 0.0
  %v8926 = vsel %vm8910, %v8878, 0.0
  %v8927 = vsel %vm8911, %v8879, 0.0
  %v8928 = vsel %vm8912, %v8880, 0.0
  %v8929 = vsel %vm8913, %v8881, 0.0
  %v8930 = vsel %vm8914, %v8882, 0.0
  %v8931 = vsel %vm8915, %v8883, 0.0
  %v8932 = vsel %vm8916, %v8884, 0.0
  %v8933 = vsel %vm8917, %v8885, 0.0
  %v8934 = vsel %vm8918, %v8886, 0.0
  %v8935 = vsel %vm8919, %v8887, 0.0
  %v8936 = vsel %vm8920, %v8888, 0.0
  %v8937 = vsel %vm8921, %v8889, 0.0
  %v8938 = vsel %vm8922, %v8890, 0.0
  %v8939 = vpack.c.bf16 %v8924, %v8923
  %v8940 = vpack.c.bf16 %v8926, %v8925
  %v8941 = vpack.c.bf16 %v8928, %v8927
  %v8942 = vpack.c.bf16 %v8930, %v8929
  %v8943 = vpack.c.bf16 %v8932, %v8931
  %v8944 = vpack.c.bf16 %v8934, %v8933
  %v8945 = vpack.c.bf16 %v8936, %v8935
  %v8946 = vpack.c.bf16 %v8938, %v8937
  %v8947 = vld [vmem:[%s7050 + $0x100] sm:$0xf]
  %v8948 = vld [vmem:[%s7050 + $0x104] sm:$0xf]
  %v8949 = vld [vmem:[%s7050 + $0x108] sm:$0xf]
  %v8950 = vld [vmem:[%s7050 + $0x10c] sm:$0xf]
  %v8951 = vld [vmem:[%s7050 + $0x110] sm:$0xf]
  %v8952 = vld [vmem:[%s7050 + $0x114] sm:$0xf]
  %v8953 = vld [vmem:[%s7050 + $0x118] sm:$0xf]
  %v8954 = vld [vmem:[%s7050 + $0x11c] sm:$0xf]
  %v8963 = vunpack.c.l.b16 %v8947
  %v8964 = vunpack.c.l.b16 %v8948
  %v8965 = vunpack.c.l.b16 %v8949
  %v8966 = vunpack.c.l.b16 %v8950
  %v8967 = vunpack.c.l.b16 %v8951
  %v8968 = vunpack.c.l.b16 %v8952
  %v8969 = vunpack.c.l.b16 %v8953
  %v8970 = vunpack.c.l.b16 %v8954
  %v8971 = vpack.c.b16 %v8964, %v8963
  %v8972 = vpack.c.b16 %v8966, %v8965
  %v8973 = vpack.c.b16 %v8968, %v8967
  %v8974 = vpack.c.b16 %v8970, %v8969
  %v8980 = vsel %vm31, %v8939, 0
  %v8983 = vsel %vm31, %v8940, 0
  %v8986 = vsel %vm31, %v8941, 0
  %v8989 = vsel %vm31, %v8942, 0
  %v8992 = vsel %vm31, %v8943, 0
  %v8995 = vsel %vm31, %v8944, 0
  %v8998 = vsel %vm31, %v8945, 0
  %v9001 = vsel %vm31, %v8946, 0
  %9003 = vmatprep.subr.bf16.mxu0 0
  %9004 = vmatpush1.bf16.msra.mxu0 0
  %9005 = vmatprep.subr.bf16.mxu0 0
  %9006 = vmatpush1.bf16.msra.mxu0 0
  %9007 = vmatprep.subr.bf16.mxu0 0
  %9008 = vmatpush1.bf16.msra.mxu0 0
  %9009 = vmatprep.subr.bf16.mxu0 0
  %9010 = vmatpush1.bf16.msra.mxu0 0
  %9011 = vmatprep.subr.bf16.mxu0 0
  %9012 = vmatpush1.bf16.msra.mxu0 %v8974
  %9013 = vmatprep.subr.bf16.mxu0 0
  %9014 = vmatpush1.bf16.msra.mxu0 %v8973
  %9015 = vmatprep.subr.bf16.mxu0 0
  %9016 = vmatpush1.bf16.msra.mxu0 %v8972
  %9017 = vmatprep.subr.bf16.mxu0 0
  %9018 = vmatpush1.bf16.msra.mxu0 %v8971
  %9019 = vmatprep.subr.bf16.mxu0 0
  %9020 = vmatpush2.bf16.msra.mxu0 0
  %9021 = vmatprep.subr.bf16.mxu0 0
  %9022 = vmatpush2.bf16.msra.mxu0 0
  %9023 = vmatprep.subr.bf16.mxu0 0
  %9024 = vmatpush2.bf16.msra.mxu0 0
  %9025 = vmatprep.subr.bf16.mxu0 0
  %9026 = vmatpush2.bf16.msra.mxu0 0
  %9027 = vmatprep.subr.bf16.mxu0 0
  %9028 = vmatpush2.bf16.msra.mxu0 0
  %9029 = vmatprep.subr.bf16.mxu0 0
  %9030 = vmatpush2.bf16.msra.mxu0 0
  %9031 = vmatprep.subr.bf16.mxu0 0
  %9032 = vmatpush2.bf16.msra.mxu0 0
  %9033 = vmatprep.subr.bf16.mxu0 0
  %9034 = vmatpush2.bf16.msra.mxu0 0
  %9035 = vmatprep.mubr.bf16.mxu0 0
  %9036 = vmatmul.mubr.bf16.gmra.mxu0 %v8980
  %v9037 = vpop.f32.mrf.mxu0
  %v9038 = vadd.f32 0.0, %v9037
  %v9039 = vpop.f32.mrf.mxu0
  %v9040 = vpop.f32.mrf.mxu0
  %v9041 = vadd.f32 0.0, %v9040
  %v9042 = vpop.f32.mrf.mxu0
  %9043 = vmatprep.mubr.bf16.mxu0 0
  %9044 = vmatmul.mubr.bf16.gmra.mxu0 %v8983
  %v9045 = vpop.f32.mrf.mxu0
  %v9046 = vadd.f32 0.0, %v9045
  %v9047 = vpop.f32.mrf.mxu0
  %v9048 = vpop.f32.mrf.mxu0
  %v9049 = vadd.f32 0.0, %v9048
  %v9050 = vpop.f32.mrf.mxu0
  %9051 = vmatprep.mubr.bf16.mxu0 0
  %9052 = vmatmul.mubr.bf16.gmra.mxu0 %v8986
  %v9053 = vpop.f32.mrf.mxu0
  %v9054 = vadd.f32 0.0, %v9053
  %v9055 = vpop.f32.mrf.mxu0
  %v9056 = vpop.f32.mrf.mxu0
  %v9057 = vadd.f32 0.0, %v9056
  %v9058 = vpop.f32.mrf.mxu0
  %9059 = vmatprep.mubr.bf16.mxu0 0
  %9060 = vmatmul.mubr.bf16.gmra.mxu0 %v8989
  %v9061 = vpop.f32.mrf.mxu0
  %v9062 = vadd.f32 0.0, %v9061
  %v9063 = vpop.f32.mrf.mxu0
  %v9064 = vpop.f32.mrf.mxu0
  %v9065 = vadd.f32 0.0, %v9064
  %v9066 = vpop.f32.mrf.mxu0
  %9067 = vmatprep.mubr.bf16.mxu0 0
  %9068 = vmatmul.mubr.bf16.gmra.mxu0 %v8992
  %v9069 = vpop.f32.mrf.mxu0
  %v9070 = vadd.f32 0.0, %v9069
  %v9071 = vpop.f32.mrf.mxu0
  %v9072 = vpop.f32.mrf.mxu0
  %v9073 = vadd.f32 0.0, %v9072
  %v9074 = vpop.f32.mrf.mxu0
  %9075 = vmatprep.mubr.bf16.mxu0 0
  %9076 = vmatmul.mubr.bf16.gmra.mxu0 %v8995
  %v9077 = vpop.f32.mrf.mxu0
  %v9078 = vadd.f32 0.0, %v9077
  %v9079 = vpop.f32.mrf.mxu0
  %v9080 = vpop.f32.mrf.mxu0
  %v9081 = vadd.f32 0.0, %v9080
  %v9082 = vpop.f32.mrf.mxu0
  %9083 = vmatprep.mubr.bf16.mxu0 0
  %9084 = vmatmul.mubr.bf16.gmra.mxu0 %v8998
  %v9085 = vpop.f32.mrf.mxu0
  %v9086 = vadd.f32 0.0, %v9085
  %v9087 = vpop.f32.mrf.mxu0
  %v9088 = vpop.f32.mrf.mxu0
  %v9089 = vadd.f32 0.0, %v9088
  %v9090 = vpop.f32.mrf.mxu0
  %9091 = vmatprep.mubr.bf16.mxu0 0
  %9092 = vmatmul.mubr.bf16.gmra.mxu0 %v9001
  %v9093 = vpop.f32.mrf.mxu0
  %v9094 = vadd.f32 0.0, %v9093
  %v9095 = vpop.f32.mrf.mxu0
  %v9096 = vpop.f32.mrf.mxu0
  %v9097 = vadd.f32 0.0, %v9096
  %v9098 = vpop.f32.mrf.mxu0
  %9099 = vdwg.mxu0
  %v9100 = vadd.f32 %v8859, %v9038
  %v9101 = vadd.f32 %v8860, %v9041
  %v9102 = vadd.f32 %v8861, %v9046
  %v9103 = vadd.f32 %v8862, %v9049
  %v9104 = vadd.f32 %v8863, %v9054
  %v9105 = vadd.f32 %v8864, %v9057
  %v9106 = vadd.f32 %v8865, %v9062
  %v9107 = vadd.f32 %v8866, %v9065
  %v9108 = vadd.f32 %v8867, %v9070
  %v9109 = vadd.f32 %v8868, %v9073
  %v9110 = vadd.f32 %v8869, %v9078
  %v9111 = vadd.f32 %v8870, %v9081
  %v9112 = vadd.f32 %v8871, %v9086
  %v9113 = vadd.f32 %v8872, %v9089
  %v9114 = vadd.f32 %v8873, %v9094
  %v9115 = vadd.f32 %v8874, %v9097
  %s9116 = scalar_lea.vmem %s5, 3
  %v9117 = vld [vmem:[%s9116] sm:$0x1]
  %v9119 = vlaneseq
  %v9120 = vshrl.u32 %v9119, 7
  %v9121 = vsub.s32 0, %v9120
  %v9122 = vrot.slane %v9117, %v9121
  %v9124 = vadd.f32 %v9100, %v9122
  %v9125 = vadd.f32 %v9101, %v9122
  %v9126 = vadd.f32 %v9102, %v9122
  %v9127 = vadd.f32 %v9103, %v9122
  %v9128 = vadd.f32 %v9104, %v9122
  %v9129 = vadd.f32 %v9105, %v9122
  %v9130 = vadd.f32 %v9106, %v9122
  %v9131 = vadd.f32 %v9107, %v9122
  %v9132 = vadd.f32 %v9108, %v9122
  %v9133 = vadd.f32 %v9109, %v9122
  %v9134 = vadd.f32 %v9110, %v9122
  %v9135 = vadd.f32 %v9111, %v9122
  %v9136 = vadd.f32 %v9112, %v9122
  %v9137 = vadd.f32 %v9113, %v9122
  %v9138 = vadd.f32 %v9114, %v9122
  %v9139 = vadd.f32 %v9115, %v9122
  %v9140 = vadd.f32 %v9124, %v4736
  %v9141 = vadd.f32 %v9125, %v4737
  %v9142 = vadd.f32 %v9126, %v4738
  %v9143 = vadd.f32 %v9127, %v4739
  %v9144 = vadd.f32 %v9128, %v4740
  %v9145 = vadd.f32 %v9129, %v4741
  %v9146 = vadd.f32 %v9130, %v4742
  %v9147 = vadd.f32 %v9131, %v4743
  %v9148 = vadd.f32 %v9132, %v4744
  %v9149 = vadd.f32 %v9133, %v4745
  %v9150 = vadd.f32 %v9134, %v4746
  %v9151 = vadd.f32 %v9135, %v4747
  %v9152 = vadd.f32 %v9136, %v4748
  %v9153 = vadd.f32 %v9137, %v4749
  %v9154 = vadd.f32 %v9138, %v4750
  %v9155 = vadd.f32 %v9139, %v4751
  %v9156 = vmax.f32 %v9140, 0.0
  %v9157 = vmax.f32 %v9141, 0.0
  %v9158 = vmax.f32 %v9142, 0.0
  %v9159 = vmax.f32 %v9143, 0.0
  %v9160 = vmax.f32 %v9144, 0.0
  %v9161 = vmax.f32 %v9145, 0.0
  %v9162 = vmax.f32 %v9146, 0.0
  %v9163 = vmax.f32 %v9147, 0.0
  %v9164 = vmax.f32 %v9148, 0.0
  %v9165 = vmax.f32 %v9149, 0.0
  %v9166 = vmax.f32 %v9150, 0.0
  %v9167 = vmax.f32 %v9151, 0.0
  %v9168 = vmax.f32 %v9152, 0.0
  %v9169 = vmax.f32 %v9153, 0.0
  %v9170 = vmax.f32 %v9154, 0.0
  %v9171 = vmax.f32 %v9155, 0.0
  %v9172 = vsel %vm69, %v9156, 0.0
  %v9173 = vsel %vm70, %v9157, 0.0
  %v9174 = vsel %vm71, %v9158, 0.0
  %v9175 = vsel %vm72, %v9159, 0.0
  %v9176 = vsel %vm73, %v9160, 0.0
  %v9177 = vsel %vm74, %v9161, 0.0
  %v9178 = vsel %vm75, %v9162, 0.0
  %v9179 = vsel %vm76, %v9163, 0.0
  %v9180 = vsel %vm77, %v9164, 0.0
  %v9181 = vsel %vm78, %v9165, 0.0
  %v9182 = vsel %vm79, %v9166, 0.0
  %v9183 = vsel %vm80, %v9167, 0.0
  %v9184 = vsel %vm81, %v9168, 0.0
  %v9185 = vsel %vm82, %v9169, 0.0
  %v9186 = vsel %vm83, %v9170, 0.0
  %v9187 = vsel %vm84, %v9171, 0.0
  %v9188 = vld [vmem:[%s6] sm:$0xff]
  %v9189 = vld [vmem:[%s6 + $0x8] sm:$0xff]
  %v9190 = vld [vmem:[%s6 + $0x10] sm:$0xff]
  %v9191 = vld [vmem:[%s6 + $0x18] sm:$0xff]
  %v9192 = vld [vmem:[%s6 + $0x20] sm:$0xff]
  %v9193 = vld [vmem:[%s6 + $0x28] sm:$0xff]
  %v9194 = vld [vmem:[%s6 + $0x30] sm:$0xff]
  %v9195 = vld [vmem:[%s6 + $0x38] sm:$0xff]
  %v9196 = vld [vmem:[%s6 + $0x40] sm:$0xff]
  %v9197 = vld [vmem:[%s6 + $0x48] sm:$0xff]
  %v9198 = vld [vmem:[%s6 + $0x50] sm:$0xff]
  %v9199 = vld [vmem:[%s6 + $0x58] sm:$0xff]
  %v9200 = vld [vmem:[%s6 + $0x60] sm:$0xff]
  %v9201 = vld [vmem:[%s6 + $0x68] sm:$0xff]
  %v9202 = vld [vmem:[%s6 + $0x70] sm:$0xff]
  %v9203 = vld [vmem:[%s6 + $0x78] sm:$0xff]
  %v9204 = vmul.f32 %v9172, %v9188
  %v9205 = vmul.f32 %v9173, %v9189
  %v9206 = vmul.f32 %v9174, %v9190
  %v9207 = vmul.f32 %v9175, %v9191
  %v9208 = vmul.f32 %v9176, %v9192
  %v9209 = vmul.f32 %v9177, %v9193
  %v9210 = vmul.f32 %v9178, %v9194
  %v9211 = vmul.f32 %v9179, %v9195
  %v9212 = vmul.f32 %v9180, %v9196
  %v9213 = vmul.f32 %v9181, %v9197
  %v9214 = vmul.f32 %v9182, %v9198
  %v9215 = vmul.f32 %v9183, %v9199
  %v9216 = vmul.f32 %v9184, %v9200
  %v9217 = vmul.f32 %v9185, %v9201
  %v9218 = vmul.f32 %v9186, %v9202
  %v9219 = vmul.f32 %v9187, %v9203
  %vm9220 = vcmp.lt.s32.totalorder %v53, 63
  %vm9221 = vcmp.lt.s32.totalorder %v54, 63
  %vm9222 = vcmp.lt.s32.totalorder %v55, 63
  %vm9223 = vcmp.lt.s32.totalorder %v56, 63
  %vm9224 = vcmp.lt.s32.totalorder %v57, 63
  %vm9225 = vcmp.lt.s32.totalorder %v58, 63
  %vm9226 = vcmp.lt.s32.totalorder %v59, 63
  %vm9227 = vcmp.lt.s32.totalorder %v60, 63
  %vm9228 = vcmp.lt.s32.totalorder %v61, 63
  %vm9229 = vcmp.lt.s32.totalorder %v62, 63
  %vm9230 = vcmp.lt.s32.totalorder %v63, 63
  %vm9231 = vcmp.lt.s32.totalorder %v64, 63
  %vm9232 = vcmp.lt.s32.totalorder %v65, 63
  %vm9233 = vcmp.lt.s32.totalorder %v66, 63
  %vm9234 = vcmp.lt.s32.totalorder %v67, 63
  %vm9235 = vcmp.lt.s32.totalorder %v68, 63
  %v9236 = vsel %vm9220, %v9204, 0.0
  %v9237 = vsel %vm9221, %v9205, 0.0
  %v9238 = vsel %vm9222, %v9206, 0.0
  %v9239 = vsel %vm9223, %v9207, 0.0
  %v9240 = vsel %vm9224, %v9208, 0.0
  %v9241 = vsel %vm9225, %v9209, 0.0
  %v9242 = vsel %vm9226, %v9210, 0.0
  %v9243 = vsel %vm9227, %v9211, 0.0
  %v9244 = vsel %vm9228, %v9212, 0.0
  %v9245 = vsel %vm9229, %v9213, 0.0
  %v9246 = vsel %vm9230, %v9214, 0.0
  %v9247 = vsel %vm9231, %v9215, 0.0
  %v9248 = vsel %vm9232, %v9216, 0.0
  %v9249 = vsel %vm9233, %v9217, 0.0
  %v9250 = vsel %vm9234, %v9218, 0.0
  %v9251 = vsel %vm9235, %v9219, 0.0
  %v9252 = vsel %vm31, %v9236, 0.0
  %v9253 = vsel %vm31, %v9237, 0.0
  %v9254 = vadd.f32 %v9252, %v9253
  %v9255 = vsel %vm31, %v9238, 0.0
  %v9256 = vadd.f32 %v9254, %v9255
  %v9257 = vsel %vm31, %v9239, 0.0
  %v9258 = vadd.f32 %v9256, %v9257
  %v9259 = vsel %vm31, %v9240, 0.0
  %v9260 = vadd.f32 %v9258, %v9259
  %v9261 = vsel %vm31, %v9241, 0.0
  %v9262 = vadd.f32 %v9260, %v9261
  %v9263 = vsel %vm31, %v9242, 0.0
  %v9264 = vadd.f32 %v9262, %v9263
  %v9265 = vsel %vm31, %v9243, 0.0
  %v9266 = vadd.f32 %v9264, %v9265
  %v9267 = vsel %vm31, %v9244, 0.0
  %v9268 = vadd.f32 %v9266, %v9267
  %v9269 = vsel %vm31, %v9245, 0.0
  %v9270 = vadd.f32 %v9268, %v9269
  %v9271 = vsel %vm31, %v9246, 0.0
  %v9272 = vadd.f32 %v9270, %v9271
  %v9273 = vsel %vm31, %v9247, 0.0
  %v9274 = vadd.f32 %v9272, %v9273
  %v9275 = vsel %vm31, %v9248, 0.0
  %v9276 = vadd.f32 %v9274, %v9275
  %v9277 = vsel %vm31, %v9249, 0.0
  %v9278 = vadd.f32 %v9276, %v9277
  %v9279 = vsel %vm31, %v9250, 0.0
  %v9280 = vadd.f32 %v9278, %v9279
  %v9281 = vsel %vm31, %v9251, 0.0
  %v9282 = vadd.f32 %v9280, %v9281
  %9283 = vadd.xlane.f32.xlu0 %v9282
  %v9284 = vpop.xlane.xlu0 %9283
  %v9285 = vrot.slane %v9284, 4
  %v9286 = vadd.f32 %v9284, %v9285
  %v9287 = vrot.slane %v9286, 2
  %v9288 = vadd.f32 %v9286, %v9287
  %v9289 = vrot.slane %v9288, 1
  %v9290 = vadd.f32 %v9288, %v9289
  %s9291 = vtos %v9290
  %vm9292 = vcmp.ge.s32.totalorder %v53, 63
  %vm9293 = vcmp.ge.s32.totalorder %v54, 63
  %vm9294 = vcmp.ge.s32.totalorder %v55, 63
  %vm9295 = vcmp.ge.s32.totalorder %v56, 63
  %vm9296 = vcmp.ge.s32.totalorder %v57, 63
  %vm9297 = vcmp.ge.s32.totalorder %v58, 63
  %vm9298 = vcmp.ge.s32.totalorder %v59, 63
  %vm9299 = vcmp.ge.s32.totalorder %v60, 63
  %vm9300 = vcmp.ge.s32.totalorder %v61, 63
  %vm9301 = vcmp.ge.s32.totalorder %v62, 63
  %vm9302 = vcmp.ge.s32.totalorder %v63, 63
  %vm9303 = vcmp.ge.s32.totalorder %v64, 63
  %vm9304 = vcmp.ge.s32.totalorder %v65, 63
  %vm9305 = vcmp.ge.s32.totalorder %v66, 63
  %vm9306 = vcmp.ge.s32.totalorder %v67, 63
  %vm9307 = vcmp.ge.s32.totalorder %v68, 63
  %vm9308 = vmand %vm9292, %vm69
  %vm9309 = vmand %vm9293, %vm70
  %vm9310 = vmand %vm9294, %vm71
  %vm9311 = vmand %vm9295, %vm72
  %vm9312 = vmand %vm9296, %vm73
  %vm9313 = vmand %vm9297, %vm74
  %vm9314 = vmand %vm9298, %vm75
  %vm9315 = vmand %vm9299, %vm76
  %vm9316 = vmand %vm9300, %vm77
  %vm9317 = vmand %vm9301, %vm78
  %vm9318 = vmand %vm9302, %vm79
  %vm9319 = vmand %vm9303, %vm80
  %vm9320 = vmand %vm9304, %vm81
  %vm9321 = vmand %vm9305, %vm82
  %vm9322 = vmand %vm9306, %vm83
  %vm9323 = vmand %vm9307, %vm84
  %v9324 = vsel %vm9308, %v9204, 0.0
  %v9325 = vsel %vm9309, %v9205, 0.0
  %v9326 = vsel %vm9310, %v9206, 0.0
  %v9327 = vsel %vm9311, %v9207, 0.0
  %v9328 = vsel %vm9312, %v9208, 0.0
  %v9329 = vsel %vm9313, %v9209, 0.0
  %v9330 = vsel %vm9314, %v9210, 0.0
  %v9331 = vsel %vm9315, %v9211, 0.0
  %v9332 = vsel %vm9316, %v9212, 0.0
  %v9333 = vsel %vm9317, %v9213, 0.0
  %v9334 = vsel %vm9318, %v9214, 0.0
  %v9335 = vsel %vm9319, %v9215, 0.0
  %v9336 = vsel %vm9320, %v9216, 0.0
  %v9337 = vsel %vm9321, %v9217, 0.0
  %v9338 = vsel %vm9322, %v9218, 0.0
  %v9339 = vsel %vm9323, %v9219, 0.0
  %v9340 = vsel %vm31, %v9324, 0.0
  %v9341 = vsel %vm31, %v9325, 0.0
  %v9342 = vadd.f32 %v9340, %v9341
  %v9343 = vsel %vm31, %v9326, 0.0
  %v9344 = vadd.f32 %v9342, %v9343
  %v9345 = vsel %vm31, %v9327, 0.0
  %v9346 = vadd.f32 %v9344, %v9345
  %v9347 = vsel %vm31, %v9328, 0.0
  %v9348 = vadd.f32 %v9346, %v9347
  %v9349 = vsel %vm31, %v9329, 0.0
  %v9350 = vadd.f32 %v9348, %v9349
  %v9351 = vsel %vm31, %v9330, 0.0
  %v9352 = vadd.f32 %v9350, %v9351
  %v9353 = vsel %vm31, %v9331, 0.0
  %v9354 = vadd.f32 %v9352, %v9353
  %v9355 = vsel %vm31, %v9332, 0.0
  %v9356 = vadd.f32 %v9354, %v9355
  %v9357 = vsel %vm31, %v9333, 0.0
  %v9358 = vadd.f32 %v9356, %v9357
  %v9359 = vsel %vm31, %v9334, 0.0
  %v9360 = vadd.f32 %v9358, %v9359
  %v9361 = vsel %vm31, %v9335, 0.0
  %v9362 = vadd.f32 %v9360, %v9361
  %v9363 = vsel %vm31, %v9336, 0.0
  %v9364 = vadd.f32 %v9362, %v9363
  %v9365 = vsel %vm31, %v9337, 0.0
  %v9366 = vadd.f32 %v9364, %v9365
  %v9367 = vsel %vm31, %v9338, 0.0
  %v9368 = vadd.f32 %v9366, %v9367
  %v9369 = vsel %vm31, %v9339, 0.0
  %v9370 = vadd.f32 %v9368, %v9369
  %9371 = vadd.xlane.f32.xlu0 %v9370
  %v9372 = vpop.xlane.xlu0 %9371
  %v9373 = vrot.slane %v9372, 4
  %v9374 = vadd.f32 %v9372, %v9373
  %v9375 = vrot.slane %v9374, 2
  %v9376 = vadd.f32 %v9374, %v9375
  %v9377 = vrot.slane %v9376, 1
  %v9378 = vadd.f32 %v9376, %v9377
  %s9379 = vtos %v9378
  %s9380 = sld [smem:[#allocation3]]
  %vm9381 = vcmp.eq.s32.totalorder %v53, 0
  %v9382 = vsel %vm9381, 1, 0
  %v9383 = vcvt.s32.f32 %v9382
  %v9384 = vstv %s9291
  %v9385 = vmul.f32 %v9383, %v9384
  %v9386 = vsub.f32 1.0, %v9383
  %v9387 = vstv %s9379
  %v9388 = vmul.f32 %v9386, %v9387
  %v9389 = vadd.f32 %v9385, %v9388
  %v9390 = vstv %s9380
  %v9391 = vadd.f32 %v9389, %v9390
  %v9392 = vsub.f32 0.0, %v9391
  %v9393 = vmul.f32 %v9392, 1.442695
  %v9394 = vpow.pop %v9393
  %v9395 = vadd.f32 %v9394, 1.0
  %v9396 = vrcp.pop %v9395
  %v9397 = vmul.f32 1.0, %v9396
  %vm9398 = vcmask 1024
  %9399 = vst.msk [vmem:[%s8] sm:$0x3] %vm9398, %v9397
  // Predicated region
  $region34: #{resnet_forward.1} parent=0 // pred_check
    _
  $region35: #{resnet_forward.1} parent=0 // pred_check_branch
    %9401 = sbr.rel (0) target = $region37
  $region36: #{resnet_forward.1} parent=0 // pred_region
    _
  $region37: #{resnet_forward.1} parent=0 // pred_fallthru
    _
  // Predicated region
  $region38: #{resnet_forward.1} parent=0 // pred_check
    _
  $region39: #{resnet_forward.1} parent=0 // pred_check_branch
    %9403 = sbr.rel (0) target = $region41
  $region40: #{resnet_forward.1} parent=0 // pred_region
    _
  $region41: #{resnet_forward.1} parent=0 // pred_fallthru
    _

</llo_original>
